<compile_context>
chip_gen: v7x
topology: tpu7x:2x2x1
jax: 0.10.0
libtpu: 0.0.40
codegen_flags: <defaults>
</compile_context>

<pallas_src>
import functools

import jax
import jax.numpy as jnp
from jax.experimental import pallas as pl
from jax.experimental.pallas import tpu as pltpu

# Model dims (from the PyTorch script)
Z_DIM = 2
N_CLASSES = 10
IN_DIM = Z_DIM + N_CLASSES  # 12
HID = 1000
X_DIM = 784


def _round_up(x, m):
    return (x + m - 1) // m * m


# Padded (lane-friendly) dims
IN_P = _round_up(IN_DIM, 128)   # 128
HID_P = _round_up(HID, 128)     # 1024
OUT_P = _round_up(X_DIM, 128)   # 896


def pnet_kernel(x_ref, w1_ref, b1_ref, w2_ref, b2_ref, w3_ref, b3_ref, o_ref):
    # lin1 (+ dropout == identity in eval) + relu. bf16 operands, f32 accumulate.
    h = jnp.dot(x_ref[...], w1_ref[...], preferred_element_type=jnp.float32)
    h = jnp.maximum(h + b1_ref[...], 0.0)
    # lin2 (+ dropout == identity in eval)
    h = jnp.dot(h.astype(jnp.bfloat16), w2_ref[...],
                preferred_element_type=jnp.float32)
    h = h + b2_ref[...]
    # lin3 + sigmoid
    h = jnp.dot(h.astype(jnp.bfloat16), w3_ref[...],
                preferred_element_type=jnp.float32)
    o_ref[...] = jax.nn.sigmoid(h + b3_ref[...])


def prepare_params(params):
    """One-time padding + bf16 cast of the weights (do NOT call per forward).

    Weights -> bf16, padded (in_P, out_P); biases -> f32, padded (1, out_P).
    Padding is zeros, hence inert."""
    w1, b1, w2, b2, w3, b3 = (
        params["w1"], params["b1"], params["w2"],
        params["b2"], params["w3"], params["b3"],
    )
    w1_p = jnp.zeros((IN_P, HID_P), jnp.bfloat16).at[:IN_DIM, :HID].set(
        w1.astype(jnp.bfloat16))
    w2_p = jnp.zeros((HID_P, HID_P), jnp.bfloat16).at[:HID, :HID].set(
        w2.astype(jnp.bfloat16))
    w3_p = jnp.zeros((HID_P, OUT_P), jnp.bfloat16).at[:HID, :X_DIM].set(
        w3.astype(jnp.bfloat16))
    b1_p = jnp.zeros((1, HID_P), jnp.float32).at[0, :HID].set(b1)
    b2_p = jnp.zeros((1, HID_P), jnp.float32).at[0, :HID].set(b2)
    b3_p = jnp.zeros((1, OUT_P), jnp.float32).at[0, :X_DIM].set(b3)
    return (w1_p, b1_p, w2_p, b2_p, w3_p, b3_p)
    # TODO(synk): for repeated tiny-batch inference, a cross-call VMEM-resident
    # weight scheme (P10 futures) would remove even the once-per-call weight DMA.


@jax.jit
def p_net_forward(x, padded_params):
    """x: (B, 12) float32; padded_params: output of prepare_params.

    Returns (B, 784) float32."""
    w1_p, b1_p, w2_p, b2_p, w3_p, b3_p = padded_params
    B = x.shape[0]

    # Batch tile: up to 256 rows (fills the 256-row MXU on v6e/v7x); small
    # batches get a single tile padded to a sublane multiple of 8.
    TB = min(256, _round_up(B, 8))
    Bp = _round_up(B, TB)
    grid = (Bp // TB,)

    # Only the activation is padded per call (tiny: Bp x 128 bf16).
    x_p = jnp.zeros((Bp, IN_P), jnp.bfloat16).at[:B, :IN_DIM].set(
        x.astype(jnp.bfloat16))

    flops = 2 * Bp * (IN_P * HID_P + HID_P * HID_P + HID_P * OUT_P)
    bytes_accessed = (
        x_p.size * 2                                   # bf16 input
        + (w1_p.size + w2_p.size + w3_p.size) * 2      # bf16 weights
        + (b1_p.size + b2_p.size + b3_p.size) * 4      # f32 biases
        + Bp * OUT_P * 4                               # f32 output
    )
    cost = pl.CostEstimate(flops=flops,
                           transcendentals=Bp * OUT_P,   # sigmoid -> exp
                           bytes_accessed=bytes_accessed)

    out = pl.pallas_call(
        pnet_kernel,
        out_shape=jax.ShapeDtypeStruct((Bp, OUT_P), jnp.float32),
        grid_spec=pltpu.PrefetchScalarGridSpec(
            num_scalar_prefetch=0,
            grid=grid,
            in_specs=[
                # x: tiled over batch.
                pl.BlockSpec((TB, IN_P), lambda i: (i, 0)),
                # weights/biases: same block every step -> stay VMEM-resident.
                pl.BlockSpec((IN_P, HID_P), lambda i: (0, 0)),
                pl.BlockSpec((1, HID_P), lambda i: (0, 0)),
                pl.BlockSpec((HID_P, HID_P), lambda i: (0, 0)),
                pl.BlockSpec((1, HID_P), lambda i: (0, 0)),
                pl.BlockSpec((HID_P, OUT_P), lambda i: (0, 0)),
                pl.BlockSpec((1, OUT_P), lambda i: (0, 0)),
            ],
            out_specs=pl.BlockSpec((TB, OUT_P), lambda i: (i, 0)),
        ),
        compiler_params=pltpu.CompilerParams(
            dimension_semantics=("parallel",),
            vmem_limit_bytes=32 << 20,   # actual need ~10 MiB; fits all gens
        ),
        cost_estimate=cost,
    )(x_p, w1_p, b1_p, w2_p, b2_p, w3_p, b3_p)

    return out[:B, :X_DIM]


def init_params(key):
    """Deterministic init matching nn.Linear's default U(-1/sqrt(fan_in), ...).

    Weights stored as (in_features, out_features)."""
    def linear(key, fan_in, fan_out):
        kw, kb = jax.random.split(key)
        bound = 1.0 / jnp.sqrt(fan_in)
        w = jax.random.uniform(kw, (fan_in, fan_out), jnp.float32, -bound, bound)
        b = jax.random.uniform(kb, (fan_out,), jnp.float32, -bound, bound)
        return w, b

    k1, k2, k3 = jax.random.split(key, 3)
    w1, b1 = linear(k1, IN_DIM, HID)
    w2, b2 = linear(k2, HID, HID)
    w3, b3 = linear(k3, HID, X_DIM)
    return {"w1": w1, "b1": b1, "w2": w2, "b2": b2, "w3": w3, "b3": b3}


def reference_forward(x, params):
    h = jnp.maximum(x @ params["w1"] + params["b1"], 0.0)
    h = h @ params["w2"] + params["b2"]
    h = h @ params["w3"] + params["b3"]
    return jax.nn.sigmoid(h)


if __name__ == "__main__":
    key = jax.random.PRNGKey(0)
    kp, kx = jax.random.split(key)
    params = init_params(kp)
    padded_params = prepare_params(params)   # one-time pad + bf16 cast

    B = 8
    x = jax.random.normal(kx, (B, IN_DIM), jnp.float32)

    out = p_net_forward(x, padded_params)
    out = jax.block_until_ready(out)

    ref = reference_forward(x, params)
    assert out.shape == (B, X_DIM), out.shape
    # bf16 weights vs f32 reference -> loosened tolerance (f32 accumulation kept).
    max_err = float(jnp.max(jnp.abs(out - ref)))
    assert max_err < 2e-2, max_err
    print("KERNEL_OK")
</pallas_src>

<mosaic_0001>
module attributes {stable_mosaic.version = 11 : i64} {
  func.func @pnet_kernel(%arg0: i32, %arg1: memref<8x128xbf16, #tpu.memory_space<vmem>>, %arg2: memref<128x1024xbf16, #tpu.memory_space<vmem>>, %arg3: memref<1x1024xf32, #tpu.memory_space<vmem>>, %arg4: memref<1024x1024xbf16, #tpu.memory_space<vmem>>, %arg5: memref<1x1024xf32, #tpu.memory_space<vmem>>, %arg6: memref<1024x896xbf16, #tpu.memory_space<vmem>>, %arg7: memref<1x896xf32, #tpu.memory_space<vmem>>, %arg8: memref<8x896xf32, #tpu.memory_space<vmem>>) attributes {dimension_semantics = [#tpu.dimension_semantics<parallel>], iteration_bounds = array<i64: 1>, scalar_prefetch = 0 : i64, scratch_operands = 0 : i64, tpu.core_type = #tpu.core_type<tc>, window_params = [{transform_indices = @transform_0, window_bounds = array<i64: 8, 128>}, {pipeline_mode = #tpu.pipeline_mode<synchronous>, transform_indices = @transform_1, window_bounds = array<i64: 128, 1024>}, {pipeline_mode = #tpu.pipeline_mode<synchronous>, transform_indices = @transform_2, window_bounds = array<i64: 1, 1024>}, {pipeline_mode = #tpu.pipeline_mode<synchronous>, transform_indices = @transform_3, window_bounds = array<i64: 1024, 1024>}, {pipeline_mode = #tpu.pipeline_mode<synchronous>, transform_indices = @transform_4, window_bounds = array<i64: 1, 1024>}, {pipeline_mode = #tpu.pipeline_mode<synchronous>, transform_indices = @transform_5, window_bounds = array<i64: 1024, 896>}, {pipeline_mode = #tpu.pipeline_mode<synchronous>, transform_indices = @transform_6, window_bounds = array<i64: 1, 896>}, {transform_indices = @transform_7, window_bounds = array<i64: 8, 896>}]} {
    %c0 = arith.constant 0 : index
    %c0_0 = arith.constant 0 : index
    %0 = vector.load %arg1[%c0, %c0_0] : memref<8x128xbf16, #tpu.memory_space<vmem>>, vector<8x128xbf16>
    %c0_1 = arith.constant 0 : index
    %c0_2 = arith.constant 0 : index
    %1 = vector.load %arg2[%c0_1, %c0_2] : memref<128x1024xbf16, #tpu.memory_space<vmem>>, vector<128x1024xbf16>
    %cst = arith.constant dense<0.000000e+00> : vector<8x1024xf32>
    %2 = tpu.matmul %0, %1, %cst {dimension_numbers = #tpu.dot_dimension_numbers<[1], [0], [0], [1], [0, 0, 1, 1], [], []>} : vector<8x128xbf16>, vector<128x1024xbf16>, vector<8x1024xf32> -> vector<8x1024xf32>
    %c0_3 = arith.constant 0 : index
    %c0_4 = arith.constant 0 : index
    %3 = vector.load %arg3[%c0_3, %c0_4] : memref<1x1024xf32, #tpu.memory_space<vmem>>, vector<1x1024xf32>
    %4 = vector.broadcast %3 : vector<1x1024xf32> to vector<8x1024xf32>
    %5 = arith.addf %2, %4 : vector<8x1024xf32>
    %cst_5 = arith.constant 0.000000e+00 : f32
    %6 = vector.broadcast %cst_5 : f32 to vector<8x1024xf32>
    %7 = arith.maximumf %5, %6 : vector<8x1024xf32>
    %8 = arith.truncf %7 : vector<8x1024xf32> to vector<8x1024xbf16>
    %c0_6 = arith.constant 0 : index
    %c0_7 = arith.constant 0 : index
    %9 = vector.load %arg4[%c0_6, %c0_7] : memref<1024x1024xbf16, #tpu.memory_space<vmem>>, vector<1024x1024xbf16>
    %cst_8 = arith.constant dense<0.000000e+00> : vector<8x1024xf32>
    %10 = tpu.matmul %8, %9, %cst_8 {dimension_numbers = #tpu.dot_dimension_numbers<[1], [0], [0], [1], [0, 0, 1, 1], [], []>} : vector<8x1024xbf16>, vector<1024x1024xbf16>, vector<8x1024xf32> -> vector<8x1024xf32>
    %c0_9 = arith.constant 0 : index
    %c0_10 = arith.constant 0 : index
    %11 = vector.load %arg5[%c0_9, %c0_10] : memref<1x1024xf32, #tpu.memory_space<vmem>>, vector<1x1024xf32>
    %12 = vector.broadcast %11 : vector<1x1024xf32> to vector<8x1024xf32>
    %13 = arith.addf %10, %12 : vector<8x1024xf32>
    %14 = arith.truncf %13 : vector<8x1024xf32> to vector<8x1024xbf16>
    %c0_11 = arith.constant 0 : index
    %c0_12 = arith.constant 0 : index
    %15 = vector.load %arg6[%c0_11, %c0_12] : memref<1024x896xbf16, #tpu.memory_space<vmem>>, vector<1024x896xbf16>
    %cst_13 = arith.constant dense<0.000000e+00> : vector<8x896xf32>
    %16 = tpu.matmul %14, %15, %cst_13 {dimension_numbers = #tpu.dot_dimension_numbers<[1], [0], [0], [1], [0, 0, 1, 1], [], []>} : vector<8x1024xbf16>, vector<1024x896xbf16>, vector<8x896xf32> -> vector<8x896xf32>
    %c0_14 = arith.constant 0 : index
    %c0_15 = arith.constant 0 : index
    %17 = vector.load %arg7[%c0_14, %c0_15] : memref<1x896xf32, #tpu.memory_space<vmem>>, vector<1x896xf32>
    %18 = vector.broadcast %17 : vector<1x896xf32> to vector<8x896xf32>
    %19 = arith.addf %16, %18 : vector<8x896xf32>
    %20 = arith.negf %19 : vector<8x896xf32>
    %21 = math.exp %20 : vector<8x896xf32>
    %cst_16 = arith.constant 1.000000e+00 : f32
    %22 = vector.broadcast %cst_16 : f32 to vector<8x896xf32>
    %23 = arith.addf %22, %21 : vector<8x896xf32>
    %24 = arith.divf %22, %23 : vector<8x896xf32>
    %c0_17 = arith.constant 0 : index
    %c0_18 = arith.constant 0 : index
    %25 = vector.load %arg8[%c0_17, %c0_18] : memref<8x896xf32, #tpu.memory_space<vmem>>, vector<8x896xf32>
    tpu.vector_store %arg8[%c0_17, %c0_18], %24 {strides = array<i32>} : memref<8x896xf32, #tpu.memory_space<vmem>>, vector<8x896xf32>,
    return
  }
  func.func @transform_0(%arg0: i32) -> (i32, i32) {
    %c0_i32 = arith.constant 0 : i32
    %c0_i32_0 = arith.constant 0 : i32
    return %arg0, %c0_i32 : i32, i32
  }
  func.func @transform_1(%arg0: i32) -> (i32, i32) {
    %c0_i32 = arith.constant 0 : i32
    %c0_i32_0 = arith.constant 0 : i32
    %c0_i32_1 = arith.constant 0 : i32
    return %c0_i32, %c0_i32_0 : i32, i32
  }
  func.func @transform_2(%arg0: i32) -> (i32, i32) {
    %c0_i32 = arith.constant 0 : i32
    %c0_i32_0 = arith.constant 0 : i32
    %c0_i32_1 = arith.constant 0 : i32
    return %c0_i32, %c0_i32_0 : i32, i32
  }
  func.func @transform_3(%arg0: i32) -> (i32, i32) {
    %c0_i32 = arith.constant 0 : i32
    %c0_i32_0 = arith.constant 0 : i32
    %c0_i32_1 = arith.constant 0 : i32
    return %c0_i32, %c0_i32_0 : i32, i32
  }
  func.func @transform_4(%arg0: i32) -> (i32, i32) {
    %c0_i32 = arith.constant 0 : i32
    %c0_i32_0 = arith.constant 0 : i32
    %c0_i32_1 = arith.constant 0 : i32
    return %c0_i32, %c0_i32_0 : i32, i32
  }
  func.func @transform_5(%arg0: i32) -> (i32, i32) {
    %c0_i32 = arith.constant 0 : i32
    %c0_i32_0 = arith.constant 0 : i32
    %c0_i32_1 = arith.constant 0 : i32
    return %c0_i32, %c0_i32_0 : i32, i32
  }
  func.func @transform_6(%arg0: i32) -> (i32, i32) {
    %c0_i32 = arith.constant 0 : i32
    %c0_i32_0 = arith.constant 0 : i32
    %c0_i32_1 = arith.constant 0 : i32
    return %c0_i32, %c0_i32_0 : i32, i32
  }
  func.func @transform_7(%arg0: i32) -> (i32, i32) {
    %c0_i32 = arith.constant 0 : i32
    %c0_i32_0 = arith.constant 0 : i32
    return %arg0, %c0_i32 : i32, i32
  }
}

</mosaic_0001>

<llo_original>
// kernel: p_net_forward.1
$region0: #{p_net_forward.1}
  #allocation0 [shape = 'u32[]', space=smem, size = 0x4, offset = 0x4, fixed_abs, tag = 'smem constant byte address 0x4 - core index']
  #allocation1 [shape = 'u32[144,128]{1,0:T(1,128)}', space=vmem, size = 0x12000, scoped, tag = 'internal scratch']
  %s0 = inlined_call_operand.vmem [shape: bf16[8,128], index: 0, kind: input, shape index: {}]
  %s1 = inlined_call_operand.hbm [shape: bf16[128,1024], index: 1, kind: input, shape index: {}]
  %s2 = inlined_call_operand.hbm [shape: f32[1,1024], index: 2, kind: input, shape index: {}]
  %s3 = inlined_call_operand.hbm [shape: bf16[1024,1024], index: 3, kind: input, shape index: {}]
  %s4 = inlined_call_operand.hbm [shape: f32[1,1024], index: 4, kind: input, shape index: {}]
  %s5 = inlined_call_operand.hbm [shape: bf16[1024,896], index: 5, kind: input, shape index: {}]
  %s6 = inlined_call_operand.hbm [shape: f32[1,896], index: 6, kind: input, shape index: {}]
  %s7 = inlined_call_operand.hbm [shape: f32[8,896], index: 7, kind: output, shape index: {}]
  %s8 = sld [smem:[#allocation0]]
  $region62: #{p_net_forward.1} parent=0
    _
  %s10 = ssub.s32 1, %s8
  %s11 = scalar_select 0, %s10, %s8
  $region1: #{p_net_forward.1} parent=0
    #allocation2 [shape = 'u8[262144]{0}', space=vmem, size = 0x40000, scoped, tag = 'input window, operand 1, single buffered']
    #allocation3 [shape = 's32[1]{0}', space=sflag, size = 0x4, scoped, tag = 'scoped memory for p_net_forward.1']
    #allocation4 [shape = 's32[1]{0}', space=sflag, size = 0x4, scoped, tag = 'scoped memory for p_net_forward.1']
    #allocation5 [shape = 'u8[4096]{0}', space=vmem, size = 0x1000, scoped, tag = 'input window, operand 2, single buffered']
    #allocation6 [shape = 's32[1]{0}', space=sflag, size = 0x4, scoped, tag = 'scoped memory for p_net_forward.1']
    #allocation7 [shape = 'u8[2097152]{0}', space=vmem, size = 0x200000, scoped, tag = 'input window, operand 3, single buffered']
    #allocation8 [shape = 'u8[4096]{0}', space=vmem, size = 0x1000, scoped, tag = 'input window, operand 4, single buffered']
    #allocation9 [shape = 's32[1]{0}', space=sflag, size = 0x4, scoped, tag = 'scoped memory for p_net_forward.1']
    #allocation10 [shape = 'u8[1835008]{0}', space=vmem, size = 0x1c0000, scoped, tag = 'input window, operand 5, single buffered']
    #allocation11 [shape = 'u8[3584]{0}', space=vmem, size = 0x1000, scoped, tag = 'input window, operand 6, single buffered']
    #allocation12 [shape = 's32[1]{0}', space=sflag, size = 0x4, scoped, tag = 'scoped memory for p_net_forward.1']
    #allocation13 [shape = 'u8[28672]{0}', space=vmem, size = 0x7000, scoped, tag = 'output window, operand 0, single buffered']
    %12 = vsyncpa [#allocation3], 0
    %13 = vsyncpa [#allocation6], 0
    %14 = vsyncpa [#allocation9], 0
    %15 = vsyncpa [#allocation12], 0
    %16 = vsyncpa [#allocation4], 0
    // Predicated region
    $region2: #{p_net_forward.1} parent=1 // pred_check
      _
    $region3: #{p_net_forward.1} parent=1 // pred_check_branch
      %18 = sbr.rel (0) target = $region5
    $region4: #{p_net_forward.1} parent=1 // pred_region
      _
    $region5: #{p_net_forward.1} parent=1 // pred_fallthru
      _
    // Predicated region
    $region6: #{p_net_forward.1} parent=1 // pred_check
      _
    $region7: #{p_net_forward.1} parent=1 // pred_check_branch
      %20 = sbr.rel (0) target = $region9
    $region8: #{p_net_forward.1} parent=1 // pred_region
      %s22 = ssub.s32 8192, 8192
      %23 = vsyncadd [#allocation3], %s22
      %s24 = sshll.u32 [#allocation2], 4
      %s25 = int_to_ptr.vmem [resolvable:$true] %s24
      %30 = dma.hbm_to_vmem [thread:$0]  %s1, 8192, %s25, [#allocation3], 512, 512, 32
    $region9: #{p_net_forward.1} parent=1 // pred_fallthru
      _
    // Predicated region
    $region10: #{p_net_forward.1} parent=1 // pred_check
      _
    $region11: #{p_net_forward.1} parent=1 // pred_check_branch
      %32 = sbr.rel (0) target = $region13
    $region12: #{p_net_forward.1} parent=1 // pred_region
      %s34 = ssub.s32 128, 128
      %35 = vsyncadd [#allocation6], %s34
      %s37 = sshll.u32 [#allocation5], 4
      %s38 = int_to_ptr.vmem [resolvable:$true] %s37
      %40 = dma.hbm_to_vmem [thread:$0]  %s2, 128, %s38, [#allocation6]
    $region13: #{p_net_forward.1} parent=1 // pred_fallthru
      _
    // Predicated region
    $region14: #{p_net_forward.1} parent=1 // pred_check
      _
    $region15: #{p_net_forward.1} parent=1 // pred_check_branch
      %42 = sbr.rel (0) target = $region17
    $region16: #{p_net_forward.1} parent=1 // pred_region
      %s44 = ssub.s32 65536, 65536
      %45 = vsyncadd [#allocation6], %s44
      %s46 = sshll.u32 [#allocation7], 4
      %s47 = int_to_ptr.vmem [resolvable:$true] %s46
      %52 = dma.hbm_to_vmem [thread:$0]  %s3, 65536, %s47, [#allocation6], 512, 512, 32
    $region17: #{p_net_forward.1} parent=1 // pred_fallthru
      _
    // Predicated region
    $region18: #{p_net_forward.1} parent=1 // pred_check
      _
    $region19: #{p_net_forward.1} parent=1 // pred_check_branch
      %54 = sbr.rel (0) target = $region21
    $region20: #{p_net_forward.1} parent=1 // pred_region
      %s56 = ssub.s32 128, 128
      %57 = vsyncadd [#allocation9], %s56
      %s59 = sshll.u32 [#allocation8], 4
      %s60 = int_to_ptr.vmem [resolvable:$true] %s59
      %62 = dma.hbm_to_vmem [thread:$0]  %s4, 128, %s60, [#allocation9]
    $region21: #{p_net_forward.1} parent=1 // pred_fallthru
      _
    // Predicated region
    $region22: #{p_net_forward.1} parent=1 // pred_check
      _
    $region23: #{p_net_forward.1} parent=1 // pred_check_branch
      %64 = sbr.rel (0) target = $region25
    $region24: #{p_net_forward.1} parent=1 // pred_region
      %s66 = ssub.s32 57344, 57344
      %67 = vsyncadd [#allocation9], %s66
      %s68 = sshll.u32 [#allocation10], 4
      %s69 = int_to_ptr.vmem [resolvable:$true] %s68
      %74 = dma.hbm_to_vmem [thread:$0]  %s5, 57344, %s69, [#allocation9], 448, 448, 28
    $region25: #{p_net_forward.1} parent=1 // pred_fallthru
      _
    // Predicated region
    $region26: #{p_net_forward.1} parent=1 // pred_check
      _
    $region27: #{p_net_forward.1} parent=1 // pred_check_branch
      %76 = sbr.rel (0) target = $region29
    $region28: #{p_net_forward.1} parent=1 // pred_region
      %s78 = ssub.s32 112, 112
      %79 = vsyncadd [#allocation12], %s78
      %s81 = sshll.u32 [#allocation11], 4
      %s82 = int_to_ptr.vmem [resolvable:$true] %s81
      %84 = dma.hbm_to_vmem [thread:$0]  %s6, 112, %s82, [#allocation12]
    $region29: #{p_net_forward.1} parent=1 // pred_fallthru
      _
    // Predicated region
    $region30: #{p_net_forward.1} parent=1 // pred_check
      _
    $region31: #{p_net_forward.1} parent=1 // pred_check_branch
      %86 = sbr.rel (0) target = $region33
    $region32: #{p_net_forward.1} parent=1 // pred_region
      %87 = dma.done [#allocation3], 8192
    $region33: #{p_net_forward.1} parent=1 // pred_fallthru
      _
    // Predicated region
    $region34: #{p_net_forward.1} parent=1 // pred_check
      _
    $region35: #{p_net_forward.1} parent=1 // pred_check_branch
      %89 = sbr.rel (0) target = $region37
    $region36: #{p_net_forward.1} parent=1 // pred_region
      %90 = dma.done [#allocation6], 128
    $region37: #{p_net_forward.1} parent=1 // pred_fallthru
      _
    // Predicated region
    $region38: #{p_net_forward.1} parent=1 // pred_check
      _
    $region39: #{p_net_forward.1} parent=1 // pred_check_branch
      %92 = sbr.rel (0) target = $region41
    $region40: #{p_net_forward.1} parent=1 // pred_region
      %93 = dma.done [#allocation6], 65536
    $region41: #{p_net_forward.1} parent=1 // pred_fallthru
      _
    // Predicated region
    $region42: #{p_net_forward.1} parent=1 // pred_check
      _
    $region43: #{p_net_forward.1} parent=1 // pred_check_branch
      %95 = sbr.rel (0) target = $region45
    $region44: #{p_net_forward.1} parent=1 // pred_region
      %96 = dma.done [#allocation9], 128
    $region45: #{p_net_forward.1} parent=1 // pred_fallthru
      _
    // Predicated region
    $region46: #{p_net_forward.1} parent=1 // pred_check
      _
    $region47: #{p_net_forward.1} parent=1 // pred_check_branch
      %98 = sbr.rel (0) target = $region49
    $region48: #{p_net_forward.1} parent=1 // pred_region
      %99 = dma.done [#allocation9], 57344
    $region49: #{p_net_forward.1} parent=1 // pred_fallthru
      _
    // Predicated region
    $region50: #{p_net_forward.1} parent=1 // pred_check
      _
    $region51: #{p_net_forward.1} parent=1 // pred_check_branch
      %101 = sbr.rel (0) target = $region53
    $region52: #{p_net_forward.1} parent=1 // pred_region
      %102 = dma.done [#allocation12], 112
    $region53: #{p_net_forward.1} parent=1 // pred_fallthru
      _
    %v104 = vld [vmem:[%s0] sm:$0xf]
    %v105 = vld [vmem:[#allocation2] sm:$0xff]
    %v106 = vld [vmem:[#allocation2 + $0x8] sm:$0xff]
    %v107 = vld [vmem:[#allocation2 + $0x10] sm:$0xff]
    %v108 = vld [vmem:[#allocation2 + $0x18] sm:$0xff]
    %v109 = vld [vmem:[#allocation2 + $0x20] sm:$0xff]
    %v110 = vld [vmem:[#allocation2 + $0x28] sm:$0xff]
    %v111 = vld [vmem:[#allocation2 + $0x30] sm:$0xff]
    %v112 = vld [vmem:[#allocation2 + $0x38] sm:$0xff]
    %v113 = vld [vmem:[#allocation2 + $0x40] sm:$0xff]
    %v114 = vld [vmem:[#allocation2 + $0x48] sm:$0xff]
    %v115 = vld [vmem:[#allocation2 + $0x50] sm:$0xff]
    %v116 = vld [vmem:[#allocation2 + $0x58] sm:$0xff]
    %v117 = vld [vmem:[#allocation2 + $0x60] sm:$0xff]
    %v118 = vld [vmem:[#allocation2 + $0x68] sm:$0xff]
    %v119 = vld [vmem:[#allocation2 + $0x70] sm:$0xff]
    %v120 = vld [vmem:[#allocation2 + $0x78] sm:$0xff]
    %v121 = vld [vmem:[#allocation2 + $0x80] sm:$0xff]
    %v122 = vld [vmem:[#allocation2 + $0x88] sm:$0xff]
    %v123 = vld [vmem:[#allocation2 + $0x90] sm:$0xff]
    %v124 = vld [vmem:[#allocation2 + $0x98] sm:$0xff]
    %v125 = vld [vmem:[#allocation2 + $0xa0] sm:$0xff]
    %v126 = vld [vmem:[#allocation2 + $0xa8] sm:$0xff]
    %v127 = vld [vmem:[#allocation2 + $0xb0] sm:$0xff]
    %v128 = vld [vmem:[#allocation2 + $0xb8] sm:$0xff]
    %v129 = vld [vmem:[#allocation2 + $0xc0] sm:$0xff]
    %v130 = vld [vmem:[#allocation2 + $0xc8] sm:$0xff]
    %v131 = vld [vmem:[#allocation2 + $0xd0] sm:$0xff]
    %v132 = vld [vmem:[#allocation2 + $0xd8] sm:$0xff]
    %v133 = vld [vmem:[#allocation2 + $0xe0] sm:$0xff]
    %v134 = vld [vmem:[#allocation2 + $0xe8] sm:$0xff]
    %v135 = vld [vmem:[#allocation2 + $0xf0] sm:$0xff]
    %v136 = vld [vmem:[#allocation2 + $0xf8] sm:$0xff]
    %v137 = vld [vmem:[#allocation2 + $0x100] sm:$0xff]
    %v138 = vld [vmem:[#allocation2 + $0x108] sm:$0xff]
    %v139 = vld [vmem:[#allocation2 + $0x110] sm:$0xff]
    %v140 = vld [vmem:[#allocation2 + $0x118] sm:$0xff]
    %v141 = vld [vmem:[#allocation2 + $0x120] sm:$0xff]
    %v142 = vld [vmem:[#allocation2 + $0x128] sm:$0xff]
    %v143 = vld [vmem:[#allocation2 + $0x130] sm:$0xff]
    %v144 = vld [vmem:[#allocation2 + $0x138] sm:$0xff]
    %v145 = vld [vmem:[#allocation2 + $0x140] sm:$0xff]
    %v146 = vld [vmem:[#allocation2 + $0x148] sm:$0xff]
    %v147 = vld [vmem:[#allocation2 + $0x150] sm:$0xff]
    %v148 = vld [vmem:[#allocation2 + $0x158] sm:$0xff]
    %v149 = vld [vmem:[#allocation2 + $0x160] sm:$0xff]
    %v150 = vld [vmem:[#allocation2 + $0x168] sm:$0xff]
    %v151 = vld [vmem:[#allocation2 + $0x170] sm:$0xff]
    %v152 = vld [vmem:[#allocation2 + $0x178] sm:$0xff]
    %v153 = vld [vmem:[#allocation2 + $0x180] sm:$0xff]
    %v154 = vld [vmem:[#allocation2 + $0x188] sm:$0xff]
    %v155 = vld [vmem:[#allocation2 + $0x190] sm:$0xff]
    %v156 = vld [vmem:[#allocation2 + $0x198] sm:$0xff]
    %v157 = vld [vmem:[#allocation2 + $0x1a0] sm:$0xff]
    %v158 = vld [vmem:[#allocation2 + $0x1a8] sm:$0xff]
    %v159 = vld [vmem:[#allocation2 + $0x1b0] sm:$0xff]
    %v160 = vld [vmem:[#allocation2 + $0x1b8] sm:$0xff]
    %v161 = vld [vmem:[#allocation2 + $0x1c0] sm:$0xff]
    %v162 = vld [vmem:[#allocation2 + $0x1c8] sm:$0xff]
    %v163 = vld [vmem:[#allocation2 + $0x1d0] sm:$0xff]
    %v164 = vld [vmem:[#allocation2 + $0x1d8] sm:$0xff]
    %v165 = vld [vmem:[#allocation2 + $0x1e0] sm:$0xff]
    %v166 = vld [vmem:[#allocation2 + $0x1e8] sm:$0xff]
    %v167 = vld [vmem:[#allocation2 + $0x1f0] sm:$0xff]
    %v168 = vld [vmem:[#allocation2 + $0x1f8] sm:$0xff]
    %v169 = vld [vmem:[#allocation5] sm:$0xff]
    %v171 = vlaneseq
    %v172 = vshrl.u32 %v171, 7
    %v173 = vsub.s32 0, %v172
    %v174 = vrot.slane %v169, %v173
    %v175 = vlaneseq
    %v176 = vshrl.u32 %v175, 7
    %v177 = vsub.s32 1, %v176
    %v178 = vrot.slane %v169, %v177
    %v179 = vlaneseq
    %v180 = vshrl.u32 %v179, 7
    %v181 = vsub.s32 2, %v180
    %v182 = vrot.slane %v169, %v181
    %v183 = vlaneseq
    %v184 = vshrl.u32 %v183, 7
    %v185 = vsub.s32 3, %v184
    %v186 = vrot.slane %v169, %v185
    %v187 = vlaneseq
    %v188 = vshrl.u32 %v187, 7
    %v189 = vsub.s32 4, %v188
    %v190 = vrot.slane %v169, %v189
    %v191 = vlaneseq
    %v192 = vshrl.u32 %v191, 7
    %v193 = vsub.s32 5, %v192
    %v194 = vrot.slane %v169, %v193
    %v195 = vlaneseq
    %v196 = vshrl.u32 %v195, 7
    %v197 = vsub.s32 6, %v196
    %v198 = vrot.slane %v169, %v197
    %v199 = vlaneseq
    %v200 = vshrl.u32 %v199, 7
    %v201 = vsub.s32 7, %v200
    %v202 = vrot.slane %v169, %v201
    %v275 = vunpack.c.l.b16 %v105
    %v276 = vunpack.c.h.b16 %v105
    %v277 = vunpack.c.l.b16 %v106
    %v278 = vunpack.c.h.b16 %v106
    %v279 = vunpack.c.l.b16 %v107
    %v280 = vunpack.c.h.b16 %v107
    %v281 = vunpack.c.l.b16 %v108
    %v282 = vunpack.c.h.b16 %v108
    %v283 = vunpack.c.l.b16 %v109
    %v284 = vunpack.c.h.b16 %v109
    %v285 = vunpack.c.l.b16 %v110
    %v286 = vunpack.c.h.b16 %v110
    %v287 = vunpack.c.l.b16 %v111
    %v288 = vunpack.c.h.b16 %v111
    %v289 = vunpack.c.l.b16 %v112
    %v290 = vunpack.c.h.b16 %v112
    %v291 = vunpack.c.l.b16 %v113
    %v292 = vunpack.c.h.b16 %v113
    %v293 = vunpack.c.l.b16 %v114
    %v294 = vunpack.c.h.b16 %v114
    %v295 = vunpack.c.l.b16 %v115
    %v296 = vunpack.c.h.b16 %v115
    %v297 = vunpack.c.l.b16 %v116
    %v298 = vunpack.c.h.b16 %v116
    %v299 = vunpack.c.l.b16 %v117
    %v300 = vunpack.c.h.b16 %v117
    %v301 = vunpack.c.l.b16 %v118
    %v302 = vunpack.c.h.b16 %v118
    %v303 = vunpack.c.l.b16 %v119
    %v304 = vunpack.c.h.b16 %v119
    %v305 = vunpack.c.l.b16 %v120
    %v306 = vunpack.c.h.b16 %v120
    %v307 = vunpack.c.l.b16 %v121
    %v308 = vunpack.c.h.b16 %v121
    %v309 = vunpack.c.l.b16 %v122
    %v310 = vunpack.c.h.b16 %v122
    %v311 = vunpack.c.l.b16 %v123
    %v312 = vunpack.c.h.b16 %v123
    %v313 = vunpack.c.l.b16 %v124
    %v314 = vunpack.c.h.b16 %v124
    %v315 = vunpack.c.l.b16 %v125
    %v316 = vunpack.c.h.b16 %v125
    %v317 = vunpack.c.l.b16 %v126
    %v318 = vunpack.c.h.b16 %v126
    %v319 = vunpack.c.l.b16 %v127
    %v320 = vunpack.c.h.b16 %v127
    %v321 = vunpack.c.l.b16 %v128
    %v322 = vunpack.c.h.b16 %v128
    %v323 = vunpack.c.l.b16 %v129
    %v324 = vunpack.c.h.b16 %v129
    %v325 = vunpack.c.l.b16 %v130
    %v326 = vunpack.c.h.b16 %v130
    %v327 = vunpack.c.l.b16 %v131
    %v328 = vunpack.c.h.b16 %v131
    %v329 = vunpack.c.l.b16 %v132
    %v330 = vunpack.c.h.b16 %v132
    %v331 = vunpack.c.l.b16 %v133
    %v332 = vunpack.c.h.b16 %v133
    %v333 = vunpack.c.l.b16 %v134
    %v334 = vunpack.c.h.b16 %v134
    %v335 = vunpack.c.l.b16 %v135
    %v336 = vunpack.c.h.b16 %v135
    %v337 = vunpack.c.l.b16 %v136
    %v338 = vunpack.c.h.b16 %v136
    %v339 = vunpack.c.l.b16 %v137
    %v340 = vunpack.c.h.b16 %v137
    %v341 = vunpack.c.l.b16 %v138
    %v342 = vunpack.c.h.b16 %v138
    %v343 = vunpack.c.l.b16 %v139
    %v344 = vunpack.c.h.b16 %v139
    %v345 = vunpack.c.l.b16 %v140
    %v346 = vunpack.c.h.b16 %v140
    %v347 = vunpack.c.l.b16 %v141
    %v348 = vunpack.c.h.b16 %v141
    %v349 = vunpack.c.l.b16 %v142
    %v350 = vunpack.c.h.b16 %v142
    %v351 = vunpack.c.l.b16 %v143
    %v352 = vunpack.c.h.b16 %v143
    %v353 = vunpack.c.l.b16 %v144
    %v354 = vunpack.c.h.b16 %v144
    %v355 = vunpack.c.l.b16 %v145
    %v356 = vunpack.c.h.b16 %v145
    %v357 = vunpack.c.l.b16 %v146
    %v358 = vunpack.c.h.b16 %v146
    %v359 = vunpack.c.l.b16 %v147
    %v360 = vunpack.c.h.b16 %v147
    %v361 = vunpack.c.l.b16 %v148
    %v362 = vunpack.c.h.b16 %v148
    %v363 = vunpack.c.l.b16 %v149
    %v364 = vunpack.c.h.b16 %v149
    %v365 = vunpack.c.l.b16 %v150
    %v366 = vunpack.c.h.b16 %v150
    %v367 = vunpack.c.l.b16 %v151
    %v368 = vunpack.c.h.b16 %v151
    %v369 = vunpack.c.l.b16 %v152
    %v370 = vunpack.c.h.b16 %v152
    %v371 = vunpack.c.l.b16 %v153
    %v372 = vunpack.c.h.b16 %v153
    %v373 = vunpack.c.l.b16 %v154
    %v374 = vunpack.c.h.b16 %v154
    %v375 = vunpack.c.l.b16 %v155
    %v376 = vunpack.c.h.b16 %v155
    %v377 = vunpack.c.l.b16 %v156
    %v378 = vunpack.c.h.b16 %v156
    %v379 = vunpack.c.l.b16 %v157
    %v380 = vunpack.c.h.b16 %v157
    %v381 = vunpack.c.l.b16 %v158
    %v382 = vunpack.c.h.b16 %v158
    %v383 = vunpack.c.l.b16 %v159
    %v384 = vunpack.c.h.b16 %v159
    %v385 = vunpack.c.l.b16 %v160
    %v386 = vunpack.c.h.b16 %v160
    %v387 = vunpack.c.l.b16 %v161
    %v388 = vunpack.c.h.b16 %v161
    %v389 = vunpack.c.l.b16 %v162
    %v390 = vunpack.c.h.b16 %v162
    %v391 = vunpack.c.l.b16 %v163
    %v392 = vunpack.c.h.b16 %v163
    %v393 = vunpack.c.l.b16 %v164
    %v394 = vunpack.c.h.b16 %v164
    %v395 = vunpack.c.l.b16 %v165
    %v396 = vunpack.c.h.b16 %v165
    %v397 = vunpack.c.l.b16 %v166
    %v398 = vunpack.c.h.b16 %v166
    %v399 = vunpack.c.l.b16 %v167
    %v400 = vunpack.c.h.b16 %v167
    %v401 = vunpack.c.l.b16 %v168
    %v402 = vunpack.c.h.b16 %v168
    %v403 = vpack.c.b16 %v283, %v275
    %v404 = vpack.c.b16 %v284, %v276
    %v405 = vpack.c.b16 %v285, %v277
    %v406 = vpack.c.b16 %v286, %v278
    %v407 = vpack.c.b16 %v287, %v279
    %v408 = vpack.c.b16 %v288, %v280
    %v409 = vpack.c.b16 %v289, %v281
    %v410 = vpack.c.b16 %v290, %v282
    %v411 = vpack.c.b16 %v299, %v291
    %v412 = vpack.c.b16 %v300, %v292
    %v413 = vpack.c.b16 %v301, %v293
    %v414 = vpack.c.b16 %v302, %v294
    %v415 = vpack.c.b16 %v303, %v295
    %v416 = vpack.c.b16 %v304, %v296
    %v417 = vpack.c.b16 %v305, %v297
    %v418 = vpack.c.b16 %v306, %v298
    %v419 = vpack.c.b16 %v315, %v307
    %v420 = vpack.c.b16 %v316, %v308
    %v421 = vpack.c.b16 %v317, %v309
    %v422 = vpack.c.b16 %v318, %v310
    %v423 = vpack.c.b16 %v319, %v311
    %v424 = vpack.c.b16 %v320, %v312
    %v425 = vpack.c.b16 %v321, %v313
    %v426 = vpack.c.b16 %v322, %v314
    %v427 = vpack.c.b16 %v331, %v323
    %v428 = vpack.c.b16 %v332, %v324
    %v429 = vpack.c.b16 %v333, %v325
    %v430 = vpack.c.b16 %v334, %v326
    %v431 = vpack.c.b16 %v335, %v327
    %v432 = vpack.c.b16 %v336, %v328
    %v433 = vpack.c.b16 %v337, %v329
    %v434 = vpack.c.b16 %v338, %v330
    %v435 = vpack.c.b16 %v347, %v339
    %v436 = vpack.c.b16 %v348, %v340
    %v437 = vpack.c.b16 %v349, %v341
    %v438 = vpack.c.b16 %v350, %v342
    %v439 = vpack.c.b16 %v351, %v343
    %v440 = vpack.c.b16 %v352, %v344
    %v441 = vpack.c.b16 %v353, %v345
    %v442 = vpack.c.b16 %v354, %v346
    %v443 = vpack.c.b16 %v363, %v355
    %v444 = vpack.c.b16 %v364, %v356
    %v445 = vpack.c.b16 %v365, %v357
    %v446 = vpack.c.b16 %v366, %v358
    %v447 = vpack.c.b16 %v367, %v359
    %v448 = vpack.c.b16 %v368, %v360
    %v449 = vpack.c.b16 %v369, %v361
    %v450 = vpack.c.b16 %v370, %v362
    %v451 = vpack.c.b16 %v379, %v371
    %v452 = vpack.c.b16 %v380, %v372
    %v453 = vpack.c.b16 %v381, %v373
    %v454 = vpack.c.b16 %v382, %v374
    %v455 = vpack.c.b16 %v383, %v375
    %v456 = vpack.c.b16 %v384, %v376
    %v457 = vpack.c.b16 %v385, %v377
    %v458 = vpack.c.b16 %v386, %v378
    %v459 = vpack.c.b16 %v395, %v387
    %v460 = vpack.c.b16 %v396, %v388
    %v461 = vpack.c.b16 %v397, %v389
    %v462 = vpack.c.b16 %v398, %v390
    %v463 = vpack.c.b16 %v399, %v391
    %v464 = vpack.c.b16 %v400, %v392
    %v465 = vpack.c.b16 %v401, %v393
    %v466 = vpack.c.b16 %v402, %v394
    %531 = vmatprep.subr.bf16.mxu0 %v404
    %532 = vmatpush1.bf16.msra.mxu0 %v403
    %533 = vmatprep.subr.bf16.mxu0 %v412
    %534 = vmatpush1.bf16.msra.mxu0 %v411
    %535 = vmatprep.subr.bf16.mxu0 %v420
    %536 = vmatpush1.bf16.msra.mxu0 %v419
    %537 = vmatprep.subr.bf16.mxu0 %v428
    %538 = vmatpush1.bf16.msra.mxu0 %v427
    %539 = vmatprep.subr.bf16.mxu0 %v436
    %540 = vmatpush1.bf16.msra.mxu0 %v435
    %541 = vmatprep.subr.bf16.mxu0 %v444
    %542 = vmatpush1.bf16.msra.mxu0 %v443
    %543 = vmatprep.subr.bf16.mxu0 %v452
    %544 = vmatpush1.bf16.msra.mxu0 %v451
    %545 = vmatprep.subr.bf16.mxu0 %v460
    %546 = vmatpush1.bf16.msra.mxu0 %v459
    %547 = vmatprep.subr.bf16.mxu0 0
    %548 = vmatpush1.bf16.msra.mxu0 0
    %549 = vmatprep.subr.bf16.mxu0 0
    %550 = vmatpush1.bf16.msra.mxu0 0
    %551 = vmatprep.subr.bf16.mxu0 0
    %552 = vmatpush1.bf16.msra.mxu0 0
    %553 = vmatprep.subr.bf16.mxu0 0
    %554 = vmatpush1.bf16.msra.mxu0 0
    %555 = vmatprep.subr.bf16.mxu0 0
    %556 = vmatpush1.bf16.msra.mxu0 0
    %557 = vmatprep.subr.bf16.mxu0 0
    %558 = vmatpush1.bf16.msra.mxu0 0
    %559 = vmatprep.subr.bf16.mxu0 0
    %560 = vmatpush1.bf16.msra.mxu0 0
    %561 = vmatprep.subr.bf16.mxu0 0
    %562 = vmatpush1.bf16.msra.mxu0 0
    %563 = vmatprep.mubr.bf16.mxu0 0
    %564 = vmatmul.mubr.bf16.gmra.mrb[0].mxu0 %v104
    %v565 = vpop.f32.mrb[0].mxu0
    %v566 = vadd.f32 %v174, %v565
    %v567 = vpop.f32.mrb[0].mxu0
    %v568 = vadd.f32 %v178, %v567
    %v569 = vpop.f32.mrb[0].mxu0
    %v570 = vpop.f32.mrb[0].mxu0
    %571 = vdwg.mxu0
    %572 = vmatprep.subr.bf16.mxu0 %v406
    %573 = vmatpush1.bf16.msra.mxu0 %v405
    %574 = vmatprep.subr.bf16.mxu0 %v414
    %575 = vmatpush1.bf16.msra.mxu0 %v413
    %576 = vmatprep.subr.bf16.mxu0 %v422
    %577 = vmatpush1.bf16.msra.mxu0 %v421
    %578 = vmatprep.subr.bf16.mxu0 %v430
    %579 = vmatpush1.bf16.msra.mxu0 %v429
    %580 = vmatprep.subr.bf16.mxu0 %v438
    %581 = vmatpush1.bf16.msra.mxu0 %v437
    %582 = vmatprep.subr.bf16.mxu0 %v446
    %583 = vmatpush1.bf16.msra.mxu0 %v445
    %584 = vmatprep.subr.bf16.mxu0 %v454
    %585 = vmatpush1.bf16.msra.mxu0 %v453
    %586 = vmatprep.subr.bf16.mxu0 %v462
    %587 = vmatpush1.bf16.msra.mxu0 %v461
    %588 = vmatprep.subr.bf16.mxu0 0
    %589 = vmatpush1.bf16.msra.mxu0 0
    %590 = vmatprep.subr.bf16.mxu0 0
    %591 = vmatpush1.bf16.msra.mxu0 0
    %592 = vmatprep.subr.bf16.mxu0 0
    %593 = vmatpush1.bf16.msra.mxu0 0
    %594 = vmatprep.subr.bf16.mxu0 0
    %595 = vmatpush1.bf16.msra.mxu0 0
    %596 = vmatprep.subr.bf16.mxu0 0
    %597 = vmatpush1.bf16.msra.mxu0 0
    %598 = vmatprep.subr.bf16.mxu0 0
    %599 = vmatpush1.bf16.msra.mxu0 0
    %600 = vmatprep.subr.bf16.mxu0 0
    %601 = vmatpush1.bf16.msra.mxu0 0
    %602 = vmatprep.subr.bf16.mxu0 0
    %603 = vmatpush1.bf16.msra.mxu0 0
    %604 = vmatprep.mubr.bf16.mxu0 0
    %605 = vmatmul.mubr.bf16.gmra.mrb[0].mxu0 %v104
    %v606 = vpop.f32.mrb[0].mxu0
    %v607 = vadd.f32 %v182, %v606
    %v608 = vpop.f32.mrb[0].mxu0
    %v609 = vadd.f32 %v186, %v608
    %v610 = vpop.f32.mrb[0].mxu0
    %v611 = vpop.f32.mrb[0].mxu0
    %612 = vdwg.mxu0
    %613 = vmatprep.subr.bf16.mxu0 %v408
    %614 = vmatpush1.bf16.msra.mxu0 %v407
    %615 = vmatprep.subr.bf16.mxu0 %v416
    %616 = vmatpush1.bf16.msra.mxu0 %v415
    %617 = vmatprep.subr.bf16.mxu0 %v424
    %618 = vmatpush1.bf16.msra.mxu0 %v423
    %619 = vmatprep.subr.bf16.mxu0 %v432
    %620 = vmatpush1.bf16.msra.mxu0 %v431
    %621 = vmatprep.subr.bf16.mxu0 %v440
    %622 = vmatpush1.bf16.msra.mxu0 %v439
    %623 = vmatprep.subr.bf16.mxu0 %v448
    %624 = vmatpush1.bf16.msra.mxu0 %v447
    %625 = vmatprep.subr.bf16.mxu0 %v456
    %626 = vmatpush1.bf16.msra.mxu0 %v455
    %627 = vmatprep.subr.bf16.mxu0 %v464
    %628 = vmatpush1.bf16.msra.mxu0 %v463
    %629 = vmatprep.subr.bf16.mxu0 0
    %630 = vmatpush1.bf16.msra.mxu0 0
    %631 = vmatprep.subr.bf16.mxu0 0
    %632 = vmatpush1.bf16.msra.mxu0 0
    %633 = vmatprep.subr.bf16.mxu0 0
    %634 = vmatpush1.bf16.msra.mxu0 0
    %635 = vmatprep.subr.bf16.mxu0 0
    %636 = vmatpush1.bf16.msra.mxu0 0
    %637 = vmatprep.subr.bf16.mxu0 0
    %638 = vmatpush1.bf16.msra.mxu0 0
    %639 = vmatprep.subr.bf16.mxu0 0
    %640 = vmatpush1.bf16.msra.mxu0 0
    %641 = vmatprep.subr.bf16.mxu0 0
    %642 = vmatpush1.bf16.msra.mxu0 0
    %643 = vmatprep.subr.bf16.mxu0 0
    %644 = vmatpush1.bf16.msra.mxu0 0
    %645 = vmatprep.mubr.bf16.mxu0 0
    %646 = vmatmul.mubr.bf16.gmra.mrb[0].mxu0 %v104
    %v647 = vpop.f32.mrb[0].mxu0
    %v648 = vadd.f32 %v190, %v647
    %v649 = vpop.f32.mrb[0].mxu0
    %v650 = vadd.f32 %v194, %v649
    %v651 = vpop.f32.mrb[0].mxu0
    %v652 = vpop.f32.mrb[0].mxu0
    %653 = vdwg.mxu0
    %654 = vmatprep.subr.bf16.mxu0 %v410
    %655 = vmatpush1.bf16.msra.mxu0 %v409
    %656 = vmatprep.subr.bf16.mxu0 %v418
    %657 = vmatpush1.bf16.msra.mxu0 %v417
    %658 = vmatprep.subr.bf16.mxu0 %v426
    %659 = vmatpush1.bf16.msra.mxu0 %v425
    %660 = vmatprep.subr.bf16.mxu0 %v434
    %661 = vmatpush1.bf16.msra.mxu0 %v433
    %662 = vmatprep.subr.bf16.mxu0 %v442
    %663 = vmatpush1.bf16.msra.mxu0 %v441
    %664 = vmatprep.subr.bf16.mxu0 %v450
    %665 = vmatpush1.bf16.msra.mxu0 %v449
    %666 = vmatprep.subr.bf16.mxu0 %v458
    %667 = vmatpush1.bf16.msra.mxu0 %v457
    %668 = vmatprep.subr.bf16.mxu0 %v466
    %669 = vmatpush1.bf16.msra.mxu0 %v465
    %670 = vmatprep.subr.bf16.mxu0 0
    %671 = vmatpush1.bf16.msra.mxu0 0
    %672 = vmatprep.subr.bf16.mxu0 0
    %673 = vmatpush1.bf16.msra.mxu0 0
    %674 = vmatprep.subr.bf16.mxu0 0
    %675 = vmatpush1.bf16.msra.mxu0 0
    %676 = vmatprep.subr.bf16.mxu0 0
    %677 = vmatpush1.bf16.msra.mxu0 0
    %678 = vmatprep.subr.bf16.mxu0 0
    %679 = vmatpush1.bf16.msra.mxu0 0
    %680 = vmatprep.subr.bf16.mxu0 0
    %681 = vmatpush1.bf16.msra.mxu0 0
    %682 = vmatprep.subr.bf16.mxu0 0
    %683 = vmatpush1.bf16.msra.mxu0 0
    %684 = vmatprep.subr.bf16.mxu0 0
    %685 = vmatpush1.bf16.msra.mxu0 0
    %686 = vmatprep.mubr.bf16.mxu0 0
    %687 = vmatmul.mubr.bf16.gmra.mrb[0].mxu0 %v104
    %v688 = vpop.f32.mrb[0].mxu0
    %v689 = vadd.f32 %v198, %v688
    %v690 = vpop.f32.mrb[0].mxu0
    %v691 = vadd.f32 %v202, %v690
    %v692 = vpop.f32.mrb[0].mxu0
    %v693 = vpop.f32.mrb[0].mxu0
    %694 = vdwg.mxu0
    %v695 = vmax.f32 %v566, 0.0
    %v696 = vmax.f32 %v568, 0.0
    %v697 = vmax.f32 %v607, 0.0
    %v698 = vmax.f32 %v609, 0.0
    %v699 = vmax.f32 %v648, 0.0
    %v700 = vmax.f32 %v650, 0.0
    %v701 = vmax.f32 %v689, 0.0
    %v702 = vmax.f32 %v691, 0.0
    %v703 = vpack.c.bf16 %v695, %v695
    %v704 = vpack.c.bf16 %v696, %v696
    %v705 = vpack.c.bf16 %v697, %v697
    %v706 = vpack.c.bf16 %v698, %v698
    %v707 = vpack.c.bf16 %v699, %v699
    %v708 = vpack.c.bf16 %v700, %v700
    %v709 = vpack.c.bf16 %v701, %v701
    %v710 = vpack.c.bf16 %v702, %v702
    %v711 = vld [vmem:[#allocation7] sm:$0xff]
    %v712 = vld [vmem:[#allocation7 + $0x8] sm:$0xff]
    %v713 = vld [vmem:[#allocation7 + $0x10] sm:$0xff]
    %v714 = vld [vmem:[#allocation7 + $0x18] sm:$0xff]
    %v715 = vld [vmem:[#allocation7 + $0x20] sm:$0xff]
    %v716 = vld [vmem:[#allocation7 + $0x28] sm:$0xff]
    %v717 = vld [vmem:[#allocation7 + $0x30] sm:$0xff]
    %v718 = vld [vmem:[#allocation7 + $0x38] sm:$0xff]
    %v719 = vld [vmem:[#allocation7 + $0x40] sm:$0xff]
    %v720 = vld [vmem:[#allocation7 + $0x48] sm:$0xff]
    %v721 = vld [vmem:[#allocation7 + $0x50] sm:$0xff]
    %v722 = vld [vmem:[#allocation7 + $0x58] sm:$0xff]
    %v723 = vld [vmem:[#allocation7 + $0x60] sm:$0xff]
    %v724 = vld [vmem:[#allocation7 + $0x68] sm:$0xff]
    %v725 = vld [vmem:[#allocation7 + $0x70] sm:$0xff]
    %v726 = vld [vmem:[#allocation7 + $0x78] sm:$0xff]
    %v727 = vld [vmem:[#allocation7 + $0x80] sm:$0xff]
    %v728 = vld [vmem:[#allocation7 + $0x88] sm:$0xff]
    %v729 = vld [vmem:[#allocation7 + $0x90] sm:$0xff]
    %v730 = vld [vmem:[#allocation7 + $0x98] sm:$0xff]
    %v731 = vld [vmem:[#allocation7 + $0xa0] sm:$0xff]
    %v732 = vld [vmem:[#allocation7 + $0xa8] sm:$0xff]
    %v733 = vld [vmem:[#allocation7 + $0xb0] sm:$0xff]
    %v734 = vld [vmem:[#allocation7 + $0xb8] sm:$0xff]
    %v735 = vld [vmem:[#allocation7 + $0xc0] sm:$0xff]
    %v736 = vld [vmem:[#allocation7 + $0xc8] sm:$0xff]
    %v737 = vld [vmem:[#allocation7 + $0xd0] sm:$0xff]
    %v738 = vld [vmem:[#allocation7 + $0xd8] sm:$0xff]
    %v739 = vld [vmem:[#allocation7 + $0xe0] sm:$0xff]
    %v740 = vld [vmem:[#allocation7 + $0xe8] sm:$0xff]
    %v741 = vld [vmem:[#allocation7 + $0xf0] sm:$0xff]
    %v742 = vld [vmem:[#allocation7 + $0xf8] sm:$0xff]
    %v743 = vld [vmem:[#allocation7 + $0x100] sm:$0xff]
    %v744 = vld [vmem:[#allocation7 + $0x108] sm:$0xff]
    %v745 = vld [vmem:[#allocation7 + $0x110] sm:$0xff]
    %v746 = vld [vmem:[#allocation7 + $0x118] sm:$0xff]
    %v747 = vld [vmem:[#allocation7 + $0x120] sm:$0xff]
    %v748 = vld [vmem:[#allocation7 + $0x128] sm:$0xff]
    %v749 = vld [vmem:[#allocation7 + $0x130] sm:$0xff]
    %v750 = vld [vmem:[#allocation7 + $0x138] sm:$0xff]
    %v751 = vld [vmem:[#allocation7 + $0x140] sm:$0xff]
    %v752 = vld [vmem:[#allocation7 + $0x148] sm:$0xff]
    %v753 = vld [vmem:[#allocation7 + $0x150] sm:$0xff]
    %v754 = vld [vmem:[#allocation7 + $0x158] sm:$0xff]
    %v755 = vld [vmem:[#allocation7 + $0x160] sm:$0xff]
    %v756 = vld [vmem:[#allocation7 + $0x168] sm:$0xff]
    %v757 = vld [vmem:[#allocation7 + $0x170] sm:$0xff]
    %v758 = vld [vmem:[#allocation7 + $0x178] sm:$0xff]
    %v759 = vld [vmem:[#allocation7 + $0x180] sm:$0xff]
    %v760 = vld [vmem:[#allocation7 + $0x188] sm:$0xff]
    %v761 = vld [vmem:[#allocation7 + $0x190] sm:$0xff]
    %v762 = vld [vmem:[#allocation7 + $0x198] sm:$0xff]
    %v763 = vld [vmem:[#allocation7 + $0x1a0] sm:$0xff]
    %v764 = vld [vmem:[#allocation7 + $0x1a8] sm:$0xff]
    %v765 = vld [vmem:[#allocation7 + $0x1b0] sm:$0xff]
    %v766 = vld [vmem:[#allocation7 + $0x1b8] sm:$0xff]
    %v767 = vld [vmem:[#allocation7 + $0x1c0] sm:$0xff]
    %v768 = vld [vmem:[#allocation7 + $0x1c8] sm:$0xff]
    %v769 = vld [vmem:[#allocation7 + $0x1d0] sm:$0xff]
    %v770 = vld [vmem:[#allocation7 + $0x1d8] sm:$0xff]
    %v771 = vld [vmem:[#allocation7 + $0x1e0] sm:$0xff]
    %v772 = vld [vmem:[#allocation7 + $0x1e8] sm:$0xff]
    %v773 = vld [vmem:[#allocation7 + $0x1f0] sm:$0xff]
    %v774 = vld [vmem:[#allocation7 + $0x1f8] sm:$0xff]
    %v775 = vld [vmem:[#allocation7 + $0x200] sm:$0xff]
    %v776 = vld [vmem:[#allocation7 + $0x208] sm:$0xff]
    %v777 = vld [vmem:[#allocation7 + $0x210] sm:$0xff]
    %v778 = vld [vmem:[#allocation7 + $0x218] sm:$0xff]
    %v779 = vld [vmem:[#allocation7 + $0x220] sm:$0xff]
    %v780 = vld [vmem:[#allocation7 + $0x228] sm:$0xff]
    %v781 = vld [vmem:[#allocation7 + $0x230] sm:$0xff]
    %v782 = vld [vmem:[#allocation7 + $0x238] sm:$0xff]
    %v783 = vld [vmem:[#allocation7 + $0x240] sm:$0xff]
    %v784 = vld [vmem:[#allocation7 + $0x248] sm:$0xff]
    %v785 = vld [vmem:[#allocation7 + $0x250] sm:$0xff]
    %v786 = vld [vmem:[#allocation7 + $0x258] sm:$0xff]
    %v787 = vld [vmem:[#allocation7 + $0x260] sm:$0xff]
    %v788 = vld [vmem:[#allocation7 + $0x268] sm:$0xff]
    %v789 = vld [vmem:[#allocation7 + $0x270] sm:$0xff]
    %v790 = vld [vmem:[#allocation7 + $0x278] sm:$0xff]
    %v791 = vld [vmem:[#allocation7 + $0x280] sm:$0xff]
    %v792 = vld [vmem:[#allocation7 + $0x288] sm:$0xff]
    %v793 = vld [vmem:[#allocation7 + $0x290] sm:$0xff]
    %v794 = vld [vmem:[#allocation7 + $0x298] sm:$0xff]
    %v795 = vld [vmem:[#allocation7 + $0x2a0] sm:$0xff]
    %v796 = vld [vmem:[#allocation7 + $0x2a8] sm:$0xff]
    %v797 = vld [vmem:[#allocation7 + $0x2b0] sm:$0xff]
    %v798 = vld [vmem:[#allocation7 + $0x2b8] sm:$0xff]
    %v799 = vld [vmem:[#allocation7 + $0x2c0] sm:$0xff]
    %v800 = vld [vmem:[#allocation7 + $0x2c8] sm:$0xff]
    %v801 = vld [vmem:[#allocation7 + $0x2d0] sm:$0xff]
    %v802 = vld [vmem:[#allocation7 + $0x2d8] sm:$0xff]
    %v803 = vld [vmem:[#allocation7 + $0x2e0] sm:$0xff]
    %v804 = vld [vmem:[#allocation7 + $0x2e8] sm:$0xff]
    %v805 = vld [vmem:[#allocation7 + $0x2f0] sm:$0xff]
    %v806 = vld [vmem:[#allocation7 + $0x2f8] sm:$0xff]
    %v807 = vld [vmem:[#allocation7 + $0x300] sm:$0xff]
    %v808 = vld [vmem:[#allocation7 + $0x308] sm:$0xff]
    %v809 = vld [vmem:[#allocation7 + $0x310] sm:$0xff]
    %v810 = vld [vmem:[#allocation7 + $0x318] sm:$0xff]
    %v811 = vld [vmem:[#allocation7 + $0x320] sm:$0xff]
    %v812 = vld [vmem:[#allocation7 + $0x328] sm:$0xff]
    %v813 = vld [vmem:[#allocation7 + $0x330] sm:$0xff]
    %v814 = vld [vmem:[#allocation7 + $0x338] sm:$0xff]
    %v815 = vld [vmem:[#allocation7 + $0x340] sm:$0xff]
    %v816 = vld [vmem:[#allocation7 + $0x348] sm:$0xff]
    %v817 = vld [vmem:[#allocation7 + $0x350] sm:$0xff]
    %v818 = vld [vmem:[#allocation7 + $0x358] sm:$0xff]
    %v819 = vld [vmem:[#allocation7 + $0x360] sm:$0xff]
    %v820 = vld [vmem:[#allocation7 + $0x368] sm:$0xff]
    %v821 = vld [vmem:[#allocation7 + $0x370] sm:$0xff]
    %v822 = vld [vmem:[#allocation7 + $0x378] sm:$0xff]
    %v823 = vld [vmem:[#allocation7 + $0x380] sm:$0xff]
    %v824 = vld [vmem:[#allocation7 + $0x388] sm:$0xff]
    %v825 = vld [vmem:[#allocation7 + $0x390] sm:$0xff]
    %v826 = vld [vmem:[#allocation7 + $0x398] sm:$0xff]
    %v827 = vld [vmem:[#allocation7 + $0x3a0] sm:$0xff]
    %v828 = vld [vmem:[#allocation7 + $0x3a8] sm:$0xff]
    %v829 = vld [vmem:[#allocation7 + $0x3b0] sm:$0xff]
    %v830 = vld [vmem:[#allocation7 + $0x3b8] sm:$0xff]
    %v831 = vld [vmem:[#allocation7 + $0x3c0] sm:$0xff]
    %v832 = vld [vmem:[#allocation7 + $0x3c8] sm:$0xff]
    %v833 = vld [vmem:[#allocation7 + $0x3d0] sm:$0xff]
    %v834 = vld [vmem:[#allocation7 + $0x3d8] sm:$0xff]
    %v835 = vld [vmem:[#allocation7 + $0x3e0] sm:$0xff]
    %v836 = vld [vmem:[#allocation7 + $0x3e8] sm:$0xff]
    %v837 = vld [vmem:[#allocation7 + $0x3f0] sm:$0xff]
    %v838 = vld [vmem:[#allocation7 + $0x3f8] sm:$0xff]
    %v839 = vld [vmem:[#allocation7 + $0x400] sm:$0xff]
    %v840 = vld [vmem:[#allocation7 + $0x408] sm:$0xff]
    %v841 = vld [vmem:[#allocation7 + $0x410] sm:$0xff]
    %v842 = vld [vmem:[#allocation7 + $0x418] sm:$0xff]
    %v843 = vld [vmem:[#allocation7 + $0x420] sm:$0xff]
    %v844 = vld [vmem:[#allocation7 + $0x428] sm:$0xff]
    %v845 = vld [vmem:[#allocation7 + $0x430] sm:$0xff]
    %v846 = vld [vmem:[#allocation7 + $0x438] sm:$0xff]
    %v847 = vld [vmem:[#allocation7 + $0x440] sm:$0xff]
    %v848 = vld [vmem:[#allocation7 + $0x448] sm:$0xff]
    %v849 = vld [vmem:[#allocation7 + $0x450] sm:$0xff]
    %v850 = vld [vmem:[#allocation7 + $0x458] sm:$0xff]
    %v851 = vld [vmem:[#allocation7 + $0x460] sm:$0xff]
    %v852 = vld [vmem:[#allocation7 + $0x468] sm:$0xff]
    %v853 = vld [vmem:[#allocation7 + $0x470] sm:$0xff]
    %v854 = vld [vmem:[#allocation7 + $0x478] sm:$0xff]
    %v855 = vld [vmem:[#allocation7 + $0x480] sm:$0xff]
    %v856 = vld [vmem:[#allocation7 + $0x488] sm:$0xff]
    %v857 = vld [vmem:[#allocation7 + $0x490] sm:$0xff]
    %v858 = vld [vmem:[#allocation7 + $0x498] sm:$0xff]
    %v859 = vld [vmem:[#allocation7 + $0x4a0] sm:$0xff]
    %v860 = vld [vmem:[#allocation7 + $0x4a8] sm:$0xff]
    %v861 = vld [vmem:[#allocation7 + $0x4b0] sm:$0xff]
    %v862 = vld [vmem:[#allocation7 + $0x4b8] sm:$0xff]
    %v863 = vld [vmem:[#allocation7 + $0x4c0] sm:$0xff]
    %v864 = vld [vmem:[#allocation7 + $0x4c8] sm:$0xff]
    %v865 = vld [vmem:[#allocation7 + $0x4d0] sm:$0xff]
    %v866 = vld [vmem:[#allocation7 + $0x4d8] sm:$0xff]
    %v867 = vld [vmem:[#allocation7 + $0x4e0] sm:$0xff]
    %v868 = vld [vmem:[#allocation7 + $0x4e8] sm:$0xff]
    %v869 = vld [vmem:[#allocation7 + $0x4f0] sm:$0xff]
    %v870 = vld [vmem:[#allocation7 + $0x4f8] sm:$0xff]
    %v871 = vld [vmem:[#allocation7 + $0x500] sm:$0xff]
    %v872 = vld [vmem:[#allocation7 + $0x508] sm:$0xff]
    %v873 = vld [vmem:[#allocation7 + $0x510] sm:$0xff]
    %v874 = vld [vmem:[#allocation7 + $0x518] sm:$0xff]
    %v875 = vld [vmem:[#allocation7 + $0x520] sm:$0xff]
    %v876 = vld [vmem:[#allocation7 + $0x528] sm:$0xff]
    %v877 = vld [vmem:[#allocation7 + $0x530] sm:$0xff]
    %v878 = vld [vmem:[#allocation7 + $0x538] sm:$0xff]
    %v879 = vld [vmem:[#allocation7 + $0x540] sm:$0xff]
    %v880 = vld [vmem:[#allocation7 + $0x548] sm:$0xff]
    %v881 = vld [vmem:[#allocation7 + $0x550] sm:$0xff]
    %v882 = vld [vmem:[#allocation7 + $0x558] sm:$0xff]
    %v883 = vld [vmem:[#allocation7 + $0x560] sm:$0xff]
    %v884 = vld [vmem:[#allocation7 + $0x568] sm:$0xff]
    %v885 = vld [vmem:[#allocation7 + $0x570] sm:$0xff]
    %v886 = vld [vmem:[#allocation7 + $0x578] sm:$0xff]
    %v887 = vld [vmem:[#allocation7 + $0x580] sm:$0xff]
    %v888 = vld [vmem:[#allocation7 + $0x588] sm:$0xff]
    %v889 = vld [vmem:[#allocation7 + $0x590] sm:$0xff]
    %v890 = vld [vmem:[#allocation7 + $0x598] sm:$0xff]
    %v891 = vld [vmem:[#allocation7 + $0x5a0] sm:$0xff]
    %v892 = vld [vmem:[#allocation7 + $0x5a8] sm:$0xff]
    %v893 = vld [vmem:[#allocation7 + $0x5b0] sm:$0xff]
    %v894 = vld [vmem:[#allocation7 + $0x5b8] sm:$0xff]
    %v895 = vld [vmem:[#allocation7 + $0x5c0] sm:$0xff]
    %v896 = vld [vmem:[#allocation7 + $0x5c8] sm:$0xff]
    %v897 = vld [vmem:[#allocation7 + $0x5d0] sm:$0xff]
    %v898 = vld [vmem:[#allocation7 + $0x5d8] sm:$0xff]
    %v899 = vld [vmem:[#allocation7 + $0x5e0] sm:$0xff]
    %v900 = vld [vmem:[#allocation7 + $0x5e8] sm:$0xff]
    %v901 = vld [vmem:[#allocation7 + $0x5f0] sm:$0xff]
    %v902 = vld [vmem:[#allocation7 + $0x5f8] sm:$0xff]
    %v903 = vld [vmem:[#allocation7 + $0x600] sm:$0xff]
    %v904 = vld [vmem:[#allocation7 + $0x608] sm:$0xff]
    %v905 = vld [vmem:[#allocation7 + $0x610] sm:$0xff]
    %v906 = vld [vmem:[#allocation7 + $0x618] sm:$0xff]
    %v907 = vld [vmem:[#allocation7 + $0x620] sm:$0xff]
    %v908 = vld [vmem:[#allocation7 + $0x628] sm:$0xff]
    %v909 = vld [vmem:[#allocation7 + $0x630] sm:$0xff]
    %v910 = vld [vmem:[#allocation7 + $0x638] sm:$0xff]
    %v911 = vld [vmem:[#allocation7 + $0x640] sm:$0xff]
    %v912 = vld [vmem:[#allocation7 + $0x648] sm:$0xff]
    %v913 = vld [vmem:[#allocation7 + $0x650] sm:$0xff]
    %v914 = vld [vmem:[#allocation7 + $0x658] sm:$0xff]
    %v915 = vld [vmem:[#allocation7 + $0x660] sm:$0xff]
    %v916 = vld [vmem:[#allocation7 + $0x668] sm:$0xff]
    %v917 = vld [vmem:[#allocation7 + $0x670] sm:$0xff]
    %v918 = vld [vmem:[#allocation7 + $0x678] sm:$0xff]
    %v919 = vld [vmem:[#allocation7 + $0x680] sm:$0xff]
    %v920 = vld [vmem:[#allocation7 + $0x688] sm:$0xff]
    %v921 = vld [vmem:[#allocation7 + $0x690] sm:$0xff]
    %v922 = vld [vmem:[#allocation7 + $0x698] sm:$0xff]
    %v923 = vld [vmem:[#allocation7 + $0x6a0] sm:$0xff]
    %v924 = vld [vmem:[#allocation7 + $0x6a8] sm:$0xff]
    %v925 = vld [vmem:[#allocation7 + $0x6b0] sm:$0xff]
    %v926 = vld [vmem:[#allocation7 + $0x6b8] sm:$0xff]
    %v927 = vld [vmem:[#allocation7 + $0x6c0] sm:$0xff]
    %v928 = vld [vmem:[#allocation7 + $0x6c8] sm:$0xff]
    %v929 = vld [vmem:[#allocation7 + $0x6d0] sm:$0xff]
    %v930 = vld [vmem:[#allocation7 + $0x6d8] sm:$0xff]
    %v931 = vld [vmem:[#allocation7 + $0x6e0] sm:$0xff]
    %v932 = vld [vmem:[#allocation7 + $0x6e8] sm:$0xff]
    %v933 = vld [vmem:[#allocation7 + $0x6f0] sm:$0xff]
    %v934 = vld [vmem:[#allocation7 + $0x6f8] sm:$0xff]
    %v935 = vld [vmem:[#allocation7 + $0x700] sm:$0xff]
    %v936 = vld [vmem:[#allocation7 + $0x708] sm:$0xff]
    %v937 = vld [vmem:[#allocation7 + $0x710] sm:$0xff]
    %v938 = vld [vmem:[#allocation7 + $0x718] sm:$0xff]
    %v939 = vld [vmem:[#allocation7 + $0x720] sm:$0xff]
    %v940 = vld [vmem:[#allocation7 + $0x728] sm:$0xff]
    %v941 = vld [vmem:[#allocation7 + $0x730] sm:$0xff]
    %v942 = vld [vmem:[#allocation7 + $0x738] sm:$0xff]
    %v943 = vld [vmem:[#allocation7 + $0x740] sm:$0xff]
    %v944 = vld [vmem:[#allocation7 + $0x748] sm:$0xff]
    %v945 = vld [vmem:[#allocation7 + $0x750] sm:$0xff]
    %v946 = vld [vmem:[#allocation7 + $0x758] sm:$0xff]
    %v947 = vld [vmem:[#allocation7 + $0x760] sm:$0xff]
    %v948 = vld [vmem:[#allocation7 + $0x768] sm:$0xff]
    %v949 = vld [vmem:[#allocation7 + $0x770] sm:$0xff]
    %v950 = vld [vmem:[#allocation7 + $0x778] sm:$0xff]
    %v951 = vld [vmem:[#allocation7 + $0x780] sm:$0xff]
    %v952 = vld [vmem:[#allocation7 + $0x788] sm:$0xff]
    %v953 = vld [vmem:[#allocation7 + $0x790] sm:$0xff]
    %v954 = vld [vmem:[#allocation7 + $0x798] sm:$0xff]
    %v955 = vld [vmem:[#allocation7 + $0x7a0] sm:$0xff]
    %v956 = vld [vmem:[#allocation7 + $0x7a8] sm:$0xff]
    %v957 = vld [vmem:[#allocation7 + $0x7b0] sm:$0xff]
    %v958 = vld [vmem:[#allocation7 + $0x7b8] sm:$0xff]
    %v959 = vld [vmem:[#allocation7 + $0x7c0] sm:$0xff]
    %v960 = vld [vmem:[#allocation7 + $0x7c8] sm:$0xff]
    %v961 = vld [vmem:[#allocation7 + $0x7d0] sm:$0xff]
    %v962 = vld [vmem:[#allocation7 + $0x7d8] sm:$0xff]
    %v963 = vld [vmem:[#allocation7 + $0x7e0] sm:$0xff]
    %v964 = vld [vmem:[#allocation7 + $0x7e8] sm:$0xff]
    %v965 = vld [vmem:[#allocation7 + $0x7f0] sm:$0xff]
    %v966 = vld [vmem:[#allocation7 + $0x7f8] sm:$0xff]
    %v967 = vld [vmem:[#allocation7 + $0x800] sm:$0xff]
    %v968 = vld [vmem:[#allocation7 + $0x808] sm:$0xff]
    %v969 = vld [vmem:[#allocation7 + $0x810] sm:$0xff]
    %v970 = vld [vmem:[#allocation7 + $0x818] sm:$0xff]
    %v971 = vld [vmem:[#allocation7 + $0x820] sm:$0xff]
    %v972 = vld [vmem:[#allocation7 + $0x828] sm:$0xff]
    %v973 = vld [vmem:[#allocation7 + $0x830] sm:$0xff]
    %v974 = vld [vmem:[#allocation7 + $0x838] sm:$0xff]
    %v975 = vld [vmem:[#allocation7 + $0x840] sm:$0xff]
    %v976 = vld [vmem:[#allocation7 + $0x848] sm:$0xff]
    %v977 = vld [vmem:[#allocation7 + $0x850] sm:$0xff]
    %v978 = vld [vmem:[#allocation7 + $0x858] sm:$0xff]
    %v979 = vld [vmem:[#allocation7 + $0x860] sm:$0xff]
    %v980 = vld [vmem:[#allocation7 + $0x868] sm:$0xff]
    %v981 = vld [vmem:[#allocation7 + $0x870] sm:$0xff]
    %v982 = vld [vmem:[#allocation7 + $0x878] sm:$0xff]
    %v983 = vld [vmem:[#allocation7 + $0x880] sm:$0xff]
    %v984 = vld [vmem:[#allocation7 + $0x888] sm:$0xff]
    %v985 = vld [vmem:[#allocation7 + $0x890] sm:$0xff]
    %v986 = vld [vmem:[#allocation7 + $0x898] sm:$0xff]
    %v987 = vld [vmem:[#allocation7 + $0x8a0] sm:$0xff]
    %v988 = vld [vmem:[#allocation7 + $0x8a8] sm:$0xff]
    %v989 = vld [vmem:[#allocation7 + $0x8b0] sm:$0xff]
    %v990 = vld [vmem:[#allocation7 + $0x8b8] sm:$0xff]
    %v991 = vld [vmem:[#allocation7 + $0x8c0] sm:$0xff]
    %v992 = vld [vmem:[#allocation7 + $0x8c8] sm:$0xff]
    %v993 = vld [vmem:[#allocation7 + $0x8d0] sm:$0xff]
    %v994 = vld [vmem:[#allocation7 + $0x8d8] sm:$0xff]
    %v995 = vld [vmem:[#allocation7 + $0x8e0] sm:$0xff]
    %v996 = vld [vmem:[#allocation7 + $0x8e8] sm:$0xff]
    %v997 = vld [vmem:[#allocation7 + $0x8f0] sm:$0xff]
    %v998 = vld [vmem:[#allocation7 + $0x8f8] sm:$0xff]
    %v999 = vld [vmem:[#allocation7 + $0x900] sm:$0xff]
    %v1000 = vld [vmem:[#allocation7 + $0x908] sm:$0xff]
    %v1001 = vld [vmem:[#allocation7 + $0x910] sm:$0xff]
    %v1002 = vld [vmem:[#allocation7 + $0x918] sm:$0xff]
    %v1003 = vld [vmem:[#allocation7 + $0x920] sm:$0xff]
    %v1004 = vld [vmem:[#allocation7 + $0x928] sm:$0xff]
    %v1005 = vld [vmem:[#allocation7 + $0x930] sm:$0xff]
    %v1006 = vld [vmem:[#allocation7 + $0x938] sm:$0xff]
    %v1007 = vld [vmem:[#allocation7 + $0x940] sm:$0xff]
    %v1008 = vld [vmem:[#allocation7 + $0x948] sm:$0xff]
    %v1009 = vld [vmem:[#allocation7 + $0x950] sm:$0xff]
    %v1010 = vld [vmem:[#allocation7 + $0x958] sm:$0xff]
    %v1011 = vld [vmem:[#allocation7 + $0x960] sm:$0xff]
    %v1012 = vld [vmem:[#allocation7 + $0x968] sm:$0xff]
    %v1013 = vld [vmem:[#allocation7 + $0x970] sm:$0xff]
    %v1014 = vld [vmem:[#allocation7 + $0x978] sm:$0xff]
    %v1015 = vld [vmem:[#allocation7 + $0x980] sm:$0xff]
    %v1016 = vld [vmem:[#allocation7 + $0x988] sm:$0xff]
    %v1017 = vld [vmem:[#allocation7 + $0x990] sm:$0xff]
    %v1018 = vld [vmem:[#allocation7 + $0x998] sm:$0xff]
    %v1019 = vld [vmem:[#allocation7 + $0x9a0] sm:$0xff]
    %v1020 = vld [vmem:[#allocation7 + $0x9a8] sm:$0xff]
    %v1021 = vld [vmem:[#allocation7 + $0x9b0] sm:$0xff]
    %v1022 = vld [vmem:[#allocation7 + $0x9b8] sm:$0xff]
    %v1023 = vld [vmem:[#allocation7 + $0x9c0] sm:$0xff]
    %v1024 = vld [vmem:[#allocation7 + $0x9c8] sm:$0xff]
    %v1025 = vld [vmem:[#allocation7 + $0x9d0] sm:$0xff]
    %v1026 = vld [vmem:[#allocation7 + $0x9d8] sm:$0xff]
    %v1027 = vld [vmem:[#allocation7 + $0x9e0] sm:$0xff]
    %v1028 = vld [vmem:[#allocation7 + $0x9e8] sm:$0xff]
    %v1029 = vld [vmem:[#allocation7 + $0x9f0] sm:$0xff]
    %v1030 = vld [vmem:[#allocation7 + $0x9f8] sm:$0xff]
    %v1031 = vld [vmem:[#allocation7 + $0xa00] sm:$0xff]
    %v1032 = vld [vmem:[#allocation7 + $0xa08] sm:$0xff]
    %v1033 = vld [vmem:[#allocation7 + $0xa10] sm:$0xff]
    %v1034 = vld [vmem:[#allocation7 + $0xa18] sm:$0xff]
    %v1035 = vld [vmem:[#allocation7 + $0xa20] sm:$0xff]
    %v1036 = vld [vmem:[#allocation7 + $0xa28] sm:$0xff]
    %v1037 = vld [vmem:[#allocation7 + $0xa30] sm:$0xff]
    %v1038 = vld [vmem:[#allocation7 + $0xa38] sm:$0xff]
    %v1039 = vld [vmem:[#allocation7 + $0xa40] sm:$0xff]
    %v1040 = vld [vmem:[#allocation7 + $0xa48] sm:$0xff]
    %v1041 = vld [vmem:[#allocation7 + $0xa50] sm:$0xff]
    %v1042 = vld [vmem:[#allocation7 + $0xa58] sm:$0xff]
    %v1043 = vld [vmem:[#allocation7 + $0xa60] sm:$0xff]
    %v1044 = vld [vmem:[#allocation7 + $0xa68] sm:$0xff]
    %v1045 = vld [vmem:[#allocation7 + $0xa70] sm:$0xff]
    %v1046 = vld [vmem:[#allocation7 + $0xa78] sm:$0xff]
    %v1047 = vld [vmem:[#allocation7 + $0xa80] sm:$0xff]
    %v1048 = vld [vmem:[#allocation7 + $0xa88] sm:$0xff]
    %v1049 = vld [vmem:[#allocation7 + $0xa90] sm:$0xff]
    %v1050 = vld [vmem:[#allocation7 + $0xa98] sm:$0xff]
    %v1051 = vld [vmem:[#allocation7 + $0xaa0] sm:$0xff]
    %v1052 = vld [vmem:[#allocation7 + $0xaa8] sm:$0xff]
    %v1053 = vld [vmem:[#allocation7 + $0xab0] sm:$0xff]
    %v1054 = vld [vmem:[#allocation7 + $0xab8] sm:$0xff]
    %v1055 = vld [vmem:[#allocation7 + $0xac0] sm:$0xff]
    %v1056 = vld [vmem:[#allocation7 + $0xac8] sm:$0xff]
    %v1057 = vld [vmem:[#allocation7 + $0xad0] sm:$0xff]
    %v1058 = vld [vmem:[#allocation7 + $0xad8] sm:$0xff]
    %v1059 = vld [vmem:[#allocation7 + $0xae0] sm:$0xff]
    %v1060 = vld [vmem:[#allocation7 + $0xae8] sm:$0xff]
    %v1061 = vld [vmem:[#allocation7 + $0xaf0] sm:$0xff]
    %v1062 = vld [vmem:[#allocation7 + $0xaf8] sm:$0xff]
    %v1063 = vld [vmem:[#allocation7 + $0xb00] sm:$0xff]
    %v1064 = vld [vmem:[#allocation7 + $0xb08] sm:$0xff]
    %v1065 = vld [vmem:[#allocation7 + $0xb10] sm:$0xff]
    %v1066 = vld [vmem:[#allocation7 + $0xb18] sm:$0xff]
    %v1067 = vld [vmem:[#allocation7 + $0xb20] sm:$0xff]
    %v1068 = vld [vmem:[#allocation7 + $0xb28] sm:$0xff]
    %v1069 = vld [vmem:[#allocation7 + $0xb30] sm:$0xff]
    %v1070 = vld [vmem:[#allocation7 + $0xb38] sm:$0xff]
    %v1071 = vld [vmem:[#allocation7 + $0xb40] sm:$0xff]
    %v1072 = vld [vmem:[#allocation7 + $0xb48] sm:$0xff]
    %v1073 = vld [vmem:[#allocation7 + $0xb50] sm:$0xff]
    %v1074 = vld [vmem:[#allocation7 + $0xb58] sm:$0xff]
    %v1075 = vld [vmem:[#allocation7 + $0xb60] sm:$0xff]
    %v1076 = vld [vmem:[#allocation7 + $0xb68] sm:$0xff]
    %v1077 = vld [vmem:[#allocation7 + $0xb70] sm:$0xff]
    %v1078 = vld [vmem:[#allocation7 + $0xb78] sm:$0xff]
    %v1079 = vld [vmem:[#allocation7 + $0xb80] sm:$0xff]
    %v1080 = vld [vmem:[#allocation7 + $0xb88] sm:$0xff]
    %v1081 = vld [vmem:[#allocation7 + $0xb90] sm:$0xff]
    %v1082 = vld [vmem:[#allocation7 + $0xb98] sm:$0xff]
    %v1083 = vld [vmem:[#allocation7 + $0xba0] sm:$0xff]
    %v1084 = vld [vmem:[#allocation7 + $0xba8] sm:$0xff]
    %v1085 = vld [vmem:[#allocation7 + $0xbb0] sm:$0xff]
    %v1086 = vld [vmem:[#allocation7 + $0xbb8] sm:$0xff]
    %v1087 = vld [vmem:[#allocation7 + $0xbc0] sm:$0xff]
    %v1088 = vld [vmem:[#allocation7 + $0xbc8] sm:$0xff]
    %v1089 = vld [vmem:[#allocation7 + $0xbd0] sm:$0xff]
    %v1090 = vld [vmem:[#allocation7 + $0xbd8] sm:$0xff]
    %v1091 = vld [vmem:[#allocation7 + $0xbe0] sm:$0xff]
    %v1092 = vld [vmem:[#allocation7 + $0xbe8] sm:$0xff]
    %v1093 = vld [vmem:[#allocation7 + $0xbf0] sm:$0xff]
    %v1094 = vld [vmem:[#allocation7 + $0xbf8] sm:$0xff]
    %v1095 = vld [vmem:[#allocation7 + $0xc00] sm:$0xff]
    %v1096 = vld [vmem:[#allocation7 + $0xc08] sm:$0xff]
    %v1097 = vld [vmem:[#allocation7 + $0xc10] sm:$0xff]
    %v1098 = vld [vmem:[#allocation7 + $0xc18] sm:$0xff]
    %v1099 = vld [vmem:[#allocation7 + $0xc20] sm:$0xff]
    %v1100 = vld [vmem:[#allocation7 + $0xc28] sm:$0xff]
    %v1101 = vld [vmem:[#allocation7 + $0xc30] sm:$0xff]
    %v1102 = vld [vmem:[#allocation7 + $0xc38] sm:$0xff]
    %v1103 = vld [vmem:[#allocation7 + $0xc40] sm:$0xff]
    %v1104 = vld [vmem:[#allocation7 + $0xc48] sm:$0xff]
    %v1105 = vld [vmem:[#allocation7 + $0xc50] sm:$0xff]
    %v1106 = vld [vmem:[#allocation7 + $0xc58] sm:$0xff]
    %v1107 = vld [vmem:[#allocation7 + $0xc60] sm:$0xff]
    %v1108 = vld [vmem:[#allocation7 + $0xc68] sm:$0xff]
    %v1109 = vld [vmem:[#allocation7 + $0xc70] sm:$0xff]
    %v1110 = vld [vmem:[#allocation7 + $0xc78] sm:$0xff]
    %v1111 = vld [vmem:[#allocation7 + $0xc80] sm:$0xff]
    %v1112 = vld [vmem:[#allocation7 + $0xc88] sm:$0xff]
    %v1113 = vld [vmem:[#allocation7 + $0xc90] sm:$0xff]
    %v1114 = vld [vmem:[#allocation7 + $0xc98] sm:$0xff]
    %v1115 = vld [vmem:[#allocation7 + $0xca0] sm:$0xff]
    %v1116 = vld [vmem:[#allocation7 + $0xca8] sm:$0xff]
    %v1117 = vld [vmem:[#allocation7 + $0xcb0] sm:$0xff]
    %v1118 = vld [vmem:[#allocation7 + $0xcb8] sm:$0xff]
    %v1119 = vld [vmem:[#allocation7 + $0xcc0] sm:$0xff]
    %v1120 = vld [vmem:[#allocation7 + $0xcc8] sm:$0xff]
    %v1121 = vld [vmem:[#allocation7 + $0xcd0] sm:$0xff]
    %v1122 = vld [vmem:[#allocation7 + $0xcd8] sm:$0xff]
    %v1123 = vld [vmem:[#allocation7 + $0xce0] sm:$0xff]
    %v1124 = vld [vmem:[#allocation7 + $0xce8] sm:$0xff]
    %v1125 = vld [vmem:[#allocation7 + $0xcf0] sm:$0xff]
    %v1126 = vld [vmem:[#allocation7 + $0xcf8] sm:$0xff]
    %v1127 = vld [vmem:[#allocation7 + $0xd00] sm:$0xff]
    %v1128 = vld [vmem:[#allocation7 + $0xd08] sm:$0xff]
    %v1129 = vld [vmem:[#allocation7 + $0xd10] sm:$0xff]
    %v1130 = vld [vmem:[#allocation7 + $0xd18] sm:$0xff]
    %v1131 = vld [vmem:[#allocation7 + $0xd20] sm:$0xff]
    %v1132 = vld [vmem:[#allocation7 + $0xd28] sm:$0xff]
    %v1133 = vld [vmem:[#allocation7 + $0xd30] sm:$0xff]
    %v1134 = vld [vmem:[#allocation7 + $0xd38] sm:$0xff]
    %v1135 = vld [vmem:[#allocation7 + $0xd40] sm:$0xff]
    %v1136 = vld [vmem:[#allocation7 + $0xd48] sm:$0xff]
    %v1137 = vld [vmem:[#allocation7 + $0xd50] sm:$0xff]
    %v1138 = vld [vmem:[#allocation7 + $0xd58] sm:$0xff]
    %v1139 = vld [vmem:[#allocation7 + $0xd60] sm:$0xff]
    %v1140 = vld [vmem:[#allocation7 + $0xd68] sm:$0xff]
    %v1141 = vld [vmem:[#allocation7 + $0xd70] sm:$0xff]
    %v1142 = vld [vmem:[#allocation7 + $0xd78] sm:$0xff]
    %v1143 = vld [vmem:[#allocation7 + $0xd80] sm:$0xff]
    %v1144 = vld [vmem:[#allocation7 + $0xd88] sm:$0xff]
    %v1145 = vld [vmem:[#allocation7 + $0xd90] sm:$0xff]
    %v1146 = vld [vmem:[#allocation7 + $0xd98] sm:$0xff]
    %v1147 = vld [vmem:[#allocation7 + $0xda0] sm:$0xff]
    %v1148 = vld [vmem:[#allocation7 + $0xda8] sm:$0xff]
    %v1149 = vld [vmem:[#allocation7 + $0xdb0] sm:$0xff]
    %v1150 = vld [vmem:[#allocation7 + $0xdb8] sm:$0xff]
    %v1151 = vld [vmem:[#allocation7 + $0xdc0] sm:$0xff]
    %v1152 = vld [vmem:[#allocation7 + $0xdc8] sm:$0xff]
    %v1153 = vld [vmem:[#allocation7 + $0xdd0] sm:$0xff]
    %v1154 = vld [vmem:[#allocation7 + $0xdd8] sm:$0xff]
    %v1155 = vld [vmem:[#allocation7 + $0xde0] sm:$0xff]
    %v1156 = vld [vmem:[#allocation7 + $0xde8] sm:$0xff]
    %v1157 = vld [vmem:[#allocation7 + $0xdf0] sm:$0xff]
    %v1158 = vld [vmem:[#allocation7 + $0xdf8] sm:$0xff]
    %v1159 = vld [vmem:[#allocation7 + $0xe00] sm:$0xff]
    %v1160 = vld [vmem:[#allocation7 + $0xe08] sm:$0xff]
    %v1161 = vld [vmem:[#allocation7 + $0xe10] sm:$0xff]
    %v1162 = vld [vmem:[#allocation7 + $0xe18] sm:$0xff]
    %v1163 = vld [vmem:[#allocation7 + $0xe20] sm:$0xff]
    %v1164 = vld [vmem:[#allocation7 + $0xe28] sm:$0xff]
    %v1165 = vld [vmem:[#allocation7 + $0xe30] sm:$0xff]
    %v1166 = vld [vmem:[#allocation7 + $0xe38] sm:$0xff]
    %v1167 = vld [vmem:[#allocation7 + $0xe40] sm:$0xff]
    %v1168 = vld [vmem:[#allocation7 + $0xe48] sm:$0xff]
    %v1169 = vld [vmem:[#allocation7 + $0xe50] sm:$0xff]
    %v1170 = vld [vmem:[#allocation7 + $0xe58] sm:$0xff]
    %v1171 = vld [vmem:[#allocation7 + $0xe60] sm:$0xff]
    %v1172 = vld [vmem:[#allocation7 + $0xe68] sm:$0xff]
    %v1173 = vld [vmem:[#allocation7 + $0xe70] sm:$0xff]
    %v1174 = vld [vmem:[#allocation7 + $0xe78] sm:$0xff]
    %v1175 = vld [vmem:[#allocation7 + $0xe80] sm:$0xff]
    %v1176 = vld [vmem:[#allocation7 + $0xe88] sm:$0xff]
    %v1177 = vld [vmem:[#allocation7 + $0xe90] sm:$0xff]
    %v1178 = vld [vmem:[#allocation7 + $0xe98] sm:$0xff]
    %v1179 = vld [vmem:[#allocation7 + $0xea0] sm:$0xff]
    %v1180 = vld [vmem:[#allocation7 + $0xea8] sm:$0xff]
    %v1181 = vld [vmem:[#allocation7 + $0xeb0] sm:$0xff]
    %v1182 = vld [vmem:[#allocation7 + $0xeb8] sm:$0xff]
    %v1183 = vld [vmem:[#allocation7 + $0xec0] sm:$0xff]
    %v1184 = vld [vmem:[#allocation7 + $0xec8] sm:$0xff]
    %v1185 = vld [vmem:[#allocation7 + $0xed0] sm:$0xff]
    %v1186 = vld [vmem:[#allocation7 + $0xed8] sm:$0xff]
    %v1187 = vld [vmem:[#allocation7 + $0xee0] sm:$0xff]
    %v1188 = vld [vmem:[#allocation7 + $0xee8] sm:$0xff]
    %v1189 = vld [vmem:[#allocation7 + $0xef0] sm:$0xff]
    %v1190 = vld [vmem:[#allocation7 + $0xef8] sm:$0xff]
    %v1191 = vld [vmem:[#allocation7 + $0xf00] sm:$0xff]
    %v1192 = vld [vmem:[#allocation7 + $0xf08] sm:$0xff]
    %v1193 = vld [vmem:[#allocation7 + $0xf10] sm:$0xff]
    %v1194 = vld [vmem:[#allocation7 + $0xf18] sm:$0xff]
    %v1195 = vld [vmem:[#allocation7 + $0xf20] sm:$0xff]
    %v1196 = vld [vmem:[#allocation7 + $0xf28] sm:$0xff]
    %v1197 = vld [vmem:[#allocation7 + $0xf30] sm:$0xff]
    %v1198 = vld [vmem:[#allocation7 + $0xf38] sm:$0xff]
    %v1199 = vld [vmem:[#allocation7 + $0xf40] sm:$0xff]
    %v1200 = vld [vmem:[#allocation7 + $0xf48] sm:$0xff]
    %v1201 = vld [vmem:[#allocation7 + $0xf50] sm:$0xff]
    %v1202 = vld [vmem:[#allocation7 + $0xf58] sm:$0xff]
    %v1203 = vld [vmem:[#allocation7 + $0xf60] sm:$0xff]
    %v1204 = vld [vmem:[#allocation7 + $0xf68] sm:$0xff]
    %v1205 = vld [vmem:[#allocation7 + $0xf70] sm:$0xff]
    %v1206 = vld [vmem:[#allocation7 + $0xf78] sm:$0xff]
    %v1207 = vld [vmem:[#allocation7 + $0xf80] sm:$0xff]
    %v1208 = vld [vmem:[#allocation7 + $0xf88] sm:$0xff]
    %v1209 = vld [vmem:[#allocation7 + $0xf90] sm:$0xff]
    %v1210 = vld [vmem:[#allocation7 + $0xf98] sm:$0xff]
    %v1211 = vld [vmem:[#allocation7 + $0xfa0] sm:$0xff]
    %v1212 = vld [vmem:[#allocation7 + $0xfa8] sm:$0xff]
    %v1213 = vld [vmem:[#allocation7 + $0xfb0] sm:$0xff]
    %v1214 = vld [vmem:[#allocation7 + $0xfb8] sm:$0xff]
    %v1215 = vld [vmem:[#allocation7 + $0xfc0] sm:$0xff]
    %v1216 = vld [vmem:[#allocation7 + $0xfc8] sm:$0xff]
    %v1217 = vld [vmem:[#allocation7 + $0xfd0] sm:$0xff]
    %v1218 = vld [vmem:[#allocation7 + $0xfd8] sm:$0xff]
    %v1219 = vld [vmem:[#allocation7 + $0xfe0] sm:$0xff]
    %v1220 = vld [vmem:[#allocation7 + $0xfe8] sm:$0xff]
    %v1221 = vld [vmem:[#allocation7 + $0xff0] sm:$0xff]
    %v1222 = vld [vmem:[#allocation7 + $0xff8] sm:$0xff]
    %v1223 = vld [vmem:[#allocation8] sm:$0xff]
    %v1225 = vlaneseq
    %v1226 = vshrl.u32 %v1225, 7
    %v1227 = vsub.s32 0, %v1226
    %v1228 = vrot.slane %v1223, %v1227
    %v1229 = vlaneseq
    %v1230 = vshrl.u32 %v1229, 7
    %v1231 = vsub.s32 1, %v1230
    %v1232 = vrot.slane %v1223, %v1231
    %v1233 = vlaneseq
    %v1234 = vshrl.u32 %v1233, 7
    %v1235 = vsub.s32 2, %v1234
    %v1236 = vrot.slane %v1223, %v1235
    %v1237 = vlaneseq
    %v1238 = vshrl.u32 %v1237, 7
    %v1239 = vsub.s32 3, %v1238
    %v1240 = vrot.slane %v1223, %v1239
    %v1241 = vlaneseq
    %v1242 = vshrl.u32 %v1241, 7
    %v1243 = vsub.s32 4, %v1242
    %v1244 = vrot.slane %v1223, %v1243
    %v1245 = vlaneseq
    %v1246 = vshrl.u32 %v1245, 7
    %v1247 = vsub.s32 5, %v1246
    %v1248 = vrot.slane %v1223, %v1247
    %v1249 = vlaneseq
    %v1250 = vshrl.u32 %v1249, 7
    %v1251 = vsub.s32 6, %v1250
    %v1252 = vrot.slane %v1223, %v1251
    %v1253 = vlaneseq
    %v1254 = vshrl.u32 %v1253, 7
    %v1255 = vsub.s32 7, %v1254
    %v1256 = vrot.slane %v1223, %v1255
    %v1777 = vunpack.c.l.b16 %v711
    %v1778 = vunpack.c.h.b16 %v711
    %v1779 = vunpack.c.l.b16 %v712
    %v1780 = vunpack.c.h.b16 %v712
    %v1781 = vunpack.c.l.b16 %v713
    %v1782 = vunpack.c.h.b16 %v713
    %v1783 = vunpack.c.l.b16 %v714
    %v1784 = vunpack.c.h.b16 %v714
    %v1785 = vunpack.c.l.b16 %v715
    %v1786 = vunpack.c.h.b16 %v715
    %v1787 = vunpack.c.l.b16 %v716
    %v1788 = vunpack.c.h.b16 %v716
    %v1789 = vunpack.c.l.b16 %v717
    %v1790 = vunpack.c.h.b16 %v717
    %v1791 = vunpack.c.l.b16 %v718
    %v1792 = vunpack.c.h.b16 %v718
    %v1793 = vunpack.c.l.b16 %v719
    %v1794 = vunpack.c.h.b16 %v719
    %v1795 = vunpack.c.l.b16 %v720
    %v1796 = vunpack.c.h.b16 %v720
    %v1797 = vunpack.c.l.b16 %v721
    %v1798 = vunpack.c.h.b16 %v721
    %v1799 = vunpack.c.l.b16 %v722
    %v1800 = vunpack.c.h.b16 %v722
    %v1801 = vunpack.c.l.b16 %v723
    %v1802 = vunpack.c.h.b16 %v723
    %v1803 = vunpack.c.l.b16 %v724
    %v1804 = vunpack.c.h.b16 %v724
    %v1805 = vunpack.c.l.b16 %v725
    %v1806 = vunpack.c.h.b16 %v725
    %v1807 = vunpack.c.l.b16 %v726
    %v1808 = vunpack.c.h.b16 %v726
    %v1809 = vunpack.c.l.b16 %v727
    %v1810 = vunpack.c.h.b16 %v727
    %v1811 = vunpack.c.l.b16 %v728
    %v1812 = vunpack.c.h.b16 %v728
    %v1813 = vunpack.c.l.b16 %v729
    %v1814 = vunpack.c.h.b16 %v729
    %v1815 = vunpack.c.l.b16 %v730
    %v1816 = vunpack.c.h.b16 %v730
    %v1817 = vunpack.c.l.b16 %v731
    %v1818 = vunpack.c.h.b16 %v731
    %v1819 = vunpack.c.l.b16 %v732
    %v1820 = vunpack.c.h.b16 %v732
    %v1821 = vunpack.c.l.b16 %v733
    %v1822 = vunpack.c.h.b16 %v733
    %v1823 = vunpack.c.l.b16 %v734
    %v1824 = vunpack.c.h.b16 %v734
    %v1825 = vunpack.c.l.b16 %v735
    %v1826 = vunpack.c.h.b16 %v735
    %v1827 = vunpack.c.l.b16 %v736
    %v1828 = vunpack.c.h.b16 %v736
    %v1829 = vunpack.c.l.b16 %v737
    %v1830 = vunpack.c.h.b16 %v737
    %v1831 = vunpack.c.l.b16 %v738
    %v1832 = vunpack.c.h.b16 %v738
    %v1833 = vunpack.c.l.b16 %v739
    %v1834 = vunpack.c.h.b16 %v739
    %v1835 = vunpack.c.l.b16 %v740
    %v1836 = vunpack.c.h.b16 %v740
    %v1837 = vunpack.c.l.b16 %v741
    %v1838 = vunpack.c.h.b16 %v741
    %v1839 = vunpack.c.l.b16 %v742
    %v1840 = vunpack.c.h.b16 %v742
    %v1841 = vunpack.c.l.b16 %v743
    %v1842 = vunpack.c.h.b16 %v743
    %v1843 = vunpack.c.l.b16 %v744
    %v1844 = vunpack.c.h.b16 %v744
    %v1845 = vunpack.c.l.b16 %v745
    %v1846 = vunpack.c.h.b16 %v745
    %v1847 = vunpack.c.l.b16 %v746
    %v1848 = vunpack.c.h.b16 %v746
    %v1849 = vunpack.c.l.b16 %v747
    %v1850 = vunpack.c.h.b16 %v747
    %v1851 = vunpack.c.l.b16 %v748
    %v1852 = vunpack.c.h.b16 %v748
    %v1853 = vunpack.c.l.b16 %v749
    %v1854 = vunpack.c.h.b16 %v749
    %v1855 = vunpack.c.l.b16 %v750
    %v1856 = vunpack.c.h.b16 %v750
    %v1857 = vunpack.c.l.b16 %v751
    %v1858 = vunpack.c.h.b16 %v751
    %v1859 = vunpack.c.l.b16 %v752
    %v1860 = vunpack.c.h.b16 %v752
    %v1861 = vunpack.c.l.b16 %v753
    %v1862 = vunpack.c.h.b16 %v753
    %v1863 = vunpack.c.l.b16 %v754
    %v1864 = vunpack.c.h.b16 %v754
    %v1865 = vunpack.c.l.b16 %v755
    %v1866 = vunpack.c.h.b16 %v755
    %v1867 = vunpack.c.l.b16 %v756
    %v1868 = vunpack.c.h.b16 %v756
    %v1869 = vunpack.c.l.b16 %v757
    %v1870 = vunpack.c.h.b16 %v757
    %v1871 = vunpack.c.l.b16 %v758
    %v1872 = vunpack.c.h.b16 %v758
    %v1873 = vunpack.c.l.b16 %v759
    %v1874 = vunpack.c.h.b16 %v759
    %v1875 = vunpack.c.l.b16 %v760
    %v1876 = vunpack.c.h.b16 %v760
    %v1877 = vunpack.c.l.b16 %v761
    %v1878 = vunpack.c.h.b16 %v761
    %v1879 = vunpack.c.l.b16 %v762
    %v1880 = vunpack.c.h.b16 %v762
    %v1881 = vunpack.c.l.b16 %v763
    %v1882 = vunpack.c.h.b16 %v763
    %v1883 = vunpack.c.l.b16 %v764
    %v1884 = vunpack.c.h.b16 %v764
    %v1885 = vunpack.c.l.b16 %v765
    %v1886 = vunpack.c.h.b16 %v765
    %v1887 = vunpack.c.l.b16 %v766
    %v1888 = vunpack.c.h.b16 %v766
    %v1889 = vunpack.c.l.b16 %v767
    %v1890 = vunpack.c.h.b16 %v767
    %v1891 = vunpack.c.l.b16 %v768
    %v1892 = vunpack.c.h.b16 %v768
    %v1893 = vunpack.c.l.b16 %v769
    %v1894 = vunpack.c.h.b16 %v769
    %v1895 = vunpack.c.l.b16 %v770
    %v1896 = vunpack.c.h.b16 %v770
    %v1897 = vunpack.c.l.b16 %v771
    %v1898 = vunpack.c.h.b16 %v771
    %v1899 = vunpack.c.l.b16 %v772
    %v1900 = vunpack.c.h.b16 %v772
    %v1901 = vunpack.c.l.b16 %v773
    %v1902 = vunpack.c.h.b16 %v773
    %v1903 = vunpack.c.l.b16 %v774
    %v1904 = vunpack.c.h.b16 %v774
    %v1905 = vunpack.c.l.b16 %v775
    %v1906 = vunpack.c.h.b16 %v775
    %v1907 = vunpack.c.l.b16 %v776
    %v1908 = vunpack.c.h.b16 %v776
    %v1909 = vunpack.c.l.b16 %v777
    %v1910 = vunpack.c.h.b16 %v777
    %v1911 = vunpack.c.l.b16 %v778
    %v1912 = vunpack.c.h.b16 %v778
    %v1913 = vunpack.c.l.b16 %v779
    %v1914 = vunpack.c.h.b16 %v779
    %v1915 = vunpack.c.l.b16 %v780
    %v1916 = vunpack.c.h.b16 %v780
    %v1917 = vunpack.c.l.b16 %v781
    %v1918 = vunpack.c.h.b16 %v781
    %v1919 = vunpack.c.l.b16 %v782
    %v1920 = vunpack.c.h.b16 %v782
    %v1921 = vunpack.c.l.b16 %v783
    %v1922 = vunpack.c.h.b16 %v783
    %v1923 = vunpack.c.l.b16 %v784
    %v1924 = vunpack.c.h.b16 %v784
    %v1925 = vunpack.c.l.b16 %v785
    %v1926 = vunpack.c.h.b16 %v785
    %v1927 = vunpack.c.l.b16 %v786
    %v1928 = vunpack.c.h.b16 %v786
    %v1929 = vunpack.c.l.b16 %v787
    %v1930 = vunpack.c.h.b16 %v787
    %v1931 = vunpack.c.l.b16 %v788
    %v1932 = vunpack.c.h.b16 %v788
    %v1933 = vunpack.c.l.b16 %v789
    %v1934 = vunpack.c.h.b16 %v789
    %v1935 = vunpack.c.l.b16 %v790
    %v1936 = vunpack.c.h.b16 %v790
    %v1937 = vunpack.c.l.b16 %v791
    %v1938 = vunpack.c.h.b16 %v791
    %v1939 = vunpack.c.l.b16 %v792
    %v1940 = vunpack.c.h.b16 %v792
    %v1941 = vunpack.c.l.b16 %v793
    %v1942 = vunpack.c.h.b16 %v793
    %v1943 = vunpack.c.l.b16 %v794
    %v1944 = vunpack.c.h.b16 %v794
    %v1945 = vunpack.c.l.b16 %v795
    %v1946 = vunpack.c.h.b16 %v795
    %v1947 = vunpack.c.l.b16 %v796
    %v1948 = vunpack.c.h.b16 %v796
    %v1949 = vunpack.c.l.b16 %v797
    %v1950 = vunpack.c.h.b16 %v797
    %v1951 = vunpack.c.l.b16 %v798
    %v1952 = vunpack.c.h.b16 %v798
    %v1953 = vunpack.c.l.b16 %v799
    %v1954 = vunpack.c.h.b16 %v799
    %v1955 = vunpack.c.l.b16 %v800
    %v1956 = vunpack.c.h.b16 %v800
    %v1957 = vunpack.c.l.b16 %v801
    %v1958 = vunpack.c.h.b16 %v801
    %v1959 = vunpack.c.l.b16 %v802
    %v1960 = vunpack.c.h.b16 %v802
    %v1961 = vunpack.c.l.b16 %v803
    %v1962 = vunpack.c.h.b16 %v803
    %v1963 = vunpack.c.l.b16 %v804
    %v1964 = vunpack.c.h.b16 %v804
    %v1965 = vunpack.c.l.b16 %v805
    %v1966 = vunpack.c.h.b16 %v805
    %v1967 = vunpack.c.l.b16 %v806
    %v1968 = vunpack.c.h.b16 %v806
    %v1969 = vunpack.c.l.b16 %v807
    %v1970 = vunpack.c.h.b16 %v807
    %v1971 = vunpack.c.l.b16 %v808
    %v1972 = vunpack.c.h.b16 %v808
    %v1973 = vunpack.c.l.b16 %v809
    %v1974 = vunpack.c.h.b16 %v809
    %v1975 = vunpack.c.l.b16 %v810
    %v1976 = vunpack.c.h.b16 %v810
    %v1977 = vunpack.c.l.b16 %v811
    %v1978 = vunpack.c.h.b16 %v811
    %v1979 = vunpack.c.l.b16 %v812
    %v1980 = vunpack.c.h.b16 %v812
    %v1981 = vunpack.c.l.b16 %v813
    %v1982 = vunpack.c.h.b16 %v813
    %v1983 = vunpack.c.l.b16 %v814
    %v1984 = vunpack.c.h.b16 %v814
    %v1985 = vunpack.c.l.b16 %v815
    %v1986 = vunpack.c.h.b16 %v815
    %v1987 = vunpack.c.l.b16 %v816
    %v1988 = vunpack.c.h.b16 %v816
    %v1989 = vunpack.c.l.b16 %v817
    %v1990 = vunpack.c.h.b16 %v817
    %v1991 = vunpack.c.l.b16 %v818
    %v1992 = vunpack.c.h.b16 %v818
    %v1993 = vunpack.c.l.b16 %v819
    %v1994 = vunpack.c.h.b16 %v819
    %v1995 = vunpack.c.l.b16 %v820
    %v1996 = vunpack.c.h.b16 %v820
    %v1997 = vunpack.c.l.b16 %v821
    %v1998 = vunpack.c.h.b16 %v821
    %v1999 = vunpack.c.l.b16 %v822
    %v2000 = vunpack.c.h.b16 %v822
    %v2001 = vunpack.c.l.b16 %v823
    %v2002 = vunpack.c.h.b16 %v823
    %v2003 = vunpack.c.l.b16 %v824
    %v2004 = vunpack.c.h.b16 %v824
    %v2005 = vunpack.c.l.b16 %v825
    %v2006 = vunpack.c.h.b16 %v825
    %v2007 = vunpack.c.l.b16 %v826
    %v2008 = vunpack.c.h.b16 %v826
    %v2009 = vunpack.c.l.b16 %v827
    %v2010 = vunpack.c.h.b16 %v827
    %v2011 = vunpack.c.l.b16 %v828
    %v2012 = vunpack.c.h.b16 %v828
    %v2013 = vunpack.c.l.b16 %v829
    %v2014 = vunpack.c.h.b16 %v829
    %v2015 = vunpack.c.l.b16 %v830
    %v2016 = vunpack.c.h.b16 %v830
    %v2017 = vunpack.c.l.b16 %v831
    %v2018 = vunpack.c.h.b16 %v831
    %v2019 = vunpack.c.l.b16 %v832
    %v2020 = vunpack.c.h.b16 %v832
    %v2021 = vunpack.c.l.b16 %v833
    %v2022 = vunpack.c.h.b16 %v833
    %v2023 = vunpack.c.l.b16 %v834
    %v2024 = vunpack.c.h.b16 %v834
    %v2025 = vunpack.c.l.b16 %v835
    %v2026 = vunpack.c.h.b16 %v835
    %v2027 = vunpack.c.l.b16 %v836
    %v2028 = vunpack.c.h.b16 %v836
    %v2029 = vunpack.c.l.b16 %v837
    %v2030 = vunpack.c.h.b16 %v837
    %v2031 = vunpack.c.l.b16 %v838
    %v2032 = vunpack.c.h.b16 %v838
    %v2033 = vunpack.c.l.b16 %v839
    %v2034 = vunpack.c.h.b16 %v839
    %v2035 = vunpack.c.l.b16 %v840
    %v2036 = vunpack.c.h.b16 %v840
    %v2037 = vunpack.c.l.b16 %v841
    %v2038 = vunpack.c.h.b16 %v841
    %v2039 = vunpack.c.l.b16 %v842
    %v2040 = vunpack.c.h.b16 %v842
    %v2041 = vunpack.c.l.b16 %v843
    %v2042 = vunpack.c.h.b16 %v843
    %v2043 = vunpack.c.l.b16 %v844
    %v2044 = vunpack.c.h.b16 %v844
    %v2045 = vunpack.c.l.b16 %v845
    %v2046 = vunpack.c.h.b16 %v845
    %v2047 = vunpack.c.l.b16 %v846
    %v2048 = vunpack.c.h.b16 %v846
    %v2049 = vunpack.c.l.b16 %v847
    %v2050 = vunpack.c.h.b16 %v847
    %v2051 = vunpack.c.l.b16 %v848
    %v2052 = vunpack.c.h.b16 %v848
    %v2053 = vunpack.c.l.b16 %v849
    %v2054 = vunpack.c.h.b16 %v849
    %v2055 = vunpack.c.l.b16 %v850
    %v2056 = vunpack.c.h.b16 %v850
    %v2057 = vunpack.c.l.b16 %v851
    %v2058 = vunpack.c.h.b16 %v851
    %v2059 = vunpack.c.l.b16 %v852
    %v2060 = vunpack.c.h.b16 %v852
    %v2061 = vunpack.c.l.b16 %v853
    %v2062 = vunpack.c.h.b16 %v853
    %v2063 = vunpack.c.l.b16 %v854
    %v2064 = vunpack.c.h.b16 %v854
    %v2065 = vunpack.c.l.b16 %v855
    %v2066 = vunpack.c.h.b16 %v855
    %v2067 = vunpack.c.l.b16 %v856
    %v2068 = vunpack.c.h.b16 %v856
    %v2069 = vunpack.c.l.b16 %v857
    %v2070 = vunpack.c.h.b16 %v857
    %v2071 = vunpack.c.l.b16 %v858
    %v2072 = vunpack.c.h.b16 %v858
    %v2073 = vunpack.c.l.b16 %v859
    %v2074 = vunpack.c.h.b16 %v859
    %v2075 = vunpack.c.l.b16 %v860
    %v2076 = vunpack.c.h.b16 %v860
    %v2077 = vunpack.c.l.b16 %v861
    %v2078 = vunpack.c.h.b16 %v861
    %v2079 = vunpack.c.l.b16 %v862
    %v2080 = vunpack.c.h.b16 %v862
    %v2081 = vunpack.c.l.b16 %v863
    %v2082 = vunpack.c.h.b16 %v863
    %v2083 = vunpack.c.l.b16 %v864
    %v2084 = vunpack.c.h.b16 %v864
    %v2085 = vunpack.c.l.b16 %v865
    %v2086 = vunpack.c.h.b16 %v865
    %v2087 = vunpack.c.l.b16 %v866
    %v2088 = vunpack.c.h.b16 %v866
    %v2089 = vunpack.c.l.b16 %v867
    %v2090 = vunpack.c.h.b16 %v867
    %v2091 = vunpack.c.l.b16 %v868
    %v2092 = vunpack.c.h.b16 %v868
    %v2093 = vunpack.c.l.b16 %v869
    %v2094 = vunpack.c.h.b16 %v869
    %v2095 = vunpack.c.l.b16 %v870
    %v2096 = vunpack.c.h.b16 %v870
    %v2097 = vunpack.c.l.b16 %v871
    %v2098 = vunpack.c.h.b16 %v871
    %v2099 = vunpack.c.l.b16 %v872
    %v2100 = vunpack.c.h.b16 %v872
    %v2101 = vunpack.c.l.b16 %v873
    %v2102 = vunpack.c.h.b16 %v873
    %v2103 = vunpack.c.l.b16 %v874
    %v2104 = vunpack.c.h.b16 %v874
    %v2105 = vunpack.c.l.b16 %v875
    %v2106 = vunpack.c.h.b16 %v875
    %v2107 = vunpack.c.l.b16 %v876
    %v2108 = vunpack.c.h.b16 %v876
    %v2109 = vunpack.c.l.b16 %v877
    %v2110 = vunpack.c.h.b16 %v877
    %v2111 = vunpack.c.l.b16 %v878
    %v2112 = vunpack.c.h.b16 %v878
    %v2113 = vunpack.c.l.b16 %v879
    %v2114 = vunpack.c.h.b16 %v879
    %v2115 = vunpack.c.l.b16 %v880
    %v2116 = vunpack.c.h.b16 %v880
    %v2117 = vunpack.c.l.b16 %v881
    %v2118 = vunpack.c.h.b16 %v881
    %v2119 = vunpack.c.l.b16 %v882
    %v2120 = vunpack.c.h.b16 %v882
    %v2121 = vunpack.c.l.b16 %v883
    %v2122 = vunpack.c.h.b16 %v883
    %v2123 = vunpack.c.l.b16 %v884
    %v2124 = vunpack.c.h.b16 %v884
    %v2125 = vunpack.c.l.b16 %v885
    %v2126 = vunpack.c.h.b16 %v885
    %v2127 = vunpack.c.l.b16 %v886
    %v2128 = vunpack.c.h.b16 %v886
    %v2129 = vunpack.c.l.b16 %v887
    %v2130 = vunpack.c.h.b16 %v887
    %v2131 = vunpack.c.l.b16 %v888
    %v2132 = vunpack.c.h.b16 %v888
    %v2133 = vunpack.c.l.b16 %v889
    %v2134 = vunpack.c.h.b16 %v889
    %v2135 = vunpack.c.l.b16 %v890
    %v2136 = vunpack.c.h.b16 %v890
    %v2137 = vunpack.c.l.b16 %v891
    %v2138 = vunpack.c.h.b16 %v891
    %v2139 = vunpack.c.l.b16 %v892
    %v2140 = vunpack.c.h.b16 %v892
    %v2141 = vunpack.c.l.b16 %v893
    %v2142 = vunpack.c.h.b16 %v893
    %v2143 = vunpack.c.l.b16 %v894
    %v2144 = vunpack.c.h.b16 %v894
    %v2145 = vunpack.c.l.b16 %v895
    %v2146 = vunpack.c.h.b16 %v895
    %v2147 = vunpack.c.l.b16 %v896
    %v2148 = vunpack.c.h.b16 %v896
    %v2149 = vunpack.c.l.b16 %v897
    %v2150 = vunpack.c.h.b16 %v897
    %v2151 = vunpack.c.l.b16 %v898
    %v2152 = vunpack.c.h.b16 %v898
    %v2153 = vunpack.c.l.b16 %v899
    %v2154 = vunpack.c.h.b16 %v899
    %v2155 = vunpack.c.l.b16 %v900
    %v2156 = vunpack.c.h.b16 %v900
    %v2157 = vunpack.c.l.b16 %v901
    %v2158 = vunpack.c.h.b16 %v901
    %v2159 = vunpack.c.l.b16 %v902
    %v2160 = vunpack.c.h.b16 %v902
    %v2161 = vunpack.c.l.b16 %v903
    %v2162 = vunpack.c.h.b16 %v903
    %v2163 = vunpack.c.l.b16 %v904
    %v2164 = vunpack.c.h.b16 %v904
    %v2165 = vunpack.c.l.b16 %v905
    %v2166 = vunpack.c.h.b16 %v905
    %v2167 = vunpack.c.l.b16 %v906
    %v2168 = vunpack.c.h.b16 %v906
    %v2169 = vunpack.c.l.b16 %v907
    %v2170 = vunpack.c.h.b16 %v907
    %v2171 = vunpack.c.l.b16 %v908
    %v2172 = vunpack.c.h.b16 %v908
    %v2173 = vunpack.c.l.b16 %v909
    %v2174 = vunpack.c.h.b16 %v909
    %v2175 = vunpack.c.l.b16 %v910
    %v2176 = vunpack.c.h.b16 %v910
    %v2177 = vunpack.c.l.b16 %v911
    %v2178 = vunpack.c.h.b16 %v911
    %v2179 = vunpack.c.l.b16 %v912
    %v2180 = vunpack.c.h.b16 %v912
    %v2181 = vunpack.c.l.b16 %v913
    %v2182 = vunpack.c.h.b16 %v913
    %v2183 = vunpack.c.l.b16 %v914
    %v2184 = vunpack.c.h.b16 %v914
    %v2185 = vunpack.c.l.b16 %v915
    %v2186 = vunpack.c.h.b16 %v915
    %v2187 = vunpack.c.l.b16 %v916
    %v2188 = vunpack.c.h.b16 %v916
    %v2189 = vunpack.c.l.b16 %v917
    %v2190 = vunpack.c.h.b16 %v917
    %v2191 = vunpack.c.l.b16 %v918
    %v2192 = vunpack.c.h.b16 %v918
    %v2193 = vunpack.c.l.b16 %v919
    %v2194 = vunpack.c.h.b16 %v919
    %v2195 = vunpack.c.l.b16 %v920
    %v2196 = vunpack.c.h.b16 %v920
    %v2197 = vunpack.c.l.b16 %v921
    %v2198 = vunpack.c.h.b16 %v921
    %v2199 = vunpack.c.l.b16 %v922
    %v2200 = vunpack.c.h.b16 %v922
    %v2201 = vunpack.c.l.b16 %v923
    %v2202 = vunpack.c.h.b16 %v923
    %v2203 = vunpack.c.l.b16 %v924
    %v2204 = vunpack.c.h.b16 %v924
    %v2205 = vunpack.c.l.b16 %v925
    %v2206 = vunpack.c.h.b16 %v925
    %v2207 = vunpack.c.l.b16 %v926
    %v2208 = vunpack.c.h.b16 %v926
    %v2209 = vunpack.c.l.b16 %v927
    %v2210 = vunpack.c.h.b16 %v927
    %v2211 = vunpack.c.l.b16 %v928
    %v2212 = vunpack.c.h.b16 %v928
    %v2213 = vunpack.c.l.b16 %v929
    %v2214 = vunpack.c.h.b16 %v929
    %v2215 = vunpack.c.l.b16 %v930
    %v2216 = vunpack.c.h.b16 %v930
    %v2217 = vunpack.c.l.b16 %v931
    %v2218 = vunpack.c.h.b16 %v931
    %v2219 = vunpack.c.l.b16 %v932
    %v2220 = vunpack.c.h.b16 %v932
    %v2221 = vunpack.c.l.b16 %v933
    %v2222 = vunpack.c.h.b16 %v933
    %v2223 = vunpack.c.l.b16 %v934
    %v2224 = vunpack.c.h.b16 %v934
    %v2225 = vunpack.c.l.b16 %v935
    %v2226 = vunpack.c.h.b16 %v935
    %v2227 = vunpack.c.l.b16 %v936
    %v2228 = vunpack.c.h.b16 %v936
    %v2229 = vunpack.c.l.b16 %v937
    %v2230 = vunpack.c.h.b16 %v937
    %v2231 = vunpack.c.l.b16 %v938
    %v2232 = vunpack.c.h.b16 %v938
    %v2233 = vunpack.c.l.b16 %v939
    %v2234 = vunpack.c.h.b16 %v939
    %v2235 = vunpack.c.l.b16 %v940
    %v2236 = vunpack.c.h.b16 %v940
    %v2237 = vunpack.c.l.b16 %v941
    %v2238 = vunpack.c.h.b16 %v941
    %v2239 = vunpack.c.l.b16 %v942
    %v2240 = vunpack.c.h.b16 %v942
    %v2241 = vunpack.c.l.b16 %v943
    %v2242 = vunpack.c.h.b16 %v943
    %v2243 = vunpack.c.l.b16 %v944
    %v2244 = vunpack.c.h.b16 %v944
    %v2245 = vunpack.c.l.b16 %v945
    %v2246 = vunpack.c.h.b16 %v945
    %v2247 = vunpack.c.l.b16 %v946
    %v2248 = vunpack.c.h.b16 %v946
    %v2249 = vunpack.c.l.b16 %v947
    %v2250 = vunpack.c.h.b16 %v947
    %v2251 = vunpack.c.l.b16 %v948
    %v2252 = vunpack.c.h.b16 %v948
    %v2253 = vunpack.c.l.b16 %v949
    %v2254 = vunpack.c.h.b16 %v949
    %v2255 = vunpack.c.l.b16 %v950
    %v2256 = vunpack.c.h.b16 %v950
    %v2257 = vunpack.c.l.b16 %v951
    %v2258 = vunpack.c.h.b16 %v951
    %v2259 = vunpack.c.l.b16 %v952
    %v2260 = vunpack.c.h.b16 %v952
    %v2261 = vunpack.c.l.b16 %v953
    %v2262 = vunpack.c.h.b16 %v953
    %v2263 = vunpack.c.l.b16 %v954
    %v2264 = vunpack.c.h.b16 %v954
    %v2265 = vunpack.c.l.b16 %v955
    %v2266 = vunpack.c.h.b16 %v955
    %v2267 = vunpack.c.l.b16 %v956
    %v2268 = vunpack.c.h.b16 %v956
    %v2269 = vunpack.c.l.b16 %v957
    %v2270 = vunpack.c.h.b16 %v957
    %v2271 = vunpack.c.l.b16 %v958
    %v2272 = vunpack.c.h.b16 %v958
    %v2273 = vunpack.c.l.b16 %v959
    %v2274 = vunpack.c.h.b16 %v959
    %v2275 = vunpack.c.l.b16 %v960
    %v2276 = vunpack.c.h.b16 %v960
    %v2277 = vunpack.c.l.b16 %v961
    %v2278 = vunpack.c.h.b16 %v961
    %v2279 = vunpack.c.l.b16 %v962
    %v2280 = vunpack.c.h.b16 %v962
    %v2281 = vunpack.c.l.b16 %v963
    %v2282 = vunpack.c.h.b16 %v963
    %v2283 = vunpack.c.l.b16 %v964
    %v2284 = vunpack.c.h.b16 %v964
    %v2285 = vunpack.c.l.b16 %v965
    %v2286 = vunpack.c.h.b16 %v965
    %v2287 = vunpack.c.l.b16 %v966
    %v2288 = vunpack.c.h.b16 %v966
    %v2289 = vunpack.c.l.b16 %v967
    %v2290 = vunpack.c.h.b16 %v967
    %v2291 = vunpack.c.l.b16 %v968
    %v2292 = vunpack.c.h.b16 %v968
    %v2293 = vunpack.c.l.b16 %v969
    %v2294 = vunpack.c.h.b16 %v969
    %v2295 = vunpack.c.l.b16 %v970
    %v2296 = vunpack.c.h.b16 %v970
    %v2297 = vunpack.c.l.b16 %v971
    %v2298 = vunpack.c.h.b16 %v971
    %v2299 = vunpack.c.l.b16 %v972
    %v2300 = vunpack.c.h.b16 %v972
    %v2301 = vunpack.c.l.b16 %v973
    %v2302 = vunpack.c.h.b16 %v973
    %v2303 = vunpack.c.l.b16 %v974
    %v2304 = vunpack.c.h.b16 %v974
    %v2305 = vunpack.c.l.b16 %v975
    %v2306 = vunpack.c.h.b16 %v975
    %v2307 = vunpack.c.l.b16 %v976
    %v2308 = vunpack.c.h.b16 %v976
    %v2309 = vunpack.c.l.b16 %v977
    %v2310 = vunpack.c.h.b16 %v977
    %v2311 = vunpack.c.l.b16 %v978
    %v2312 = vunpack.c.h.b16 %v978
    %v2313 = vunpack.c.l.b16 %v979
    %v2314 = vunpack.c.h.b16 %v979
    %v2315 = vunpack.c.l.b16 %v980
    %v2316 = vunpack.c.h.b16 %v980
    %v2317 = vunpack.c.l.b16 %v981
    %v2318 = vunpack.c.h.b16 %v981
    %v2319 = vunpack.c.l.b16 %v982
    %v2320 = vunpack.c.h.b16 %v982
    %v2321 = vunpack.c.l.b16 %v983
    %v2322 = vunpack.c.h.b16 %v983
    %v2323 = vunpack.c.l.b16 %v984
    %v2324 = vunpack.c.h.b16 %v984
    %v2325 = vunpack.c.l.b16 %v985
    %v2326 = vunpack.c.h.b16 %v985
    %v2327 = vunpack.c.l.b16 %v986
    %v2328 = vunpack.c.h.b16 %v986
    %v2329 = vunpack.c.l.b16 %v987
    %v2330 = vunpack.c.h.b16 %v987
    %v2331 = vunpack.c.l.b16 %v988
    %v2332 = vunpack.c.h.b16 %v988
    %v2333 = vunpack.c.l.b16 %v989
    %v2334 = vunpack.c.h.b16 %v989
    %v2335 = vunpack.c.l.b16 %v990
    %v2336 = vunpack.c.h.b16 %v990
    %v2337 = vunpack.c.l.b16 %v991
    %v2338 = vunpack.c.h.b16 %v991
    %v2339 = vunpack.c.l.b16 %v992
    %v2340 = vunpack.c.h.b16 %v992
    %v2341 = vunpack.c.l.b16 %v993
    %v2342 = vunpack.c.h.b16 %v993
    %v2343 = vunpack.c.l.b16 %v994
    %v2344 = vunpack.c.h.b16 %v994
    %v2345 = vunpack.c.l.b16 %v995
    %v2346 = vunpack.c.h.b16 %v995
    %v2347 = vunpack.c.l.b16 %v996
    %v2348 = vunpack.c.h.b16 %v996
    %v2349 = vunpack.c.l.b16 %v997
    %v2350 = vunpack.c.h.b16 %v997
    %v2351 = vunpack.c.l.b16 %v998
    %v2352 = vunpack.c.h.b16 %v998
    %v2353 = vunpack.c.l.b16 %v999
    %v2354 = vunpack.c.h.b16 %v999
    %v2355 = vunpack.c.l.b16 %v1000
    %v2356 = vunpack.c.h.b16 %v1000
    %v2357 = vunpack.c.l.b16 %v1001
    %v2358 = vunpack.c.h.b16 %v1001
    %v2359 = vunpack.c.l.b16 %v1002
    %v2360 = vunpack.c.h.b16 %v1002
    %v2361 = vunpack.c.l.b16 %v1003
    %v2362 = vunpack.c.h.b16 %v1003
    %v2363 = vunpack.c.l.b16 %v1004
    %v2364 = vunpack.c.h.b16 %v1004
    %v2365 = vunpack.c.l.b16 %v1005
    %v2366 = vunpack.c.h.b16 %v1005
    %v2367 = vunpack.c.l.b16 %v1006
    %v2368 = vunpack.c.h.b16 %v1006
    %v2369 = vunpack.c.l.b16 %v1007
    %v2370 = vunpack.c.h.b16 %v1007
    %v2371 = vunpack.c.l.b16 %v1008
    %v2372 = vunpack.c.h.b16 %v1008
    %v2373 = vunpack.c.l.b16 %v1009
    %v2374 = vunpack.c.h.b16 %v1009
    %v2375 = vunpack.c.l.b16 %v1010
    %v2376 = vunpack.c.h.b16 %v1010
    %v2377 = vunpack.c.l.b16 %v1011
    %v2378 = vunpack.c.h.b16 %v1011
    %v2379 = vunpack.c.l.b16 %v1012
    %v2380 = vunpack.c.h.b16 %v1012
    %v2381 = vunpack.c.l.b16 %v1013
    %v2382 = vunpack.c.h.b16 %v1013
    %v2383 = vunpack.c.l.b16 %v1014
    %v2384 = vunpack.c.h.b16 %v1014
    %v2385 = vunpack.c.l.b16 %v1015
    %v2386 = vunpack.c.h.b16 %v1015
    %v2387 = vunpack.c.l.b16 %v1016
    %v2388 = vunpack.c.h.b16 %v1016
    %v2389 = vunpack.c.l.b16 %v1017
    %v2390 = vunpack.c.h.b16 %v1017
    %v2391 = vunpack.c.l.b16 %v1018
    %v2392 = vunpack.c.h.b16 %v1018
    %v2393 = vunpack.c.l.b16 %v1019
    %v2394 = vunpack.c.h.b16 %v1019
    %v2395 = vunpack.c.l.b16 %v1020
    %v2396 = vunpack.c.h.b16 %v1020
    %v2397 = vunpack.c.l.b16 %v1021
    %v2398 = vunpack.c.h.b16 %v1021
    %v2399 = vunpack.c.l.b16 %v1022
    %v2400 = vunpack.c.h.b16 %v1022
    %v2401 = vunpack.c.l.b16 %v1023
    %v2402 = vunpack.c.h.b16 %v1023
    %v2403 = vunpack.c.l.b16 %v1024
    %v2404 = vunpack.c.h.b16 %v1024
    %v2405 = vunpack.c.l.b16 %v1025
    %v2406 = vunpack.c.h.b16 %v1025
    %v2407 = vunpack.c.l.b16 %v1026
    %v2408 = vunpack.c.h.b16 %v1026
    %v2409 = vunpack.c.l.b16 %v1027
    %v2410 = vunpack.c.h.b16 %v1027
    %v2411 = vunpack.c.l.b16 %v1028
    %v2412 = vunpack.c.h.b16 %v1028
    %v2413 = vunpack.c.l.b16 %v1029
    %v2414 = vunpack.c.h.b16 %v1029
    %v2415 = vunpack.c.l.b16 %v1030
    %v2416 = vunpack.c.h.b16 %v1030
    %v2417 = vunpack.c.l.b16 %v1031
    %v2418 = vunpack.c.h.b16 %v1031
    %v2419 = vunpack.c.l.b16 %v1032
    %v2420 = vunpack.c.h.b16 %v1032
    %v2421 = vunpack.c.l.b16 %v1033
    %v2422 = vunpack.c.h.b16 %v1033
    %v2423 = vunpack.c.l.b16 %v1034
    %v2424 = vunpack.c.h.b16 %v1034
    %v2425 = vunpack.c.l.b16 %v1035
    %v2426 = vunpack.c.h.b16 %v1035
    %v2427 = vunpack.c.l.b16 %v1036
    %v2428 = vunpack.c.h.b16 %v1036
    %v2429 = vunpack.c.l.b16 %v1037
    %v2430 = vunpack.c.h.b16 %v1037
    %v2431 = vunpack.c.l.b16 %v1038
    %v2432 = vunpack.c.h.b16 %v1038
    %v2433 = vunpack.c.l.b16 %v1039
    %v2434 = vunpack.c.h.b16 %v1039
    %v2435 = vunpack.c.l.b16 %v1040
    %v2436 = vunpack.c.h.b16 %v1040
    %v2437 = vunpack.c.l.b16 %v1041
    %v2438 = vunpack.c.h.b16 %v1041
    %v2439 = vunpack.c.l.b16 %v1042
    %v2440 = vunpack.c.h.b16 %v1042
    %v2441 = vunpack.c.l.b16 %v1043
    %v2442 = vunpack.c.h.b16 %v1043
    %v2443 = vunpack.c.l.b16 %v1044
    %v2444 = vunpack.c.h.b16 %v1044
    %v2445 = vunpack.c.l.b16 %v1045
    %v2446 = vunpack.c.h.b16 %v1045
    %v2447 = vunpack.c.l.b16 %v1046
    %v2448 = vunpack.c.h.b16 %v1046
    %v2449 = vunpack.c.l.b16 %v1047
    %v2450 = vunpack.c.h.b16 %v1047
    %v2451 = vunpack.c.l.b16 %v1048
    %v2452 = vunpack.c.h.b16 %v1048
    %v2453 = vunpack.c.l.b16 %v1049
    %v2454 = vunpack.c.h.b16 %v1049
    %v2455 = vunpack.c.l.b16 %v1050
    %v2456 = vunpack.c.h.b16 %v1050
    %v2457 = vunpack.c.l.b16 %v1051
    %v2458 = vunpack.c.h.b16 %v1051
    %v2459 = vunpack.c.l.b16 %v1052
    %v2460 = vunpack.c.h.b16 %v1052
    %v2461 = vunpack.c.l.b16 %v1053
    %v2462 = vunpack.c.h.b16 %v1053
    %v2463 = vunpack.c.l.b16 %v1054
    %v2464 = vunpack.c.h.b16 %v1054
    %v2465 = vunpack.c.l.b16 %v1055
    %v2466 = vunpack.c.h.b16 %v1055
    %v2467 = vunpack.c.l.b16 %v1056
    %v2468 = vunpack.c.h.b16 %v1056
    %v2469 = vunpack.c.l.b16 %v1057
    %v2470 = vunpack.c.h.b16 %v1057
    %v2471 = vunpack.c.l.b16 %v1058
    %v2472 = vunpack.c.h.b16 %v1058
    %v2473 = vunpack.c.l.b16 %v1059
    %v2474 = vunpack.c.h.b16 %v1059
    %v2475 = vunpack.c.l.b16 %v1060
    %v2476 = vunpack.c.h.b16 %v1060
    %v2477 = vunpack.c.l.b16 %v1061
    %v2478 = vunpack.c.h.b16 %v1061
    %v2479 = vunpack.c.l.b16 %v1062
    %v2480 = vunpack.c.h.b16 %v1062
    %v2481 = vunpack.c.l.b16 %v1063
    %v2482 = vunpack.c.h.b16 %v1063
    %v2483 = vunpack.c.l.b16 %v1064
    %v2484 = vunpack.c.h.b16 %v1064
    %v2485 = vunpack.c.l.b16 %v1065
    %v2486 = vunpack.c.h.b16 %v1065
    %v2487 = vunpack.c.l.b16 %v1066
    %v2488 = vunpack.c.h.b16 %v1066
    %v2489 = vunpack.c.l.b16 %v1067
    %v2490 = vunpack.c.h.b16 %v1067
    %v2491 = vunpack.c.l.b16 %v1068
    %v2492 = vunpack.c.h.b16 %v1068
    %v2493 = vunpack.c.l.b16 %v1069
    %v2494 = vunpack.c.h.b16 %v1069
    %v2495 = vunpack.c.l.b16 %v1070
    %v2496 = vunpack.c.h.b16 %v1070
    %v2497 = vunpack.c.l.b16 %v1071
    %v2498 = vunpack.c.h.b16 %v1071
    %v2499 = vunpack.c.l.b16 %v1072
    %v2500 = vunpack.c.h.b16 %v1072
    %v2501 = vunpack.c.l.b16 %v1073
    %v2502 = vunpack.c.h.b16 %v1073
    %v2503 = vunpack.c.l.b16 %v1074
    %v2504 = vunpack.c.h.b16 %v1074
    %v2505 = vunpack.c.l.b16 %v1075
    %v2506 = vunpack.c.h.b16 %v1075
    %v2507 = vunpack.c.l.b16 %v1076
    %v2508 = vunpack.c.h.b16 %v1076
    %v2509 = vunpack.c.l.b16 %v1077
    %v2510 = vunpack.c.h.b16 %v1077
    %v2511 = vunpack.c.l.b16 %v1078
    %v2512 = vunpack.c.h.b16 %v1078
    %v2513 = vunpack.c.l.b16 %v1079
    %v2514 = vunpack.c.h.b16 %v1079
    %v2515 = vunpack.c.l.b16 %v1080
    %v2516 = vunpack.c.h.b16 %v1080
    %v2517 = vunpack.c.l.b16 %v1081
    %v2518 = vunpack.c.h.b16 %v1081
    %v2519 = vunpack.c.l.b16 %v1082
    %v2520 = vunpack.c.h.b16 %v1082
    %v2521 = vunpack.c.l.b16 %v1083
    %v2522 = vunpack.c.h.b16 %v1083
    %v2523 = vunpack.c.l.b16 %v1084
    %v2524 = vunpack.c.h.b16 %v1084
    %v2525 = vunpack.c.l.b16 %v1085
    %v2526 = vunpack.c.h.b16 %v1085
    %v2527 = vunpack.c.l.b16 %v1086
    %v2528 = vunpack.c.h.b16 %v1086
    %v2529 = vunpack.c.l.b16 %v1087
    %v2530 = vunpack.c.h.b16 %v1087
    %v2531 = vunpack.c.l.b16 %v1088
    %v2532 = vunpack.c.h.b16 %v1088
    %v2533 = vunpack.c.l.b16 %v1089
    %v2534 = vunpack.c.h.b16 %v1089
    %v2535 = vunpack.c.l.b16 %v1090
    %v2536 = vunpack.c.h.b16 %v1090
    %v2537 = vunpack.c.l.b16 %v1091
    %v2538 = vunpack.c.h.b16 %v1091
    %v2539 = vunpack.c.l.b16 %v1092
    %v2540 = vunpack.c.h.b16 %v1092
    %v2541 = vunpack.c.l.b16 %v1093
    %v2542 = vunpack.c.h.b16 %v1093
    %v2543 = vunpack.c.l.b16 %v1094
    %v2544 = vunpack.c.h.b16 %v1094
    %v2545 = vunpack.c.l.b16 %v1095
    %v2546 = vunpack.c.h.b16 %v1095
    %v2547 = vunpack.c.l.b16 %v1096
    %v2548 = vunpack.c.h.b16 %v1096
    %v2549 = vunpack.c.l.b16 %v1097
    %v2550 = vunpack.c.h.b16 %v1097
    %v2551 = vunpack.c.l.b16 %v1098
    %v2552 = vunpack.c.h.b16 %v1098
    %v2553 = vunpack.c.l.b16 %v1099
    %v2554 = vunpack.c.h.b16 %v1099
    %v2555 = vunpack.c.l.b16 %v1100
    %v2556 = vunpack.c.h.b16 %v1100
    %v2557 = vunpack.c.l.b16 %v1101
    %v2558 = vunpack.c.h.b16 %v1101
    %v2559 = vunpack.c.l.b16 %v1102
    %v2560 = vunpack.c.h.b16 %v1102
    %v2561 = vunpack.c.l.b16 %v1103
    %v2562 = vunpack.c.h.b16 %v1103
    %v2563 = vunpack.c.l.b16 %v1104
    %v2564 = vunpack.c.h.b16 %v1104
    %v2565 = vunpack.c.l.b16 %v1105
    %v2566 = vunpack.c.h.b16 %v1105
    %v2567 = vunpack.c.l.b16 %v1106
    %v2568 = vunpack.c.h.b16 %v1106
    %v2569 = vunpack.c.l.b16 %v1107
    %v2570 = vunpack.c.h.b16 %v1107
    %v2571 = vunpack.c.l.b16 %v1108
    %v2572 = vunpack.c.h.b16 %v1108
    %v2573 = vunpack.c.l.b16 %v1109
    %v2574 = vunpack.c.h.b16 %v1109
    %v2575 = vunpack.c.l.b16 %v1110
    %v2576 = vunpack.c.h.b16 %v1110
    %v2577 = vunpack.c.l.b16 %v1111
    %v2578 = vunpack.c.h.b16 %v1111
    %v2579 = vunpack.c.l.b16 %v1112
    %v2580 = vunpack.c.h.b16 %v1112
    %v2581 = vunpack.c.l.b16 %v1113
    %v2582 = vunpack.c.h.b16 %v1113
    %v2583 = vunpack.c.l.b16 %v1114
    %v2584 = vunpack.c.h.b16 %v1114
    %v2585 = vunpack.c.l.b16 %v1115
    %v2586 = vunpack.c.h.b16 %v1115
    %v2587 = vunpack.c.l.b16 %v1116
    %v2588 = vunpack.c.h.b16 %v1116
    %v2589 = vunpack.c.l.b16 %v1117
    %v2590 = vunpack.c.h.b16 %v1117
    %v2591 = vunpack.c.l.b16 %v1118
    %v2592 = vunpack.c.h.b16 %v1118
    %v2593 = vunpack.c.l.b16 %v1119
    %v2594 = vunpack.c.h.b16 %v1119
    %v2595 = vunpack.c.l.b16 %v1120
    %v2596 = vunpack.c.h.b16 %v1120
    %v2597 = vunpack.c.l.b16 %v1121
    %v2598 = vunpack.c.h.b16 %v1121
    %v2599 = vunpack.c.l.b16 %v1122
    %v2600 = vunpack.c.h.b16 %v1122
    %v2601 = vunpack.c.l.b16 %v1123
    %v2602 = vunpack.c.h.b16 %v1123
    %v2603 = vunpack.c.l.b16 %v1124
    %v2604 = vunpack.c.h.b16 %v1124
    %v2605 = vunpack.c.l.b16 %v1125
    %v2606 = vunpack.c.h.b16 %v1125
    %v2607 = vunpack.c.l.b16 %v1126
    %v2608 = vunpack.c.h.b16 %v1126
    %v2609 = vunpack.c.l.b16 %v1127
    %v2610 = vunpack.c.h.b16 %v1127
    %v2611 = vunpack.c.l.b16 %v1128
    %v2612 = vunpack.c.h.b16 %v1128
    %v2613 = vunpack.c.l.b16 %v1129
    %v2614 = vunpack.c.h.b16 %v1129
    %v2615 = vunpack.c.l.b16 %v1130
    %v2616 = vunpack.c.h.b16 %v1130
    %v2617 = vunpack.c.l.b16 %v1131
    %v2618 = vunpack.c.h.b16 %v1131
    %v2619 = vunpack.c.l.b16 %v1132
    %v2620 = vunpack.c.h.b16 %v1132
    %v2621 = vunpack.c.l.b16 %v1133
    %v2622 = vunpack.c.h.b16 %v1133
    %v2623 = vunpack.c.l.b16 %v1134
    %v2624 = vunpack.c.h.b16 %v1134
    %v2625 = vunpack.c.l.b16 %v1135
    %v2626 = vunpack.c.h.b16 %v1135
    %v2627 = vunpack.c.l.b16 %v1136
    %v2628 = vunpack.c.h.b16 %v1136
    %v2629 = vunpack.c.l.b16 %v1137
    %v2630 = vunpack.c.h.b16 %v1137
    %v2631 = vunpack.c.l.b16 %v1138
    %v2632 = vunpack.c.h.b16 %v1138
    %v2633 = vunpack.c.l.b16 %v1139
    %v2634 = vunpack.c.h.b16 %v1139
    %v2635 = vunpack.c.l.b16 %v1140
    %v2636 = vunpack.c.h.b16 %v1140
    %v2637 = vunpack.c.l.b16 %v1141
    %v2638 = vunpack.c.h.b16 %v1141
    %v2639 = vunpack.c.l.b16 %v1142
    %v2640 = vunpack.c.h.b16 %v1142
    %v2641 = vunpack.c.l.b16 %v1143
    %v2642 = vunpack.c.h.b16 %v1143
    %v2643 = vunpack.c.l.b16 %v1144
    %v2644 = vunpack.c.h.b16 %v1144
    %v2645 = vunpack.c.l.b16 %v1145
    %v2646 = vunpack.c.h.b16 %v1145
    %v2647 = vunpack.c.l.b16 %v1146
    %v2648 = vunpack.c.h.b16 %v1146
    %v2649 = vunpack.c.l.b16 %v1147
    %v2650 = vunpack.c.h.b16 %v1147
    %v2651 = vunpack.c.l.b16 %v1148
    %v2652 = vunpack.c.h.b16 %v1148
    %v2653 = vunpack.c.l.b16 %v1149
    %v2654 = vunpack.c.h.b16 %v1149
    %v2655 = vunpack.c.l.b16 %v1150
    %v2656 = vunpack.c.h.b16 %v1150
    %v2657 = vunpack.c.l.b16 %v1151
    %v2658 = vunpack.c.h.b16 %v1151
    %v2659 = vunpack.c.l.b16 %v1152
    %v2660 = vunpack.c.h.b16 %v1152
    %v2661 = vunpack.c.l.b16 %v1153
    %v2662 = vunpack.c.h.b16 %v1153
    %v2663 = vunpack.c.l.b16 %v1154
    %v2664 = vunpack.c.h.b16 %v1154
    %v2665 = vunpack.c.l.b16 %v1155
    %v2666 = vunpack.c.h.b16 %v1155
    %v2667 = vunpack.c.l.b16 %v1156
    %v2668 = vunpack.c.h.b16 %v1156
    %v2669 = vunpack.c.l.b16 %v1157
    %v2670 = vunpack.c.h.b16 %v1157
    %v2671 = vunpack.c.l.b16 %v1158
    %v2672 = vunpack.c.h.b16 %v1158
    %v2673 = vunpack.c.l.b16 %v1159
    %v2674 = vunpack.c.h.b16 %v1159
    %v2675 = vunpack.c.l.b16 %v1160
    %v2676 = vunpack.c.h.b16 %v1160
    %v2677 = vunpack.c.l.b16 %v1161
    %v2678 = vunpack.c.h.b16 %v1161
    %v2679 = vunpack.c.l.b16 %v1162
    %v2680 = vunpack.c.h.b16 %v1162
    %v2681 = vunpack.c.l.b16 %v1163
    %v2682 = vunpack.c.h.b16 %v1163
    %v2683 = vunpack.c.l.b16 %v1164
    %v2684 = vunpack.c.h.b16 %v1164
    %v2685 = vunpack.c.l.b16 %v1165
    %v2686 = vunpack.c.h.b16 %v1165
    %v2687 = vunpack.c.l.b16 %v1166
    %v2688 = vunpack.c.h.b16 %v1166
    %v2689 = vunpack.c.l.b16 %v1167
    %v2690 = vunpack.c.h.b16 %v1167
    %v2691 = vunpack.c.l.b16 %v1168
    %v2692 = vunpack.c.h.b16 %v1168
    %v2693 = vunpack.c.l.b16 %v1169
    %v2694 = vunpack.c.h.b16 %v1169
    %v2695 = vunpack.c.l.b16 %v1170
    %v2696 = vunpack.c.h.b16 %v1170
    %v2697 = vunpack.c.l.b16 %v1171
    %v2698 = vunpack.c.h.b16 %v1171
    %v2699 = vunpack.c.l.b16 %v1172
    %v2700 = vunpack.c.h.b16 %v1172
    %v2701 = vunpack.c.l.b16 %v1173
    %v2702 = vunpack.c.h.b16 %v1173
    %v2703 = vunpack.c.l.b16 %v1174
    %v2704 = vunpack.c.h.b16 %v1174
    %v2705 = vunpack.c.l.b16 %v1175
    %v2706 = vunpack.c.h.b16 %v1175
    %v2707 = vunpack.c.l.b16 %v1176
    %v2708 = vunpack.c.h.b16 %v1176
    %v2709 = vunpack.c.l.b16 %v1177
    %v2710 = vunpack.c.h.b16 %v1177
    %v2711 = vunpack.c.l.b16 %v1178
    %v2712 = vunpack.c.h.b16 %v1178
    %v2713 = vunpack.c.l.b16 %v1179
    %v2714 = vunpack.c.h.b16 %v1179
    %v2715 = vunpack.c.l.b16 %v1180
    %v2716 = vunpack.c.h.b16 %v1180
    %v2717 = vunpack.c.l.b16 %v1181
    %v2718 = vunpack.c.h.b16 %v1181
    %v2719 = vunpack.c.l.b16 %v1182
    %v2720 = vunpack.c.h.b16 %v1182
    %v2721 = vunpack.c.l.b16 %v1183
    %v2722 = vunpack.c.h.b16 %v1183
    %v2723 = vunpack.c.l.b16 %v1184
    %v2724 = vunpack.c.h.b16 %v1184
    %v2725 = vunpack.c.l.b16 %v1185
    %v2726 = vunpack.c.h.b16 %v1185
    %v2727 = vunpack.c.l.b16 %v1186
    %v2728 = vunpack.c.h.b16 %v1186
    %v2729 = vunpack.c.l.b16 %v1187
    %v2730 = vunpack.c.h.b16 %v1187
    %v2731 = vunpack.c.l.b16 %v1188
    %v2732 = vunpack.c.h.b16 %v1188
    %v2733 = vunpack.c.l.b16 %v1189
    %v2734 = vunpack.c.h.b16 %v1189
    %v2735 = vunpack.c.l.b16 %v1190
    %v2736 = vunpack.c.h.b16 %v1190
    %v2737 = vunpack.c.l.b16 %v1191
    %v2738 = vunpack.c.h.b16 %v1191
    %v2739 = vunpack.c.l.b16 %v1192
    %v2740 = vunpack.c.h.b16 %v1192
    %v2741 = vunpack.c.l.b16 %v1193
    %v2742 = vunpack.c.h.b16 %v1193
    %v2743 = vunpack.c.l.b16 %v1194
    %v2744 = vunpack.c.h.b16 %v1194
    %v2745 = vunpack.c.l.b16 %v1195
    %v2746 = vunpack.c.h.b16 %v1195
    %v2747 = vunpack.c.l.b16 %v1196
    %v2748 = vunpack.c.h.b16 %v1196
    %v2749 = vunpack.c.l.b16 %v1197
    %v2750 = vunpack.c.h.b16 %v1197
    %v2751 = vunpack.c.l.b16 %v1198
    %v2752 = vunpack.c.h.b16 %v1198
    %v2753 = vunpack.c.l.b16 %v1199
    %v2754 = vunpack.c.h.b16 %v1199
    %v2755 = vunpack.c.l.b16 %v1200
    %v2756 = vunpack.c.h.b16 %v1200
    %v2757 = vunpack.c.l.b16 %v1201
    %v2758 = vunpack.c.h.b16 %v1201
    %v2759 = vunpack.c.l.b16 %v1202
    %v2760 = vunpack.c.h.b16 %v1202
    %v2761 = vunpack.c.l.b16 %v1203
    %v2762 = vunpack.c.h.b16 %v1203
    %v2763 = vunpack.c.l.b16 %v1204
    %v2764 = vunpack.c.h.b16 %v1204
    %v2765 = vunpack.c.l.b16 %v1205
    %v2766 = vunpack.c.h.b16 %v1205
    %v2767 = vunpack.c.l.b16 %v1206
    %v2768 = vunpack.c.h.b16 %v1206
    %v2769 = vunpack.c.l.b16 %v1207
    %v2770 = vunpack.c.h.b16 %v1207
    %v2771 = vunpack.c.l.b16 %v1208
    %v2772 = vunpack.c.h.b16 %v1208
    %v2773 = vunpack.c.l.b16 %v1209
    %v2774 = vunpack.c.h.b16 %v1209
    %v2775 = vunpack.c.l.b16 %v1210
    %v2776 = vunpack.c.h.b16 %v1210
    %v2777 = vunpack.c.l.b16 %v1211
    %v2778 = vunpack.c.h.b16 %v1211
    %v2779 = vunpack.c.l.b16 %v1212
    %v2780 = vunpack.c.h.b16 %v1212
    %v2781 = vunpack.c.l.b16 %v1213
    %v2782 = vunpack.c.h.b16 %v1213
    %v2783 = vunpack.c.l.b16 %v1214
    %v2784 = vunpack.c.h.b16 %v1214
    %v2785 = vunpack.c.l.b16 %v1215
    %v2786 = vunpack.c.h.b16 %v1215
    %v2787 = vunpack.c.l.b16 %v1216
    %v2788 = vunpack.c.h.b16 %v1216
    %v2789 = vunpack.c.l.b16 %v1217
    %v2790 = vunpack.c.h.b16 %v1217
    %v2791 = vunpack.c.l.b16 %v1218
    %v2792 = vunpack.c.h.b16 %v1218
    %v2793 = vunpack.c.l.b16 %v1219
    %v2794 = vunpack.c.h.b16 %v1219
    %v2795 = vunpack.c.l.b16 %v1220
    %v2796 = vunpack.c.h.b16 %v1220
    %v2797 = vunpack.c.l.b16 %v1221
    %v2798 = vunpack.c.h.b16 %v1221
    %v2799 = vunpack.c.l.b16 %v1222
    %v2800 = vunpack.c.h.b16 %v1222
    %v2801 = vpack.c.b16 %v1785, %v1777
    %v2802 = vpack.c.b16 %v1786, %v1778
    %v2803 = vpack.c.b16 %v1787, %v1779
    %v2804 = vpack.c.b16 %v1788, %v1780
    %v2805 = vpack.c.b16 %v1789, %v1781
    %v2806 = vpack.c.b16 %v1790, %v1782
    %v2807 = vpack.c.b16 %v1791, %v1783
    %v2808 = vpack.c.b16 %v1792, %v1784
    %v2809 = vpack.c.b16 %v1801, %v1793
    %v2810 = vpack.c.b16 %v1802, %v1794
    %v2811 = vpack.c.b16 %v1803, %v1795
    %v2812 = vpack.c.b16 %v1804, %v1796
    %v2813 = vpack.c.b16 %v1805, %v1797
    %v2814 = vpack.c.b16 %v1806, %v1798
    %v2815 = vpack.c.b16 %v1807, %v1799
    %v2816 = vpack.c.b16 %v1808, %v1800
    %v2817 = vpack.c.b16 %v1817, %v1809
    %v2818 = vpack.c.b16 %v1818, %v1810
    %v2819 = vpack.c.b16 %v1819, %v1811
    %v2820 = vpack.c.b16 %v1820, %v1812
    %v2821 = vpack.c.b16 %v1821, %v1813
    %v2822 = vpack.c.b16 %v1822, %v1814
    %v2823 = vpack.c.b16 %v1823, %v1815
    %v2824 = vpack.c.b16 %v1824, %v1816
    %v2825 = vpack.c.b16 %v1833, %v1825
    %v2826 = vpack.c.b16 %v1834, %v1826
    %v2827 = vpack.c.b16 %v1835, %v1827
    %v2828 = vpack.c.b16 %v1836, %v1828
    %v2829 = vpack.c.b16 %v1837, %v1829
    %v2830 = vpack.c.b16 %v1838, %v1830
    %v2831 = vpack.c.b16 %v1839, %v1831
    %v2832 = vpack.c.b16 %v1840, %v1832
    %v2833 = vpack.c.b16 %v1849, %v1841
    %v2834 = vpack.c.b16 %v1850, %v1842
    %v2835 = vpack.c.b16 %v1851, %v1843
    %v2836 = vpack.c.b16 %v1852, %v1844
    %v2837 = vpack.c.b16 %v1853, %v1845
    %v2838 = vpack.c.b16 %v1854, %v1846
    %v2839 = vpack.c.b16 %v1855, %v1847
    %v2840 = vpack.c.b16 %v1856, %v1848
    %v2841 = vpack.c.b16 %v1865, %v1857
    %v2842 = vpack.c.b16 %v1866, %v1858
    %v2843 = vpack.c.b16 %v1867, %v1859
    %v2844 = vpack.c.b16 %v1868, %v1860
    %v2845 = vpack.c.b16 %v1869, %v1861
    %v2846 = vpack.c.b16 %v1870, %v1862
    %v2847 = vpack.c.b16 %v1871, %v1863
    %v2848 = vpack.c.b16 %v1872, %v1864
    %v2849 = vpack.c.b16 %v1881, %v1873
    %v2850 = vpack.c.b16 %v1882, %v1874
    %v2851 = vpack.c.b16 %v1883, %v1875
    %v2852 = vpack.c.b16 %v1884, %v1876
    %v2853 = vpack.c.b16 %v1885, %v1877
    %v2854 = vpack.c.b16 %v1886, %v1878
    %v2855 = vpack.c.b16 %v1887, %v1879
    %v2856 = vpack.c.b16 %v1888, %v1880
    %v2857 = vpack.c.b16 %v1897, %v1889
    %v2858 = vpack.c.b16 %v1898, %v1890
    %v2859 = vpack.c.b16 %v1899, %v1891
    %v2860 = vpack.c.b16 %v1900, %v1892
    %v2861 = vpack.c.b16 %v1901, %v1893
    %v2862 = vpack.c.b16 %v1902, %v1894
    %v2863 = vpack.c.b16 %v1903, %v1895
    %v2864 = vpack.c.b16 %v1904, %v1896
    %v2865 = vpack.c.b16 %v1913, %v1905
    %v2866 = vpack.c.b16 %v1914, %v1906
    %v2867 = vpack.c.b16 %v1915, %v1907
    %v2868 = vpack.c.b16 %v1916, %v1908
    %v2869 = vpack.c.b16 %v1917, %v1909
    %v2870 = vpack.c.b16 %v1918, %v1910
    %v2871 = vpack.c.b16 %v1919, %v1911
    %v2872 = vpack.c.b16 %v1920, %v1912
    %v2873 = vpack.c.b16 %v1929, %v1921
    %v2874 = vpack.c.b16 %v1930, %v1922
    %v2875 = vpack.c.b16 %v1931, %v1923
    %v2876 = vpack.c.b16 %v1932, %v1924
    %v2877 = vpack.c.b16 %v1933, %v1925
    %v2878 = vpack.c.b16 %v1934, %v1926
    %v2879 = vpack.c.b16 %v1935, %v1927
    %v2880 = vpack.c.b16 %v1936, %v1928
    %v2881 = vpack.c.b16 %v1945, %v1937
    %v2882 = vpack.c.b16 %v1946, %v1938
    %v2883 = vpack.c.b16 %v1947, %v1939
    %v2884 = vpack.c.b16 %v1948, %v1940
    %v2885 = vpack.c.b16 %v1949, %v1941
    %v2886 = vpack.c.b16 %v1950, %v1942
    %v2887 = vpack.c.b16 %v1951, %v1943
    %v2888 = vpack.c.b16 %v1952, %v1944
    %v2889 = vpack.c.b16 %v1961, %v1953
    %v2890 = vpack.c.b16 %v1962, %v1954
    %v2891 = vpack.c.b16 %v1963, %v1955
    %v2892 = vpack.c.b16 %v1964, %v1956
    %v2893 = vpack.c.b16 %v1965, %v1957
    %v2894 = vpack.c.b16 %v1966, %v1958
    %v2895 = vpack.c.b16 %v1967, %v1959
    %v2896 = vpack.c.b16 %v1968, %v1960
    %v2897 = vpack.c.b16 %v1977, %v1969
    %v2898 = vpack.c.b16 %v1978, %v1970
    %v2899 = vpack.c.b16 %v1979, %v1971
    %v2900 = vpack.c.b16 %v1980, %v1972
    %v2901 = vpack.c.b16 %v1981, %v1973
    %v2902 = vpack.c.b16 %v1982, %v1974
    %v2903 = vpack.c.b16 %v1983, %v1975
    %v2904 = vpack.c.b16 %v1984, %v1976
    %v2905 = vpack.c.b16 %v1993, %v1985
    %v2906 = vpack.c.b16 %v1994, %v1986
    %v2907 = vpack.c.b16 %v1995, %v1987
    %v2908 = vpack.c.b16 %v1996, %v1988
    %v2909 = vpack.c.b16 %v1997, %v1989
    %v2910 = vpack.c.b16 %v1998, %v1990
    %v2911 = vpack.c.b16 %v1999, %v1991
    %v2912 = vpack.c.b16 %v2000, %v1992
    %v2913 = vpack.c.b16 %v2009, %v2001
    %v2914 = vpack.c.b16 %v2010, %v2002
    %v2915 = vpack.c.b16 %v2011, %v2003
    %v2916 = vpack.c.b16 %v2012, %v2004
    %v2917 = vpack.c.b16 %v2013, %v2005
    %v2918 = vpack.c.b16 %v2014, %v2006
    %v2919 = vpack.c.b16 %v2015, %v2007
    %v2920 = vpack.c.b16 %v2016, %v2008
    %v2921 = vpack.c.b16 %v2025, %v2017
    %v2922 = vpack.c.b16 %v2026, %v2018
    %v2923 = vpack.c.b16 %v2027, %v2019
    %v2924 = vpack.c.b16 %v2028, %v2020
    %v2925 = vpack.c.b16 %v2029, %v2021
    %v2926 = vpack.c.b16 %v2030, %v2022
    %v2927 = vpack.c.b16 %v2031, %v2023
    %v2928 = vpack.c.b16 %v2032, %v2024
    %v2929 = vpack.c.b16 %v2041, %v2033
    %v2930 = vpack.c.b16 %v2042, %v2034
    %v2931 = vpack.c.b16 %v2043, %v2035
    %v2932 = vpack.c.b16 %v2044, %v2036
    %v2933 = vpack.c.b16 %v2045, %v2037
    %v2934 = vpack.c.b16 %v2046, %v2038
    %v2935 = vpack.c.b16 %v2047, %v2039
    %v2936 = vpack.c.b16 %v2048, %v2040
    %v2937 = vpack.c.b16 %v2057, %v2049
    %v2938 = vpack.c.b16 %v2058, %v2050
    %v2939 = vpack.c.b16 %v2059, %v2051
    %v2940 = vpack.c.b16 %v2060, %v2052
    %v2941 = vpack.c.b16 %v2061, %v2053
    %v2942 = vpack.c.b16 %v2062, %v2054
    %v2943 = vpack.c.b16 %v2063, %v2055
    %v2944 = vpack.c.b16 %v2064, %v2056
    %v2945 = vpack.c.b16 %v2073, %v2065
    %v2946 = vpack.c.b16 %v2074, %v2066
    %v2947 = vpack.c.b16 %v2075, %v2067
    %v2948 = vpack.c.b16 %v2076, %v2068
    %v2949 = vpack.c.b16 %v2077, %v2069
    %v2950 = vpack.c.b16 %v2078, %v2070
    %v2951 = vpack.c.b16 %v2079, %v2071
    %v2952 = vpack.c.b16 %v2080, %v2072
    %v2953 = vpack.c.b16 %v2089, %v2081
    %v2954 = vpack.c.b16 %v2090, %v2082
    %v2955 = vpack.c.b16 %v2091, %v2083
    %v2956 = vpack.c.b16 %v2092, %v2084
    %v2957 = vpack.c.b16 %v2093, %v2085
    %v2958 = vpack.c.b16 %v2094, %v2086
    %v2959 = vpack.c.b16 %v2095, %v2087
    %v2960 = vpack.c.b16 %v2096, %v2088
    %v2961 = vpack.c.b16 %v2105, %v2097
    %v2962 = vpack.c.b16 %v2106, %v2098
    %v2963 = vpack.c.b16 %v2107, %v2099
    %v2964 = vpack.c.b16 %v2108, %v2100
    %v2965 = vpack.c.b16 %v2109, %v2101
    %v2966 = vpack.c.b16 %v2110, %v2102
    %v2967 = vpack.c.b16 %v2111, %v2103
    %v2968 = vpack.c.b16 %v2112, %v2104
    %v2969 = vpack.c.b16 %v2121, %v2113
    %v2970 = vpack.c.b16 %v2122, %v2114
    %v2971 = vpack.c.b16 %v2123, %v2115
    %v2972 = vpack.c.b16 %v2124, %v2116
    %v2973 = vpack.c.b16 %v2125, %v2117
    %v2974 = vpack.c.b16 %v2126, %v2118
    %v2975 = vpack.c.b16 %v2127, %v2119
    %v2976 = vpack.c.b16 %v2128, %v2120
    %v2977 = vpack.c.b16 %v2137, %v2129
    %v2978 = vpack.c.b16 %v2138, %v2130
    %v2979 = vpack.c.b16 %v2139, %v2131
    %v2980 = vpack.c.b16 %v2140, %v2132
    %v2981 = vpack.c.b16 %v2141, %v2133
    %v2982 = vpack.c.b16 %v2142, %v2134
    %v2983 = vpack.c.b16 %v2143, %v2135
    %v2984 = vpack.c.b16 %v2144, %v2136
    %v2985 = vpack.c.b16 %v2153, %v2145
    %v2986 = vpack.c.b16 %v2154, %v2146
    %v2987 = vpack.c.b16 %v2155, %v2147
    %v2988 = vpack.c.b16 %v2156, %v2148
    %v2989 = vpack.c.b16 %v2157, %v2149
    %v2990 = vpack.c.b16 %v2158, %v2150
    %v2991 = vpack.c.b16 %v2159, %v2151
    %v2992 = vpack.c.b16 %v2160, %v2152
    %v2993 = vpack.c.b16 %v2169, %v2161
    %v2994 = vpack.c.b16 %v2170, %v2162
    %v2995 = vpack.c.b16 %v2171, %v2163
    %v2996 = vpack.c.b16 %v2172, %v2164
    %v2997 = vpack.c.b16 %v2173, %v2165
    %v2998 = vpack.c.b16 %v2174, %v2166
    %v2999 = vpack.c.b16 %v2175, %v2167
    %v3000 = vpack.c.b16 %v2176, %v2168
    %v3001 = vpack.c.b16 %v2185, %v2177
    %v3002 = vpack.c.b16 %v2186, %v2178
    %v3003 = vpack.c.b16 %v2187, %v2179
    %v3004 = vpack.c.b16 %v2188, %v2180
    %v3005 = vpack.c.b16 %v2189, %v2181
    %v3006 = vpack.c.b16 %v2190, %v2182
    %v3007 = vpack.c.b16 %v2191, %v2183
    %v3008 = vpack.c.b16 %v2192, %v2184
    %v3009 = vpack.c.b16 %v2201, %v2193
    %v3010 = vpack.c.b16 %v2202, %v2194
    %v3011 = vpack.c.b16 %v2203, %v2195
    %v3012 = vpack.c.b16 %v2204, %v2196
    %v3013 = vpack.c.b16 %v2205, %v2197
    %v3014 = vpack.c.b16 %v2206, %v2198
    %v3015 = vpack.c.b16 %v2207, %v2199
    %v3016 = vpack.c.b16 %v2208, %v2200
    %v3017 = vpack.c.b16 %v2217, %v2209
    %v3018 = vpack.c.b16 %v2218, %v2210
    %v3019 = vpack.c.b16 %v2219, %v2211
    %v3020 = vpack.c.b16 %v2220, %v2212
    %v3021 = vpack.c.b16 %v2221, %v2213
    %v3022 = vpack.c.b16 %v2222, %v2214
    %v3023 = vpack.c.b16 %v2223, %v2215
    %v3024 = vpack.c.b16 %v2224, %v2216
    %v3025 = vpack.c.b16 %v2233, %v2225
    %v3026 = vpack.c.b16 %v2234, %v2226
    %v3027 = vpack.c.b16 %v2235, %v2227
    %v3028 = vpack.c.b16 %v2236, %v2228
    %v3029 = vpack.c.b16 %v2237, %v2229
    %v3030 = vpack.c.b16 %v2238, %v2230
    %v3031 = vpack.c.b16 %v2239, %v2231
    %v3032 = vpack.c.b16 %v2240, %v2232
    %v3033 = vpack.c.b16 %v2249, %v2241
    %v3034 = vpack.c.b16 %v2250, %v2242
    %v3035 = vpack.c.b16 %v2251, %v2243
    %v3036 = vpack.c.b16 %v2252, %v2244
    %v3037 = vpack.c.b16 %v2253, %v2245
    %v3038 = vpack.c.b16 %v2254, %v2246
    %v3039 = vpack.c.b16 %v2255, %v2247
    %v3040 = vpack.c.b16 %v2256, %v2248
    %v3041 = vpack.c.b16 %v2265, %v2257
    %v3042 = vpack.c.b16 %v2266, %v2258
    %v3043 = vpack.c.b16 %v2267, %v2259
    %v3044 = vpack.c.b16 %v2268, %v2260
    %v3045 = vpack.c.b16 %v2269, %v2261
    %v3046 = vpack.c.b16 %v2270, %v2262
    %v3047 = vpack.c.b16 %v2271, %v2263
    %v3048 = vpack.c.b16 %v2272, %v2264
    %v3049 = vpack.c.b16 %v2281, %v2273
    %v3050 = vpack.c.b16 %v2282, %v2274
    %v3051 = vpack.c.b16 %v2283, %v2275
    %v3052 = vpack.c.b16 %v2284, %v2276
    %v3053 = vpack.c.b16 %v2285, %v2277
    %v3054 = vpack.c.b16 %v2286, %v2278
    %v3055 = vpack.c.b16 %v2287, %v2279
    %v3056 = vpack.c.b16 %v2288, %v2280
    %v3057 = vpack.c.b16 %v2297, %v2289
    %v3058 = vpack.c.b16 %v2298, %v2290
    %v3059 = vpack.c.b16 %v2299, %v2291
    %v3060 = vpack.c.b16 %v2300, %v2292
    %v3061 = vpack.c.b16 %v2301, %v2293
    %v3062 = vpack.c.b16 %v2302, %v2294
    %v3063 = vpack.c.b16 %v2303, %v2295
    %v3064 = vpack.c.b16 %v2304, %v2296
    %v3065 = vpack.c.b16 %v2313, %v2305
    %v3066 = vpack.c.b16 %v2314, %v2306
    %v3067 = vpack.c.b16 %v2315, %v2307
    %v3068 = vpack.c.b16 %v2316, %v2308
    %v3069 = vpack.c.b16 %v2317, %v2309
    %v3070 = vpack.c.b16 %v2318, %v2310
    %v3071 = vpack.c.b16 %v2319, %v2311
    %v3072 = vpack.c.b16 %v2320, %v2312
    %v3073 = vpack.c.b16 %v2329, %v2321
    %v3074 = vpack.c.b16 %v2330, %v2322
    %v3075 = vpack.c.b16 %v2331, %v2323
    %v3076 = vpack.c.b16 %v2332, %v2324
    %v3077 = vpack.c.b16 %v2333, %v2325
    %v3078 = vpack.c.b16 %v2334, %v2326
    %v3079 = vpack.c.b16 %v2335, %v2327
    %v3080 = vpack.c.b16 %v2336, %v2328
    %v3081 = vpack.c.b16 %v2345, %v2337
    %v3082 = vpack.c.b16 %v2346, %v2338
    %v3083 = vpack.c.b16 %v2347, %v2339
    %v3084 = vpack.c.b16 %v2348, %v2340
    %v3085 = vpack.c.b16 %v2349, %v2341
    %v3086 = vpack.c.b16 %v2350, %v2342
    %v3087 = vpack.c.b16 %v2351, %v2343
    %v3088 = vpack.c.b16 %v2352, %v2344
    %v3089 = vpack.c.b16 %v2361, %v2353
    %v3090 = vpack.c.b16 %v2362, %v2354
    %v3091 = vpack.c.b16 %v2363, %v2355
    %v3092 = vpack.c.b16 %v2364, %v2356
    %v3093 = vpack.c.b16 %v2365, %v2357
    %v3094 = vpack.c.b16 %v2366, %v2358
    %v3095 = vpack.c.b16 %v2367, %v2359
    %v3096 = vpack.c.b16 %v2368, %v2360
    %v3097 = vpack.c.b16 %v2377, %v2369
    %v3098 = vpack.c.b16 %v2378, %v2370
    %v3099 = vpack.c.b16 %v2379, %v2371
    %v3100 = vpack.c.b16 %v2380, %v2372
    %v3101 = vpack.c.b16 %v2381, %v2373
    %v3102 = vpack.c.b16 %v2382, %v2374
    %v3103 = vpack.c.b16 %v2383, %v2375
    %v3104 = vpack.c.b16 %v2384, %v2376
    %v3105 = vpack.c.b16 %v2393, %v2385
    %v3106 = vpack.c.b16 %v2394, %v2386
    %v3107 = vpack.c.b16 %v2395, %v2387
    %v3108 = vpack.c.b16 %v2396, %v2388
    %v3109 = vpack.c.b16 %v2397, %v2389
    %v3110 = vpack.c.b16 %v2398, %v2390
    %v3111 = vpack.c.b16 %v2399, %v2391
    %v3112 = vpack.c.b16 %v2400, %v2392
    %v3113 = vpack.c.b16 %v2409, %v2401
    %v3114 = vpack.c.b16 %v2410, %v2402
    %v3115 = vpack.c.b16 %v2411, %v2403
    %v3116 = vpack.c.b16 %v2412, %v2404
    %v3117 = vpack.c.b16 %v2413, %v2405
    %v3118 = vpack.c.b16 %v2414, %v2406
    %v3119 = vpack.c.b16 %v2415, %v2407
    %v3120 = vpack.c.b16 %v2416, %v2408
    %v3121 = vpack.c.b16 %v2425, %v2417
    %v3122 = vpack.c.b16 %v2426, %v2418
    %v3123 = vpack.c.b16 %v2427, %v2419
    %v3124 = vpack.c.b16 %v2428, %v2420
    %v3125 = vpack.c.b16 %v2429, %v2421
    %v3126 = vpack.c.b16 %v2430, %v2422
    %v3127 = vpack.c.b16 %v2431, %v2423
    %v3128 = vpack.c.b16 %v2432, %v2424
    %v3129 = vpack.c.b16 %v2441, %v2433
    %v3130 = vpack.c.b16 %v2442, %v2434
    %v3131 = vpack.c.b16 %v2443, %v2435
    %v3132 = vpack.c.b16 %v2444, %v2436
    %v3133 = vpack.c.b16 %v2445, %v2437
    %v3134 = vpack.c.b16 %v2446, %v2438
    %v3135 = vpack.c.b16 %v2447, %v2439
    %v3136 = vpack.c.b16 %v2448, %v2440
    %v3137 = vpack.c.b16 %v2457, %v2449
    %v3138 = vpack.c.b16 %v2458, %v2450
    %v3139 = vpack.c.b16 %v2459, %v2451
    %v3140 = vpack.c.b16 %v2460, %v2452
    %v3141 = vpack.c.b16 %v2461, %v2453
    %v3142 = vpack.c.b16 %v2462, %v2454
    %v3143 = vpack.c.b16 %v2463, %v2455
    %v3144 = vpack.c.b16 %v2464, %v2456
    %v3145 = vpack.c.b16 %v2473, %v2465
    %v3146 = vpack.c.b16 %v2474, %v2466
    %v3147 = vpack.c.b16 %v2475, %v2467
    %v3148 = vpack.c.b16 %v2476, %v2468
    %v3149 = vpack.c.b16 %v2477, %v2469
    %v3150 = vpack.c.b16 %v2478, %v2470
    %v3151 = vpack.c.b16 %v2479, %v2471
    %v3152 = vpack.c.b16 %v2480, %v2472
    %v3153 = vpack.c.b16 %v2489, %v2481
    %v3154 = vpack.c.b16 %v2490, %v2482
    %v3155 = vpack.c.b16 %v2491, %v2483
    %v3156 = vpack.c.b16 %v2492, %v2484
    %v3157 = vpack.c.b16 %v2493, %v2485
    %v3158 = vpack.c.b16 %v2494, %v2486
    %v3159 = vpack.c.b16 %v2495, %v2487
    %v3160 = vpack.c.b16 %v2496, %v2488
    %v3161 = vpack.c.b16 %v2505, %v2497
    %v3162 = vpack.c.b16 %v2506, %v2498
    %v3163 = vpack.c.b16 %v2507, %v2499
    %v3164 = vpack.c.b16 %v2508, %v2500
    %v3165 = vpack.c.b16 %v2509, %v2501
    %v3166 = vpack.c.b16 %v2510, %v2502
    %v3167 = vpack.c.b16 %v2511, %v2503
    %v3168 = vpack.c.b16 %v2512, %v2504
    %v3169 = vpack.c.b16 %v2521, %v2513
    %v3170 = vpack.c.b16 %v2522, %v2514
    %v3171 = vpack.c.b16 %v2523, %v2515
    %v3172 = vpack.c.b16 %v2524, %v2516
    %v3173 = vpack.c.b16 %v2525, %v2517
    %v3174 = vpack.c.b16 %v2526, %v2518
    %v3175 = vpack.c.b16 %v2527, %v2519
    %v3176 = vpack.c.b16 %v2528, %v2520
    %v3177 = vpack.c.b16 %v2537, %v2529
    %v3178 = vpack.c.b16 %v2538, %v2530
    %v3179 = vpack.c.b16 %v2539, %v2531
    %v3180 = vpack.c.b16 %v2540, %v2532
    %v3181 = vpack.c.b16 %v2541, %v2533
    %v3182 = vpack.c.b16 %v2542, %v2534
    %v3183 = vpack.c.b16 %v2543, %v2535
    %v3184 = vpack.c.b16 %v2544, %v2536
    %v3185 = vpack.c.b16 %v2553, %v2545
    %v3186 = vpack.c.b16 %v2554, %v2546
    %v3187 = vpack.c.b16 %v2555, %v2547
    %v3188 = vpack.c.b16 %v2556, %v2548
    %v3189 = vpack.c.b16 %v2557, %v2549
    %v3190 = vpack.c.b16 %v2558, %v2550
    %v3191 = vpack.c.b16 %v2559, %v2551
    %v3192 = vpack.c.b16 %v2560, %v2552
    %v3193 = vpack.c.b16 %v2569, %v2561
    %v3194 = vpack.c.b16 %v2570, %v2562
    %v3195 = vpack.c.b16 %v2571, %v2563
    %v3196 = vpack.c.b16 %v2572, %v2564
    %v3197 = vpack.c.b16 %v2573, %v2565
    %v3198 = vpack.c.b16 %v2574, %v2566
    %v3199 = vpack.c.b16 %v2575, %v2567
    %v3200 = vpack.c.b16 %v2576, %v2568
    %v3201 = vpack.c.b16 %v2585, %v2577
    %v3202 = vpack.c.b16 %v2586, %v2578
    %v3203 = vpack.c.b16 %v2587, %v2579
    %v3204 = vpack.c.b16 %v2588, %v2580
    %v3205 = vpack.c.b16 %v2589, %v2581
    %v3206 = vpack.c.b16 %v2590, %v2582
    %v3207 = vpack.c.b16 %v2591, %v2583
    %v3208 = vpack.c.b16 %v2592, %v2584
    %v3209 = vpack.c.b16 %v2601, %v2593
    %v3210 = vpack.c.b16 %v2602, %v2594
    %v3211 = vpack.c.b16 %v2603, %v2595
    %v3212 = vpack.c.b16 %v2604, %v2596
    %v3213 = vpack.c.b16 %v2605, %v2597
    %v3214 = vpack.c.b16 %v2606, %v2598
    %v3215 = vpack.c.b16 %v2607, %v2599
    %v3216 = vpack.c.b16 %v2608, %v2600
    %v3217 = vpack.c.b16 %v2617, %v2609
    %v3218 = vpack.c.b16 %v2618, %v2610
    %v3219 = vpack.c.b16 %v2619, %v2611
    %v3220 = vpack.c.b16 %v2620, %v2612
    %v3221 = vpack.c.b16 %v2621, %v2613
    %v3222 = vpack.c.b16 %v2622, %v2614
    %v3223 = vpack.c.b16 %v2623, %v2615
    %v3224 = vpack.c.b16 %v2624, %v2616
    %v3225 = vpack.c.b16 %v2633, %v2625
    %v3226 = vpack.c.b16 %v2634, %v2626
    %v3227 = vpack.c.b16 %v2635, %v2627
    %v3228 = vpack.c.b16 %v2636, %v2628
    %v3229 = vpack.c.b16 %v2637, %v2629
    %v3230 = vpack.c.b16 %v2638, %v2630
    %v3231 = vpack.c.b16 %v2639, %v2631
    %v3232 = vpack.c.b16 %v2640, %v2632
    %v3233 = vpack.c.b16 %v2649, %v2641
    %v3234 = vpack.c.b16 %v2650, %v2642
    %v3235 = vpack.c.b16 %v2651, %v2643
    %v3236 = vpack.c.b16 %v2652, %v2644
    %v3237 = vpack.c.b16 %v2653, %v2645
    %v3238 = vpack.c.b16 %v2654, %v2646
    %v3239 = vpack.c.b16 %v2655, %v2647
    %v3240 = vpack.c.b16 %v2656, %v2648
    %v3241 = vpack.c.b16 %v2665, %v2657
    %v3242 = vpack.c.b16 %v2666, %v2658
    %v3243 = vpack.c.b16 %v2667, %v2659
    %v3244 = vpack.c.b16 %v2668, %v2660
    %v3245 = vpack.c.b16 %v2669, %v2661
    %v3246 = vpack.c.b16 %v2670, %v2662
    %v3247 = vpack.c.b16 %v2671, %v2663
    %v3248 = vpack.c.b16 %v2672, %v2664
    %v3249 = vpack.c.b16 %v2681, %v2673
    %v3250 = vpack.c.b16 %v2682, %v2674
    %v3251 = vpack.c.b16 %v2683, %v2675
    %v3252 = vpack.c.b16 %v2684, %v2676
    %v3253 = vpack.c.b16 %v2685, %v2677
    %v3254 = vpack.c.b16 %v2686, %v2678
    %v3255 = vpack.c.b16 %v2687, %v2679
    %v3256 = vpack.c.b16 %v2688, %v2680
    %v3257 = vpack.c.b16 %v2697, %v2689
    %v3258 = vpack.c.b16 %v2698, %v2690
    %v3259 = vpack.c.b16 %v2699, %v2691
    %v3260 = vpack.c.b16 %v2700, %v2692
    %v3261 = vpack.c.b16 %v2701, %v2693
    %v3262 = vpack.c.b16 %v2702, %v2694
    %v3263 = vpack.c.b16 %v2703, %v2695
    %v3264 = vpack.c.b16 %v2704, %v2696
    %v3265 = vpack.c.b16 %v2713, %v2705
    %v3266 = vpack.c.b16 %v2714, %v2706
    %v3267 = vpack.c.b16 %v2715, %v2707
    %v3268 = vpack.c.b16 %v2716, %v2708
    %v3269 = vpack.c.b16 %v2717, %v2709
    %v3270 = vpack.c.b16 %v2718, %v2710
    %v3271 = vpack.c.b16 %v2719, %v2711
    %v3272 = vpack.c.b16 %v2720, %v2712
    %v3273 = vpack.c.b16 %v2729, %v2721
    %v3274 = vpack.c.b16 %v2730, %v2722
    %v3275 = vpack.c.b16 %v2731, %v2723
    %v3276 = vpack.c.b16 %v2732, %v2724
    %v3277 = vpack.c.b16 %v2733, %v2725
    %v3278 = vpack.c.b16 %v2734, %v2726
    %v3279 = vpack.c.b16 %v2735, %v2727
    %v3280 = vpack.c.b16 %v2736, %v2728
    %v3281 = vpack.c.b16 %v2745, %v2737
    %v3282 = vpack.c.b16 %v2746, %v2738
    %v3283 = vpack.c.b16 %v2747, %v2739
    %v3284 = vpack.c.b16 %v2748, %v2740
    %v3285 = vpack.c.b16 %v2749, %v2741
    %v3286 = vpack.c.b16 %v2750, %v2742
    %v3287 = vpack.c.b16 %v2751, %v2743
    %v3288 = vpack.c.b16 %v2752, %v2744
    %v3289 = vpack.c.b16 %v2761, %v2753
    %v3290 = vpack.c.b16 %v2762, %v2754
    %v3291 = vpack.c.b16 %v2763, %v2755
    %v3292 = vpack.c.b16 %v2764, %v2756
    %v3293 = vpack.c.b16 %v2765, %v2757
    %v3294 = vpack.c.b16 %v2766, %v2758
    %v3295 = vpack.c.b16 %v2767, %v2759
    %v3296 = vpack.c.b16 %v2768, %v2760
    %v3297 = vpack.c.b16 %v2777, %v2769
    %v3298 = vpack.c.b16 %v2778, %v2770
    %v3299 = vpack.c.b16 %v2779, %v2771
    %v3300 = vpack.c.b16 %v2780, %v2772
    %v3301 = vpack.c.b16 %v2781, %v2773
    %v3302 = vpack.c.b16 %v2782, %v2774
    %v3303 = vpack.c.b16 %v2783, %v2775
    %v3304 = vpack.c.b16 %v2784, %v2776
    %v3305 = vpack.c.b16 %v2793, %v2785
    %v3306 = vpack.c.b16 %v2794, %v2786
    %v3307 = vpack.c.b16 %v2795, %v2787
    %v3308 = vpack.c.b16 %v2796, %v2788
    %v3309 = vpack.c.b16 %v2797, %v2789
    %v3310 = vpack.c.b16 %v2798, %v2790
    %v3311 = vpack.c.b16 %v2799, %v2791
    %v3312 = vpack.c.b16 %v2800, %v2792
    %3825 = vmatprep.subr.bf16.mxu0 %v2802
    %3826 = vmatpush1.bf16.msra.mxu0 %v2801
    %3827 = vmatprep.subr.bf16.mxu0 %v2810
    %3828 = vmatpush1.bf16.msra.mxu0 %v2809
    %3829 = vmatprep.subr.bf16.mxu0 %v2818
    %3830 = vmatpush1.bf16.msra.mxu0 %v2817
    %3831 = vmatprep.subr.bf16.mxu0 %v2826
    %3832 = vmatpush1.bf16.msra.mxu0 %v2825
    %3833 = vmatprep.subr.bf16.mxu0 %v2834
    %3834 = vmatpush1.bf16.msra.mxu0 %v2833
    %3835 = vmatprep.subr.bf16.mxu0 %v2842
    %3836 = vmatpush1.bf16.msra.mxu0 %v2841
    %3837 = vmatprep.subr.bf16.mxu0 %v2850
    %3838 = vmatpush1.bf16.msra.mxu0 %v2849
    %3839 = vmatprep.subr.bf16.mxu0 %v2858
    %3840 = vmatpush1.bf16.msra.mxu0 %v2857
    %3841 = vmatprep.subr.bf16.mxu0 %v2866
    %3842 = vmatpush1.bf16.msra.mxu0 %v2865
    %3843 = vmatprep.subr.bf16.mxu0 %v2874
    %3844 = vmatpush1.bf16.msra.mxu0 %v2873
    %3845 = vmatprep.subr.bf16.mxu0 %v2882
    %3846 = vmatpush1.bf16.msra.mxu0 %v2881
    %3847 = vmatprep.subr.bf16.mxu0 %v2890
    %3848 = vmatpush1.bf16.msra.mxu0 %v2889
    %3849 = vmatprep.subr.bf16.mxu0 %v2898
    %3850 = vmatpush1.bf16.msra.mxu0 %v2897
    %3851 = vmatprep.subr.bf16.mxu0 %v2906
    %3852 = vmatpush1.bf16.msra.mxu0 %v2905
    %3853 = vmatprep.subr.bf16.mxu0 %v2914
    %3854 = vmatpush1.bf16.msra.mxu0 %v2913
    %3855 = vmatprep.subr.bf16.mxu0 %v2922
    %3856 = vmatpush1.bf16.msra.mxu0 %v2921
    %3857 = vmatprep.mubr.bf16.mxu0 %v704
    %3858 = vmatmul.mubr.bf16.gmra.mrb[0].mxu0 %v703
    %v3859 = vpop.f32.mrb[0].mxu0
    %v3860 = vadd.f32 %v1228, %v3859
    %v3861 = vpop.f32.mrb[0].mxu0
    %v3862 = vadd.f32 %v1232, %v3861
    %v3863 = vpop.f32.mrb[0].mxu0
    %v3864 = vpop.f32.mrb[0].mxu0
    %3865 = vdwg.mxu0
    %3866 = vmatprep.subr.bf16.mxu0 %v2930
    %3867 = vmatpush1.bf16.msra.mxu0 %v2929
    %3868 = vmatprep.subr.bf16.mxu0 %v2938
    %3869 = vmatpush1.bf16.msra.mxu0 %v2937
    %3870 = vmatprep.subr.bf16.mxu0 %v2946
    %3871 = vmatpush1.bf16.msra.mxu0 %v2945
    %3872 = vmatprep.subr.bf16.mxu0 %v2954
    %3873 = vmatpush1.bf16.msra.mxu0 %v2953
    %3874 = vmatprep.subr.bf16.mxu0 %v2962
    %3875 = vmatpush1.bf16.msra.mxu0 %v2961
    %3876 = vmatprep.subr.bf16.mxu0 %v2970
    %3877 = vmatpush1.bf16.msra.mxu0 %v2969
    %3878 = vmatprep.subr.bf16.mxu0 %v2978
    %3879 = vmatpush1.bf16.msra.mxu0 %v2977
    %3880 = vmatprep.subr.bf16.mxu0 %v2986
    %3881 = vmatpush1.bf16.msra.mxu0 %v2985
    %3882 = vmatprep.subr.bf16.mxu0 %v2994
    %3883 = vmatpush1.bf16.msra.mxu0 %v2993
    %3884 = vmatprep.subr.bf16.mxu0 %v3002
    %3885 = vmatpush1.bf16.msra.mxu0 %v3001
    %3886 = vmatprep.subr.bf16.mxu0 %v3010
    %3887 = vmatpush1.bf16.msra.mxu0 %v3009
    %3888 = vmatprep.subr.bf16.mxu0 %v3018
    %3889 = vmatpush1.bf16.msra.mxu0 %v3017
    %3890 = vmatprep.subr.bf16.mxu0 %v3026
    %3891 = vmatpush1.bf16.msra.mxu0 %v3025
    %3892 = vmatprep.subr.bf16.mxu0 %v3034
    %3893 = vmatpush1.bf16.msra.mxu0 %v3033
    %3894 = vmatprep.subr.bf16.mxu0 %v3042
    %3895 = vmatpush1.bf16.msra.mxu0 %v3041
    %3896 = vmatprep.subr.bf16.mxu0 %v3050
    %3897 = vmatpush1.bf16.msra.mxu0 %v3049
    %3898 = vmatprep.mubr.bf16.mxu0 %v706
    %3899 = vmatmul.mubr.bf16.gmra.mrb[0].mxu0 %v705
    %v3900 = vpop.f32.mrb[0].mxu0
    %v3901 = vadd.f32 %v3860, %v3900
    %v3902 = vpop.f32.mrb[0].mxu0
    %v3903 = vadd.f32 %v3862, %v3902
    %v3904 = vpop.f32.mrb[0].mxu0
    %v3905 = vpop.f32.mrb[0].mxu0
    %3906 = vdwg.mxu0
    %3907 = vmatprep.subr.bf16.mxu0 %v3058
    %3908 = vmatpush1.bf16.msra.mxu0 %v3057
    %3909 = vmatprep.subr.bf16.mxu0 %v3066
    %3910 = vmatpush1.bf16.msra.mxu0 %v3065
    %3911 = vmatprep.subr.bf16.mxu0 %v3074
    %3912 = vmatpush1.bf16.msra.mxu0 %v3073
    %3913 = vmatprep.subr.bf16.mxu0 %v3082
    %3914 = vmatpush1.bf16.msra.mxu0 %v3081
    %3915 = vmatprep.subr.bf16.mxu0 %v3090
    %3916 = vmatpush1.bf16.msra.mxu0 %v3089
    %3917 = vmatprep.subr.bf16.mxu0 %v3098
    %3918 = vmatpush1.bf16.msra.mxu0 %v3097
    %3919 = vmatprep.subr.bf16.mxu0 %v3106
    %3920 = vmatpush1.bf16.msra.mxu0 %v3105
    %3921 = vmatprep.subr.bf16.mxu0 %v3114
    %3922 = vmatpush1.bf16.msra.mxu0 %v3113
    %3923 = vmatprep.subr.bf16.mxu0 %v3122
    %3924 = vmatpush1.bf16.msra.mxu0 %v3121
    %3925 = vmatprep.subr.bf16.mxu0 %v3130
    %3926 = vmatpush1.bf16.msra.mxu0 %v3129
    %3927 = vmatprep.subr.bf16.mxu0 %v3138
    %3928 = vmatpush1.bf16.msra.mxu0 %v3137
    %3929 = vmatprep.subr.bf16.mxu0 %v3146
    %3930 = vmatpush1.bf16.msra.mxu0 %v3145
    %3931 = vmatprep.subr.bf16.mxu0 %v3154
    %3932 = vmatpush1.bf16.msra.mxu0 %v3153
    %3933 = vmatprep.subr.bf16.mxu0 %v3162
    %3934 = vmatpush1.bf16.msra.mxu0 %v3161
    %3935 = vmatprep.subr.bf16.mxu0 %v3170
    %3936 = vmatpush1.bf16.msra.mxu0 %v3169
    %3937 = vmatprep.subr.bf16.mxu0 %v3178
    %3938 = vmatpush1.bf16.msra.mxu0 %v3177
    %3939 = vmatprep.mubr.bf16.mxu0 %v708
    %3940 = vmatmul.mubr.bf16.gmra.mrb[0].mxu0 %v707
    %v3941 = vpop.f32.mrb[0].mxu0
    %v3942 = vadd.f32 %v3901, %v3941
    %v3943 = vpop.f32.mrb[0].mxu0
    %v3944 = vadd.f32 %v3903, %v3943
    %v3945 = vpop.f32.mrb[0].mxu0
    %v3946 = vpop.f32.mrb[0].mxu0
    %3947 = vdwg.mxu0
    %3948 = vmatprep.subr.bf16.mxu0 %v3186
    %3949 = vmatpush1.bf16.msra.mxu0 %v3185
    %3950 = vmatprep.subr.bf16.mxu0 %v3194
    %3951 = vmatpush1.bf16.msra.mxu0 %v3193
    %3952 = vmatprep.subr.bf16.mxu0 %v3202
    %3953 = vmatpush1.bf16.msra.mxu0 %v3201
    %3954 = vmatprep.subr.bf16.mxu0 %v3210
    %3955 = vmatpush1.bf16.msra.mxu0 %v3209
    %3956 = vmatprep.subr.bf16.mxu0 %v3218
    %3957 = vmatpush1.bf16.msra.mxu0 %v3217
    %3958 = vmatprep.subr.bf16.mxu0 %v3226
    %3959 = vmatpush1.bf16.msra.mxu0 %v3225
    %3960 = vmatprep.subr.bf16.mxu0 %v3234
    %3961 = vmatpush1.bf16.msra.mxu0 %v3233
    %3962 = vmatprep.subr.bf16.mxu0 %v3242
    %3963 = vmatpush1.bf16.msra.mxu0 %v3241
    %3964 = vmatprep.subr.bf16.mxu0 %v3250
    %3965 = vmatpush1.bf16.msra.mxu0 %v3249
    %3966 = vmatprep.subr.bf16.mxu0 %v3258
    %3967 = vmatpush1.bf16.msra.mxu0 %v3257
    %3968 = vmatprep.subr.bf16.mxu0 %v3266
    %3969 = vmatpush1.bf16.msra.mxu0 %v3265
    %3970 = vmatprep.subr.bf16.mxu0 %v3274
    %3971 = vmatpush1.bf16.msra.mxu0 %v3273
    %3972 = vmatprep.subr.bf16.mxu0 %v3282
    %3973 = vmatpush1.bf16.msra.mxu0 %v3281
    %3974 = vmatprep.subr.bf16.mxu0 %v3290
    %3975 = vmatpush1.bf16.msra.mxu0 %v3289
    %3976 = vmatprep.subr.bf16.mxu0 %v3298
    %3977 = vmatpush1.bf16.msra.mxu0 %v3297
    %3978 = vmatprep.subr.bf16.mxu0 %v3306
    %3979 = vmatpush1.bf16.msra.mxu0 %v3305
    %3980 = vmatprep.mubr.bf16.mxu0 %v710
    %3981 = vmatmul.mubr.bf16.gmra.mrb[0].mxu0 %v709
    %v3982 = vpop.f32.mrb[0].mxu0
    %v3983 = vadd.f32 %v3942, %v3982
    %v3984 = vpop.f32.mrb[0].mxu0
    %v3985 = vadd.f32 %v3944, %v3984
    %v3986 = vpop.f32.mrb[0].mxu0
    %v3987 = vpop.f32.mrb[0].mxu0
    %3988 = vdwg.mxu0
    %3989 = vmatprep.subr.bf16.mxu0 %v2804
    %3990 = vmatpush1.bf16.msra.mxu0 %v2803
    %3991 = vmatprep.subr.bf16.mxu0 %v2812
    %3992 = vmatpush1.bf16.msra.mxu0 %v2811
    %3993 = vmatprep.subr.bf16.mxu0 %v2820
    %3994 = vmatpush1.bf16.msra.mxu0 %v2819
    %3995 = vmatprep.subr.bf16.mxu0 %v2828
    %3996 = vmatpush1.bf16.msra.mxu0 %v2827
    %3997 = vmatprep.subr.bf16.mxu0 %v2836
    %3998 = vmatpush1.bf16.msra.mxu0 %v2835
    %3999 = vmatprep.subr.bf16.mxu0 %v2844
    %4000 = vmatpush1.bf16.msra.mxu0 %v2843
    %4001 = vmatprep.subr.bf16.mxu0 %v2852
    %4002 = vmatpush1.bf16.msra.mxu0 %v2851
    %4003 = vmatprep.subr.bf16.mxu0 %v2860
    %4004 = vmatpush1.bf16.msra.mxu0 %v2859
    %4005 = vmatprep.subr.bf16.mxu0 %v2868
    %4006 = vmatpush1.bf16.msra.mxu0 %v2867
    %4007 = vmatprep.subr.bf16.mxu0 %v2876
    %4008 = vmatpush1.bf16.msra.mxu0 %v2875
    %4009 = vmatprep.subr.bf16.mxu0 %v2884
    %4010 = vmatpush1.bf16.msra.mxu0 %v2883
    %4011 = vmatprep.subr.bf16.mxu0 %v2892
    %4012 = vmatpush1.bf16.msra.mxu0 %v2891
    %4013 = vmatprep.subr.bf16.mxu0 %v2900
    %4014 = vmatpush1.bf16.msra.mxu0 %v2899
    %4015 = vmatprep.subr.bf16.mxu0 %v2908
    %4016 = vmatpush1.bf16.msra.mxu0 %v2907
    %4017 = vmatprep.subr.bf16.mxu0 %v2916
    %4018 = vmatpush1.bf16.msra.mxu0 %v2915
    %4019 = vmatprep.subr.bf16.mxu0 %v2924
    %4020 = vmatpush1.bf16.msra.mxu0 %v2923
    %4021 = vmatprep.mubr.bf16.mxu0 %v704
    %4022 = vmatmul.mubr.bf16.gmra.mrb[0].mxu0 %v703
    %v4023 = vpop.f32.mrb[0].mxu0
    %v4024 = vadd.f32 %v1236, %v4023
    %v4025 = vpop.f32.mrb[0].mxu0
    %v4026 = vadd.f32 %v1240, %v4025
    %v4027 = vpop.f32.mrb[0].mxu0
    %v4028 = vpop.f32.mrb[0].mxu0
    %4029 = vdwg.mxu0
    %4030 = vmatprep.subr.bf16.mxu0 %v2932
    %4031 = vmatpush1.bf16.msra.mxu0 %v2931
    %4032 = vmatprep.subr.bf16.mxu0 %v2940
    %4033 = vmatpush1.bf16.msra.mxu0 %v2939
    %4034 = vmatprep.subr.bf16.mxu0 %v2948
    %4035 = vmatpush1.bf16.msra.mxu0 %v2947
    %4036 = vmatprep.subr.bf16.mxu0 %v2956
    %4037 = vmatpush1.bf16.msra.mxu0 %v2955
    %4038 = vmatprep.subr.bf16.mxu0 %v2964
    %4039 = vmatpush1.bf16.msra.mxu0 %v2963
    %4040 = vmatprep.subr.bf16.mxu0 %v2972
    %4041 = vmatpush1.bf16.msra.mxu0 %v2971
    %4042 = vmatprep.subr.bf16.mxu0 %v2980
    %4043 = vmatpush1.bf16.msra.mxu0 %v2979
    %4044 = vmatprep.subr.bf16.mxu0 %v2988
    %4045 = vmatpush1.bf16.msra.mxu0 %v2987
    %4046 = vmatprep.subr.bf16.mxu0 %v2996
    %4047 = vmatpush1.bf16.msra.mxu0 %v2995
    %4048 = vmatprep.subr.bf16.mxu0 %v3004
    %4049 = vmatpush1.bf16.msra.mxu0 %v3003
    %4050 = vmatprep.subr.bf16.mxu0 %v3012
    %4051 = vmatpush1.bf16.msra.mxu0 %v3011
    %4052 = vmatprep.subr.bf16.mxu0 %v3020
    %4053 = vmatpush1.bf16.msra.mxu0 %v3019
    %4054 = vmatprep.subr.bf16.mxu0 %v3028
    %4055 = vmatpush1.bf16.msra.mxu0 %v3027
    %4056 = vmatprep.subr.bf16.mxu0 %v3036
    %4057 = vmatpush1.bf16.msra.mxu0 %v3035
    %4058 = vmatprep.subr.bf16.mxu0 %v3044
    %4059 = vmatpush1.bf16.msra.mxu0 %v3043
    %4060 = vmatprep.subr.bf16.mxu0 %v3052
    %4061 = vmatpush1.bf16.msra.mxu0 %v3051
    %4062 = vmatprep.mubr.bf16.mxu0 %v706
    %4063 = vmatmul.mubr.bf16.gmra.mrb[0].mxu0 %v705
    %v4064 = vpop.f32.mrb[0].mxu0
    %v4065 = vadd.f32 %v4024, %v4064
    %v4066 = vpop.f32.mrb[0].mxu0
    %v4067 = vadd.f32 %v4026, %v4066
    %v4068 = vpop.f32.mrb[0].mxu0
    %v4069 = vpop.f32.mrb[0].mxu0
    %4070 = vdwg.mxu0
    %4071 = vmatprep.subr.bf16.mxu0 %v3060
    %4072 = vmatpush1.bf16.msra.mxu0 %v3059
    %4073 = vmatprep.subr.bf16.mxu0 %v3068
    %4074 = vmatpush1.bf16.msra.mxu0 %v3067
    %4075 = vmatprep.subr.bf16.mxu0 %v3076
    %4076 = vmatpush1.bf16.msra.mxu0 %v3075
    %4077 = vmatprep.subr.bf16.mxu0 %v3084
    %4078 = vmatpush1.bf16.msra.mxu0 %v3083
    %4079 = vmatprep.subr.bf16.mxu0 %v3092
    %4080 = vmatpush1.bf16.msra.mxu0 %v3091
    %4081 = vmatprep.subr.bf16.mxu0 %v3100
    %4082 = vmatpush1.bf16.msra.mxu0 %v3099
    %4083 = vmatprep.subr.bf16.mxu0 %v3108
    %4084 = vmatpush1.bf16.msra.mxu0 %v3107
    %4085 = vmatprep.subr.bf16.mxu0 %v3116
    %4086 = vmatpush1.bf16.msra.mxu0 %v3115
    %4087 = vmatprep.subr.bf16.mxu0 %v3124
    %4088 = vmatpush1.bf16.msra.mxu0 %v3123
    %4089 = vmatprep.subr.bf16.mxu0 %v3132
    %4090 = vmatpush1.bf16.msra.mxu0 %v3131
    %4091 = vmatprep.subr.bf16.mxu0 %v3140
    %4092 = vmatpush1.bf16.msra.mxu0 %v3139
    %4093 = vmatprep.subr.bf16.mxu0 %v3148
    %4094 = vmatpush1.bf16.msra.mxu0 %v3147
    %4095 = vmatprep.subr.bf16.mxu0 %v3156
    %4096 = vmatpush1.bf16.msra.mxu0 %v3155
    %4097 = vmatprep.subr.bf16.mxu0 %v3164
    %4098 = vmatpush1.bf16.msra.mxu0 %v3163
    %4099 = vmatprep.subr.bf16.mxu0 %v3172
    %4100 = vmatpush1.bf16.msra.mxu0 %v3171
    %4101 = vmatprep.subr.bf16.mxu0 %v3180
    %4102 = vmatpush1.bf16.msra.mxu0 %v3179
    %4103 = vmatprep.mubr.bf16.mxu0 %v708
    %4104 = vmatmul.mubr.bf16.gmra.mrb[0].mxu0 %v707
    %v4105 = vpop.f32.mrb[0].mxu0
    %v4106 = vadd.f32 %v4065, %v4105
    %v4107 = vpop.f32.mrb[0].mxu0
    %v4108 = vadd.f32 %v4067, %v4107
    %v4109 = vpop.f32.mrb[0].mxu0
    %v4110 = vpop.f32.mrb[0].mxu0
    %4111 = vdwg.mxu0
    %4112 = vmatprep.subr.bf16.mxu0 %v3188
    %4113 = vmatpush1.bf16.msra.mxu0 %v3187
    %4114 = vmatprep.subr.bf16.mxu0 %v3196
    %4115 = vmatpush1.bf16.msra.mxu0 %v3195
    %4116 = vmatprep.subr.bf16.mxu0 %v3204
    %4117 = vmatpush1.bf16.msra.mxu0 %v3203
    %4118 = vmatprep.subr.bf16.mxu0 %v3212
    %4119 = vmatpush1.bf16.msra.mxu0 %v3211
    %4120 = vmatprep.subr.bf16.mxu0 %v3220
    %4121 = vmatpush1.bf16.msra.mxu0 %v3219
    %4122 = vmatprep.subr.bf16.mxu0 %v3228
    %4123 = vmatpush1.bf16.msra.mxu0 %v3227
    %4124 = vmatprep.subr.bf16.mxu0 %v3236
    %4125 = vmatpush1.bf16.msra.mxu0 %v3235
    %4126 = vmatprep.subr.bf16.mxu0 %v3244
    %4127 = vmatpush1.bf16.msra.mxu0 %v3243
    %4128 = vmatprep.subr.bf16.mxu0 %v3252
    %4129 = vmatpush1.bf16.msra.mxu0 %v3251
    %4130 = vmatprep.subr.bf16.mxu0 %v3260
    %4131 = vmatpush1.bf16.msra.mxu0 %v3259
    %4132 = vmatprep.subr.bf16.mxu0 %v3268
    %4133 = vmatpush1.bf16.msra.mxu0 %v3267
    %4134 = vmatprep.subr.bf16.mxu0 %v3276
    %4135 = vmatpush1.bf16.msra.mxu0 %v3275
    %4136 = vmatprep.subr.bf16.mxu0 %v3284
    %4137 = vmatpush1.bf16.msra.mxu0 %v3283
    %4138 = vmatprep.subr.bf16.mxu0 %v3292
    %4139 = vmatpush1.bf16.msra.mxu0 %v3291
    %4140 = vmatprep.subr.bf16.mxu0 %v3300
    %4141 = vmatpush1.bf16.msra.mxu0 %v3299
    %4142 = vmatprep.subr.bf16.mxu0 %v3308
    %4143 = vmatpush1.bf16.msra.mxu0 %v3307
    %4144 = vmatprep.mubr.bf16.mxu0 %v710
    %4145 = vmatmul.mubr.bf16.gmra.mrb[0].mxu0 %v709
    %v4146 = vpop.f32.mrb[0].mxu0
    %v4147 = vadd.f32 %v4106, %v4146
    %v4148 = vpop.f32.mrb[0].mxu0
    %v4149 = vadd.f32 %v4108, %v4148
    %v4150 = vpop.f32.mrb[0].mxu0
    %v4151 = vpop.f32.mrb[0].mxu0
    %4152 = vdwg.mxu0
    %4153 = vmatprep.subr.bf16.mxu0 %v2806
    %4154 = vmatpush1.bf16.msra.mxu0 %v2805
    %4155 = vmatprep.subr.bf16.mxu0 %v2814
    %4156 = vmatpush1.bf16.msra.mxu0 %v2813
    %4157 = vmatprep.subr.bf16.mxu0 %v2822
    %4158 = vmatpush1.bf16.msra.mxu0 %v2821
    %4159 = vmatprep.subr.bf16.mxu0 %v2830
    %4160 = vmatpush1.bf16.msra.mxu0 %v2829
    %4161 = vmatprep.subr.bf16.mxu0 %v2838
    %4162 = vmatpush1.bf16.msra.mxu0 %v2837
    %4163 = vmatprep.subr.bf16.mxu0 %v2846
    %4164 = vmatpush1.bf16.msra.mxu0 %v2845
    %4165 = vmatprep.subr.bf16.mxu0 %v2854
    %4166 = vmatpush1.bf16.msra.mxu0 %v2853
    %4167 = vmatprep.subr.bf16.mxu0 %v2862
    %4168 = vmatpush1.bf16.msra.mxu0 %v2861
    %4169 = vmatprep.subr.bf16.mxu0 %v2870
    %4170 = vmatpush1.bf16.msra.mxu0 %v2869
    %4171 = vmatprep.subr.bf16.mxu0 %v2878
    %4172 = vmatpush1.bf16.msra.mxu0 %v2877
    %4173 = vmatprep.subr.bf16.mxu0 %v2886
    %4174 = vmatpush1.bf16.msra.mxu0 %v2885
    %4175 = vmatprep.subr.bf16.mxu0 %v2894
    %4176 = vmatpush1.bf16.msra.mxu0 %v2893
    %4177 = vmatprep.subr.bf16.mxu0 %v2902
    %4178 = vmatpush1.bf16.msra.mxu0 %v2901
    %4179 = vmatprep.subr.bf16.mxu0 %v2910
    %4180 = vmatpush1.bf16.msra.mxu0 %v2909
    %4181 = vmatprep.subr.bf16.mxu0 %v2918
    %4182 = vmatpush1.bf16.msra.mxu0 %v2917
    %4183 = vmatprep.subr.bf16.mxu0 %v2926
    %4184 = vmatpush1.bf16.msra.mxu0 %v2925
    %4185 = vmatprep.mubr.bf16.mxu0 %v704
    %4186 = vmatmul.mubr.bf16.gmra.mrb[0].mxu0 %v703
    %v4187 = vpop.f32.mrb[0].mxu0
    %v4188 = vadd.f32 %v1244, %v4187
    %v4189 = vpop.f32.mrb[0].mxu0
    %v4190 = vadd.f32 %v1248, %v4189
    %v4191 = vpop.f32.mrb[0].mxu0
    %v4192 = vpop.f32.mrb[0].mxu0
    %4193 = vdwg.mxu0
    %4194 = vmatprep.subr.bf16.mxu0 %v2934
    %4195 = vmatpush1.bf16.msra.mxu0 %v2933
    %4196 = vmatprep.subr.bf16.mxu0 %v2942
    %4197 = vmatpush1.bf16.msra.mxu0 %v2941
    %4198 = vmatprep.subr.bf16.mxu0 %v2950
    %4199 = vmatpush1.bf16.msra.mxu0 %v2949
    %4200 = vmatprep.subr.bf16.mxu0 %v2958
    %4201 = vmatpush1.bf16.msra.mxu0 %v2957
    %4202 = vmatprep.subr.bf16.mxu0 %v2966
    %4203 = vmatpush1.bf16.msra.mxu0 %v2965
    %4204 = vmatprep.subr.bf16.mxu0 %v2974
    %4205 = vmatpush1.bf16.msra.mxu0 %v2973
    %4206 = vmatprep.subr.bf16.mxu0 %v2982
    %4207 = vmatpush1.bf16.msra.mxu0 %v2981
    %4208 = vmatprep.subr.bf16.mxu0 %v2990
    %4209 = vmatpush1.bf16.msra.mxu0 %v2989
    %4210 = vmatprep.subr.bf16.mxu0 %v2998
    %4211 = vmatpush1.bf16.msra.mxu0 %v2997
    %4212 = vmatprep.subr.bf16.mxu0 %v3006
    %4213 = vmatpush1.bf16.msra.mxu0 %v3005
    %4214 = vmatprep.subr.bf16.mxu0 %v3014
    %4215 = vmatpush1.bf16.msra.mxu0 %v3013
    %4216 = vmatprep.subr.bf16.mxu0 %v3022
    %4217 = vmatpush1.bf16.msra.mxu0 %v3021
    %4218 = vmatprep.subr.bf16.mxu0 %v3030
    %4219 = vmatpush1.bf16.msra.mxu0 %v3029
    %4220 = vmatprep.subr.bf16.mxu0 %v3038
    %4221 = vmatpush1.bf16.msra.mxu0 %v3037
    %4222 = vmatprep.subr.bf16.mxu0 %v3046
    %4223 = vmatpush1.bf16.msra.mxu0 %v3045
    %4224 = vmatprep.subr.bf16.mxu0 %v3054
    %4225 = vmatpush1.bf16.msra.mxu0 %v3053
    %4226 = vmatprep.mubr.bf16.mxu0 %v706
    %4227 = vmatmul.mubr.bf16.gmra.mrb[0].mxu0 %v705
    %v4228 = vpop.f32.mrb[0].mxu0
    %v4229 = vadd.f32 %v4188, %v4228
    %v4230 = vpop.f32.mrb[0].mxu0
    %v4231 = vadd.f32 %v4190, %v4230
    %v4232 = vpop.f32.mrb[0].mxu0
    %v4233 = vpop.f32.mrb[0].mxu0
    %4234 = vdwg.mxu0
    %4235 = vmatprep.subr.bf16.mxu0 %v3062
    %4236 = vmatpush1.bf16.msra.mxu0 %v3061
    %4237 = vmatprep.subr.bf16.mxu0 %v3070
    %4238 = vmatpush1.bf16.msra.mxu0 %v3069
    %4239 = vmatprep.subr.bf16.mxu0 %v3078
    %4240 = vmatpush1.bf16.msra.mxu0 %v3077
    %4241 = vmatprep.subr.bf16.mxu0 %v3086
    %4242 = vmatpush1.bf16.msra.mxu0 %v3085
    %4243 = vmatprep.subr.bf16.mxu0 %v3094
    %4244 = vmatpush1.bf16.msra.mxu0 %v3093
    %4245 = vmatprep.subr.bf16.mxu0 %v3102
    %4246 = vmatpush1.bf16.msra.mxu0 %v3101
    %4247 = vmatprep.subr.bf16.mxu0 %v3110
    %4248 = vmatpush1.bf16.msra.mxu0 %v3109
    %4249 = vmatprep.subr.bf16.mxu0 %v3118
    %4250 = vmatpush1.bf16.msra.mxu0 %v3117
    %4251 = vmatprep.subr.bf16.mxu0 %v3126
    %4252 = vmatpush1.bf16.msra.mxu0 %v3125
    %4253 = vmatprep.subr.bf16.mxu0 %v3134
    %4254 = vmatpush1.bf16.msra.mxu0 %v3133
    %4255 = vmatprep.subr.bf16.mxu0 %v3142
    %4256 = vmatpush1.bf16.msra.mxu0 %v3141
    %4257 = vmatprep.subr.bf16.mxu0 %v3150
    %4258 = vmatpush1.bf16.msra.mxu0 %v3149
    %4259 = vmatprep.subr.bf16.mxu0 %v3158
    %4260 = vmatpush1.bf16.msra.mxu0 %v3157
    %4261 = vmatprep.subr.bf16.mxu0 %v3166
    %4262 = vmatpush1.bf16.msra.mxu0 %v3165
    %4263 = vmatprep.subr.bf16.mxu0 %v3174
    %4264 = vmatpush1.bf16.msra.mxu0 %v3173
    %4265 = vmatprep.subr.bf16.mxu0 %v3182
    %4266 = vmatpush1.bf16.msra.mxu0 %v3181
    %4267 = vmatprep.mubr.bf16.mxu0 %v708
    %4268 = vmatmul.mubr.bf16.gmra.mrb[0].mxu0 %v707
    %v4269 = vpop.f32.mrb[0].mxu0
    %v4270 = vadd.f32 %v4229, %v4269
    %v4271 = vpop.f32.mrb[0].mxu0
    %v4272 = vadd.f32 %v4231, %v4271
    %v4273 = vpop.f32.mrb[0].mxu0
    %v4274 = vpop.f32.mrb[0].mxu0
    %4275 = vdwg.mxu0
    %4276 = vmatprep.subr.bf16.mxu0 %v3190
    %4277 = vmatpush1.bf16.msra.mxu0 %v3189
    %4278 = vmatprep.subr.bf16.mxu0 %v3198
    %4279 = vmatpush1.bf16.msra.mxu0 %v3197
    %4280 = vmatprep.subr.bf16.mxu0 %v3206
    %4281 = vmatpush1.bf16.msra.mxu0 %v3205
    %4282 = vmatprep.subr.bf16.mxu0 %v3214
    %4283 = vmatpush1.bf16.msra.mxu0 %v3213
    %4284 = vmatprep.subr.bf16.mxu0 %v3222
    %4285 = vmatpush1.bf16.msra.mxu0 %v3221
    %4286 = vmatprep.subr.bf16.mxu0 %v3230
    %4287 = vmatpush1.bf16.msra.mxu0 %v3229
    %4288 = vmatprep.subr.bf16.mxu0 %v3238
    %4289 = vmatpush1.bf16.msra.mxu0 %v3237
    %4290 = vmatprep.subr.bf16.mxu0 %v3246
    %4291 = vmatpush1.bf16.msra.mxu0 %v3245
    %4292 = vmatprep.subr.bf16.mxu0 %v3254
    %4293 = vmatpush1.bf16.msra.mxu0 %v3253
    %4294 = vmatprep.subr.bf16.mxu0 %v3262
    %4295 = vmatpush1.bf16.msra.mxu0 %v3261
    %4296 = vmatprep.subr.bf16.mxu0 %v3270
    %4297 = vmatpush1.bf16.msra.mxu0 %v3269
    %4298 = vmatprep.subr.bf16.mxu0 %v3278
    %4299 = vmatpush1.bf16.msra.mxu0 %v3277
    %4300 = vmatprep.subr.bf16.mxu0 %v3286
    %4301 = vmatpush1.bf16.msra.mxu0 %v3285
    %4302 = vmatprep.subr.bf16.mxu0 %v3294
    %4303 = vmatpush1.bf16.msra.mxu0 %v3293
    %4304 = vmatprep.subr.bf16.mxu0 %v3302
    %4305 = vmatpush1.bf16.msra.mxu0 %v3301
    %4306 = vmatprep.subr.bf16.mxu0 %v3310
    %4307 = vmatpush1.bf16.msra.mxu0 %v3309
    %4308 = vmatprep.mubr.bf16.mxu0 %v710
    %4309 = vmatmul.mubr.bf16.gmra.mrb[0].mxu0 %v709
    %v4310 = vpop.f32.mrb[0].mxu0
    %v4311 = vadd.f32 %v4270, %v4310
    %v4312 = vpop.f32.mrb[0].mxu0
    %v4313 = vadd.f32 %v4272, %v4312
    %v4314 = vpop.f32.mrb[0].mxu0
    %v4315 = vpop.f32.mrb[0].mxu0
    %4316 = vdwg.mxu0
    %4317 = vmatprep.subr.bf16.mxu0 %v2808
    %4318 = vmatpush1.bf16.msra.mxu0 %v2807
    %4319 = vmatprep.subr.bf16.mxu0 %v2816
    %4320 = vmatpush1.bf16.msra.mxu0 %v2815
    %4321 = vmatprep.subr.bf16.mxu0 %v2824
    %4322 = vmatpush1.bf16.msra.mxu0 %v2823
    %4323 = vmatprep.subr.bf16.mxu0 %v2832
    %4324 = vmatpush1.bf16.msra.mxu0 %v2831
    %4325 = vmatprep.subr.bf16.mxu0 %v2840
    %4326 = vmatpush1.bf16.msra.mxu0 %v2839
    %4327 = vmatprep.subr.bf16.mxu0 %v2848
    %4328 = vmatpush1.bf16.msra.mxu0 %v2847
    %4329 = vmatprep.subr.bf16.mxu0 %v2856
    %4330 = vmatpush1.bf16.msra.mxu0 %v2855
    %4331 = vmatprep.subr.bf16.mxu0 %v2864
    %4332 = vmatpush1.bf16.msra.mxu0 %v2863
    %4333 = vmatprep.subr.bf16.mxu0 %v2872
    %4334 = vmatpush1.bf16.msra.mxu0 %v2871
    %4335 = vmatprep.subr.bf16.mxu0 %v2880
    %4336 = vmatpush1.bf16.msra.mxu0 %v2879
    %4337 = vmatprep.subr.bf16.mxu0 %v2888
    %4338 = vmatpush1.bf16.msra.mxu0 %v2887
    %4339 = vmatprep.subr.bf16.mxu0 %v2896
    %4340 = vmatpush1.bf16.msra.mxu0 %v2895
    %4341 = vmatprep.subr.bf16.mxu0 %v2904
    %4342 = vmatpush1.bf16.msra.mxu0 %v2903
    %4343 = vmatprep.subr.bf16.mxu0 %v2912
    %4344 = vmatpush1.bf16.msra.mxu0 %v2911
    %4345 = vmatprep.subr.bf16.mxu0 %v2920
    %4346 = vmatpush1.bf16.msra.mxu0 %v2919
    %4347 = vmatprep.subr.bf16.mxu0 %v2928
    %4348 = vmatpush1.bf16.msra.mxu0 %v2927
    %4349 = vmatprep.mubr.bf16.mxu0 %v704
    %4350 = vmatmul.mubr.bf16.gmra.mrb[0].mxu0 %v703
    %v4351 = vpop.f32.mrb[0].mxu0
    %v4352 = vadd.f32 %v1252, %v4351
    %v4353 = vpop.f32.mrb[0].mxu0
    %v4354 = vadd.f32 %v1256, %v4353
    %v4355 = vpop.f32.mrb[0].mxu0
    %v4356 = vpop.f32.mrb[0].mxu0
    %4357 = vdwg.mxu0
    %4358 = vmatprep.subr.bf16.mxu0 %v2936
    %4359 = vmatpush1.bf16.msra.mxu0 %v2935
    %4360 = vmatprep.subr.bf16.mxu0 %v2944
    %4361 = vmatpush1.bf16.msra.mxu0 %v2943
    %4362 = vmatprep.subr.bf16.mxu0 %v2952
    %4363 = vmatpush1.bf16.msra.mxu0 %v2951
    %4364 = vmatprep.subr.bf16.mxu0 %v2960
    %4365 = vmatpush1.bf16.msra.mxu0 %v2959
    %4366 = vmatprep.subr.bf16.mxu0 %v2968
    %4367 = vmatpush1.bf16.msra.mxu0 %v2967
    %4368 = vmatprep.subr.bf16.mxu0 %v2976
    %4369 = vmatpush1.bf16.msra.mxu0 %v2975
    %4370 = vmatprep.subr.bf16.mxu0 %v2984
    %4371 = vmatpush1.bf16.msra.mxu0 %v2983
    %4372 = vmatprep.subr.bf16.mxu0 %v2992
    %4373 = vmatpush1.bf16.msra.mxu0 %v2991
    %4374 = vmatprep.subr.bf16.mxu0 %v3000
    %4375 = vmatpush1.bf16.msra.mxu0 %v2999
    %4376 = vmatprep.subr.bf16.mxu0 %v3008
    %4377 = vmatpush1.bf16.msra.mxu0 %v3007
    %4378 = vmatprep.subr.bf16.mxu0 %v3016
    %4379 = vmatpush1.bf16.msra.mxu0 %v3015
    %4380 = vmatprep.subr.bf16.mxu0 %v3024
    %4381 = vmatpush1.bf16.msra.mxu0 %v3023
    %4382 = vmatprep.subr.bf16.mxu0 %v3032
    %4383 = vmatpush1.bf16.msra.mxu0 %v3031
    %4384 = vmatprep.subr.bf16.mxu0 %v3040
    %4385 = vmatpush1.bf16.msra.mxu0 %v3039
    %4386 = vmatprep.subr.bf16.mxu0 %v3048
    %4387 = vmatpush1.bf16.msra.mxu0 %v3047
    %4388 = vmatprep.subr.bf16.mxu0 %v3056
    %4389 = vmatpush1.bf16.msra.mxu0 %v3055
    %4390 = vmatprep.mubr.bf16.mxu0 %v706
    %4391 = vmatmul.mubr.bf16.gmra.mrb[0].mxu0 %v705
    %v4392 = vpop.f32.mrb[0].mxu0
    %v4393 = vadd.f32 %v4352, %v4392
    %v4394 = vpop.f32.mrb[0].mxu0
    %v4395 = vadd.f32 %v4354, %v4394
    %v4396 = vpop.f32.mrb[0].mxu0
    %v4397 = vpop.f32.mrb[0].mxu0
    %4398 = vdwg.mxu0
    %4399 = vmatprep.subr.bf16.mxu0 %v3064
    %4400 = vmatpush1.bf16.msra.mxu0 %v3063
    %4401 = vmatprep.subr.bf16.mxu0 %v3072
    %4402 = vmatpush1.bf16.msra.mxu0 %v3071
    %4403 = vmatprep.subr.bf16.mxu0 %v3080
    %4404 = vmatpush1.bf16.msra.mxu0 %v3079
    %4405 = vmatprep.subr.bf16.mxu0 %v3088
    %4406 = vmatpush1.bf16.msra.mxu0 %v3087
    %4407 = vmatprep.subr.bf16.mxu0 %v3096
    %4408 = vmatpush1.bf16.msra.mxu0 %v3095
    %4409 = vmatprep.subr.bf16.mxu0 %v3104
    %4410 = vmatpush1.bf16.msra.mxu0 %v3103
    %4411 = vmatprep.subr.bf16.mxu0 %v3112
    %4412 = vmatpush1.bf16.msra.mxu0 %v3111
    %4413 = vmatprep.subr.bf16.mxu0 %v3120
    %4414 = vmatpush1.bf16.msra.mxu0 %v3119
    %4415 = vmatprep.subr.bf16.mxu0 %v3128
    %4416 = vmatpush1.bf16.msra.mxu0 %v3127
    %4417 = vmatprep.subr.bf16.mxu0 %v3136
    %4418 = vmatpush1.bf16.msra.mxu0 %v3135
    %4419 = vmatprep.subr.bf16.mxu0 %v3144
    %4420 = vmatpush1.bf16.msra.mxu0 %v3143
    %4421 = vmatprep.subr.bf16.mxu0 %v3152
    %4422 = vmatpush1.bf16.msra.mxu0 %v3151
    %4423 = vmatprep.subr.bf16.mxu0 %v3160
    %4424 = vmatpush1.bf16.msra.mxu0 %v3159
    %4425 = vmatprep.subr.bf16.mxu0 %v3168
    %4426 = vmatpush1.bf16.msra.mxu0 %v3167
    %4427 = vmatprep.subr.bf16.mxu0 %v3176
    %4428 = vmatpush1.bf16.msra.mxu0 %v3175
    %4429 = vmatprep.subr.bf16.mxu0 %v3184
    %4430 = vmatpush1.bf16.msra.mxu0 %v3183
    %4431 = vmatprep.mubr.bf16.mxu0 %v708
    %4432 = vmatmul.mubr.bf16.gmra.mrb[0].mxu0 %v707
    %v4433 = vpop.f32.mrb[0].mxu0
    %v4434 = vadd.f32 %v4393, %v4433
    %v4435 = vpop.f32.mrb[0].mxu0
    %v4436 = vadd.f32 %v4395, %v4435
    %v4437 = vpop.f32.mrb[0].mxu0
    %v4438 = vpop.f32.mrb[0].mxu0
    %4439 = vdwg.mxu0
    %4440 = vmatprep.subr.bf16.mxu0 %v3192
    %4441 = vmatpush1.bf16.msra.mxu0 %v3191
    %4442 = vmatprep.subr.bf16.mxu0 %v3200
    %4443 = vmatpush1.bf16.msra.mxu0 %v3199
    %4444 = vmatprep.subr.bf16.mxu0 %v3208
    %4445 = vmatpush1.bf16.msra.mxu0 %v3207
    %4446 = vmatprep.subr.bf16.mxu0 %v3216
    %4447 = vmatpush1.bf16.msra.mxu0 %v3215
    %4448 = vmatprep.subr.bf16.mxu0 %v3224
    %4449 = vmatpush1.bf16.msra.mxu0 %v3223
    %4450 = vmatprep.subr.bf16.mxu0 %v3232
    %4451 = vmatpush1.bf16.msra.mxu0 %v3231
    %4452 = vmatprep.subr.bf16.mxu0 %v3240
    %4453 = vmatpush1.bf16.msra.mxu0 %v3239
    %4454 = vmatprep.subr.bf16.mxu0 %v3248
    %4455 = vmatpush1.bf16.msra.mxu0 %v3247
    %4456 = vmatprep.subr.bf16.mxu0 %v3256
    %4457 = vmatpush1.bf16.msra.mxu0 %v3255
    %4458 = vmatprep.subr.bf16.mxu0 %v3264
    %4459 = vmatpush1.bf16.msra.mxu0 %v3263
    %4460 = vmatprep.subr.bf16.mxu0 %v3272
    %4461 = vmatpush1.bf16.msra.mxu0 %v3271
    %4462 = vmatprep.subr.bf16.mxu0 %v3280
    %4463 = vmatpush1.bf16.msra.mxu0 %v3279
    %4464 = vmatprep.subr.bf16.mxu0 %v3288
    %4465 = vmatpush1.bf16.msra.mxu0 %v3287
    %4466 = vmatprep.subr.bf16.mxu0 %v3296
    %4467 = vmatpush1.bf16.msra.mxu0 %v3295
    %4468 = vmatprep.subr.bf16.mxu0 %v3304
    %4469 = vmatpush1.bf16.msra.mxu0 %v3303
    %4470 = vmatprep.subr.bf16.mxu0 %v3312
    %4471 = vmatpush1.bf16.msra.mxu0 %v3311
    %4472 = vmatprep.mubr.bf16.mxu0 %v710
    %4473 = vmatmul.mubr.bf16.gmra.mrb[0].mxu0 %v709
    %v4474 = vpop.f32.mrb[0].mxu0
    %v4475 = vadd.f32 %v4434, %v4474
    %v4476 = vpop.f32.mrb[0].mxu0
    %v4477 = vadd.f32 %v4436, %v4476
    %v4478 = vpop.f32.mrb[0].mxu0
    %v4479 = vpop.f32.mrb[0].mxu0
    %4480 = vdwg.mxu0
    %v4481 = vpack.c.bf16 %v3983, %v3983
    %v4482 = vpack.c.bf16 %v3985, %v3985
    %v4483 = vpack.c.bf16 %v4147, %v4147
    %v4484 = vpack.c.bf16 %v4149, %v4149
    %v4485 = vpack.c.bf16 %v4311, %v4311
    %v4486 = vpack.c.bf16 %v4313, %v4313
    %v4487 = vpack.c.bf16 %v4475, %v4475
    %v4488 = vpack.c.bf16 %v4477, %v4477
    %v4489 = vld [vmem:[#allocation10] sm:$0xff]
    %v4490 = vld [vmem:[#allocation10 + $0x8] sm:$0xff]
    %v4491 = vld [vmem:[#allocation10 + $0x10] sm:$0xff]
    %v4492 = vld [vmem:[#allocation10 + $0x18] sm:$0xf]
    %v4493 = vld [vmem:[#allocation10 + $0x1c] sm:$0xff]
    %v4494 = vld [vmem:[#allocation10 + $0x24] sm:$0xff]
    %v4495 = vld [vmem:[#allocation10 + $0x2c] sm:$0xff]
    %v4496 = vld [vmem:[#allocation10 + $0x34] sm:$0xf]
    %v4497 = vld [vmem:[#allocation10 + $0x38] sm:$0xff]
    %v4498 = vld [vmem:[#allocation10 + $0x40] sm:$0xff]
    %v4499 = vld [vmem:[#allocation10 + $0x48] sm:$0xff]
    %v4500 = vld [vmem:[#allocation10 + $0x50] sm:$0xf]
    %v4501 = vld [vmem:[#allocation10 + $0x54] sm:$0xff]
    %v4502 = vld [vmem:[#allocation10 + $0x5c] sm:$0xff]
    %v4503 = vld [vmem:[#allocation10 + $0x64] sm:$0xff]
    %v4504 = vld [vmem:[#allocation10 + $0x6c] sm:$0xf]
    %v4505 = vld [vmem:[#allocation10 + $0x70] sm:$0xff]
    %v4506 = vld [vmem:[#allocation10 + $0x78] sm:$0xff]
    %v4507 = vld [vmem:[#allocation10 + $0x80] sm:$0xff]
    %v4508 = vld [vmem:[#allocation10 + $0x88] sm:$0xf]
    %v4509 = vld [vmem:[#allocation10 + $0x8c] sm:$0xff]
    %v4510 = vld [vmem:[#allocation10 + $0x94] sm:$0xff]
    %v4511 = vld [vmem:[#allocation10 + $0x9c] sm:$0xff]
    %v4512 = vld [vmem:[#allocation10 + $0xa4] sm:$0xf]
    %v4513 = vld [vmem:[#allocation10 + $0xa8] sm:$0xff]
    %v4514 = vld [vmem:[#allocation10 + $0xb0] sm:$0xff]
    %v4515 = vld [vmem:[#allocation10 + $0xb8] sm:$0xff]
    %v4516 = vld [vmem:[#allocation10 + $0xc0] sm:$0xf]
    %v4517 = vld [vmem:[#allocation10 + $0xc4] sm:$0xff]
    %v4518 = vld [vmem:[#allocation10 + $0xcc] sm:$0xff]
    %v4519 = vld [vmem:[#allocation10 + $0xd4] sm:$0xff]
    %v4520 = vld [vmem:[#allocation10 + $0xdc] sm:$0xf]
    %v4521 = vld [vmem:[#allocation10 + $0xe0] sm:$0xff]
    %v4522 = vld [vmem:[#allocation10 + $0xe8] sm:$0xff]
    %v4523 = vld [vmem:[#allocation10 + $0xf0] sm:$0xff]
    %v4524 = vld [vmem:[#allocation10 + $0xf8] sm:$0xf]
    %v4525 = vld [vmem:[#allocation10 + $0xfc] sm:$0xff]
    %v4526 = vld [vmem:[#allocation10 + $0x104] sm:$0xff]
    %v4527 = vld [vmem:[#allocation10 + $0x10c] sm:$0xff]
    %v4528 = vld [vmem:[#allocation10 + $0x114] sm:$0xf]
    %v4529 = vld [vmem:[#allocation10 + $0x118] sm:$0xff]
    %v4530 = vld [vmem:[#allocation10 + $0x120] sm:$0xff]
    %v4531 = vld [vmem:[#allocation10 + $0x128] sm:$0xff]
    %v4532 = vld [vmem:[#allocation10 + $0x130] sm:$0xf]
    %v4533 = vld [vmem:[#allocation10 + $0x134] sm:$0xff]
    %v4534 = vld [vmem:[#allocation10 + $0x13c] sm:$0xff]
    %v4535 = vld [vmem:[#allocation10 + $0x144] sm:$0xff]
    %v4536 = vld [vmem:[#allocation10 + $0x14c] sm:$0xf]
    %v4537 = vld [vmem:[#allocation10 + $0x150] sm:$0xff]
    %v4538 = vld [vmem:[#allocation10 + $0x158] sm:$0xff]
    %v4539 = vld [vmem:[#allocation10 + $0x160] sm:$0xff]
    %v4540 = vld [vmem:[#allocation10 + $0x168] sm:$0xf]
    %v4541 = vld [vmem:[#allocation10 + $0x16c] sm:$0xff]
    %v4542 = vld [vmem:[#allocation10 + $0x174] sm:$0xff]
    %v4543 = vld [vmem:[#allocation10 + $0x17c] sm:$0xff]
    %v4544 = vld [vmem:[#allocation10 + $0x184] sm:$0xf]
    %v4545 = vld [vmem:[#allocation10 + $0x188] sm:$0xff]
    %v4546 = vld [vmem:[#allocation10 + $0x190] sm:$0xff]
    %v4547 = vld [vmem:[#allocation10 + $0x198] sm:$0xff]
    %v4548 = vld [vmem:[#allocation10 + $0x1a0] sm:$0xf]
    %v4549 = vld [vmem:[#allocation10 + $0x1a4] sm:$0xff]
    %v4550 = vld [vmem:[#allocation10 + $0x1ac] sm:$0xff]
    %v4551 = vld [vmem:[#allocation10 + $0x1b4] sm:$0xff]
    %v4552 = vld [vmem:[#allocation10 + $0x1bc] sm:$0xf]
    %v4553 = vld [vmem:[#allocation10 + $0x1c0] sm:$0xff]
    %v4554 = vld [vmem:[#allocation10 + $0x1c8] sm:$0xff]
    %v4555 = vld [vmem:[#allocation10 + $0x1d0] sm:$0xff]
    %v4556 = vld [vmem:[#allocation10 + $0x1d8] sm:$0xf]
    %v4557 = vld [vmem:[#allocation10 + $0x1dc] sm:$0xff]
    %v4558 = vld [vmem:[#allocation10 + $0x1e4] sm:$0xff]
    %v4559 = vld [vmem:[#allocation10 + $0x1ec] sm:$0xff]
    %v4560 = vld [vmem:[#allocation10 + $0x1f4] sm:$0xf]
    %v4561 = vld [vmem:[#allocation10 + $0x1f8] sm:$0xff]
    %v4562 = vld [vmem:[#allocation10 + $0x200] sm:$0xff]
    %v4563 = vld [vmem:[#allocation10 + $0x208] sm:$0xff]
    %v4564 = vld [vmem:[#allocation10 + $0x210] sm:$0xf]
    %v4565 = vld [vmem:[#allocation10 + $0x214] sm:$0xff]
    %v4566 = vld [vmem:[#allocation10 + $0x21c] sm:$0xff]
    %v4567 = vld [vmem:[#allocation10 + $0x224] sm:$0xff]
    %v4568 = vld [vmem:[#allocation10 + $0x22c] sm:$0xf]
    %v4569 = vld [vmem:[#allocation10 + $0x230] sm:$0xff]
    %v4570 = vld [vmem:[#allocation10 + $0x238] sm:$0xff]
    %v4571 = vld [vmem:[#allocation10 + $0x240] sm:$0xff]
    %v4572 = vld [vmem:[#allocation10 + $0x248] sm:$0xf]
    %v4573 = vld [vmem:[#allocation10 + $0x24c] sm:$0xff]
    %v4574 = vld [vmem:[#allocation10 + $0x254] sm:$0xff]
    %v4575 = vld [vmem:[#allocation10 + $0x25c] sm:$0xff]
    %v4576 = vld [vmem:[#allocation10 + $0x264] sm:$0xf]
    %v4577 = vld [vmem:[#allocation10 + $0x268] sm:$0xff]
    %v4578 = vld [vmem:[#allocation10 + $0x270] sm:$0xff]
    %v4579 = vld [vmem:[#allocation10 + $0x278] sm:$0xff]
    %v4580 = vld [vmem:[#allocation10 + $0x280] sm:$0xf]
    %v4581 = vld [vmem:[#allocation10 + $0x284] sm:$0xff]
    %v4582 = vld [vmem:[#allocation10 + $0x28c] sm:$0xff]
    %v4583 = vld [vmem:[#allocation10 + $0x294] sm:$0xff]
    %v4584 = vld [vmem:[#allocation10 + $0x29c] sm:$0xf]
    %v4585 = vld [vmem:[#allocation10 + $0x2a0] sm:$0xff]
    %v4586 = vld [vmem:[#allocation10 + $0x2a8] sm:$0xff]
    %v4587 = vld [vmem:[#allocation10 + $0x2b0] sm:$0xff]
    %v4588 = vld [vmem:[#allocation10 + $0x2b8] sm:$0xf]
    %v4589 = vld [vmem:[#allocation10 + $0x2bc] sm:$0xff]
    %v4590 = vld [vmem:[#allocation10 + $0x2c4] sm:$0xff]
    %v4591 = vld [vmem:[#allocation10 + $0x2cc] sm:$0xff]
    %v4592 = vld [vmem:[#allocation10 + $0x2d4] sm:$0xf]
    %v4593 = vld [vmem:[#allocation10 + $0x2d8] sm:$0xff]
    %v4594 = vld [vmem:[#allocation10 + $0x2e0] sm:$0xff]
    %v4595 = vld [vmem:[#allocation10 + $0x2e8] sm:$0xff]
    %v4596 = vld [vmem:[#allocation10 + $0x2f0] sm:$0xf]
    %v4597 = vld [vmem:[#allocation10 + $0x2f4] sm:$0xff]
    %v4598 = vld [vmem:[#allocation10 + $0x2fc] sm:$0xff]
    %v4599 = vld [vmem:[#allocation10 + $0x304] sm:$0xff]
    %v4600 = vld [vmem:[#allocation10 + $0x30c] sm:$0xf]
    %v4601 = vld [vmem:[#allocation10 + $0x310] sm:$0xff]
    %v4602 = vld [vmem:[#allocation10 + $0x318] sm:$0xff]
    %v4603 = vld [vmem:[#allocation10 + $0x320] sm:$0xff]
    %v4604 = vld [vmem:[#allocation10 + $0x328] sm:$0xf]
    %v4605 = vld [vmem:[#allocation10 + $0x32c] sm:$0xff]
    %v4606 = vld [vmem:[#allocation10 + $0x334] sm:$0xff]
    %v4607 = vld [vmem:[#allocation10 + $0x33c] sm:$0xff]
    %v4608 = vld [vmem:[#allocation10 + $0x344] sm:$0xf]
    %v4609 = vld [vmem:[#allocation10 + $0x348] sm:$0xff]
    %v4610 = vld [vmem:[#allocation10 + $0x350] sm:$0xff]
    %v4611 = vld [vmem:[#allocation10 + $0x358] sm:$0xff]
    %v4612 = vld [vmem:[#allocation10 + $0x360] sm:$0xf]
    %v4613 = vld [vmem:[#allocation10 + $0x364] sm:$0xff]
    %v4614 = vld [vmem:[#allocation10 + $0x36c] sm:$0xff]
    %v4615 = vld [vmem:[#allocation10 + $0x374] sm:$0xff]
    %v4616 = vld [vmem:[#allocation10 + $0x37c] sm:$0xf]
    %v4617 = vld [vmem:[#allocation10 + $0x380] sm:$0xff]
    %v4618 = vld [vmem:[#allocation10 + $0x388] sm:$0xff]
    %v4619 = vld [vmem:[#allocation10 + $0x390] sm:$0xff]
    %v4620 = vld [vmem:[#allocation10 + $0x398] sm:$0xf]
    %v4621 = vld [vmem:[#allocation10 + $0x39c] sm:$0xff]
    %v4622 = vld [vmem:[#allocation10 + $0x3a4] sm:$0xff]
    %v4623 = vld [vmem:[#allocation10 + $0x3ac] sm:$0xff]
    %v4624 = vld [vmem:[#allocation10 + $0x3b4] sm:$0xf]
    %v4625 = vld [vmem:[#allocation10 + $0x3b8] sm:$0xff]
    %v4626 = vld [vmem:[#allocation10 + $0x3c0] sm:$0xff]
    %v4627 = vld [vmem:[#allocation10 + $0x3c8] sm:$0xff]
    %v4628 = vld [vmem:[#allocation10 + $0x3d0] sm:$0xf]
    %v4629 = vld [vmem:[#allocation10 + $0x3d4] sm:$0xff]
    %v4630 = vld [vmem:[#allocation10 + $0x3dc] sm:$0xff]
    %v4631 = vld [vmem:[#allocation10 + $0x3e4] sm:$0xff]
    %v4632 = vld [vmem:[#allocation10 + $0x3ec] sm:$0xf]
    %v4633 = vld [vmem:[#allocation10 + $0x3f0] sm:$0xff]
    %v4634 = vld [vmem:[#allocation10 + $0x3f8] sm:$0xff]
    %v4635 = vld [vmem:[#allocation10 + $0x400] sm:$0xff]
    %v4636 = vld [vmem:[#allocation10 + $0x408] sm:$0xf]
    %v4637 = vld [vmem:[#allocation10 + $0x40c] sm:$0xff]
    %v4638 = vld [vmem:[#allocation10 + $0x414] sm:$0xff]
    %v4639 = vld [vmem:[#allocation10 + $0x41c] sm:$0xff]
    %v4640 = vld [vmem:[#allocation10 + $0x424] sm:$0xf]
    %v4641 = vld [vmem:[#allocation10 + $0x428] sm:$0xff]
    %v4642 = vld [vmem:[#allocation10 + $0x430] sm:$0xff]
    %v4643 = vld [vmem:[#allocation10 + $0x438] sm:$0xff]
    %v4644 = vld [vmem:[#allocation10 + $0x440] sm:$0xf]
    %v4645 = vld [vmem:[#allocation10 + $0x444] sm:$0xff]
    %v4646 = vld [vmem:[#allocation10 + $0x44c] sm:$0xff]
    %v4647 = vld [vmem:[#allocation10 + $0x454] sm:$0xff]
    %v4648 = vld [vmem:[#allocation10 + $0x45c] sm:$0xf]
    %v4649 = vld [vmem:[#allocation10 + $0x460] sm:$0xff]
    %v4650 = vld [vmem:[#allocation10 + $0x468] sm:$0xff]
    %v4651 = vld [vmem:[#allocation10 + $0x470] sm:$0xff]
    %v4652 = vld [vmem:[#allocation10 + $0x478] sm:$0xf]
    %v4653 = vld [vmem:[#allocation10 + $0x47c] sm:$0xff]
    %v4654 = vld [vmem:[#allocation10 + $0x484] sm:$0xff]
    %v4655 = vld [vmem:[#allocation10 + $0x48c] sm:$0xff]
    %v4656 = vld [vmem:[#allocation10 + $0x494] sm:$0xf]
    %v4657 = vld [vmem:[#allocation10 + $0x498] sm:$0xff]
    %v4658 = vld [vmem:[#allocation10 + $0x4a0] sm:$0xff]
    %v4659 = vld [vmem:[#allocation10 + $0x4a8] sm:$0xff]
    %v4660 = vld [vmem:[#allocation10 + $0x4b0] sm:$0xf]
    %v4661 = vld [vmem:[#allocation10 + $0x4b4] sm:$0xff]
    %v4662 = vld [vmem:[#allocation10 + $0x4bc] sm:$0xff]
    %v4663 = vld [vmem:[#allocation10 + $0x4c4] sm:$0xff]
    %v4664 = vld [vmem:[#allocation10 + $0x4cc] sm:$0xf]
    %v4665 = vld [vmem:[#allocation10 + $0x4d0] sm:$0xff]
    %v4666 = vld [vmem:[#allocation10 + $0x4d8] sm:$0xff]
    %v4667 = vld [vmem:[#allocation10 + $0x4e0] sm:$0xff]
    %v4668 = vld [vmem:[#allocation10 + $0x4e8] sm:$0xf]
    %v4669 = vld [vmem:[#allocation10 + $0x4ec] sm:$0xff]
    %v4670 = vld [vmem:[#allocation10 + $0x4f4] sm:$0xff]
    %v4671 = vld [vmem:[#allocation10 + $0x4fc] sm:$0xff]
    %v4672 = vld [vmem:[#allocation10 + $0x504] sm:$0xf]
    %v4673 = vld [vmem:[#allocation10 + $0x508] sm:$0xff]
    %v4674 = vld [vmem:[#allocation10 + $0x510] sm:$0xff]
    %v4675 = vld [vmem:[#allocation10 + $0x518] sm:$0xff]
    %v4676 = vld [vmem:[#allocation10 + $0x520] sm:$0xf]
    %v4677 = vld [vmem:[#allocation10 + $0x524] sm:$0xff]
    %v4678 = vld [vmem:[#allocation10 + $0x52c] sm:$0xff]
    %v4679 = vld [vmem:[#allocation10 + $0x534] sm:$0xff]
    %v4680 = vld [vmem:[#allocation10 + $0x53c] sm:$0xf]
    %v4681 = vld [vmem:[#allocation10 + $0x540] sm:$0xff]
    %v4682 = vld [vmem:[#allocation10 + $0x548] sm:$0xff]
    %v4683 = vld [vmem:[#allocation10 + $0x550] sm:$0xff]
    %v4684 = vld [vmem:[#allocation10 + $0x558] sm:$0xf]
    %v4685 = vld [vmem:[#allocation10 + $0x55c] sm:$0xff]
    %v4686 = vld [vmem:[#allocation10 + $0x564] sm:$0xff]
    %v4687 = vld [vmem:[#allocation10 + $0x56c] sm:$0xff]
    %v4688 = vld [vmem:[#allocation10 + $0x574] sm:$0xf]
    %v4689 = vld [vmem:[#allocation10 + $0x578] sm:$0xff]
    %v4690 = vld [vmem:[#allocation10 + $0x580] sm:$0xff]
    %v4691 = vld [vmem:[#allocation10 + $0x588] sm:$0xff]
    %v4692 = vld [vmem:[#allocation10 + $0x590] sm:$0xf]
    %v4693 = vld [vmem:[#allocation10 + $0x594] sm:$0xff]
    %v4694 = vld [vmem:[#allocation10 + $0x59c] sm:$0xff]
    %v4695 = vld [vmem:[#allocation10 + $0x5a4] sm:$0xff]
    %v4696 = vld [vmem:[#allocation10 + $0x5ac] sm:$0xf]
    %v4697 = vld [vmem:[#allocation10 + $0x5b0] sm:$0xff]
    %v4698 = vld [vmem:[#allocation10 + $0x5b8] sm:$0xff]
    %v4699 = vld [vmem:[#allocation10 + $0x5c0] sm:$0xff]
    %v4700 = vld [vmem:[#allocation10 + $0x5c8] sm:$0xf]
    %v4701 = vld [vmem:[#allocation10 + $0x5cc] sm:$0xff]
    %v4702 = vld [vmem:[#allocation10 + $0x5d4] sm:$0xff]
    %v4703 = vld [vmem:[#allocation10 + $0x5dc] sm:$0xff]
    %v4704 = vld [vmem:[#allocation10 + $0x5e4] sm:$0xf]
    %v4705 = vld [vmem:[#allocation10 + $0x5e8] sm:$0xff]
    %v4706 = vld [vmem:[#allocation10 + $0x5f0] sm:$0xff]
    %v4707 = vld [vmem:[#allocation10 + $0x5f8] sm:$0xff]
    %v4708 = vld [vmem:[#allocation10 + $0x600] sm:$0xf]
    %v4709 = vld [vmem:[#allocation10 + $0x604] sm:$0xff]
    %v4710 = vld [vmem:[#allocation10 + $0x60c] sm:$0xff]
    %v4711 = vld [vmem:[#allocation10 + $0x614] sm:$0xff]
    %v4712 = vld [vmem:[#allocation10 + $0x61c] sm:$0xf]
    %v4713 = vld [vmem:[#allocation10 + $0x620] sm:$0xff]
    %v4714 = vld [vmem:[#allocation10 + $0x628] sm:$0xff]
    %v4715 = vld [vmem:[#allocation10 + $0x630] sm:$0xff]
    %v4716 = vld [vmem:[#allocation10 + $0x638] sm:$0xf]
    %v4717 = vld [vmem:[#allocation10 + $0x63c] sm:$0xff]
    %v4718 = vld [vmem:[#allocation10 + $0x644] sm:$0xff]
    %v4719 = vld [vmem:[#allocation10 + $0x64c] sm:$0xff]
    %v4720 = vld [vmem:[#allocation10 + $0x654] sm:$0xf]
    %v4721 = vld [vmem:[#allocation10 + $0x658] sm:$0xff]
    %v4722 = vld [vmem:[#allocation10 + $0x660] sm:$0xff]
    %v4723 = vld [vmem:[#allocation10 + $0x668] sm:$0xff]
    %v4724 = vld [vmem:[#allocation10 + $0x670] sm:$0xf]
    %v4725 = vld [vmem:[#allocation10 + $0x674] sm:$0xff]
    %v4726 = vld [vmem:[#allocation10 + $0x67c] sm:$0xff]
    %v4727 = vld [vmem:[#allocation10 + $0x684] sm:$0xff]
    %v4728 = vld [vmem:[#allocation10 + $0x68c] sm:$0xf]
    %v4729 = vld [vmem:[#allocation10 + $0x690] sm:$0xff]
    %v4730 = vld [vmem:[#allocation10 + $0x698] sm:$0xff]
    %v4731 = vld [vmem:[#allocation10 + $0x6a0] sm:$0xff]
    %v4732 = vld [vmem:[#allocation10 + $0x6a8] sm:$0xf]
    %v4733 = vld [vmem:[#allocation10 + $0x6ac] sm:$0xff]
    %v4734 = vld [vmem:[#allocation10 + $0x6b4] sm:$0xff]
    %v4735 = vld [vmem:[#allocation10 + $0x6bc] sm:$0xff]
    %v4736 = vld [vmem:[#allocation10 + $0x6c4] sm:$0xf]
    %v4737 = vld [vmem:[#allocation10 + $0x6c8] sm:$0xff]
    %v4738 = vld [vmem:[#allocation10 + $0x6d0] sm:$0xff]
    %v4739 = vld [vmem:[#allocation10 + $0x6d8] sm:$0xff]
    %v4740 = vld [vmem:[#allocation10 + $0x6e0] sm:$0xf]
    %v4741 = vld [vmem:[#allocation10 + $0x6e4] sm:$0xff]
    %v4742 = vld [vmem:[#allocation10 + $0x6ec] sm:$0xff]
    %v4743 = vld [vmem:[#allocation10 + $0x6f4] sm:$0xff]
    %v4744 = vld [vmem:[#allocation10 + $0x6fc] sm:$0xf]
    %v4745 = vld [vmem:[#allocation10 + $0x700] sm:$0xff]
    %v4746 = vld [vmem:[#allocation10 + $0x708] sm:$0xff]
    %v4747 = vld [vmem:[#allocation10 + $0x710] sm:$0xff]
    %v4748 = vld [vmem:[#allocation10 + $0x718] sm:$0xf]
    %v4749 = vld [vmem:[#allocation10 + $0x71c] sm:$0xff]
    %v4750 = vld [vmem:[#allocation10 + $0x724] sm:$0xff]
    %v4751 = vld [vmem:[#allocation10 + $0x72c] sm:$0xff]
    %v4752 = vld [vmem:[#allocation10 + $0x734] sm:$0xf]
    %v4753 = vld [vmem:[#allocation10 + $0x738] sm:$0xff]
    %v4754 = vld [vmem:[#allocation10 + $0x740] sm:$0xff]
    %v4755 = vld [vmem:[#allocation10 + $0x748] sm:$0xff]
    %v4756 = vld [vmem:[#allocation10 + $0x750] sm:$0xf]
    %v4757 = vld [vmem:[#allocation10 + $0x754] sm:$0xff]
    %v4758 = vld [vmem:[#allocation10 + $0x75c] sm:$0xff]
    %v4759 = vld [vmem:[#allocation10 + $0x764] sm:$0xff]
    %v4760 = vld [vmem:[#allocation10 + $0x76c] sm:$0xf]
    %v4761 = vld [vmem:[#allocation10 + $0x770] sm:$0xff]
    %v4762 = vld [vmem:[#allocation10 + $0x778] sm:$0xff]
    %v4763 = vld [vmem:[#allocation10 + $0x780] sm:$0xff]
    %v4764 = vld [vmem:[#allocation10 + $0x788] sm:$0xf]
    %v4765 = vld [vmem:[#allocation10 + $0x78c] sm:$0xff]
    %v4766 = vld [vmem:[#allocation10 + $0x794] sm:$0xff]
    %v4767 = vld [vmem:[#allocation10 + $0x79c] sm:$0xff]
    %v4768 = vld [vmem:[#allocation10 + $0x7a4] sm:$0xf]
    %v4769 = vld [vmem:[#allocation10 + $0x7a8] sm:$0xff]
    %v4770 = vld [vmem:[#allocation10 + $0x7b0] sm:$0xff]
    %v4771 = vld [vmem:[#allocation10 + $0x7b8] sm:$0xff]
    %v4772 = vld [vmem:[#allocation10 + $0x7c0] sm:$0xf]
    %v4773 = vld [vmem:[#allocation10 + $0x7c4] sm:$0xff]
    %v4774 = vld [vmem:[#allocation10 + $0x7cc] sm:$0xff]
    %v4775 = vld [vmem:[#allocation10 + $0x7d4] sm:$0xff]
    %v4776 = vld [vmem:[#allocation10 + $0x7dc] sm:$0xf]
    %v4777 = vld [vmem:[#allocation10 + $0x7e0] sm:$0xff]
    %v4778 = vld [vmem:[#allocation10 + $0x7e8] sm:$0xff]
    %v4779 = vld [vmem:[#allocation10 + $0x7f0] sm:$0xff]
    %v4780 = vld [vmem:[#allocation10 + $0x7f8] sm:$0xf]
    %v4781 = vld [vmem:[#allocation10 + $0x7fc] sm:$0xff]
    %v4782 = vld [vmem:[#allocation10 + $0x804] sm:$0xff]
    %v4783 = vld [vmem:[#allocation10 + $0x80c] sm:$0xff]
    %v4784 = vld [vmem:[#allocation10 + $0x814] sm:$0xf]
    %v4785 = vld [vmem:[#allocation10 + $0x818] sm:$0xff]
    %v4786 = vld [vmem:[#allocation10 + $0x820] sm:$0xff]
    %v4787 = vld [vmem:[#allocation10 + $0x828] sm:$0xff]
    %v4788 = vld [vmem:[#allocation10 + $0x830] sm:$0xf]
    %v4789 = vld [vmem:[#allocation10 + $0x834] sm:$0xff]
    %v4790 = vld [vmem:[#allocation10 + $0x83c] sm:$0xff]
    %v4791 = vld [vmem:[#allocation10 + $0x844] sm:$0xff]
    %v4792 = vld [vmem:[#allocation10 + $0x84c] sm:$0xf]
    %v4793 = vld [vmem:[#allocation10 + $0x850] sm:$0xff]
    %v4794 = vld [vmem:[#allocation10 + $0x858] sm:$0xff]
    %v4795 = vld [vmem:[#allocation10 + $0x860] sm:$0xff]
    %v4796 = vld [vmem:[#allocation10 + $0x868] sm:$0xf]
    %v4797 = vld [vmem:[#allocation10 + $0x86c] sm:$0xff]
    %v4798 = vld [vmem:[#allocation10 + $0x874] sm:$0xff]
    %v4799 = vld [vmem:[#allocation10 + $0x87c] sm:$0xff]
    %v4800 = vld [vmem:[#allocation10 + $0x884] sm:$0xf]
    %v4801 = vld [vmem:[#allocation10 + $0x888] sm:$0xff]
    %v4802 = vld [vmem:[#allocation10 + $0x890] sm:$0xff]
    %v4803 = vld [vmem:[#allocation10 + $0x898] sm:$0xff]
    %v4804 = vld [vmem:[#allocation10 + $0x8a0] sm:$0xf]
    %v4805 = vld [vmem:[#allocation10 + $0x8a4] sm:$0xff]
    %v4806 = vld [vmem:[#allocation10 + $0x8ac] sm:$0xff]
    %v4807 = vld [vmem:[#allocation10 + $0x8b4] sm:$0xff]
    %v4808 = vld [vmem:[#allocation10 + $0x8bc] sm:$0xf]
    %v4809 = vld [vmem:[#allocation10 + $0x8c0] sm:$0xff]
    %v4810 = vld [vmem:[#allocation10 + $0x8c8] sm:$0xff]
    %v4811 = vld [vmem:[#allocation10 + $0x8d0] sm:$0xff]
    %v4812 = vld [vmem:[#allocation10 + $0x8d8] sm:$0xf]
    %v4813 = vld [vmem:[#allocation10 + $0x8dc] sm:$0xff]
    %v4814 = vld [vmem:[#allocation10 + $0x8e4] sm:$0xff]
    %v4815 = vld [vmem:[#allocation10 + $0x8ec] sm:$0xff]
    %v4816 = vld [vmem:[#allocation10 + $0x8f4] sm:$0xf]
    %v4817 = vld [vmem:[#allocation10 + $0x8f8] sm:$0xff]
    %v4818 = vld [vmem:[#allocation10 + $0x900] sm:$0xff]
    %v4819 = vld [vmem:[#allocation10 + $0x908] sm:$0xff]
    %v4820 = vld [vmem:[#allocation10 + $0x910] sm:$0xf]
    %v4821 = vld [vmem:[#allocation10 + $0x914] sm:$0xff]
    %v4822 = vld [vmem:[#allocation10 + $0x91c] sm:$0xff]
    %v4823 = vld [vmem:[#allocation10 + $0x924] sm:$0xff]
    %v4824 = vld [vmem:[#allocation10 + $0x92c] sm:$0xf]
    %v4825 = vld [vmem:[#allocation10 + $0x930] sm:$0xff]
    %v4826 = vld [vmem:[#allocation10 + $0x938] sm:$0xff]
    %v4827 = vld [vmem:[#allocation10 + $0x940] sm:$0xff]
    %v4828 = vld [vmem:[#allocation10 + $0x948] sm:$0xf]
    %v4829 = vld [vmem:[#allocation10 + $0x94c] sm:$0xff]
    %v4830 = vld [vmem:[#allocation10 + $0x954] sm:$0xff]
    %v4831 = vld [vmem:[#allocation10 + $0x95c] sm:$0xff]
    %v4832 = vld [vmem:[#allocation10 + $0x964] sm:$0xf]
    %v4833 = vld [vmem:[#allocation10 + $0x968] sm:$0xff]
    %v4834 = vld [vmem:[#allocation10 + $0x970] sm:$0xff]
    %v4835 = vld [vmem:[#allocation10 + $0x978] sm:$0xff]
    %v4836 = vld [vmem:[#allocation10 + $0x980] sm:$0xf]
    %v4837 = vld [vmem:[#allocation10 + $0x984] sm:$0xff]
    %v4838 = vld [vmem:[#allocation10 + $0x98c] sm:$0xff]
    %v4839 = vld [vmem:[#allocation10 + $0x994] sm:$0xff]
    %v4840 = vld [vmem:[#allocation10 + $0x99c] sm:$0xf]
    %v4841 = vld [vmem:[#allocation10 + $0x9a0] sm:$0xff]
    %v4842 = vld [vmem:[#allocation10 + $0x9a8] sm:$0xff]
    %v4843 = vld [vmem:[#allocation10 + $0x9b0] sm:$0xff]
    %v4844 = vld [vmem:[#allocation10 + $0x9b8] sm:$0xf]
    %v4845 = vld [vmem:[#allocation10 + $0x9bc] sm:$0xff]
    %v4846 = vld [vmem:[#allocation10 + $0x9c4] sm:$0xff]
    %v4847 = vld [vmem:[#allocation10 + $0x9cc] sm:$0xff]
    %v4848 = vld [vmem:[#allocation10 + $0x9d4] sm:$0xf]
    %v4849 = vld [vmem:[#allocation10 + $0x9d8] sm:$0xff]
    %v4850 = vld [vmem:[#allocation10 + $0x9e0] sm:$0xff]
    %v4851 = vld [vmem:[#allocation10 + $0x9e8] sm:$0xff]
    %v4852 = vld [vmem:[#allocation10 + $0x9f0] sm:$0xf]
    %v4853 = vld [vmem:[#allocation10 + $0x9f4] sm:$0xff]
    %v4854 = vld [vmem:[#allocation10 + $0x9fc] sm:$0xff]
    %v4855 = vld [vmem:[#allocation10 + $0xa04] sm:$0xff]
    %v4856 = vld [vmem:[#allocation10 + $0xa0c] sm:$0xf]
    %v4857 = vld [vmem:[#allocation10 + $0xa10] sm:$0xff]
    %v4858 = vld [vmem:[#allocation10 + $0xa18] sm:$0xff]
    %v4859 = vld [vmem:[#allocation10 + $0xa20] sm:$0xff]
    %v4860 = vld [vmem:[#allocation10 + $0xa28] sm:$0xf]
    %v4861 = vld [vmem:[#allocation10 + $0xa2c] sm:$0xff]
    %v4862 = vld [vmem:[#allocation10 + $0xa34] sm:$0xff]
    %v4863 = vld [vmem:[#allocation10 + $0xa3c] sm:$0xff]
    %v4864 = vld [vmem:[#allocation10 + $0xa44] sm:$0xf]
    %v4865 = vld [vmem:[#allocation10 + $0xa48] sm:$0xff]
    %v4866 = vld [vmem:[#allocation10 + $0xa50] sm:$0xff]
    %v4867 = vld [vmem:[#allocation10 + $0xa58] sm:$0xff]
    %v4868 = vld [vmem:[#allocation10 + $0xa60] sm:$0xf]
    %v4869 = vld [vmem:[#allocation10 + $0xa64] sm:$0xff]
    %v4870 = vld [vmem:[#allocation10 + $0xa6c] sm:$0xff]
    %v4871 = vld [vmem:[#allocation10 + $0xa74] sm:$0xff]
    %v4872 = vld [vmem:[#allocation10 + $0xa7c] sm:$0xf]
    %v4873 = vld [vmem:[#allocation10 + $0xa80] sm:$0xff]
    %v4874 = vld [vmem:[#allocation10 + $0xa88] sm:$0xff]
    %v4875 = vld [vmem:[#allocation10 + $0xa90] sm:$0xff]
    %v4876 = vld [vmem:[#allocation10 + $0xa98] sm:$0xf]
    %v4877 = vld [vmem:[#allocation10 + $0xa9c] sm:$0xff]
    %v4878 = vld [vmem:[#allocation10 + $0xaa4] sm:$0xff]
    %v4879 = vld [vmem:[#allocation10 + $0xaac] sm:$0xff]
    %v4880 = vld [vmem:[#allocation10 + $0xab4] sm:$0xf]
    %v4881 = vld [vmem:[#allocation10 + $0xab8] sm:$0xff]
    %v4882 = vld [vmem:[#allocation10 + $0xac0] sm:$0xff]
    %v4883 = vld [vmem:[#allocation10 + $0xac8] sm:$0xff]
    %v4884 = vld [vmem:[#allocation10 + $0xad0] sm:$0xf]
    %v4885 = vld [vmem:[#allocation10 + $0xad4] sm:$0xff]
    %v4886 = vld [vmem:[#allocation10 + $0xadc] sm:$0xff]
    %v4887 = vld [vmem:[#allocation10 + $0xae4] sm:$0xff]
    %v4888 = vld [vmem:[#allocation10 + $0xaec] sm:$0xf]
    %v4889 = vld [vmem:[#allocation10 + $0xaf0] sm:$0xff]
    %v4890 = vld [vmem:[#allocation10 + $0xaf8] sm:$0xff]
    %v4891 = vld [vmem:[#allocation10 + $0xb00] sm:$0xff]
    %v4892 = vld [vmem:[#allocation10 + $0xb08] sm:$0xf]
    %v4893 = vld [vmem:[#allocation10 + $0xb0c] sm:$0xff]
    %v4894 = vld [vmem:[#allocation10 + $0xb14] sm:$0xff]
    %v4895 = vld [vmem:[#allocation10 + $0xb1c] sm:$0xff]
    %v4896 = vld [vmem:[#allocation10 + $0xb24] sm:$0xf]
    %v4897 = vld [vmem:[#allocation10 + $0xb28] sm:$0xff]
    %v4898 = vld [vmem:[#allocation10 + $0xb30] sm:$0xff]
    %v4899 = vld [vmem:[#allocation10 + $0xb38] sm:$0xff]
    %v4900 = vld [vmem:[#allocation10 + $0xb40] sm:$0xf]
    %v4901 = vld [vmem:[#allocation10 + $0xb44] sm:$0xff]
    %v4902 = vld [vmem:[#allocation10 + $0xb4c] sm:$0xff]
    %v4903 = vld [vmem:[#allocation10 + $0xb54] sm:$0xff]
    %v4904 = vld [vmem:[#allocation10 + $0xb5c] sm:$0xf]
    %v4905 = vld [vmem:[#allocation10 + $0xb60] sm:$0xff]
    %v4906 = vld [vmem:[#allocation10 + $0xb68] sm:$0xff]
    %v4907 = vld [vmem:[#allocation10 + $0xb70] sm:$0xff]
    %v4908 = vld [vmem:[#allocation10 + $0xb78] sm:$0xf]
    %v4909 = vld [vmem:[#allocation10 + $0xb7c] sm:$0xff]
    %v4910 = vld [vmem:[#allocation10 + $0xb84] sm:$0xff]
    %v4911 = vld [vmem:[#allocation10 + $0xb8c] sm:$0xff]
    %v4912 = vld [vmem:[#allocation10 + $0xb94] sm:$0xf]
    %v4913 = vld [vmem:[#allocation10 + $0xb98] sm:$0xff]
    %v4914 = vld [vmem:[#allocation10 + $0xba0] sm:$0xff]
    %v4915 = vld [vmem:[#allocation10 + $0xba8] sm:$0xff]
    %v4916 = vld [vmem:[#allocation10 + $0xbb0] sm:$0xf]
    %v4917 = vld [vmem:[#allocation10 + $0xbb4] sm:$0xff]
    %v4918 = vld [vmem:[#allocation10 + $0xbbc] sm:$0xff]
    %v4919 = vld [vmem:[#allocation10 + $0xbc4] sm:$0xff]
    %v4920 = vld [vmem:[#allocation10 + $0xbcc] sm:$0xf]
    %v4921 = vld [vmem:[#allocation10 + $0xbd0] sm:$0xff]
    %v4922 = vld [vmem:[#allocation10 + $0xbd8] sm:$0xff]
    %v4923 = vld [vmem:[#allocation10 + $0xbe0] sm:$0xff]
    %v4924 = vld [vmem:[#allocation10 + $0xbe8] sm:$0xf]
    %v4925 = vld [vmem:[#allocation10 + $0xbec] sm:$0xff]
    %v4926 = vld [vmem:[#allocation10 + $0xbf4] sm:$0xff]
    %v4927 = vld [vmem:[#allocation10 + $0xbfc] sm:$0xff]
    %v4928 = vld [vmem:[#allocation10 + $0xc04] sm:$0xf]
    %v4929 = vld [vmem:[#allocation10 + $0xc08] sm:$0xff]
    %v4930 = vld [vmem:[#allocation10 + $0xc10] sm:$0xff]
    %v4931 = vld [vmem:[#allocation10 + $0xc18] sm:$0xff]
    %v4932 = vld [vmem:[#allocation10 + $0xc20] sm:$0xf]
    %v4933 = vld [vmem:[#allocation10 + $0xc24] sm:$0xff]
    %v4934 = vld [vmem:[#allocation10 + $0xc2c] sm:$0xff]
    %v4935 = vld [vmem:[#allocation10 + $0xc34] sm:$0xff]
    %v4936 = vld [vmem:[#allocation10 + $0xc3c] sm:$0xf]
    %v4937 = vld [vmem:[#allocation10 + $0xc40] sm:$0xff]
    %v4938 = vld [vmem:[#allocation10 + $0xc48] sm:$0xff]
    %v4939 = vld [vmem:[#allocation10 + $0xc50] sm:$0xff]
    %v4940 = vld [vmem:[#allocation10 + $0xc58] sm:$0xf]
    %v4941 = vld [vmem:[#allocation10 + $0xc5c] sm:$0xff]
    %v4942 = vld [vmem:[#allocation10 + $0xc64] sm:$0xff]
    %v4943 = vld [vmem:[#allocation10 + $0xc6c] sm:$0xff]
    %v4944 = vld [vmem:[#allocation10 + $0xc74] sm:$0xf]
    %v4945 = vld [vmem:[#allocation10 + $0xc78] sm:$0xff]
    %v4946 = vld [vmem:[#allocation10 + $0xc80] sm:$0xff]
    %v4947 = vld [vmem:[#allocation10 + $0xc88] sm:$0xff]
    %v4948 = vld [vmem:[#allocation10 + $0xc90] sm:$0xf]
    %v4949 = vld [vmem:[#allocation10 + $0xc94] sm:$0xff]
    %v4950 = vld [vmem:[#allocation10 + $0xc9c] sm:$0xff]
    %v4951 = vld [vmem:[#allocation10 + $0xca4] sm:$0xff]
    %v4952 = vld [vmem:[#allocation10 + $0xcac] sm:$0xf]
    %v4953 = vld [vmem:[#allocation10 + $0xcb0] sm:$0xff]
    %v4954 = vld [vmem:[#allocation10 + $0xcb8] sm:$0xff]
    %v4955 = vld [vmem:[#allocation10 + $0xcc0] sm:$0xff]
    %v4956 = vld [vmem:[#allocation10 + $0xcc8] sm:$0xf]
    %v4957 = vld [vmem:[#allocation10 + $0xccc] sm:$0xff]
    %v4958 = vld [vmem:[#allocation10 + $0xcd4] sm:$0xff]
    %v4959 = vld [vmem:[#allocation10 + $0xcdc] sm:$0xff]
    %v4960 = vld [vmem:[#allocation10 + $0xce4] sm:$0xf]
    %v4961 = vld [vmem:[#allocation10 + $0xce8] sm:$0xff]
    %v4962 = vld [vmem:[#allocation10 + $0xcf0] sm:$0xff]
    %v4963 = vld [vmem:[#allocation10 + $0xcf8] sm:$0xff]
    %v4964 = vld [vmem:[#allocation10 + $0xd00] sm:$0xf]
    %v4965 = vld [vmem:[#allocation10 + $0xd04] sm:$0xff]
    %v4966 = vld [vmem:[#allocation10 + $0xd0c] sm:$0xff]
    %v4967 = vld [vmem:[#allocation10 + $0xd14] sm:$0xff]
    %v4968 = vld [vmem:[#allocation10 + $0xd1c] sm:$0xf]
    %v4969 = vld [vmem:[#allocation10 + $0xd20] sm:$0xff]
    %v4970 = vld [vmem:[#allocation10 + $0xd28] sm:$0xff]
    %v4971 = vld [vmem:[#allocation10 + $0xd30] sm:$0xff]
    %v4972 = vld [vmem:[#allocation10 + $0xd38] sm:$0xf]
    %v4973 = vld [vmem:[#allocation10 + $0xd3c] sm:$0xff]
    %v4974 = vld [vmem:[#allocation10 + $0xd44] sm:$0xff]
    %v4975 = vld [vmem:[#allocation10 + $0xd4c] sm:$0xff]
    %v4976 = vld [vmem:[#allocation10 + $0xd54] sm:$0xf]
    %v4977 = vld [vmem:[#allocation10 + $0xd58] sm:$0xff]
    %v4978 = vld [vmem:[#allocation10 + $0xd60] sm:$0xff]
    %v4979 = vld [vmem:[#allocation10 + $0xd68] sm:$0xff]
    %v4980 = vld [vmem:[#allocation10 + $0xd70] sm:$0xf]
    %v4981 = vld [vmem:[#allocation10 + $0xd74] sm:$0xff]
    %v4982 = vld [vmem:[#allocation10 + $0xd7c] sm:$0xff]
    %v4983 = vld [vmem:[#allocation10 + $0xd84] sm:$0xff]
    %v4984 = vld [vmem:[#allocation10 + $0xd8c] sm:$0xf]
    %v4985 = vld [vmem:[#allocation10 + $0xd90] sm:$0xff]
    %v4986 = vld [vmem:[#allocation10 + $0xd98] sm:$0xff]
    %v4987 = vld [vmem:[#allocation10 + $0xda0] sm:$0xff]
    %v4988 = vld [vmem:[#allocation10 + $0xda8] sm:$0xf]
    %v4989 = vld [vmem:[#allocation10 + $0xdac] sm:$0xff]
    %v4990 = vld [vmem:[#allocation10 + $0xdb4] sm:$0xff]
    %v4991 = vld [vmem:[#allocation10 + $0xdbc] sm:$0xff]
    %v4992 = vld [vmem:[#allocation10 + $0xdc4] sm:$0xf]
    %v4993 = vld [vmem:[#allocation10 + $0xdc8] sm:$0xff]
    %v4994 = vld [vmem:[#allocation10 + $0xdd0] sm:$0xff]
    %v4995 = vld [vmem:[#allocation10 + $0xdd8] sm:$0xff]
    %v4996 = vld [vmem:[#allocation10 + $0xde0] sm:$0xf]
    %v4997 = vld [vmem:[#allocation10 + $0xde4] sm:$0xff]
    %v4998 = vld [vmem:[#allocation10 + $0xdec] sm:$0xff]
    %v4999 = vld [vmem:[#allocation10 + $0xdf4] sm:$0xff]
    %v5000 = vld [vmem:[#allocation10 + $0xdfc] sm:$0xf]
    %v5001 = vld [vmem:[#allocation11] sm:$0xff]
    %v5003 = vlaneseq
    %v5004 = vshrl.u32 %v5003, 7
    %v5005 = vsub.s32 0, %v5004
    %v5006 = vrot.slane %v5001, %v5005
    %v5007 = vlaneseq
    %v5008 = vshrl.u32 %v5007, 7
    %v5009 = vsub.s32 1, %v5008
    %v5010 = vrot.slane %v5001, %v5009
    %v5011 = vlaneseq
    %v5012 = vshrl.u32 %v5011, 7
    %v5013 = vsub.s32 2, %v5012
    %v5014 = vrot.slane %v5001, %v5013
    %v5015 = vlaneseq
    %v5016 = vshrl.u32 %v5015, 7
    %v5017 = vsub.s32 3, %v5016
    %v5018 = vrot.slane %v5001, %v5017
    %v5019 = vlaneseq
    %v5020 = vshrl.u32 %v5019, 7
    %v5021 = vsub.s32 4, %v5020
    %v5022 = vrot.slane %v5001, %v5021
    %v5023 = vlaneseq
    %v5024 = vshrl.u32 %v5023, 7
    %v5025 = vsub.s32 5, %v5024
    %v5026 = vrot.slane %v5001, %v5025
    %v5027 = vlaneseq
    %v5028 = vshrl.u32 %v5027, 7
    %v5029 = vsub.s32 6, %v5028
    %v5030 = vrot.slane %v5001, %v5029
    %v5550 = vunpack.c.l.b16 %v4489
    %v5551 = vunpack.c.h.b16 %v4489
    %v5552 = vunpack.c.l.b16 %v4490
    %v5553 = vunpack.c.h.b16 %v4490
    %v5554 = vunpack.c.l.b16 %v4491
    %v5555 = vunpack.c.h.b16 %v4491
    %v5556 = vunpack.c.l.b16 %v4492
    %v5557 = vunpack.c.l.b16 %v4493
    %v5558 = vunpack.c.h.b16 %v4493
    %v5559 = vunpack.c.l.b16 %v4494
    %v5560 = vunpack.c.h.b16 %v4494
    %v5561 = vunpack.c.l.b16 %v4495
    %v5562 = vunpack.c.h.b16 %v4495
    %v5563 = vunpack.c.l.b16 %v4496
    %v5564 = vunpack.c.l.b16 %v4497
    %v5565 = vunpack.c.h.b16 %v4497
    %v5566 = vunpack.c.l.b16 %v4498
    %v5567 = vunpack.c.h.b16 %v4498
    %v5568 = vunpack.c.l.b16 %v4499
    %v5569 = vunpack.c.h.b16 %v4499
    %v5570 = vunpack.c.l.b16 %v4500
    %v5571 = vunpack.c.l.b16 %v4501
    %v5572 = vunpack.c.h.b16 %v4501
    %v5573 = vunpack.c.l.b16 %v4502
    %v5574 = vunpack.c.h.b16 %v4502
    %v5575 = vunpack.c.l.b16 %v4503
    %v5576 = vunpack.c.h.b16 %v4503
    %v5577 = vunpack.c.l.b16 %v4504
    %v5578 = vunpack.c.l.b16 %v4505
    %v5579 = vunpack.c.h.b16 %v4505
    %v5580 = vunpack.c.l.b16 %v4506
    %v5581 = vunpack.c.h.b16 %v4506
    %v5582 = vunpack.c.l.b16 %v4507
    %v5583 = vunpack.c.h.b16 %v4507
    %v5584 = vunpack.c.l.b16 %v4508
    %v5585 = vunpack.c.l.b16 %v4509
    %v5586 = vunpack.c.h.b16 %v4509
    %v5587 = vunpack.c.l.b16 %v4510
    %v5588 = vunpack.c.h.b16 %v4510
    %v5589 = vunpack.c.l.b16 %v4511
    %v5590 = vunpack.c.h.b16 %v4511
    %v5591 = vunpack.c.l.b16 %v4512
    %v5592 = vunpack.c.l.b16 %v4513
    %v5593 = vunpack.c.h.b16 %v4513
    %v5594 = vunpack.c.l.b16 %v4514
    %v5595 = vunpack.c.h.b16 %v4514
    %v5596 = vunpack.c.l.b16 %v4515
    %v5597 = vunpack.c.h.b16 %v4515
    %v5598 = vunpack.c.l.b16 %v4516
    %v5599 = vunpack.c.l.b16 %v4517
    %v5600 = vunpack.c.h.b16 %v4517
    %v5601 = vunpack.c.l.b16 %v4518
    %v5602 = vunpack.c.h.b16 %v4518
    %v5603 = vunpack.c.l.b16 %v4519
    %v5604 = vunpack.c.h.b16 %v4519
    %v5605 = vunpack.c.l.b16 %v4520
    %v5606 = vunpack.c.l.b16 %v4521
    %v5607 = vunpack.c.h.b16 %v4521
    %v5608 = vunpack.c.l.b16 %v4522
    %v5609 = vunpack.c.h.b16 %v4522
    %v5610 = vunpack.c.l.b16 %v4523
    %v5611 = vunpack.c.h.b16 %v4523
    %v5612 = vunpack.c.l.b16 %v4524
    %v5613 = vunpack.c.l.b16 %v4525
    %v5614 = vunpack.c.h.b16 %v4525
    %v5615 = vunpack.c.l.b16 %v4526
    %v5616 = vunpack.c.h.b16 %v4526
    %v5617 = vunpack.c.l.b16 %v4527
    %v5618 = vunpack.c.h.b16 %v4527
    %v5619 = vunpack.c.l.b16 %v4528
    %v5620 = vunpack.c.l.b16 %v4529
    %v5621 = vunpack.c.h.b16 %v4529
    %v5622 = vunpack.c.l.b16 %v4530
    %v5623 = vunpack.c.h.b16 %v4530
    %v5624 = vunpack.c.l.b16 %v4531
    %v5625 = vunpack.c.h.b16 %v4531
    %v5626 = vunpack.c.l.b16 %v4532
    %v5627 = vunpack.c.l.b16 %v4533
    %v5628 = vunpack.c.h.b16 %v4533
    %v5629 = vunpack.c.l.b16 %v4534
    %v5630 = vunpack.c.h.b16 %v4534
    %v5631 = vunpack.c.l.b16 %v4535
    %v5632 = vunpack.c.h.b16 %v4535
    %v5633 = vunpack.c.l.b16 %v4536
    %v5634 = vunpack.c.l.b16 %v4537
    %v5635 = vunpack.c.h.b16 %v4537
    %v5636 = vunpack.c.l.b16 %v4538
    %v5637 = vunpack.c.h.b16 %v4538
    %v5638 = vunpack.c.l.b16 %v4539
    %v5639 = vunpack.c.h.b16 %v4539
    %v5640 = vunpack.c.l.b16 %v4540
    %v5641 = vunpack.c.l.b16 %v4541
    %v5642 = vunpack.c.h.b16 %v4541
    %v5643 = vunpack.c.l.b16 %v4542
    %v5644 = vunpack.c.h.b16 %v4542
    %v5645 = vunpack.c.l.b16 %v4543
    %v5646 = vunpack.c.h.b16 %v4543
    %v5647 = vunpack.c.l.b16 %v4544
    %v5648 = vunpack.c.l.b16 %v4545
    %v5649 = vunpack.c.h.b16 %v4545
    %v5650 = vunpack.c.l.b16 %v4546
    %v5651 = vunpack.c.h.b16 %v4546
    %v5652 = vunpack.c.l.b16 %v4547
    %v5653 = vunpack.c.h.b16 %v4547
    %v5654 = vunpack.c.l.b16 %v4548
    %v5655 = vunpack.c.l.b16 %v4549
    %v5656 = vunpack.c.h.b16 %v4549
    %v5657 = vunpack.c.l.b16 %v4550
    %v5658 = vunpack.c.h.b16 %v4550
    %v5659 = vunpack.c.l.b16 %v4551
    %v5660 = vunpack.c.h.b16 %v4551
    %v5661 = vunpack.c.l.b16 %v4552
    %v5662 = vunpack.c.l.b16 %v4553
    %v5663 = vunpack.c.h.b16 %v4553
    %v5664 = vunpack.c.l.b16 %v4554
    %v5665 = vunpack.c.h.b16 %v4554
    %v5666 = vunpack.c.l.b16 %v4555
    %v5667 = vunpack.c.h.b16 %v4555
    %v5668 = vunpack.c.l.b16 %v4556
    %v5669 = vunpack.c.l.b16 %v4557
    %v5670 = vunpack.c.h.b16 %v4557
    %v5671 = vunpack.c.l.b16 %v4558
    %v5672 = vunpack.c.h.b16 %v4558
    %v5673 = vunpack.c.l.b16 %v4559
    %v5674 = vunpack.c.h.b16 %v4559
    %v5675 = vunpack.c.l.b16 %v4560
    %v5676 = vunpack.c.l.b16 %v4561
    %v5677 = vunpack.c.h.b16 %v4561
    %v5678 = vunpack.c.l.b16 %v4562
    %v5679 = vunpack.c.h.b16 %v4562
    %v5680 = vunpack.c.l.b16 %v4563
    %v5681 = vunpack.c.h.b16 %v4563
    %v5682 = vunpack.c.l.b16 %v4564
    %v5683 = vunpack.c.l.b16 %v4565
    %v5684 = vunpack.c.h.b16 %v4565
    %v5685 = vunpack.c.l.b16 %v4566
    %v5686 = vunpack.c.h.b16 %v4566
    %v5687 = vunpack.c.l.b16 %v4567
    %v5688 = vunpack.c.h.b16 %v4567
    %v5689 = vunpack.c.l.b16 %v4568
    %v5690 = vunpack.c.l.b16 %v4569
    %v5691 = vunpack.c.h.b16 %v4569
    %v5692 = vunpack.c.l.b16 %v4570
    %v5693 = vunpack.c.h.b16 %v4570
    %v5694 = vunpack.c.l.b16 %v4571
    %v5695 = vunpack.c.h.b16 %v4571
    %v5696 = vunpack.c.l.b16 %v4572
    %v5697 = vunpack.c.l.b16 %v4573
    %v5698 = vunpack.c.h.b16 %v4573
    %v5699 = vunpack.c.l.b16 %v4574
    %v5700 = vunpack.c.h.b16 %v4574
    %v5701 = vunpack.c.l.b16 %v4575
    %v5702 = vunpack.c.h.b16 %v4575
    %v5703 = vunpack.c.l.b16 %v4576
    %v5704 = vunpack.c.l.b16 %v4577
    %v5705 = vunpack.c.h.b16 %v4577
    %v5706 = vunpack.c.l.b16 %v4578
    %v5707 = vunpack.c.h.b16 %v4578
    %v5708 = vunpack.c.l.b16 %v4579
    %v5709 = vunpack.c.h.b16 %v4579
    %v5710 = vunpack.c.l.b16 %v4580
    %v5711 = vunpack.c.l.b16 %v4581
    %v5712 = vunpack.c.h.b16 %v4581
    %v5713 = vunpack.c.l.b16 %v4582
    %v5714 = vunpack.c.h.b16 %v4582
    %v5715 = vunpack.c.l.b16 %v4583
    %v5716 = vunpack.c.h.b16 %v4583
    %v5717 = vunpack.c.l.b16 %v4584
    %v5718 = vunpack.c.l.b16 %v4585
    %v5719 = vunpack.c.h.b16 %v4585
    %v5720 = vunpack.c.l.b16 %v4586
    %v5721 = vunpack.c.h.b16 %v4586
    %v5722 = vunpack.c.l.b16 %v4587
    %v5723 = vunpack.c.h.b16 %v4587
    %v5724 = vunpack.c.l.b16 %v4588
    %v5725 = vunpack.c.l.b16 %v4589
    %v5726 = vunpack.c.h.b16 %v4589
    %v5727 = vunpack.c.l.b16 %v4590
    %v5728 = vunpack.c.h.b16 %v4590
    %v5729 = vunpack.c.l.b16 %v4591
    %v5730 = vunpack.c.h.b16 %v4591
    %v5731 = vunpack.c.l.b16 %v4592
    %v5732 = vunpack.c.l.b16 %v4593
    %v5733 = vunpack.c.h.b16 %v4593
    %v5734 = vunpack.c.l.b16 %v4594
    %v5735 = vunpack.c.h.b16 %v4594
    %v5736 = vunpack.c.l.b16 %v4595
    %v5737 = vunpack.c.h.b16 %v4595
    %v5738 = vunpack.c.l.b16 %v4596
    %v5739 = vunpack.c.l.b16 %v4597
    %v5740 = vunpack.c.h.b16 %v4597
    %v5741 = vunpack.c.l.b16 %v4598
    %v5742 = vunpack.c.h.b16 %v4598
    %v5743 = vunpack.c.l.b16 %v4599
    %v5744 = vunpack.c.h.b16 %v4599
    %v5745 = vunpack.c.l.b16 %v4600
    %v5746 = vunpack.c.l.b16 %v4601
    %v5747 = vunpack.c.h.b16 %v4601
    %v5748 = vunpack.c.l.b16 %v4602
    %v5749 = vunpack.c.h.b16 %v4602
    %v5750 = vunpack.c.l.b16 %v4603
    %v5751 = vunpack.c.h.b16 %v4603
    %v5752 = vunpack.c.l.b16 %v4604
    %v5753 = vunpack.c.l.b16 %v4605
    %v5754 = vunpack.c.h.b16 %v4605
    %v5755 = vunpack.c.l.b16 %v4606
    %v5756 = vunpack.c.h.b16 %v4606
    %v5757 = vunpack.c.l.b16 %v4607
    %v5758 = vunpack.c.h.b16 %v4607
    %v5759 = vunpack.c.l.b16 %v4608
    %v5760 = vunpack.c.l.b16 %v4609
    %v5761 = vunpack.c.h.b16 %v4609
    %v5762 = vunpack.c.l.b16 %v4610
    %v5763 = vunpack.c.h.b16 %v4610
    %v5764 = vunpack.c.l.b16 %v4611
    %v5765 = vunpack.c.h.b16 %v4611
    %v5766 = vunpack.c.l.b16 %v4612
    %v5767 = vunpack.c.l.b16 %v4613
    %v5768 = vunpack.c.h.b16 %v4613
    %v5769 = vunpack.c.l.b16 %v4614
    %v5770 = vunpack.c.h.b16 %v4614
    %v5771 = vunpack.c.l.b16 %v4615
    %v5772 = vunpack.c.h.b16 %v4615
    %v5773 = vunpack.c.l.b16 %v4616
    %v5774 = vunpack.c.l.b16 %v4617
    %v5775 = vunpack.c.h.b16 %v4617
    %v5776 = vunpack.c.l.b16 %v4618
    %v5777 = vunpack.c.h.b16 %v4618
    %v5778 = vunpack.c.l.b16 %v4619
    %v5779 = vunpack.c.h.b16 %v4619
    %v5780 = vunpack.c.l.b16 %v4620
    %v5781 = vunpack.c.l.b16 %v4621
    %v5782 = vunpack.c.h.b16 %v4621
    %v5783 = vunpack.c.l.b16 %v4622
    %v5784 = vunpack.c.h.b16 %v4622
    %v5785 = vunpack.c.l.b16 %v4623
    %v5786 = vunpack.c.h.b16 %v4623
    %v5787 = vunpack.c.l.b16 %v4624
    %v5788 = vunpack.c.l.b16 %v4625
    %v5789 = vunpack.c.h.b16 %v4625
    %v5790 = vunpack.c.l.b16 %v4626
    %v5791 = vunpack.c.h.b16 %v4626
    %v5792 = vunpack.c.l.b16 %v4627
    %v5793 = vunpack.c.h.b16 %v4627
    %v5794 = vunpack.c.l.b16 %v4628
    %v5795 = vunpack.c.l.b16 %v4629
    %v5796 = vunpack.c.h.b16 %v4629
    %v5797 = vunpack.c.l.b16 %v4630
    %v5798 = vunpack.c.h.b16 %v4630
    %v5799 = vunpack.c.l.b16 %v4631
    %v5800 = vunpack.c.h.b16 %v4631
    %v5801 = vunpack.c.l.b16 %v4632
    %v5802 = vunpack.c.l.b16 %v4633
    %v5803 = vunpack.c.h.b16 %v4633
    %v5804 = vunpack.c.l.b16 %v4634
    %v5805 = vunpack.c.h.b16 %v4634
    %v5806 = vunpack.c.l.b16 %v4635
    %v5807 = vunpack.c.h.b16 %v4635
    %v5808 = vunpack.c.l.b16 %v4636
    %v5809 = vunpack.c.l.b16 %v4637
    %v5810 = vunpack.c.h.b16 %v4637
    %v5811 = vunpack.c.l.b16 %v4638
    %v5812 = vunpack.c.h.b16 %v4638
    %v5813 = vunpack.c.l.b16 %v4639
    %v5814 = vunpack.c.h.b16 %v4639
    %v5815 = vunpack.c.l.b16 %v4640
    %v5816 = vunpack.c.l.b16 %v4641
    %v5817 = vunpack.c.h.b16 %v4641
    %v5818 = vunpack.c.l.b16 %v4642
    %v5819 = vunpack.c.h.b16 %v4642
    %v5820 = vunpack.c.l.b16 %v4643
    %v5821 = vunpack.c.h.b16 %v4643
    %v5822 = vunpack.c.l.b16 %v4644
    %v5823 = vunpack.c.l.b16 %v4645
    %v5824 = vunpack.c.h.b16 %v4645
    %v5825 = vunpack.c.l.b16 %v4646
    %v5826 = vunpack.c.h.b16 %v4646
    %v5827 = vunpack.c.l.b16 %v4647
    %v5828 = vunpack.c.h.b16 %v4647
    %v5829 = vunpack.c.l.b16 %v4648
    %v5830 = vunpack.c.l.b16 %v4649
    %v5831 = vunpack.c.h.b16 %v4649
    %v5832 = vunpack.c.l.b16 %v4650
    %v5833 = vunpack.c.h.b16 %v4650
    %v5834 = vunpack.c.l.b16 %v4651
    %v5835 = vunpack.c.h.b16 %v4651
    %v5836 = vunpack.c.l.b16 %v4652
    %v5837 = vunpack.c.l.b16 %v4653
    %v5838 = vunpack.c.h.b16 %v4653
    %v5839 = vunpack.c.l.b16 %v4654
    %v5840 = vunpack.c.h.b16 %v4654
    %v5841 = vunpack.c.l.b16 %v4655
    %v5842 = vunpack.c.h.b16 %v4655
    %v5843 = vunpack.c.l.b16 %v4656
    %v5844 = vunpack.c.l.b16 %v4657
    %v5845 = vunpack.c.h.b16 %v4657
    %v5846 = vunpack.c.l.b16 %v4658
    %v5847 = vunpack.c.h.b16 %v4658
    %v5848 = vunpack.c.l.b16 %v4659
    %v5849 = vunpack.c.h.b16 %v4659
    %v5850 = vunpack.c.l.b16 %v4660
    %v5851 = vunpack.c.l.b16 %v4661
    %v5852 = vunpack.c.h.b16 %v4661
    %v5853 = vunpack.c.l.b16 %v4662
    %v5854 = vunpack.c.h.b16 %v4662
    %v5855 = vunpack.c.l.b16 %v4663
    %v5856 = vunpack.c.h.b16 %v4663
    %v5857 = vunpack.c.l.b16 %v4664
    %v5858 = vunpack.c.l.b16 %v4665
    %v5859 = vunpack.c.h.b16 %v4665
    %v5860 = vunpack.c.l.b16 %v4666
    %v5861 = vunpack.c.h.b16 %v4666
    %v5862 = vunpack.c.l.b16 %v4667
    %v5863 = vunpack.c.h.b16 %v4667
    %v5864 = vunpack.c.l.b16 %v4668
    %v5865 = vunpack.c.l.b16 %v4669
    %v5866 = vunpack.c.h.b16 %v4669
    %v5867 = vunpack.c.l.b16 %v4670
    %v5868 = vunpack.c.h.b16 %v4670
    %v5869 = vunpack.c.l.b16 %v4671
    %v5870 = vunpack.c.h.b16 %v4671
    %v5871 = vunpack.c.l.b16 %v4672
    %v5872 = vunpack.c.l.b16 %v4673
    %v5873 = vunpack.c.h.b16 %v4673
    %v5874 = vunpack.c.l.b16 %v4674
    %v5875 = vunpack.c.h.b16 %v4674
    %v5876 = vunpack.c.l.b16 %v4675
    %v5877 = vunpack.c.h.b16 %v4675
    %v5878 = vunpack.c.l.b16 %v4676
    %v5879 = vunpack.c.l.b16 %v4677
    %v5880 = vunpack.c.h.b16 %v4677
    %v5881 = vunpack.c.l.b16 %v4678
    %v5882 = vunpack.c.h.b16 %v4678
    %v5883 = vunpack.c.l.b16 %v4679
    %v5884 = vunpack.c.h.b16 %v4679
    %v5885 = vunpack.c.l.b16 %v4680
    %v5886 = vunpack.c.l.b16 %v4681
    %v5887 = vunpack.c.h.b16 %v4681
    %v5888 = vunpack.c.l.b16 %v4682
    %v5889 = vunpack.c.h.b16 %v4682
    %v5890 = vunpack.c.l.b16 %v4683
    %v5891 = vunpack.c.h.b16 %v4683
    %v5892 = vunpack.c.l.b16 %v4684
    %v5893 = vunpack.c.l.b16 %v4685
    %v5894 = vunpack.c.h.b16 %v4685
    %v5895 = vunpack.c.l.b16 %v4686
    %v5896 = vunpack.c.h.b16 %v4686
    %v5897 = vunpack.c.l.b16 %v4687
    %v5898 = vunpack.c.h.b16 %v4687
    %v5899 = vunpack.c.l.b16 %v4688
    %v5900 = vunpack.c.l.b16 %v4689
    %v5901 = vunpack.c.h.b16 %v4689
    %v5902 = vunpack.c.l.b16 %v4690
    %v5903 = vunpack.c.h.b16 %v4690
    %v5904 = vunpack.c.l.b16 %v4691
    %v5905 = vunpack.c.h.b16 %v4691
    %v5906 = vunpack.c.l.b16 %v4692
    %v5907 = vunpack.c.l.b16 %v4693
    %v5908 = vunpack.c.h.b16 %v4693
    %v5909 = vunpack.c.l.b16 %v4694
    %v5910 = vunpack.c.h.b16 %v4694
    %v5911 = vunpack.c.l.b16 %v4695
    %v5912 = vunpack.c.h.b16 %v4695
    %v5913 = vunpack.c.l.b16 %v4696
    %v5914 = vunpack.c.l.b16 %v4697
    %v5915 = vunpack.c.h.b16 %v4697
    %v5916 = vunpack.c.l.b16 %v4698
    %v5917 = vunpack.c.h.b16 %v4698
    %v5918 = vunpack.c.l.b16 %v4699
    %v5919 = vunpack.c.h.b16 %v4699
    %v5920 = vunpack.c.l.b16 %v4700
    %v5921 = vunpack.c.l.b16 %v4701
    %v5922 = vunpack.c.h.b16 %v4701
    %v5923 = vunpack.c.l.b16 %v4702
    %v5924 = vunpack.c.h.b16 %v4702
    %v5925 = vunpack.c.l.b16 %v4703
    %v5926 = vunpack.c.h.b16 %v4703
    %v5927 = vunpack.c.l.b16 %v4704
    %v5928 = vunpack.c.l.b16 %v4705
    %v5929 = vunpack.c.h.b16 %v4705
    %v5930 = vunpack.c.l.b16 %v4706
    %v5931 = vunpack.c.h.b16 %v4706
    %v5932 = vunpack.c.l.b16 %v4707
    %v5933 = vunpack.c.h.b16 %v4707
    %v5934 = vunpack.c.l.b16 %v4708
    %v5935 = vunpack.c.l.b16 %v4709
    %v5936 = vunpack.c.h.b16 %v4709
    %v5937 = vunpack.c.l.b16 %v4710
    %v5938 = vunpack.c.h.b16 %v4710
    %v5939 = vunpack.c.l.b16 %v4711
    %v5940 = vunpack.c.h.b16 %v4711
    %v5941 = vunpack.c.l.b16 %v4712
    %v5942 = vunpack.c.l.b16 %v4713
    %v5943 = vunpack.c.h.b16 %v4713
    %v5944 = vunpack.c.l.b16 %v4714
    %v5945 = vunpack.c.h.b16 %v4714
    %v5946 = vunpack.c.l.b16 %v4715
    %v5947 = vunpack.c.h.b16 %v4715
    %v5948 = vunpack.c.l.b16 %v4716
    %v5949 = vunpack.c.l.b16 %v4717
    %v5950 = vunpack.c.h.b16 %v4717
    %v5951 = vunpack.c.l.b16 %v4718
    %v5952 = vunpack.c.h.b16 %v4718
    %v5953 = vunpack.c.l.b16 %v4719
    %v5954 = vunpack.c.h.b16 %v4719
    %v5955 = vunpack.c.l.b16 %v4720
    %v5956 = vunpack.c.l.b16 %v4721
    %v5957 = vunpack.c.h.b16 %v4721
    %v5958 = vunpack.c.l.b16 %v4722
    %v5959 = vunpack.c.h.b16 %v4722
    %v5960 = vunpack.c.l.b16 %v4723
    %v5961 = vunpack.c.h.b16 %v4723
    %v5962 = vunpack.c.l.b16 %v4724
    %v5963 = vunpack.c.l.b16 %v4725
    %v5964 = vunpack.c.h.b16 %v4725
    %v5965 = vunpack.c.l.b16 %v4726
    %v5966 = vunpack.c.h.b16 %v4726
    %v5967 = vunpack.c.l.b16 %v4727
    %v5968 = vunpack.c.h.b16 %v4727
    %v5969 = vunpack.c.l.b16 %v4728
    %v5970 = vunpack.c.l.b16 %v4729
    %v5971 = vunpack.c.h.b16 %v4729
    %v5972 = vunpack.c.l.b16 %v4730
    %v5973 = vunpack.c.h.b16 %v4730
    %v5974 = vunpack.c.l.b16 %v4731
    %v5975 = vunpack.c.h.b16 %v4731
    %v5976 = vunpack.c.l.b16 %v4732
    %v5977 = vunpack.c.l.b16 %v4733
    %v5978 = vunpack.c.h.b16 %v4733
    %v5979 = vunpack.c.l.b16 %v4734
    %v5980 = vunpack.c.h.b16 %v4734
    %v5981 = vunpack.c.l.b16 %v4735
    %v5982 = vunpack.c.h.b16 %v4735
    %v5983 = vunpack.c.l.b16 %v4736
    %v5984 = vunpack.c.l.b16 %v4737
    %v5985 = vunpack.c.h.b16 %v4737
    %v5986 = vunpack.c.l.b16 %v4738
    %v5987 = vunpack.c.h.b16 %v4738
    %v5988 = vunpack.c.l.b16 %v4739
    %v5989 = vunpack.c.h.b16 %v4739
    %v5990 = vunpack.c.l.b16 %v4740
    %v5991 = vunpack.c.l.b16 %v4741
    %v5992 = vunpack.c.h.b16 %v4741
    %v5993 = vunpack.c.l.b16 %v4742
    %v5994 = vunpack.c.h.b16 %v4742
    %v5995 = vunpack.c.l.b16 %v4743
    %v5996 = vunpack.c.h.b16 %v4743
    %v5997 = vunpack.c.l.b16 %v4744
    %v5998 = vunpack.c.l.b16 %v4745
    %v5999 = vunpack.c.h.b16 %v4745
    %v6000 = vunpack.c.l.b16 %v4746
    %v6001 = vunpack.c.h.b16 %v4746
    %v6002 = vunpack.c.l.b16 %v4747
    %v6003 = vunpack.c.h.b16 %v4747
    %v6004 = vunpack.c.l.b16 %v4748
    %v6005 = vunpack.c.l.b16 %v4749
    %v6006 = vunpack.c.h.b16 %v4749
    %v6007 = vunpack.c.l.b16 %v4750
    %v6008 = vunpack.c.h.b16 %v4750
    %v6009 = vunpack.c.l.b16 %v4751
    %v6010 = vunpack.c.h.b16 %v4751
    %v6011 = vunpack.c.l.b16 %v4752
    %v6012 = vunpack.c.l.b16 %v4753
    %v6013 = vunpack.c.h.b16 %v4753
    %v6014 = vunpack.c.l.b16 %v4754
    %v6015 = vunpack.c.h.b16 %v4754
    %v6016 = vunpack.c.l.b16 %v4755
    %v6017 = vunpack.c.h.b16 %v4755
    %v6018 = vunpack.c.l.b16 %v4756
    %v6019 = vunpack.c.l.b16 %v4757
    %v6020 = vunpack.c.h.b16 %v4757
    %v6021 = vunpack.c.l.b16 %v4758
    %v6022 = vunpack.c.h.b16 %v4758
    %v6023 = vunpack.c.l.b16 %v4759
    %v6024 = vunpack.c.h.b16 %v4759
    %v6025 = vunpack.c.l.b16 %v4760
    %v6026 = vunpack.c.l.b16 %v4761
    %v6027 = vunpack.c.h.b16 %v4761
    %v6028 = vunpack.c.l.b16 %v4762
    %v6029 = vunpack.c.h.b16 %v4762
    %v6030 = vunpack.c.l.b16 %v4763
    %v6031 = vunpack.c.h.b16 %v4763
    %v6032 = vunpack.c.l.b16 %v4764
    %v6033 = vunpack.c.l.b16 %v4765
    %v6034 = vunpack.c.h.b16 %v4765
    %v6035 = vunpack.c.l.b16 %v4766
    %v6036 = vunpack.c.h.b16 %v4766
    %v6037 = vunpack.c.l.b16 %v4767
    %v6038 = vunpack.c.h.b16 %v4767
    %v6039 = vunpack.c.l.b16 %v4768
    %v6040 = vunpack.c.l.b16 %v4769
    %v6041 = vunpack.c.h.b16 %v4769
    %v6042 = vunpack.c.l.b16 %v4770
    %v6043 = vunpack.c.h.b16 %v4770
    %v6044 = vunpack.c.l.b16 %v4771
    %v6045 = vunpack.c.h.b16 %v4771
    %v6046 = vunpack.c.l.b16 %v4772
    %v6047 = vunpack.c.l.b16 %v4773
    %v6048 = vunpack.c.h.b16 %v4773
    %v6049 = vunpack.c.l.b16 %v4774
    %v6050 = vunpack.c.h.b16 %v4774
    %v6051 = vunpack.c.l.b16 %v4775
    %v6052 = vunpack.c.h.b16 %v4775
    %v6053 = vunpack.c.l.b16 %v4776
    %v6054 = vunpack.c.l.b16 %v4777
    %v6055 = vunpack.c.h.b16 %v4777
    %v6056 = vunpack.c.l.b16 %v4778
    %v6057 = vunpack.c.h.b16 %v4778
    %v6058 = vunpack.c.l.b16 %v4779
    %v6059 = vunpack.c.h.b16 %v4779
    %v6060 = vunpack.c.l.b16 %v4780
    %v6061 = vunpack.c.l.b16 %v4781
    %v6062 = vunpack.c.h.b16 %v4781
    %v6063 = vunpack.c.l.b16 %v4782
    %v6064 = vunpack.c.h.b16 %v4782
    %v6065 = vunpack.c.l.b16 %v4783
    %v6066 = vunpack.c.h.b16 %v4783
    %v6067 = vunpack.c.l.b16 %v4784
    %v6068 = vunpack.c.l.b16 %v4785
    %v6069 = vunpack.c.h.b16 %v4785
    %v6070 = vunpack.c.l.b16 %v4786
    %v6071 = vunpack.c.h.b16 %v4786
    %v6072 = vunpack.c.l.b16 %v4787
    %v6073 = vunpack.c.h.b16 %v4787
    %v6074 = vunpack.c.l.b16 %v4788
    %v6075 = vunpack.c.l.b16 %v4789
    %v6076 = vunpack.c.h.b16 %v4789
    %v6077 = vunpack.c.l.b16 %v4790
    %v6078 = vunpack.c.h.b16 %v4790
    %v6079 = vunpack.c.l.b16 %v4791
    %v6080 = vunpack.c.h.b16 %v4791
    %v6081 = vunpack.c.l.b16 %v4792
    %v6082 = vunpack.c.l.b16 %v4793
    %v6083 = vunpack.c.h.b16 %v4793
    %v6084 = vunpack.c.l.b16 %v4794
    %v6085 = vunpack.c.h.b16 %v4794
    %v6086 = vunpack.c.l.b16 %v4795
    %v6087 = vunpack.c.h.b16 %v4795
    %v6088 = vunpack.c.l.b16 %v4796
    %v6089 = vunpack.c.l.b16 %v4797
    %v6090 = vunpack.c.h.b16 %v4797
    %v6091 = vunpack.c.l.b16 %v4798
    %v6092 = vunpack.c.h.b16 %v4798
    %v6093 = vunpack.c.l.b16 %v4799
    %v6094 = vunpack.c.h.b16 %v4799
    %v6095 = vunpack.c.l.b16 %v4800
    %v6096 = vunpack.c.l.b16 %v4801
    %v6097 = vunpack.c.h.b16 %v4801
    %v6098 = vunpack.c.l.b16 %v4802
    %v6099 = vunpack.c.h.b16 %v4802
    %v6100 = vunpack.c.l.b16 %v4803
    %v6101 = vunpack.c.h.b16 %v4803
    %v6102 = vunpack.c.l.b16 %v4804
    %v6103 = vunpack.c.l.b16 %v4805
    %v6104 = vunpack.c.h.b16 %v4805
    %v6105 = vunpack.c.l.b16 %v4806
    %v6106 = vunpack.c.h.b16 %v4806
    %v6107 = vunpack.c.l.b16 %v4807
    %v6108 = vunpack.c.h.b16 %v4807
    %v6109 = vunpack.c.l.b16 %v4808
    %v6110 = vunpack.c.l.b16 %v4809
    %v6111 = vunpack.c.h.b16 %v4809
    %v6112 = vunpack.c.l.b16 %v4810
    %v6113 = vunpack.c.h.b16 %v4810
    %v6114 = vunpack.c.l.b16 %v4811
    %v6115 = vunpack.c.h.b16 %v4811
    %v6116 = vunpack.c.l.b16 %v4812
    %v6117 = vunpack.c.l.b16 %v4813
    %v6118 = vunpack.c.h.b16 %v4813
    %v6119 = vunpack.c.l.b16 %v4814
    %v6120 = vunpack.c.h.b16 %v4814
    %v6121 = vunpack.c.l.b16 %v4815
    %v6122 = vunpack.c.h.b16 %v4815
    %v6123 = vunpack.c.l.b16 %v4816
    %v6124 = vunpack.c.l.b16 %v4817
    %v6125 = vunpack.c.h.b16 %v4817
    %v6126 = vunpack.c.l.b16 %v4818
    %v6127 = vunpack.c.h.b16 %v4818
    %v6128 = vunpack.c.l.b16 %v4819
    %v6129 = vunpack.c.h.b16 %v4819
    %v6130 = vunpack.c.l.b16 %v4820
    %v6131 = vunpack.c.l.b16 %v4821
    %v6132 = vunpack.c.h.b16 %v4821
    %v6133 = vunpack.c.l.b16 %v4822
    %v6134 = vunpack.c.h.b16 %v4822
    %v6135 = vunpack.c.l.b16 %v4823
    %v6136 = vunpack.c.h.b16 %v4823
    %v6137 = vunpack.c.l.b16 %v4824
    %v6138 = vunpack.c.l.b16 %v4825
    %v6139 = vunpack.c.h.b16 %v4825
    %v6140 = vunpack.c.l.b16 %v4826
    %v6141 = vunpack.c.h.b16 %v4826
    %v6142 = vunpack.c.l.b16 %v4827
    %v6143 = vunpack.c.h.b16 %v4827
    %v6144 = vunpack.c.l.b16 %v4828
    %v6145 = vunpack.c.l.b16 %v4829
    %v6146 = vunpack.c.h.b16 %v4829
    %v6147 = vunpack.c.l.b16 %v4830
    %v6148 = vunpack.c.h.b16 %v4830
    %v6149 = vunpack.c.l.b16 %v4831
    %v6150 = vunpack.c.h.b16 %v4831
    %v6151 = vunpack.c.l.b16 %v4832
    %v6152 = vunpack.c.l.b16 %v4833
    %v6153 = vunpack.c.h.b16 %v4833
    %v6154 = vunpack.c.l.b16 %v4834
    %v6155 = vunpack.c.h.b16 %v4834
    %v6156 = vunpack.c.l.b16 %v4835
    %v6157 = vunpack.c.h.b16 %v4835
    %v6158 = vunpack.c.l.b16 %v4836
    %v6159 = vunpack.c.l.b16 %v4837
    %v6160 = vunpack.c.h.b16 %v4837
    %v6161 = vunpack.c.l.b16 %v4838
    %v6162 = vunpack.c.h.b16 %v4838
    %v6163 = vunpack.c.l.b16 %v4839
    %v6164 = vunpack.c.h.b16 %v4839
    %v6165 = vunpack.c.l.b16 %v4840
    %v6166 = vunpack.c.l.b16 %v4841
    %v6167 = vunpack.c.h.b16 %v4841
    %v6168 = vunpack.c.l.b16 %v4842
    %v6169 = vunpack.c.h.b16 %v4842
    %v6170 = vunpack.c.l.b16 %v4843
    %v6171 = vunpack.c.h.b16 %v4843
    %v6172 = vunpack.c.l.b16 %v4844
    %v6173 = vunpack.c.l.b16 %v4845
    %v6174 = vunpack.c.h.b16 %v4845
    %v6175 = vunpack.c.l.b16 %v4846
    %v6176 = vunpack.c.h.b16 %v4846
    %v6177 = vunpack.c.l.b16 %v4847
    %v6178 = vunpack.c.h.b16 %v4847
    %v6179 = vunpack.c.l.b16 %v4848
    %v6180 = vunpack.c.l.b16 %v4849
    %v6181 = vunpack.c.h.b16 %v4849
    %v6182 = vunpack.c.l.b16 %v4850
    %v6183 = vunpack.c.h.b16 %v4850
    %v6184 = vunpack.c.l.b16 %v4851
    %v6185 = vunpack.c.h.b16 %v4851
    %v6186 = vunpack.c.l.b16 %v4852
    %v6187 = vunpack.c.l.b16 %v4853
    %v6188 = vunpack.c.h.b16 %v4853
    %v6189 = vunpack.c.l.b16 %v4854
    %v6190 = vunpack.c.h.b16 %v4854
    %v6191 = vunpack.c.l.b16 %v4855
    %v6192 = vunpack.c.h.b16 %v4855
    %v6193 = vunpack.c.l.b16 %v4856
    %v6194 = vunpack.c.l.b16 %v4857
    %v6195 = vunpack.c.h.b16 %v4857
    %v6196 = vunpack.c.l.b16 %v4858
    %v6197 = vunpack.c.h.b16 %v4858
    %v6198 = vunpack.c.l.b16 %v4859
    %v6199 = vunpack.c.h.b16 %v4859
    %v6200 = vunpack.c.l.b16 %v4860
    %v6201 = vunpack.c.l.b16 %v4861
    %v6202 = vunpack.c.h.b16 %v4861
    %v6203 = vunpack.c.l.b16 %v4862
    %v6204 = vunpack.c.h.b16 %v4862
    %v6205 = vunpack.c.l.b16 %v4863
    %v6206 = vunpack.c.h.b16 %v4863
    %v6207 = vunpack.c.l.b16 %v4864
    %v6208 = vunpack.c.l.b16 %v4865
    %v6209 = vunpack.c.h.b16 %v4865
    %v6210 = vunpack.c.l.b16 %v4866
    %v6211 = vunpack.c.h.b16 %v4866
    %v6212 = vunpack.c.l.b16 %v4867
    %v6213 = vunpack.c.h.b16 %v4867
    %v6214 = vunpack.c.l.b16 %v4868
    %v6215 = vunpack.c.l.b16 %v4869
    %v6216 = vunpack.c.h.b16 %v4869
    %v6217 = vunpack.c.l.b16 %v4870
    %v6218 = vunpack.c.h.b16 %v4870
    %v6219 = vunpack.c.l.b16 %v4871
    %v6220 = vunpack.c.h.b16 %v4871
    %v6221 = vunpack.c.l.b16 %v4872
    %v6222 = vunpack.c.l.b16 %v4873
    %v6223 = vunpack.c.h.b16 %v4873
    %v6224 = vunpack.c.l.b16 %v4874
    %v6225 = vunpack.c.h.b16 %v4874
    %v6226 = vunpack.c.l.b16 %v4875
    %v6227 = vunpack.c.h.b16 %v4875
    %v6228 = vunpack.c.l.b16 %v4876
    %v6229 = vunpack.c.l.b16 %v4877
    %v6230 = vunpack.c.h.b16 %v4877
    %v6231 = vunpack.c.l.b16 %v4878
    %v6232 = vunpack.c.h.b16 %v4878
    %v6233 = vunpack.c.l.b16 %v4879
    %v6234 = vunpack.c.h.b16 %v4879
    %v6235 = vunpack.c.l.b16 %v4880
    %v6236 = vunpack.c.l.b16 %v4881
    %v6237 = vunpack.c.h.b16 %v4881
    %v6238 = vunpack.c.l.b16 %v4882
    %v6239 = vunpack.c.h.b16 %v4882
    %v6240 = vunpack.c.l.b16 %v4883
    %v6241 = vunpack.c.h.b16 %v4883
    %v6242 = vunpack.c.l.b16 %v4884
    %v6243 = vunpack.c.l.b16 %v4885
    %v6244 = vunpack.c.h.b16 %v4885
    %v6245 = vunpack.c.l.b16 %v4886
    %v6246 = vunpack.c.h.b16 %v4886
    %v6247 = vunpack.c.l.b16 %v4887
    %v6248 = vunpack.c.h.b16 %v4887
    %v6249 = vunpack.c.l.b16 %v4888
    %v6250 = vunpack.c.l.b16 %v4889
    %v6251 = vunpack.c.h.b16 %v4889
    %v6252 = vunpack.c.l.b16 %v4890
    %v6253 = vunpack.c.h.b16 %v4890
    %v6254 = vunpack.c.l.b16 %v4891
    %v6255 = vunpack.c.h.b16 %v4891
    %v6256 = vunpack.c.l.b16 %v4892
    %v6257 = vunpack.c.l.b16 %v4893
    %v6258 = vunpack.c.h.b16 %v4893
    %v6259 = vunpack.c.l.b16 %v4894
    %v6260 = vunpack.c.h.b16 %v4894
    %v6261 = vunpack.c.l.b16 %v4895
    %v6262 = vunpack.c.h.b16 %v4895
    %v6263 = vunpack.c.l.b16 %v4896
    %v6264 = vunpack.c.l.b16 %v4897
    %v6265 = vunpack.c.h.b16 %v4897
    %v6266 = vunpack.c.l.b16 %v4898
    %v6267 = vunpack.c.h.b16 %v4898
    %v6268 = vunpack.c.l.b16 %v4899
    %v6269 = vunpack.c.h.b16 %v4899
    %v6270 = vunpack.c.l.b16 %v4900
    %v6271 = vunpack.c.l.b16 %v4901
    %v6272 = vunpack.c.h.b16 %v4901
    %v6273 = vunpack.c.l.b16 %v4902
    %v6274 = vunpack.c.h.b16 %v4902
    %v6275 = vunpack.c.l.b16 %v4903
    %v6276 = vunpack.c.h.b16 %v4903
    %v6277 = vunpack.c.l.b16 %v4904
    %v6278 = vunpack.c.l.b16 %v4905
    %v6279 = vunpack.c.h.b16 %v4905
    %v6280 = vunpack.c.l.b16 %v4906
    %v6281 = vunpack.c.h.b16 %v4906
    %v6282 = vunpack.c.l.b16 %v4907
    %v6283 = vunpack.c.h.b16 %v4907
    %v6284 = vunpack.c.l.b16 %v4908
    %v6285 = vunpack.c.l.b16 %v4909
    %v6286 = vunpack.c.h.b16 %v4909
    %v6287 = vunpack.c.l.b16 %v4910
    %v6288 = vunpack.c.h.b16 %v4910
    %v6289 = vunpack.c.l.b16 %v4911
    %v6290 = vunpack.c.h.b16 %v4911
    %v6291 = vunpack.c.l.b16 %v4912
    %v6292 = vunpack.c.l.b16 %v4913
    %v6293 = vunpack.c.h.b16 %v4913
    %v6294 = vunpack.c.l.b16 %v4914
    %v6295 = vunpack.c.h.b16 %v4914
    %v6296 = vunpack.c.l.b16 %v4915
    %v6297 = vunpack.c.h.b16 %v4915
    %v6298 = vunpack.c.l.b16 %v4916
    %v6299 = vunpack.c.l.b16 %v4917
    %v6300 = vunpack.c.h.b16 %v4917
    %v6301 = vunpack.c.l.b16 %v4918
    %v6302 = vunpack.c.h.b16 %v4918
    %v6303 = vunpack.c.l.b16 %v4919
    %v6304 = vunpack.c.h.b16 %v4919
    %v6305 = vunpack.c.l.b16 %v4920
    %v6306 = vunpack.c.l.b16 %v4921
    %v6307 = vunpack.c.h.b16 %v4921
    %v6308 = vunpack.c.l.b16 %v4922
    %v6309 = vunpack.c.h.b16 %v4922
    %v6310 = vunpack.c.l.b16 %v4923
    %v6311 = vunpack.c.h.b16 %v4923
    %v6312 = vunpack.c.l.b16 %v4924
    %v6313 = vunpack.c.l.b16 %v4925
    %v6314 = vunpack.c.h.b16 %v4925
    %v6315 = vunpack.c.l.b16 %v4926
    %v6316 = vunpack.c.h.b16 %v4926
    %v6317 = vunpack.c.l.b16 %v4927
    %v6318 = vunpack.c.h.b16 %v4927
    %v6319 = vunpack.c.l.b16 %v4928
    %v6320 = vunpack.c.l.b16 %v4929
    %v6321 = vunpack.c.h.b16 %v4929
    %v6322 = vunpack.c.l.b16 %v4930
    %v6323 = vunpack.c.h.b16 %v4930
    %v6324 = vunpack.c.l.b16 %v4931
    %v6325 = vunpack.c.h.b16 %v4931
    %v6326 = vunpack.c.l.b16 %v4932
    %v6327 = vunpack.c.l.b16 %v4933
    %v6328 = vunpack.c.h.b16 %v4933
    %v6329 = vunpack.c.l.b16 %v4934
    %v6330 = vunpack.c.h.b16 %v4934
    %v6331 = vunpack.c.l.b16 %v4935
    %v6332 = vunpack.c.h.b16 %v4935
    %v6333 = vunpack.c.l.b16 %v4936
    %v6334 = vunpack.c.l.b16 %v4937
    %v6335 = vunpack.c.h.b16 %v4937
    %v6336 = vunpack.c.l.b16 %v4938
    %v6337 = vunpack.c.h.b16 %v4938
    %v6338 = vunpack.c.l.b16 %v4939
    %v6339 = vunpack.c.h.b16 %v4939
    %v6340 = vunpack.c.l.b16 %v4940
    %v6341 = vunpack.c.l.b16 %v4941
    %v6342 = vunpack.c.h.b16 %v4941
    %v6343 = vunpack.c.l.b16 %v4942
    %v6344 = vunpack.c.h.b16 %v4942
    %v6345 = vunpack.c.l.b16 %v4943
    %v6346 = vunpack.c.h.b16 %v4943
    %v6347 = vunpack.c.l.b16 %v4944
    %v6348 = vunpack.c.l.b16 %v4945
    %v6349 = vunpack.c.h.b16 %v4945
    %v6350 = vunpack.c.l.b16 %v4946
    %v6351 = vunpack.c.h.b16 %v4946
    %v6352 = vunpack.c.l.b16 %v4947
    %v6353 = vunpack.c.h.b16 %v4947
    %v6354 = vunpack.c.l.b16 %v4948
    %v6355 = vunpack.c.l.b16 %v4949
    %v6356 = vunpack.c.h.b16 %v4949
    %v6357 = vunpack.c.l.b16 %v4950
    %v6358 = vunpack.c.h.b16 %v4950
    %v6359 = vunpack.c.l.b16 %v4951
    %v6360 = vunpack.c.h.b16 %v4951
    %v6361 = vunpack.c.l.b16 %v4952
    %v6362 = vunpack.c.l.b16 %v4953
    %v6363 = vunpack.c.h.b16 %v4953
    %v6364 = vunpack.c.l.b16 %v4954
    %v6365 = vunpack.c.h.b16 %v4954
    %v6366 = vunpack.c.l.b16 %v4955
    %v6367 = vunpack.c.h.b16 %v4955
    %v6368 = vunpack.c.l.b16 %v4956
    %v6369 = vunpack.c.l.b16 %v4957
    %v6370 = vunpack.c.h.b16 %v4957
    %v6371 = vunpack.c.l.b16 %v4958
    %v6372 = vunpack.c.h.b16 %v4958
    %v6373 = vunpack.c.l.b16 %v4959
    %v6374 = vunpack.c.h.b16 %v4959
    %v6375 = vunpack.c.l.b16 %v4960
    %v6376 = vunpack.c.l.b16 %v4961
    %v6377 = vunpack.c.h.b16 %v4961
    %v6378 = vunpack.c.l.b16 %v4962
    %v6379 = vunpack.c.h.b16 %v4962
    %v6380 = vunpack.c.l.b16 %v4963
    %v6381 = vunpack.c.h.b16 %v4963
    %v6382 = vunpack.c.l.b16 %v4964
    %v6383 = vunpack.c.l.b16 %v4965
    %v6384 = vunpack.c.h.b16 %v4965
    %v6385 = vunpack.c.l.b16 %v4966
    %v6386 = vunpack.c.h.b16 %v4966
    %v6387 = vunpack.c.l.b16 %v4967
    %v6388 = vunpack.c.h.b16 %v4967
    %v6389 = vunpack.c.l.b16 %v4968
    %v6390 = vunpack.c.l.b16 %v4969
    %v6391 = vunpack.c.h.b16 %v4969
    %v6392 = vunpack.c.l.b16 %v4970
    %v6393 = vunpack.c.h.b16 %v4970
    %v6394 = vunpack.c.l.b16 %v4971
    %v6395 = vunpack.c.h.b16 %v4971
    %v6396 = vunpack.c.l.b16 %v4972
    %v6397 = vunpack.c.l.b16 %v4973
    %v6398 = vunpack.c.h.b16 %v4973
    %v6399 = vunpack.c.l.b16 %v4974
    %v6400 = vunpack.c.h.b16 %v4974
    %v6401 = vunpack.c.l.b16 %v4975
    %v6402 = vunpack.c.h.b16 %v4975
    %v6403 = vunpack.c.l.b16 %v4976
    %v6404 = vunpack.c.l.b16 %v4977
    %v6405 = vunpack.c.h.b16 %v4977
    %v6406 = vunpack.c.l.b16 %v4978
    %v6407 = vunpack.c.h.b16 %v4978
    %v6408 = vunpack.c.l.b16 %v4979
    %v6409 = vunpack.c.h.b16 %v4979
    %v6410 = vunpack.c.l.b16 %v4980
    %v6411 = vunpack.c.l.b16 %v4981
    %v6412 = vunpack.c.h.b16 %v4981
    %v6413 = vunpack.c.l.b16 %v4982
    %v6414 = vunpack.c.h.b16 %v4982
    %v6415 = vunpack.c.l.b16 %v4983
    %v6416 = vunpack.c.h.b16 %v4983
    %v6417 = vunpack.c.l.b16 %v4984
    %v6418 = vunpack.c.l.b16 %v4985
    %v6419 = vunpack.c.h.b16 %v4985
    %v6420 = vunpack.c.l.b16 %v4986
    %v6421 = vunpack.c.h.b16 %v4986
    %v6422 = vunpack.c.l.b16 %v4987
    %v6423 = vunpack.c.h.b16 %v4987
    %v6424 = vunpack.c.l.b16 %v4988
    %v6425 = vunpack.c.l.b16 %v4989
    %v6426 = vunpack.c.h.b16 %v4989
    %v6427 = vunpack.c.l.b16 %v4990
    %v6428 = vunpack.c.h.b16 %v4990
    %v6429 = vunpack.c.l.b16 %v4991
    %v6430 = vunpack.c.h.b16 %v4991
    %v6431 = vunpack.c.l.b16 %v4992
    %v6432 = vunpack.c.l.b16 %v4993
    %v6433 = vunpack.c.h.b16 %v4993
    %v6434 = vunpack.c.l.b16 %v4994
    %v6435 = vunpack.c.h.b16 %v4994
    %v6436 = vunpack.c.l.b16 %v4995
    %v6437 = vunpack.c.h.b16 %v4995
    %v6438 = vunpack.c.l.b16 %v4996
    %v6439 = vunpack.c.l.b16 %v4997
    %v6440 = vunpack.c.h.b16 %v4997
    %v6441 = vunpack.c.l.b16 %v4998
    %v6442 = vunpack.c.h.b16 %v4998
    %v6443 = vunpack.c.l.b16 %v4999
    %v6444 = vunpack.c.h.b16 %v4999
    %v6445 = vunpack.c.l.b16 %v5000
    %v6446 = vpack.c.b16 %v5557, %v5550
    %v6447 = vpack.c.b16 %v5558, %v5551
    %v6448 = vpack.c.b16 %v5559, %v5552
    %v6449 = vpack.c.b16 %v5560, %v5553
    %v6450 = vpack.c.b16 %v5561, %v5554
    %v6451 = vpack.c.b16 %v5562, %v5555
    %v6452 = vpack.c.b16 %v5563, %v5556
    %v6453 = vpack.c.b16 %v5571, %v5564
    %v6454 = vpack.c.b16 %v5572, %v5565
    %v6455 = vpack.c.b16 %v5573, %v5566
    %v6456 = vpack.c.b16 %v5574, %v5567
    %v6457 = vpack.c.b16 %v5575, %v5568
    %v6458 = vpack.c.b16 %v5576, %v5569
    %v6459 = vpack.c.b16 %v5577, %v5570
    %v6460 = vpack.c.b16 %v5585, %v5578
    %v6461 = vpack.c.b16 %v5586, %v5579
    %v6462 = vpack.c.b16 %v5587, %v5580
    %v6463 = vpack.c.b16 %v5588, %v5581
    %v6464 = vpack.c.b16 %v5589, %v5582
    %v6465 = vpack.c.b16 %v5590, %v5583
    %v6466 = vpack.c.b16 %v5591, %v5584
    %v6467 = vpack.c.b16 %v5599, %v5592
    %v6468 = vpack.c.b16 %v5600, %v5593
    %v6469 = vpack.c.b16 %v5601, %v5594
    %v6470 = vpack.c.b16 %v5602, %v5595
    %v6471 = vpack.c.b16 %v5603, %v5596
    %v6472 = vpack.c.b16 %v5604, %v5597
    %v6473 = vpack.c.b16 %v5605, %v5598
    %v6474 = vpack.c.b16 %v5613, %v5606
    %v6475 = vpack.c.b16 %v5614, %v5607
    %v6476 = vpack.c.b16 %v5615, %v5608
    %v6477 = vpack.c.b16 %v5616, %v5609
    %v6478 = vpack.c.b16 %v5617, %v5610
    %v6479 = vpack.c.b16 %v5618, %v5611
    %v6480 = vpack.c.b16 %v5619, %v5612
    %v6481 = vpack.c.b16 %v5627, %v5620
    %v6482 = vpack.c.b16 %v5628, %v5621
    %v6483 = vpack.c.b16 %v5629, %v5622
    %v6484 = vpack.c.b16 %v5630, %v5623
    %v6485 = vpack.c.b16 %v5631, %v5624
    %v6486 = vpack.c.b16 %v5632, %v5625
    %v6487 = vpack.c.b16 %v5633, %v5626
    %v6488 = vpack.c.b16 %v5641, %v5634
    %v6489 = vpack.c.b16 %v5642, %v5635
    %v6490 = vpack.c.b16 %v5643, %v5636
    %v6491 = vpack.c.b16 %v5644, %v5637
    %v6492 = vpack.c.b16 %v5645, %v5638
    %v6493 = vpack.c.b16 %v5646, %v5639
    %v6494 = vpack.c.b16 %v5647, %v5640
    %v6495 = vpack.c.b16 %v5655, %v5648
    %v6496 = vpack.c.b16 %v5656, %v5649
    %v6497 = vpack.c.b16 %v5657, %v5650
    %v6498 = vpack.c.b16 %v5658, %v5651
    %v6499 = vpack.c.b16 %v5659, %v5652
    %v6500 = vpack.c.b16 %v5660, %v5653
    %v6501 = vpack.c.b16 %v5661, %v5654
    %v6502 = vpack.c.b16 %v5669, %v5662
    %v6503 = vpack.c.b16 %v5670, %v5663
    %v6504 = vpack.c.b16 %v5671, %v5664
    %v6505 = vpack.c.b16 %v5672, %v5665
    %v6506 = vpack.c.b16 %v5673, %v5666
    %v6507 = vpack.c.b16 %v5674, %v5667
    %v6508 = vpack.c.b16 %v5675, %v5668
    %v6509 = vpack.c.b16 %v5683, %v5676
    %v6510 = vpack.c.b16 %v5684, %v5677
    %v6511 = vpack.c.b16 %v5685, %v5678
    %v6512 = vpack.c.b16 %v5686, %v5679
    %v6513 = vpack.c.b16 %v5687, %v5680
    %v6514 = vpack.c.b16 %v5688, %v5681
    %v6515 = vpack.c.b16 %v5689, %v5682
    %v6516 = vpack.c.b16 %v5697, %v5690
    %v6517 = vpack.c.b16 %v5698, %v5691
    %v6518 = vpack.c.b16 %v5699, %v5692
    %v6519 = vpack.c.b16 %v5700, %v5693
    %v6520 = vpack.c.b16 %v5701, %v5694
    %v6521 = vpack.c.b16 %v5702, %v5695
    %v6522 = vpack.c.b16 %v5703, %v5696
    %v6523 = vpack.c.b16 %v5711, %v5704
    %v6524 = vpack.c.b16 %v5712, %v5705
    %v6525 = vpack.c.b16 %v5713, %v5706
    %v6526 = vpack.c.b16 %v5714, %v5707
    %v6527 = vpack.c.b16 %v5715, %v5708
    %v6528 = vpack.c.b16 %v5716, %v5709
    %v6529 = vpack.c.b16 %v5717, %v5710
    %v6530 = vpack.c.b16 %v5725, %v5718
    %v6531 = vpack.c.b16 %v5726, %v5719
    %v6532 = vpack.c.b16 %v5727, %v5720
    %v6533 = vpack.c.b16 %v5728, %v5721
    %v6534 = vpack.c.b16 %v5729, %v5722
    %v6535 = vpack.c.b16 %v5730, %v5723
    %v6536 = vpack.c.b16 %v5731, %v5724
    %v6537 = vpack.c.b16 %v5739, %v5732
    %v6538 = vpack.c.b16 %v5740, %v5733
    %v6539 = vpack.c.b16 %v5741, %v5734
    %v6540 = vpack.c.b16 %v5742, %v5735
    %v6541 = vpack.c.b16 %v5743, %v5736
    %v6542 = vpack.c.b16 %v5744, %v5737
    %v6543 = vpack.c.b16 %v5745, %v5738
    %v6544 = vpack.c.b16 %v5753, %v5746
    %v6545 = vpack.c.b16 %v5754, %v5747
    %v6546 = vpack.c.b16 %v5755, %v5748
    %v6547 = vpack.c.b16 %v5756, %v5749
    %v6548 = vpack.c.b16 %v5757, %v5750
    %v6549 = vpack.c.b16 %v5758, %v5751
    %v6550 = vpack.c.b16 %v5759, %v5752
    %v6551 = vpack.c.b16 %v5767, %v5760
    %v6552 = vpack.c.b16 %v5768, %v5761
    %v6553 = vpack.c.b16 %v5769, %v5762
    %v6554 = vpack.c.b16 %v5770, %v5763
    %v6555 = vpack.c.b16 %v5771, %v5764
    %v6556 = vpack.c.b16 %v5772, %v5765
    %v6557 = vpack.c.b16 %v5773, %v5766
    %v6558 = vpack.c.b16 %v5781, %v5774
    %v6559 = vpack.c.b16 %v5782, %v5775
    %v6560 = vpack.c.b16 %v5783, %v5776
    %v6561 = vpack.c.b16 %v5784, %v5777
    %v6562 = vpack.c.b16 %v5785, %v5778
    %v6563 = vpack.c.b16 %v5786, %v5779
    %v6564 = vpack.c.b16 %v5787, %v5780
    %v6565 = vpack.c.b16 %v5795, %v5788
    %v6566 = vpack.c.b16 %v5796, %v5789
    %v6567 = vpack.c.b16 %v5797, %v5790
    %v6568 = vpack.c.b16 %v5798, %v5791
    %v6569 = vpack.c.b16 %v5799, %v5792
    %v6570 = vpack.c.b16 %v5800, %v5793
    %v6571 = vpack.c.b16 %v5801, %v5794
    %v6572 = vpack.c.b16 %v5809, %v5802
    %v6573 = vpack.c.b16 %v5810, %v5803
    %v6574 = vpack.c.b16 %v5811, %v5804
    %v6575 = vpack.c.b16 %v5812, %v5805
    %v6576 = vpack.c.b16 %v5813, %v5806
    %v6577 = vpack.c.b16 %v5814, %v5807
    %v6578 = vpack.c.b16 %v5815, %v5808
    %v6579 = vpack.c.b16 %v5823, %v5816
    %v6580 = vpack.c.b16 %v5824, %v5817
    %v6581 = vpack.c.b16 %v5825, %v5818
    %v6582 = vpack.c.b16 %v5826, %v5819
    %v6583 = vpack.c.b16 %v5827, %v5820
    %v6584 = vpack.c.b16 %v5828, %v5821
    %v6585 = vpack.c.b16 %v5829, %v5822
    %v6586 = vpack.c.b16 %v5837, %v5830
    %v6587 = vpack.c.b16 %v5838, %v5831
    %v6588 = vpack.c.b16 %v5839, %v5832
    %v6589 = vpack.c.b16 %v5840, %v5833
    %v6590 = vpack.c.b16 %v5841, %v5834
    %v6591 = vpack.c.b16 %v5842, %v5835
    %v6592 = vpack.c.b16 %v5843, %v5836
    %v6593 = vpack.c.b16 %v5851, %v5844
    %v6594 = vpack.c.b16 %v5852, %v5845
    %v6595 = vpack.c.b16 %v5853, %v5846
    %v6596 = vpack.c.b16 %v5854, %v5847
    %v6597 = vpack.c.b16 %v5855, %v5848
    %v6598 = vpack.c.b16 %v5856, %v5849
    %v6599 = vpack.c.b16 %v5857, %v5850
    %v6600 = vpack.c.b16 %v5865, %v5858
    %v6601 = vpack.c.b16 %v5866, %v5859
    %v6602 = vpack.c.b16 %v5867, %v5860
    %v6603 = vpack.c.b16 %v5868, %v5861
    %v6604 = vpack.c.b16 %v5869, %v5862
    %v6605 = vpack.c.b16 %v5870, %v5863
    %v6606 = vpack.c.b16 %v5871, %v5864
    %v6607 = vpack.c.b16 %v5879, %v5872
    %v6608 = vpack.c.b16 %v5880, %v5873
    %v6609 = vpack.c.b16 %v5881, %v5874
    %v6610 = vpack.c.b16 %v5882, %v5875
    %v6611 = vpack.c.b16 %v5883, %v5876
    %v6612 = vpack.c.b16 %v5884, %v5877
    %v6613 = vpack.c.b16 %v5885, %v5878
    %v6614 = vpack.c.b16 %v5893, %v5886
    %v6615 = vpack.c.b16 %v5894, %v5887
    %v6616 = vpack.c.b16 %v5895, %v5888
    %v6617 = vpack.c.b16 %v5896, %v5889
    %v6618 = vpack.c.b16 %v5897, %v5890
    %v6619 = vpack.c.b16 %v5898, %v5891
    %v6620 = vpack.c.b16 %v5899, %v5892
    %v6621 = vpack.c.b16 %v5907, %v5900
    %v6622 = vpack.c.b16 %v5908, %v5901
    %v6623 = vpack.c.b16 %v5909, %v5902
    %v6624 = vpack.c.b16 %v5910, %v5903
    %v6625 = vpack.c.b16 %v5911, %v5904
    %v6626 = vpack.c.b16 %v5912, %v5905
    %v6627 = vpack.c.b16 %v5913, %v5906
    %v6628 = vpack.c.b16 %v5921, %v5914
    %v6629 = vpack.c.b16 %v5922, %v5915
    %v6630 = vpack.c.b16 %v5923, %v5916
    %v6631 = vpack.c.b16 %v5924, %v5917
    %v6632 = vpack.c.b16 %v5925, %v5918
    %v6633 = vpack.c.b16 %v5926, %v5919
    %v6634 = vpack.c.b16 %v5927, %v5920
    %v6635 = vpack.c.b16 %v5935, %v5928
    %v6636 = vpack.c.b16 %v5936, %v5929
    %v6637 = vpack.c.b16 %v5937, %v5930
    %v6638 = vpack.c.b16 %v5938, %v5931
    %v6639 = vpack.c.b16 %v5939, %v5932
    %v6640 = vpack.c.b16 %v5940, %v5933
    %v6641 = vpack.c.b16 %v5941, %v5934
    %v6642 = vpack.c.b16 %v5949, %v5942
    %v6643 = vpack.c.b16 %v5950, %v5943
    %v6644 = vpack.c.b16 %v5951, %v5944
    %v6645 = vpack.c.b16 %v5952, %v5945
    %v6646 = vpack.c.b16 %v5953, %v5946
    %v6647 = vpack.c.b16 %v5954, %v5947
    %v6648 = vpack.c.b16 %v5955, %v5948
    %v6649 = vpack.c.b16 %v5963, %v5956
    %v6650 = vpack.c.b16 %v5964, %v5957
    %v6651 = vpack.c.b16 %v5965, %v5958
    %v6652 = vpack.c.b16 %v5966, %v5959
    %v6653 = vpack.c.b16 %v5967, %v5960
    %v6654 = vpack.c.b16 %v5968, %v5961
    %v6655 = vpack.c.b16 %v5969, %v5962
    %v6656 = vpack.c.b16 %v5977, %v5970
    %v6657 = vpack.c.b16 %v5978, %v5971
    %v6658 = vpack.c.b16 %v5979, %v5972
    %v6659 = vpack.c.b16 %v5980, %v5973
    %v6660 = vpack.c.b16 %v5981, %v5974
    %v6661 = vpack.c.b16 %v5982, %v5975
    %v6662 = vpack.c.b16 %v5983, %v5976
    %v6663 = vpack.c.b16 %v5991, %v5984
    %v6664 = vpack.c.b16 %v5992, %v5985
    %v6665 = vpack.c.b16 %v5993, %v5986
    %v6666 = vpack.c.b16 %v5994, %v5987
    %v6667 = vpack.c.b16 %v5995, %v5988
    %v6668 = vpack.c.b16 %v5996, %v5989
    %v6669 = vpack.c.b16 %v5997, %v5990
    %v6670 = vpack.c.b16 %v6005, %v5998
    %v6671 = vpack.c.b16 %v6006, %v5999
    %v6672 = vpack.c.b16 %v6007, %v6000
    %v6673 = vpack.c.b16 %v6008, %v6001
    %v6674 = vpack.c.b16 %v6009, %v6002
    %v6675 = vpack.c.b16 %v6010, %v6003
    %v6676 = vpack.c.b16 %v6011, %v6004
    %v6677 = vpack.c.b16 %v6019, %v6012
    %v6678 = vpack.c.b16 %v6020, %v6013
    %v6679 = vpack.c.b16 %v6021, %v6014
    %v6680 = vpack.c.b16 %v6022, %v6015
    %v6681 = vpack.c.b16 %v6023, %v6016
    %v6682 = vpack.c.b16 %v6024, %v6017
    %v6683 = vpack.c.b16 %v6025, %v6018
    %v6684 = vpack.c.b16 %v6033, %v6026
    %v6685 = vpack.c.b16 %v6034, %v6027
    %v6686 = vpack.c.b16 %v6035, %v6028
    %v6687 = vpack.c.b16 %v6036, %v6029
    %v6688 = vpack.c.b16 %v6037, %v6030
    %v6689 = vpack.c.b16 %v6038, %v6031
    %v6690 = vpack.c.b16 %v6039, %v6032
    %v6691 = vpack.c.b16 %v6047, %v6040
    %v6692 = vpack.c.b16 %v6048, %v6041
    %v6693 = vpack.c.b16 %v6049, %v6042
    %v6694 = vpack.c.b16 %v6050, %v6043
    %v6695 = vpack.c.b16 %v6051, %v6044
    %v6696 = vpack.c.b16 %v6052, %v6045
    %v6697 = vpack.c.b16 %v6053, %v6046
    %v6698 = vpack.c.b16 %v6061, %v6054
    %v6699 = vpack.c.b16 %v6062, %v6055
    %v6700 = vpack.c.b16 %v6063, %v6056
    %v6701 = vpack.c.b16 %v6064, %v6057
    %v6702 = vpack.c.b16 %v6065, %v6058
    %v6703 = vpack.c.b16 %v6066, %v6059
    %v6704 = vpack.c.b16 %v6067, %v6060
    %v6705 = vpack.c.b16 %v6075, %v6068
    %v6706 = vpack.c.b16 %v6076, %v6069
    %v6707 = vpack.c.b16 %v6077, %v6070
    %v6708 = vpack.c.b16 %v6078, %v6071
    %v6709 = vpack.c.b16 %v6079, %v6072
    %v6710 = vpack.c.b16 %v6080, %v6073
    %v6711 = vpack.c.b16 %v6081, %v6074
    %v6712 = vpack.c.b16 %v6089, %v6082
    %v6713 = vpack.c.b16 %v6090, %v6083
    %v6714 = vpack.c.b16 %v6091, %v6084
    %v6715 = vpack.c.b16 %v6092, %v6085
    %v6716 = vpack.c.b16 %v6093, %v6086
    %v6717 = vpack.c.b16 %v6094, %v6087
    %v6718 = vpack.c.b16 %v6095, %v6088
    %v6719 = vpack.c.b16 %v6103, %v6096
    %v6720 = vpack.c.b16 %v6104, %v6097
    %v6721 = vpack.c.b16 %v6105, %v6098
    %v6722 = vpack.c.b16 %v6106, %v6099
    %v6723 = vpack.c.b16 %v6107, %v6100
    %v6724 = vpack.c.b16 %v6108, %v6101
    %v6725 = vpack.c.b16 %v6109, %v6102
    %v6726 = vpack.c.b16 %v6117, %v6110
    %v6727 = vpack.c.b16 %v6118, %v6111
    %v6728 = vpack.c.b16 %v6119, %v6112
    %v6729 = vpack.c.b16 %v6120, %v6113
    %v6730 = vpack.c.b16 %v6121, %v6114
    %v6731 = vpack.c.b16 %v6122, %v6115
    %v6732 = vpack.c.b16 %v6123, %v6116
    %v6733 = vpack.c.b16 %v6131, %v6124
    %v6734 = vpack.c.b16 %v6132, %v6125
    %v6735 = vpack.c.b16 %v6133, %v6126
    %v6736 = vpack.c.b16 %v6134, %v6127
    %v6737 = vpack.c.b16 %v6135, %v6128
    %v6738 = vpack.c.b16 %v6136, %v6129
    %v6739 = vpack.c.b16 %v6137, %v6130
    %v6740 = vpack.c.b16 %v6145, %v6138
    %v6741 = vpack.c.b16 %v6146, %v6139
    %v6742 = vpack.c.b16 %v6147, %v6140
    %v6743 = vpack.c.b16 %v6148, %v6141
    %v6744 = vpack.c.b16 %v6149, %v6142
    %v6745 = vpack.c.b16 %v6150, %v6143
    %v6746 = vpack.c.b16 %v6151, %v6144
    %v6747 = vpack.c.b16 %v6159, %v6152
    %v6748 = vpack.c.b16 %v6160, %v6153
    %v6749 = vpack.c.b16 %v6161, %v6154
    %v6750 = vpack.c.b16 %v6162, %v6155
    %v6751 = vpack.c.b16 %v6163, %v6156
    %v6752 = vpack.c.b16 %v6164, %v6157
    %v6753 = vpack.c.b16 %v6165, %v6158
    %v6754 = vpack.c.b16 %v6173, %v6166
    %v6755 = vpack.c.b16 %v6174, %v6167
    %v6756 = vpack.c.b16 %v6175, %v6168
    %v6757 = vpack.c.b16 %v6176, %v6169
    %v6758 = vpack.c.b16 %v6177, %v6170
    %v6759 = vpack.c.b16 %v6178, %v6171
    %v6760 = vpack.c.b16 %v6179, %v6172
    %v6761 = vpack.c.b16 %v6187, %v6180
    %v6762 = vpack.c.b16 %v6188, %v6181
    %v6763 = vpack.c.b16 %v6189, %v6182
    %v6764 = vpack.c.b16 %v6190, %v6183
    %v6765 = vpack.c.b16 %v6191, %v6184
    %v6766 = vpack.c.b16 %v6192, %v6185
    %v6767 = vpack.c.b16 %v6193, %v6186
    %v6768 = vpack.c.b16 %v6201, %v6194
    %v6769 = vpack.c.b16 %v6202, %v6195
    %v6770 = vpack.c.b16 %v6203, %v6196
    %v6771 = vpack.c.b16 %v6204, %v6197
    %v6772 = vpack.c.b16 %v6205, %v6198
    %v6773 = vpack.c.b16 %v6206, %v6199
    %v6774 = vpack.c.b16 %v6207, %v6200
    %v6775 = vpack.c.b16 %v6215, %v6208
    %v6776 = vpack.c.b16 %v6216, %v6209
    %v6777 = vpack.c.b16 %v6217, %v6210
    %v6778 = vpack.c.b16 %v6218, %v6211
    %v6779 = vpack.c.b16 %v6219, %v6212
    %v6780 = vpack.c.b16 %v6220, %v6213
    %v6781 = vpack.c.b16 %v6221, %v6214
    %v6782 = vpack.c.b16 %v6229, %v6222
    %v6783 = vpack.c.b16 %v6230, %v6223
    %v6784 = vpack.c.b16 %v6231, %v6224
    %v6785 = vpack.c.b16 %v6232, %v6225
    %v6786 = vpack.c.b16 %v6233, %v6226
    %v6787 = vpack.c.b16 %v6234, %v6227
    %v6788 = vpack.c.b16 %v6235, %v6228
    %v6789 = vpack.c.b16 %v6243, %v6236
    %v6790 = vpack.c.b16 %v6244, %v6237
    %v6791 = vpack.c.b16 %v6245, %v6238
    %v6792 = vpack.c.b16 %v6246, %v6239
    %v6793 = vpack.c.b16 %v6247, %v6240
    %v6794 = vpack.c.b16 %v6248, %v6241
    %v6795 = vpack.c.b16 %v6249, %v6242
    %v6796 = vpack.c.b16 %v6257, %v6250
    %v6797 = vpack.c.b16 %v6258, %v6251
    %v6798 = vpack.c.b16 %v6259, %v6252
    %v6799 = vpack.c.b16 %v6260, %v6253
    %v6800 = vpack.c.b16 %v6261, %v6254
    %v6801 = vpack.c.b16 %v6262, %v6255
    %v6802 = vpack.c.b16 %v6263, %v6256
    %v6803 = vpack.c.b16 %v6271, %v6264
    %v6804 = vpack.c.b16 %v6272, %v6265
    %v6805 = vpack.c.b16 %v6273, %v6266
    %v6806 = vpack.c.b16 %v6274, %v6267
    %v6807 = vpack.c.b16 %v6275, %v6268
    %v6808 = vpack.c.b16 %v6276, %v6269
    %v6809 = vpack.c.b16 %v6277, %v6270
    %v6810 = vpack.c.b16 %v6285, %v6278
    %v6811 = vpack.c.b16 %v6286, %v6279
    %v6812 = vpack.c.b16 %v6287, %v6280
    %v6813 = vpack.c.b16 %v6288, %v6281
    %v6814 = vpack.c.b16 %v6289, %v6282
    %v6815 = vpack.c.b16 %v6290, %v6283
    %v6816 = vpack.c.b16 %v6291, %v6284
    %v6817 = vpack.c.b16 %v6299, %v6292
    %v6818 = vpack.c.b16 %v6300, %v6293
    %v6819 = vpack.c.b16 %v6301, %v6294
    %v6820 = vpack.c.b16 %v6302, %v6295
    %v6821 = vpack.c.b16 %v6303, %v6296
    %v6822 = vpack.c.b16 %v6304, %v6297
    %v6823 = vpack.c.b16 %v6305, %v6298
    %v6824 = vpack.c.b16 %v6313, %v6306
    %v6825 = vpack.c.b16 %v6314, %v6307
    %v6826 = vpack.c.b16 %v6315, %v6308
    %v6827 = vpack.c.b16 %v6316, %v6309
    %v6828 = vpack.c.b16 %v6317, %v6310
    %v6829 = vpack.c.b16 %v6318, %v6311
    %v6830 = vpack.c.b16 %v6319, %v6312
    %v6831 = vpack.c.b16 %v6327, %v6320
    %v6832 = vpack.c.b16 %v6328, %v6321
    %v6833 = vpack.c.b16 %v6329, %v6322
    %v6834 = vpack.c.b16 %v6330, %v6323
    %v6835 = vpack.c.b16 %v6331, %v6324
    %v6836 = vpack.c.b16 %v6332, %v6325
    %v6837 = vpack.c.b16 %v6333, %v6326
    %v6838 = vpack.c.b16 %v6341, %v6334
    %v6839 = vpack.c.b16 %v6342, %v6335
    %v6840 = vpack.c.b16 %v6343, %v6336
    %v6841 = vpack.c.b16 %v6344, %v6337
    %v6842 = vpack.c.b16 %v6345, %v6338
    %v6843 = vpack.c.b16 %v6346, %v6339
    %v6844 = vpack.c.b16 %v6347, %v6340
    %v6845 = vpack.c.b16 %v6355, %v6348
    %v6846 = vpack.c.b16 %v6356, %v6349
    %v6847 = vpack.c.b16 %v6357, %v6350
    %v6848 = vpack.c.b16 %v6358, %v6351
    %v6849 = vpack.c.b16 %v6359, %v6352
    %v6850 = vpack.c.b16 %v6360, %v6353
    %v6851 = vpack.c.b16 %v6361, %v6354
    %v6852 = vpack.c.b16 %v6369, %v6362
    %v6853 = vpack.c.b16 %v6370, %v6363
    %v6854 = vpack.c.b16 %v6371, %v6364
    %v6855 = vpack.c.b16 %v6372, %v6365
    %v6856 = vpack.c.b16 %v6373, %v6366
    %v6857 = vpack.c.b16 %v6374, %v6367
    %v6858 = vpack.c.b16 %v6375, %v6368
    %v6859 = vpack.c.b16 %v6383, %v6376
    %v6860 = vpack.c.b16 %v6384, %v6377
    %v6861 = vpack.c.b16 %v6385, %v6378
    %v6862 = vpack.c.b16 %v6386, %v6379
    %v6863 = vpack.c.b16 %v6387, %v6380
    %v6864 = vpack.c.b16 %v6388, %v6381
    %v6865 = vpack.c.b16 %v6389, %v6382
    %v6866 = vpack.c.b16 %v6397, %v6390
    %v6867 = vpack.c.b16 %v6398, %v6391
    %v6868 = vpack.c.b16 %v6399, %v6392
    %v6869 = vpack.c.b16 %v6400, %v6393
    %v6870 = vpack.c.b16 %v6401, %v6394
    %v6871 = vpack.c.b16 %v6402, %v6395
    %v6872 = vpack.c.b16 %v6403, %v6396
    %v6873 = vpack.c.b16 %v6411, %v6404
    %v6874 = vpack.c.b16 %v6412, %v6405
    %v6875 = vpack.c.b16 %v6413, %v6406
    %v6876 = vpack.c.b16 %v6414, %v6407
    %v6877 = vpack.c.b16 %v6415, %v6408
    %v6878 = vpack.c.b16 %v6416, %v6409
    %v6879 = vpack.c.b16 %v6417, %v6410
    %v6880 = vpack.c.b16 %v6425, %v6418
    %v6881 = vpack.c.b16 %v6426, %v6419
    %v6882 = vpack.c.b16 %v6427, %v6420
    %v6883 = vpack.c.b16 %v6428, %v6421
    %v6884 = vpack.c.b16 %v6429, %v6422
    %v6885 = vpack.c.b16 %v6430, %v6423
    %v6886 = vpack.c.b16 %v6431, %v6424
    %v6887 = vpack.c.b16 %v6439, %v6432
    %v6888 = vpack.c.b16 %v6440, %v6433
    %v6889 = vpack.c.b16 %v6441, %v6434
    %v6890 = vpack.c.b16 %v6442, %v6435
    %v6891 = vpack.c.b16 %v6443, %v6436
    %v6892 = vpack.c.b16 %v6444, %v6437
    %v6893 = vpack.c.b16 %v6445, %v6438
    %7342 = vmatprep.subr.bf16.mxu0 %v6447
    %7343 = vmatpush1.bf16.msra.mxu0 %v6446
    %7344 = vmatprep.subr.bf16.mxu0 %v6454
    %7345 = vmatpush1.bf16.msra.mxu0 %v6453
    %7346 = vmatprep.subr.bf16.mxu0 %v6461
    %7347 = vmatpush1.bf16.msra.mxu0 %v6460
    %7348 = vmatprep.subr.bf16.mxu0 %v6468
    %7349 = vmatpush1.bf16.msra.mxu0 %v6467
    %7350 = vmatprep.subr.bf16.mxu0 %v6475
    %7351 = vmatpush1.bf16.msra.mxu0 %v6474
    %7352 = vmatprep.subr.bf16.mxu0 %v6482
    %7353 = vmatpush1.bf16.msra.mxu0 %v6481
    %7354 = vmatprep.subr.bf16.mxu0 %v6489
    %7355 = vmatpush1.bf16.msra.mxu0 %v6488
    %7356 = vmatprep.subr.bf16.mxu0 %v6496
    %7357 = vmatpush1.bf16.msra.mxu0 %v6495
    %7358 = vmatprep.subr.bf16.mxu0 %v6503
    %7359 = vmatpush1.bf16.msra.mxu0 %v6502
    %7360 = vmatprep.subr.bf16.mxu0 %v6510
    %7361 = vmatpush1.bf16.msra.mxu0 %v6509
    %7362 = vmatprep.subr.bf16.mxu0 %v6517
    %7363 = vmatpush1.bf16.msra.mxu0 %v6516
    %7364 = vmatprep.subr.bf16.mxu0 %v6524
    %7365 = vmatpush1.bf16.msra.mxu0 %v6523
    %7366 = vmatprep.subr.bf16.mxu0 %v6531
    %7367 = vmatpush1.bf16.msra.mxu0 %v6530
    %7368 = vmatprep.subr.bf16.mxu0 %v6538
    %7369 = vmatpush1.bf16.msra.mxu0 %v6537
    %7370 = vmatprep.subr.bf16.mxu0 %v6545
    %7371 = vmatpush1.bf16.msra.mxu0 %v6544
    %7372 = vmatprep.subr.bf16.mxu0 %v6552
    %7373 = vmatpush1.bf16.msra.mxu0 %v6551
    %7374 = vmatprep.mubr.bf16.mxu0 %v4482
    %7375 = vmatmul.mubr.bf16.gmra.mrb[0].mxu0 %v4481
    %v7376 = vpop.f32.mrb[0].mxu0
    %v7377 = vadd.f32 %v5006, %v7376
    %v7378 = vpop.f32.mrb[0].mxu0
    %v7379 = vadd.f32 %v5010, %v7378
    %v7380 = vpop.f32.mrb[0].mxu0
    %v7381 = vpop.f32.mrb[0].mxu0
    %7382 = vdwg.mxu0
    %7383 = vmatprep.subr.bf16.mxu0 %v6559
    %7384 = vmatpush1.bf16.msra.mxu0 %v6558
    %7385 = vmatprep.subr.bf16.mxu0 %v6566
    %7386 = vmatpush1.bf16.msra.mxu0 %v6565
    %7387 = vmatprep.subr.bf16.mxu0 %v6573
    %7388 = vmatpush1.bf16.msra.mxu0 %v6572
    %7389 = vmatprep.subr.bf16.mxu0 %v6580
    %7390 = vmatpush1.bf16.msra.mxu0 %v6579
    %7391 = vmatprep.subr.bf16.mxu0 %v6587
    %7392 = vmatpush1.bf16.msra.mxu0 %v6586
    %7393 = vmatprep.subr.bf16.mxu0 %v6594
    %7394 = vmatpush1.bf16.msra.mxu0 %v6593
    %7395 = vmatprep.subr.bf16.mxu0 %v6601
    %7396 = vmatpush1.bf16.msra.mxu0 %v6600
    %7397 = vmatprep.subr.bf16.mxu0 %v6608
    %7398 = vmatpush1.bf16.msra.mxu0 %v6607
    %7399 = vmatprep.subr.bf16.mxu0 %v6615
    %7400 = vmatpush1.bf16.msra.mxu0 %v6614
    %7401 = vmatprep.subr.bf16.mxu0 %v6622
    %7402 = vmatpush1.bf16.msra.mxu0 %v6621
    %7403 = vmatprep.subr.bf16.mxu0 %v6629
    %7404 = vmatpush1.bf16.msra.mxu0 %v6628
    %7405 = vmatprep.subr.bf16.mxu0 %v6636
    %7406 = vmatpush1.bf16.msra.mxu0 %v6635
    %7407 = vmatprep.subr.bf16.mxu0 %v6643
    %7408 = vmatpush1.bf16.msra.mxu0 %v6642
    %7409 = vmatprep.subr.bf16.mxu0 %v6650
    %7410 = vmatpush1.bf16.msra.mxu0 %v6649
    %7411 = vmatprep.subr.bf16.mxu0 %v6657
    %7412 = vmatpush1.bf16.msra.mxu0 %v6656
    %7413 = vmatprep.subr.bf16.mxu0 %v6664
    %7414 = vmatpush1.bf16.msra.mxu0 %v6663
    %7415 = vmatprep.mubr.bf16.mxu0 %v4484
    %7416 = vmatmul.mubr.bf16.gmra.mrb[0].mxu0 %v4483
    %v7417 = vpop.f32.mrb[0].mxu0
    %v7418 = vadd.f32 %v7377, %v7417
    %v7419 = vpop.f32.mrb[0].mxu0
    %v7420 = vadd.f32 %v7379, %v7419
    %v7421 = vpop.f32.mrb[0].mxu0
    %v7422 = vpop.f32.mrb[0].mxu0
    %7423 = vdwg.mxu0
    %7424 = vmatprep.subr.bf16.mxu0 %v6671
    %7425 = vmatpush1.bf16.msra.mxu0 %v6670
    %7426 = vmatprep.subr.bf16.mxu0 %v6678
    %7427 = vmatpush1.bf16.msra.mxu0 %v6677
    %7428 = vmatprep.subr.bf16.mxu0 %v6685
    %7429 = vmatpush1.bf16.msra.mxu0 %v6684
    %7430 = vmatprep.subr.bf16.mxu0 %v6692
    %7431 = vmatpush1.bf16.msra.mxu0 %v6691
    %7432 = vmatprep.subr.bf16.mxu0 %v6699
    %7433 = vmatpush1.bf16.msra.mxu0 %v6698
    %7434 = vmatprep.subr.bf16.mxu0 %v6706
    %7435 = vmatpush1.bf16.msra.mxu0 %v6705
    %7436 = vmatprep.subr.bf16.mxu0 %v6713
    %7437 = vmatpush1.bf16.msra.mxu0 %v6712
    %7438 = vmatprep.subr.bf16.mxu0 %v6720
    %7439 = vmatpush1.bf16.msra.mxu0 %v6719
    %7440 = vmatprep.subr.bf16.mxu0 %v6727
    %7441 = vmatpush1.bf16.msra.mxu0 %v6726
    %7442 = vmatprep.subr.bf16.mxu0 %v6734
    %7443 = vmatpush1.bf16.msra.mxu0 %v6733
    %7444 = vmatprep.subr.bf16.mxu0 %v6741
    %7445 = vmatpush1.bf16.msra.mxu0 %v6740
    %7446 = vmatprep.subr.bf16.mxu0 %v6748
    %7447 = vmatpush1.bf16.msra.mxu0 %v6747
    %7448 = vmatprep.subr.bf16.mxu0 %v6755
    %7449 = vmatpush1.bf16.msra.mxu0 %v6754
    %7450 = vmatprep.subr.bf16.mxu0 %v6762
    %7451 = vmatpush1.bf16.msra.mxu0 %v6761
    %7452 = vmatprep.subr.bf16.mxu0 %v6769
    %7453 = vmatpush1.bf16.msra.mxu0 %v6768
    %7454 = vmatprep.subr.bf16.mxu0 %v6776
    %7455 = vmatpush1.bf16.msra.mxu0 %v6775
    %7456 = vmatprep.mubr.bf16.mxu0 %v4486
    %7457 = vmatmul.mubr.bf16.gmra.mrb[0].mxu0 %v4485
    %v7458 = vpop.f32.mrb[0].mxu0
    %v7459 = vadd.f32 %v7418, %v7458
    %v7460 = vpop.f32.mrb[0].mxu0
    %v7461 = vadd.f32 %v7420, %v7460
    %v7462 = vpop.f32.mrb[0].mxu0
    %v7463 = vpop.f32.mrb[0].mxu0
    %7464 = vdwg.mxu0
    %7465 = vmatprep.subr.bf16.mxu0 %v6783
    %7466 = vmatpush1.bf16.msra.mxu0 %v6782
    %7467 = vmatprep.subr.bf16.mxu0 %v6790
    %7468 = vmatpush1.bf16.msra.mxu0 %v6789
    %7469 = vmatprep.subr.bf16.mxu0 %v6797
    %7470 = vmatpush1.bf16.msra.mxu0 %v6796
    %7471 = vmatprep.subr.bf16.mxu0 %v6804
    %7472 = vmatpush1.bf16.msra.mxu0 %v6803
    %7473 = vmatprep.subr.bf16.mxu0 %v6811
    %7474 = vmatpush1.bf16.msra.mxu0 %v6810
    %7475 = vmatprep.subr.bf16.mxu0 %v6818
    %7476 = vmatpush1.bf16.msra.mxu0 %v6817
    %7477 = vmatprep.subr.bf16.mxu0 %v6825
    %7478 = vmatpush1.bf16.msra.mxu0 %v6824
    %7479 = vmatprep.subr.bf16.mxu0 %v6832
    %7480 = vmatpush1.bf16.msra.mxu0 %v6831
    %7481 = vmatprep.subr.bf16.mxu0 %v6839
    %7482 = vmatpush1.bf16.msra.mxu0 %v6838
    %7483 = vmatprep.subr.bf16.mxu0 %v6846
    %7484 = vmatpush1.bf16.msra.mxu0 %v6845
    %7485 = vmatprep.subr.bf16.mxu0 %v6853
    %7486 = vmatpush1.bf16.msra.mxu0 %v6852
    %7487 = vmatprep.subr.bf16.mxu0 %v6860
    %7488 = vmatpush1.bf16.msra.mxu0 %v6859
    %7489 = vmatprep.subr.bf16.mxu0 %v6867
    %7490 = vmatpush1.bf16.msra.mxu0 %v6866
    %7491 = vmatprep.subr.bf16.mxu0 %v6874
    %7492 = vmatpush1.bf16.msra.mxu0 %v6873
    %7493 = vmatprep.subr.bf16.mxu0 %v6881
    %7494 = vmatpush1.bf16.msra.mxu0 %v6880
    %7495 = vmatprep.subr.bf16.mxu0 %v6888
    %7496 = vmatpush1.bf16.msra.mxu0 %v6887
    %7497 = vmatprep.mubr.bf16.mxu0 %v4488
    %7498 = vmatmul.mubr.bf16.gmra.mrb[0].mxu0 %v4487
    %v7499 = vpop.f32.mrb[0].mxu0
    %v7500 = vadd.f32 %v7459, %v7499
    %v7501 = vpop.f32.mrb[0].mxu0
    %v7502 = vadd.f32 %v7461, %v7501
    %v7503 = vpop.f32.mrb[0].mxu0
    %v7504 = vpop.f32.mrb[0].mxu0
    %7505 = vdwg.mxu0
    %7506 = vmatprep.subr.bf16.mxu0 %v6449
    %7507 = vmatpush1.bf16.msra.mxu0 %v6448
    %7508 = vmatprep.subr.bf16.mxu0 %v6456
    %7509 = vmatpush1.bf16.msra.mxu0 %v6455
    %7510 = vmatprep.subr.bf16.mxu0 %v6463
    %7511 = vmatpush1.bf16.msra.mxu0 %v6462
    %7512 = vmatprep.subr.bf16.mxu0 %v6470
    %7513 = vmatpush1.bf16.msra.mxu0 %v6469
    %7514 = vmatprep.subr.bf16.mxu0 %v6477
    %7515 = vmatpush1.bf16.msra.mxu0 %v6476
    %7516 = vmatprep.subr.bf16.mxu0 %v6484
    %7517 = vmatpush1.bf16.msra.mxu0 %v6483
    %7518 = vmatprep.subr.bf16.mxu0 %v6491
    %7519 = vmatpush1.bf16.msra.mxu0 %v6490
    %7520 = vmatprep.subr.bf16.mxu0 %v6498
    %7521 = vmatpush1.bf16.msra.mxu0 %v6497
    %7522 = vmatprep.subr.bf16.mxu0 %v6505
    %7523 = vmatpush1.bf16.msra.mxu0 %v6504
    %7524 = vmatprep.subr.bf16.mxu0 %v6512
    %7525 = vmatpush1.bf16.msra.mxu0 %v6511
    %7526 = vmatprep.subr.bf16.mxu0 %v6519
    %7527 = vmatpush1.bf16.msra.mxu0 %v6518
    %7528 = vmatprep.subr.bf16.mxu0 %v6526
    %7529 = vmatpush1.bf16.msra.mxu0 %v6525
    %7530 = vmatprep.subr.bf16.mxu0 %v6533
    %7531 = vmatpush1.bf16.msra.mxu0 %v6532
    %7532 = vmatprep.subr.bf16.mxu0 %v6540
    %7533 = vmatpush1.bf16.msra.mxu0 %v6539
    %7534 = vmatprep.subr.bf16.mxu0 %v6547
    %7535 = vmatpush1.bf16.msra.mxu0 %v6546
    %7536 = vmatprep.subr.bf16.mxu0 %v6554
    %7537 = vmatpush1.bf16.msra.mxu0 %v6553
    %7538 = vmatprep.mubr.bf16.mxu0 %v4482
    %7539 = vmatmul.mubr.bf16.gmra.mrb[0].mxu0 %v4481
    %v7540 = vpop.f32.mrb[0].mxu0
    %v7541 = vadd.f32 %v5014, %v7540
    %v7542 = vpop.f32.mrb[0].mxu0
    %v7543 = vadd.f32 %v5018, %v7542
    %v7544 = vpop.f32.mrb[0].mxu0
    %v7545 = vpop.f32.mrb[0].mxu0
    %7546 = vdwg.mxu0
    %7547 = vmatprep.subr.bf16.mxu0 %v6561
    %7548 = vmatpush1.bf16.msra.mxu0 %v6560
    %7549 = vmatprep.subr.bf16.mxu0 %v6568
    %7550 = vmatpush1.bf16.msra.mxu0 %v6567
    %7551 = vmatprep.subr.bf16.mxu0 %v6575
    %7552 = vmatpush1.bf16.msra.mxu0 %v6574
    %7553 = vmatprep.subr.bf16.mxu0 %v6582
    %7554 = vmatpush1.bf16.msra.mxu0 %v6581
    %7555 = vmatprep.subr.bf16.mxu0 %v6589
    %7556 = vmatpush1.bf16.msra.mxu0 %v6588
    %7557 = vmatprep.subr.bf16.mxu0 %v6596
    %7558 = vmatpush1.bf16.msra.mxu0 %v6595
    %7559 = vmatprep.subr.bf16.mxu0 %v6603
    %7560 = vmatpush1.bf16.msra.mxu0 %v6602
    %7561 = vmatprep.subr.bf16.mxu0 %v6610
    %7562 = vmatpush1.bf16.msra.mxu0 %v6609
    %7563 = vmatprep.subr.bf16.mxu0 %v6617
    %7564 = vmatpush1.bf16.msra.mxu0 %v6616
    %7565 = vmatprep.subr.bf16.mxu0 %v6624
    %7566 = vmatpush1.bf16.msra.mxu0 %v6623
    %7567 = vmatprep.subr.bf16.mxu0 %v6631
    %7568 = vmatpush1.bf16.msra.mxu0 %v6630
    %7569 = vmatprep.subr.bf16.mxu0 %v6638
    %7570 = vmatpush1.bf16.msra.mxu0 %v6637
    %7571 = vmatprep.subr.bf16.mxu0 %v6645
    %7572 = vmatpush1.bf16.msra.mxu0 %v6644
    %7573 = vmatprep.subr.bf16.mxu0 %v6652
    %7574 = vmatpush1.bf16.msra.mxu0 %v6651
    %7575 = vmatprep.subr.bf16.mxu0 %v6659
    %7576 = vmatpush1.bf16.msra.mxu0 %v6658
    %7577 = vmatprep.subr.bf16.mxu0 %v6666
    %7578 = vmatpush1.bf16.msra.mxu0 %v6665
    %7579 = vmatprep.mubr.bf16.mxu0 %v4484
    %7580 = vmatmul.mubr.bf16.gmra.mrb[0].mxu0 %v4483
    %v7581 = vpop.f32.mrb[0].mxu0
    %v7582 = vadd.f32 %v7541, %v7581
    %v7583 = vpop.f32.mrb[0].mxu0
    %v7584 = vadd.f32 %v7543, %v7583
    %v7585 = vpop.f32.mrb[0].mxu0
    %v7586 = vpop.f32.mrb[0].mxu0
    %7587 = vdwg.mxu0
    %7588 = vmatprep.subr.bf16.mxu0 %v6673
    %7589 = vmatpush1.bf16.msra.mxu0 %v6672
    %7590 = vmatprep.subr.bf16.mxu0 %v6680
    %7591 = vmatpush1.bf16.msra.mxu0 %v6679
    %7592 = vmatprep.subr.bf16.mxu0 %v6687
    %7593 = vmatpush1.bf16.msra.mxu0 %v6686
    %7594 = vmatprep.subr.bf16.mxu0 %v6694
    %7595 = vmatpush1.bf16.msra.mxu0 %v6693
    %7596 = vmatprep.subr.bf16.mxu0 %v6701
    %7597 = vmatpush1.bf16.msra.mxu0 %v6700
    %7598 = vmatprep.subr.bf16.mxu0 %v6708
    %7599 = vmatpush1.bf16.msra.mxu0 %v6707
    %7600 = vmatprep.subr.bf16.mxu0 %v6715
    %7601 = vmatpush1.bf16.msra.mxu0 %v6714
    %7602 = vmatprep.subr.bf16.mxu0 %v6722
    %7603 = vmatpush1.bf16.msra.mxu0 %v6721
    %7604 = vmatprep.subr.bf16.mxu0 %v6729
    %7605 = vmatpush1.bf16.msra.mxu0 %v6728
    %7606 = vmatprep.subr.bf16.mxu0 %v6736
    %7607 = vmatpush1.bf16.msra.mxu0 %v6735
    %7608 = vmatprep.subr.bf16.mxu0 %v6743
    %7609 = vmatpush1.bf16.msra.mxu0 %v6742
    %7610 = vmatprep.subr.bf16.mxu0 %v6750
    %7611 = vmatpush1.bf16.msra.mxu0 %v6749
    %7612 = vmatprep.subr.bf16.mxu0 %v6757
    %7613 = vmatpush1.bf16.msra.mxu0 %v6756
    %7614 = vmatprep.subr.bf16.mxu0 %v6764
    %7615 = vmatpush1.bf16.msra.mxu0 %v6763
    %7616 = vmatprep.subr.bf16.mxu0 %v6771
    %7617 = vmatpush1.bf16.msra.mxu0 %v6770
    %7618 = vmatprep.subr.bf16.mxu0 %v6778
    %7619 = vmatpush1.bf16.msra.mxu0 %v6777
    %7620 = vmatprep.mubr.bf16.mxu0 %v4486
    %7621 = vmatmul.mubr.bf16.gmra.mrb[0].mxu0 %v4485
    %v7622 = vpop.f32.mrb[0].mxu0
    %v7623 = vadd.f32 %v7582, %v7622
    %v7624 = vpop.f32.mrb[0].mxu0
    %v7625 = vadd.f32 %v7584, %v7624
    %v7626 = vpop.f32.mrb[0].mxu0
    %v7627 = vpop.f32.mrb[0].mxu0
    %7628 = vdwg.mxu0
    %7629 = vmatprep.subr.bf16.mxu0 %v6785
    %7630 = vmatpush1.bf16.msra.mxu0 %v6784
    %7631 = vmatprep.subr.bf16.mxu0 %v6792
    %7632 = vmatpush1.bf16.msra.mxu0 %v6791
    %7633 = vmatprep.subr.bf16.mxu0 %v6799
    %7634 = vmatpush1.bf16.msra.mxu0 %v6798
    %7635 = vmatprep.subr.bf16.mxu0 %v6806
    %7636 = vmatpush1.bf16.msra.mxu0 %v6805
    %7637 = vmatprep.subr.bf16.mxu0 %v6813
    %7638 = vmatpush1.bf16.msra.mxu0 %v6812
    %7639 = vmatprep.subr.bf16.mxu0 %v6820
    %7640 = vmatpush1.bf16.msra.mxu0 %v6819
    %7641 = vmatprep.subr.bf16.mxu0 %v6827
    %7642 = vmatpush1.bf16.msra.mxu0 %v6826
    %7643 = vmatprep.subr.bf16.mxu0 %v6834
    %7644 = vmatpush1.bf16.msra.mxu0 %v6833
    %7645 = vmatprep.subr.bf16.mxu0 %v6841
    %7646 = vmatpush1.bf16.msra.mxu0 %v6840
    %7647 = vmatprep.subr.bf16.mxu0 %v6848
    %7648 = vmatpush1.bf16.msra.mxu0 %v6847
    %7649 = vmatprep.subr.bf16.mxu0 %v6855
    %7650 = vmatpush1.bf16.msra.mxu0 %v6854
    %7651 = vmatprep.subr.bf16.mxu0 %v6862
    %7652 = vmatpush1.bf16.msra.mxu0 %v6861
    %7653 = vmatprep.subr.bf16.mxu0 %v6869
    %7654 = vmatpush1.bf16.msra.mxu0 %v6868
    %7655 = vmatprep.subr.bf16.mxu0 %v6876
    %7656 = vmatpush1.bf16.msra.mxu0 %v6875
    %7657 = vmatprep.subr.bf16.mxu0 %v6883
    %7658 = vmatpush1.bf16.msra.mxu0 %v6882
    %7659 = vmatprep.subr.bf16.mxu0 %v6890
    %7660 = vmatpush1.bf16.msra.mxu0 %v6889
    %7661 = vmatprep.mubr.bf16.mxu0 %v4488
    %7662 = vmatmul.mubr.bf16.gmra.mrb[0].mxu0 %v4487
    %v7663 = vpop.f32.mrb[0].mxu0
    %v7664 = vadd.f32 %v7623, %v7663
    %v7665 = vpop.f32.mrb[0].mxu0
    %v7666 = vadd.f32 %v7625, %v7665
    %v7667 = vpop.f32.mrb[0].mxu0
    %v7668 = vpop.f32.mrb[0].mxu0
    %7669 = vdwg.mxu0
    %7670 = vmatprep.subr.bf16.mxu0 %v6451
    %7671 = vmatpush1.bf16.msra.mxu0 %v6450
    %7672 = vmatprep.subr.bf16.mxu0 %v6458
    %7673 = vmatpush1.bf16.msra.mxu0 %v6457
    %7674 = vmatprep.subr.bf16.mxu0 %v6465
    %7675 = vmatpush1.bf16.msra.mxu0 %v6464
    %7676 = vmatprep.subr.bf16.mxu0 %v6472
    %7677 = vmatpush1.bf16.msra.mxu0 %v6471
    %7678 = vmatprep.subr.bf16.mxu0 %v6479
    %7679 = vmatpush1.bf16.msra.mxu0 %v6478
    %7680 = vmatprep.subr.bf16.mxu0 %v6486
    %7681 = vmatpush1.bf16.msra.mxu0 %v6485
    %7682 = vmatprep.subr.bf16.mxu0 %v6493
    %7683 = vmatpush1.bf16.msra.mxu0 %v6492
    %7684 = vmatprep.subr.bf16.mxu0 %v6500
    %7685 = vmatpush1.bf16.msra.mxu0 %v6499
    %7686 = vmatprep.subr.bf16.mxu0 %v6507
    %7687 = vmatpush1.bf16.msra.mxu0 %v6506
    %7688 = vmatprep.subr.bf16.mxu0 %v6514
    %7689 = vmatpush1.bf16.msra.mxu0 %v6513
    %7690 = vmatprep.subr.bf16.mxu0 %v6521
    %7691 = vmatpush1.bf16.msra.mxu0 %v6520
    %7692 = vmatprep.subr.bf16.mxu0 %v6528
    %7693 = vmatpush1.bf16.msra.mxu0 %v6527
    %7694 = vmatprep.subr.bf16.mxu0 %v6535
    %7695 = vmatpush1.bf16.msra.mxu0 %v6534
    %7696 = vmatprep.subr.bf16.mxu0 %v6542
    %7697 = vmatpush1.bf16.msra.mxu0 %v6541
    %7698 = vmatprep.subr.bf16.mxu0 %v6549
    %7699 = vmatpush1.bf16.msra.mxu0 %v6548
    %7700 = vmatprep.subr.bf16.mxu0 %v6556
    %7701 = vmatpush1.bf16.msra.mxu0 %v6555
    %7702 = vmatprep.mubr.bf16.mxu0 %v4482
    %7703 = vmatmul.mubr.bf16.gmra.mrb[0].mxu0 %v4481
    %v7704 = vpop.f32.mrb[0].mxu0
    %v7705 = vadd.f32 %v5022, %v7704
    %v7706 = vpop.f32.mrb[0].mxu0
    %v7707 = vadd.f32 %v5026, %v7706
    %v7708 = vpop.f32.mrb[0].mxu0
    %v7709 = vpop.f32.mrb[0].mxu0
    %7710 = vdwg.mxu0
    %7711 = vmatprep.subr.bf16.mxu0 %v6563
    %7712 = vmatpush1.bf16.msra.mxu0 %v6562
    %7713 = vmatprep.subr.bf16.mxu0 %v6570
    %7714 = vmatpush1.bf16.msra.mxu0 %v6569
    %7715 = vmatprep.subr.bf16.mxu0 %v6577
    %7716 = vmatpush1.bf16.msra.mxu0 %v6576
    %7717 = vmatprep.subr.bf16.mxu0 %v6584
    %7718 = vmatpush1.bf16.msra.mxu0 %v6583
    %7719 = vmatprep.subr.bf16.mxu0 %v6591
    %7720 = vmatpush1.bf16.msra.mxu0 %v6590
    %7721 = vmatprep.subr.bf16.mxu0 %v6598
    %7722 = vmatpush1.bf16.msra.mxu0 %v6597
    %7723 = vmatprep.subr.bf16.mxu0 %v6605
    %7724 = vmatpush1.bf16.msra.mxu0 %v6604
    %7725 = vmatprep.subr.bf16.mxu0 %v6612
    %7726 = vmatpush1.bf16.msra.mxu0 %v6611
    %7727 = vmatprep.subr.bf16.mxu0 %v6619
    %7728 = vmatpush1.bf16.msra.mxu0 %v6618
    %7729 = vmatprep.subr.bf16.mxu0 %v6626
    %7730 = vmatpush1.bf16.msra.mxu0 %v6625
    %7731 = vmatprep.subr.bf16.mxu0 %v6633
    %7732 = vmatpush1.bf16.msra.mxu0 %v6632
    %7733 = vmatprep.subr.bf16.mxu0 %v6640
    %7734 = vmatpush1.bf16.msra.mxu0 %v6639
    %7735 = vmatprep.subr.bf16.mxu0 %v6647
    %7736 = vmatpush1.bf16.msra.mxu0 %v6646
    %7737 = vmatprep.subr.bf16.mxu0 %v6654
    %7738 = vmatpush1.bf16.msra.mxu0 %v6653
    %7739 = vmatprep.subr.bf16.mxu0 %v6661
    %7740 = vmatpush1.bf16.msra.mxu0 %v6660
    %7741 = vmatprep.subr.bf16.mxu0 %v6668
    %7742 = vmatpush1.bf16.msra.mxu0 %v6667
    %7743 = vmatprep.mubr.bf16.mxu0 %v4484
    %7744 = vmatmul.mubr.bf16.gmra.mrb[0].mxu0 %v4483
    %v7745 = vpop.f32.mrb[0].mxu0
    %v7746 = vadd.f32 %v7705, %v7745
    %v7747 = vpop.f32.mrb[0].mxu0
    %v7748 = vadd.f32 %v7707, %v7747
    %v7749 = vpop.f32.mrb[0].mxu0
    %v7750 = vpop.f32.mrb[0].mxu0
    %7751 = vdwg.mxu0
    %7752 = vmatprep.subr.bf16.mxu0 %v6675
    %7753 = vmatpush1.bf16.msra.mxu0 %v6674
    %7754 = vmatprep.subr.bf16.mxu0 %v6682
    %7755 = vmatpush1.bf16.msra.mxu0 %v6681
    %7756 = vmatprep.subr.bf16.mxu0 %v6689
    %7757 = vmatpush1.bf16.msra.mxu0 %v6688
    %7758 = vmatprep.subr.bf16.mxu0 %v6696
    %7759 = vmatpush1.bf16.msra.mxu0 %v6695
    %7760 = vmatprep.subr.bf16.mxu0 %v6703
    %7761 = vmatpush1.bf16.msra.mxu0 %v6702
    %7762 = vmatprep.subr.bf16.mxu0 %v6710
    %7763 = vmatpush1.bf16.msra.mxu0 %v6709
    %7764 = vmatprep.subr.bf16.mxu0 %v6717
    %7765 = vmatpush1.bf16.msra.mxu0 %v6716
    %7766 = vmatprep.subr.bf16.mxu0 %v6724
    %7767 = vmatpush1.bf16.msra.mxu0 %v6723
    %7768 = vmatprep.subr.bf16.mxu0 %v6731
    %7769 = vmatpush1.bf16.msra.mxu0 %v6730
    %7770 = vmatprep.subr.bf16.mxu0 %v6738
    %7771 = vmatpush1.bf16.msra.mxu0 %v6737
    %7772 = vmatprep.subr.bf16.mxu0 %v6745
    %7773 = vmatpush1.bf16.msra.mxu0 %v6744
    %7774 = vmatprep.subr.bf16.mxu0 %v6752
    %7775 = vmatpush1.bf16.msra.mxu0 %v6751
    %7776 = vmatprep.subr.bf16.mxu0 %v6759
    %7777 = vmatpush1.bf16.msra.mxu0 %v6758
    %7778 = vmatprep.subr.bf16.mxu0 %v6766
    %7779 = vmatpush1.bf16.msra.mxu0 %v6765
    %7780 = vmatprep.subr.bf16.mxu0 %v6773
    %7781 = vmatpush1.bf16.msra.mxu0 %v6772
    %7782 = vmatprep.subr.bf16.mxu0 %v6780
    %7783 = vmatpush1.bf16.msra.mxu0 %v6779
    %7784 = vmatprep.mubr.bf16.mxu0 %v4486
    %7785 = vmatmul.mubr.bf16.gmra.mrb[0].mxu0 %v4485
    %v7786 = vpop.f32.mrb[0].mxu0
    %v7787 = vadd.f32 %v7746, %v7786
    %v7788 = vpop.f32.mrb[0].mxu0
    %v7789 = vadd.f32 %v7748, %v7788
    %v7790 = vpop.f32.mrb[0].mxu0
    %v7791 = vpop.f32.mrb[0].mxu0
    %7792 = vdwg.mxu0
    %7793 = vmatprep.subr.bf16.mxu0 %v6787
    %7794 = vmatpush1.bf16.msra.mxu0 %v6786
    %7795 = vmatprep.subr.bf16.mxu0 %v6794
    %7796 = vmatpush1.bf16.msra.mxu0 %v6793
    %7797 = vmatprep.subr.bf16.mxu0 %v6801
    %7798 = vmatpush1.bf16.msra.mxu0 %v6800
    %7799 = vmatprep.subr.bf16.mxu0 %v6808
    %7800 = vmatpush1.bf16.msra.mxu0 %v6807
    %7801 = vmatprep.subr.bf16.mxu0 %v6815
    %7802 = vmatpush1.bf16.msra.mxu0 %v6814
    %7803 = vmatprep.subr.bf16.mxu0 %v6822
    %7804 = vmatpush1.bf16.msra.mxu0 %v6821
    %7805 = vmatprep.subr.bf16.mxu0 %v6829
    %7806 = vmatpush1.bf16.msra.mxu0 %v6828
    %7807 = vmatprep.subr.bf16.mxu0 %v6836
    %7808 = vmatpush1.bf16.msra.mxu0 %v6835
    %7809 = vmatprep.subr.bf16.mxu0 %v6843
    %7810 = vmatpush1.bf16.msra.mxu0 %v6842
    %7811 = vmatprep.subr.bf16.mxu0 %v6850
    %7812 = vmatpush1.bf16.msra.mxu0 %v6849
    %7813 = vmatprep.subr.bf16.mxu0 %v6857
    %7814 = vmatpush1.bf16.msra.mxu0 %v6856
    %7815 = vmatprep.subr.bf16.mxu0 %v6864
    %7816 = vmatpush1.bf16.msra.mxu0 %v6863
    %7817 = vmatprep.subr.bf16.mxu0 %v6871
    %7818 = vmatpush1.bf16.msra.mxu0 %v6870
    %7819 = vmatprep.subr.bf16.mxu0 %v6878
    %7820 = vmatpush1.bf16.msra.mxu0 %v6877
    %7821 = vmatprep.subr.bf16.mxu0 %v6885
    %7822 = vmatpush1.bf16.msra.mxu0 %v6884
    %7823 = vmatprep.subr.bf16.mxu0 %v6892
    %7824 = vmatpush1.bf16.msra.mxu0 %v6891
    %7825 = vmatprep.mubr.bf16.mxu0 %v4488
    %7826 = vmatmul.mubr.bf16.gmra.mrb[0].mxu0 %v4487
    %v7827 = vpop.f32.mrb[0].mxu0
    %v7828 = vadd.f32 %v7787, %v7827
    %v7829 = vpop.f32.mrb[0].mxu0
    %v7830 = vadd.f32 %v7789, %v7829
    %v7831 = vpop.f32.mrb[0].mxu0
    %v7832 = vpop.f32.mrb[0].mxu0
    %7833 = vdwg.mxu0
    %7834 = vmatprep.subr.bf16.mxu0 0
    %7835 = vmatpush1.bf16.msra.mxu0 %v6452
    %7836 = vmatprep.subr.bf16.mxu0 0
    %7837 = vmatpush1.bf16.msra.mxu0 %v6459
    %7838 = vmatprep.subr.bf16.mxu0 0
    %7839 = vmatpush1.bf16.msra.mxu0 %v6466
    %7840 = vmatprep.subr.bf16.mxu0 0
    %7841 = vmatpush1.bf16.msra.mxu0 %v6473
    %7842 = vmatprep.subr.bf16.mxu0 0
    %7843 = vmatpush1.bf16.msra.mxu0 %v6480
    %7844 = vmatprep.subr.bf16.mxu0 0
    %7845 = vmatpush1.bf16.msra.mxu0 %v6487
    %7846 = vmatprep.subr.bf16.mxu0 0
    %7847 = vmatpush1.bf16.msra.mxu0 %v6494
    %7848 = vmatprep.subr.bf16.mxu0 0
    %7849 = vmatpush1.bf16.msra.mxu0 %v6501
    %7850 = vmatprep.subr.bf16.mxu0 0
    %7851 = vmatpush1.bf16.msra.mxu0 %v6508
    %7852 = vmatprep.subr.bf16.mxu0 0
    %7853 = vmatpush1.bf16.msra.mxu0 %v6515
    %7854 = vmatprep.subr.bf16.mxu0 0
    %7855 = vmatpush1.bf16.msra.mxu0 %v6522
    %7856 = vmatprep.subr.bf16.mxu0 0
    %7857 = vmatpush1.bf16.msra.mxu0 %v6529
    %7858 = vmatprep.subr.bf16.mxu0 0
    %7859 = vmatpush1.bf16.msra.mxu0 %v6536
    %7860 = vmatprep.subr.bf16.mxu0 0
    %7861 = vmatpush1.bf16.msra.mxu0 %v6543
    %7862 = vmatprep.subr.bf16.mxu0 0
    %7863 = vmatpush1.bf16.msra.mxu0 %v6550
    %7864 = vmatprep.subr.bf16.mxu0 0
    %7865 = vmatpush1.bf16.msra.mxu0 %v6557
    %7866 = vmatprep.mubr.bf16.mxu0 %v4482
    %7867 = vmatmul.mubr.bf16.gmra.mrb[0].mxu0 %v4481
    %v7868 = vpop.f32.mrb[0].mxu0
    %v7869 = vadd.f32 %v5030, %v7868
    %v7870 = vpop.f32.mrb[0].mxu0
    %v7871 = vpop.f32.mrb[0].mxu0
    %v7872 = vpop.f32.mrb[0].mxu0
    %7873 = vdwg.mxu0
    %7874 = vmatprep.subr.bf16.mxu0 0
    %7875 = vmatpush1.bf16.msra.mxu0 %v6564
    %7876 = vmatprep.subr.bf16.mxu0 0
    %7877 = vmatpush1.bf16.msra.mxu0 %v6571
    %7878 = vmatprep.subr.bf16.mxu0 0
    %7879 = vmatpush1.bf16.msra.mxu0 %v6578
    %7880 = vmatprep.subr.bf16.mxu0 0
    %7881 = vmatpush1.bf16.msra.mxu0 %v6585
    %7882 = vmatprep.subr.bf16.mxu0 0
    %7883 = vmatpush1.bf16.msra.mxu0 %v6592
    %7884 = vmatprep.subr.bf16.mxu0 0
    %7885 = vmatpush1.bf16.msra.mxu0 %v6599
    %7886 = vmatprep.subr.bf16.mxu0 0
    %7887 = vmatpush1.bf16.msra.mxu0 %v6606
    %7888 = vmatprep.subr.bf16.mxu0 0
    %7889 = vmatpush1.bf16.msra.mxu0 %v6613
    %7890 = vmatprep.subr.bf16.mxu0 0
    %7891 = vmatpush1.bf16.msra.mxu0 %v6620
    %7892 = vmatprep.subr.bf16.mxu0 0
    %7893 = vmatpush1.bf16.msra.mxu0 %v6627
    %7894 = vmatprep.subr.bf16.mxu0 0
    %7895 = vmatpush1.bf16.msra.mxu0 %v6634
    %7896 = vmatprep.subr.bf16.mxu0 0
    %7897 = vmatpush1.bf16.msra.mxu0 %v6641
    %7898 = vmatprep.subr.bf16.mxu0 0
    %7899 = vmatpush1.bf16.msra.mxu0 %v6648
    %7900 = vmatprep.subr.bf16.mxu0 0
    %7901 = vmatpush1.bf16.msra.mxu0 %v6655
    %7902 = vmatprep.subr.bf16.mxu0 0
    %7903 = vmatpush1.bf16.msra.mxu0 %v6662
    %7904 = vmatprep.subr.bf16.mxu0 0
    %7905 = vmatpush1.bf16.msra.mxu0 %v6669
    %7906 = vmatprep.mubr.bf16.mxu0 %v4484
    %7907 = vmatmul.mubr.bf16.gmra.mrb[0].mxu0 %v4483
    %v7908 = vpop.f32.mrb[0].mxu0
    %v7909 = vadd.f32 %v7869, %v7908
    %v7910 = vpop.f32.mrb[0].mxu0
    %v7911 = vpop.f32.mrb[0].mxu0
    %v7912 = vpop.f32.mrb[0].mxu0
    %7913 = vdwg.mxu0
    %7914 = vmatprep.subr.bf16.mxu0 0
    %7915 = vmatpush1.bf16.msra.mxu0 %v6676
    %7916 = vmatprep.subr.bf16.mxu0 0
    %7917 = vmatpush1.bf16.msra.mxu0 %v6683
    %7918 = vmatprep.subr.bf16.mxu0 0
    %7919 = vmatpush1.bf16.msra.mxu0 %v6690
    %7920 = vmatprep.subr.bf16.mxu0 0
    %7921 = vmatpush1.bf16.msra.mxu0 %v6697
    %7922 = vmatprep.subr.bf16.mxu0 0
    %7923 = vmatpush1.bf16.msra.mxu0 %v6704
    %7924 = vmatprep.subr.bf16.mxu0 0
    %7925 = vmatpush1.bf16.msra.mxu0 %v6711
    %7926 = vmatprep.subr.bf16.mxu0 0
    %7927 = vmatpush1.bf16.msra.mxu0 %v6718
    %7928 = vmatprep.subr.bf16.mxu0 0
    %7929 = vmatpush1.bf16.msra.mxu0 %v6725
    %7930 = vmatprep.subr.bf16.mxu0 0
    %7931 = vmatpush1.bf16.msra.mxu0 %v6732
    %7932 = vmatprep.subr.bf16.mxu0 0
    %7933 = vmatpush1.bf16.msra.mxu0 %v6739
    %7934 = vmatprep.subr.bf16.mxu0 0
    %7935 = vmatpush1.bf16.msra.mxu0 %v6746
    %7936 = vmatprep.subr.bf16.mxu0 0
    %7937 = vmatpush1.bf16.msra.mxu0 %v6753
    %7938 = vmatprep.subr.bf16.mxu0 0
    %7939 = vmatpush1.bf16.msra.mxu0 %v6760
    %7940 = vmatprep.subr.bf16.mxu0 0
    %7941 = vmatpush1.bf16.msra.mxu0 %v6767
    %7942 = vmatprep.subr.bf16.mxu0 0
    %7943 = vmatpush1.bf16.msra.mxu0 %v6774
    %7944 = vmatprep.subr.bf16.mxu0 0
    %7945 = vmatpush1.bf16.msra.mxu0 %v6781
    %7946 = vmatprep.mubr.bf16.mxu0 %v4486
    %7947 = vmatmul.mubr.bf16.gmra.mrb[0].mxu0 %v4485
    %v7948 = vpop.f32.mrb[0].mxu0
    %v7949 = vadd.f32 %v7909, %v7948
    %v7950 = vpop.f32.mrb[0].mxu0
    %v7951 = vpop.f32.mrb[0].mxu0
    %v7952 = vpop.f32.mrb[0].mxu0
    %7953 = vdwg.mxu0
    %7954 = vmatprep.subr.bf16.mxu0 0
    %7955 = vmatpush1.bf16.msra.mxu0 %v6788
    %7956 = vmatprep.subr.bf16.mxu0 0
    %7957 = vmatpush1.bf16.msra.mxu0 %v6795
    %7958 = vmatprep.subr.bf16.mxu0 0
    %7959 = vmatpush1.bf16.msra.mxu0 %v6802
    %7960 = vmatprep.subr.bf16.mxu0 0
    %7961 = vmatpush1.bf16.msra.mxu0 %v6809
    %7962 = vmatprep.subr.bf16.mxu0 0
    %7963 = vmatpush1.bf16.msra.mxu0 %v6816
    %7964 = vmatprep.subr.bf16.mxu0 0
    %7965 = vmatpush1.bf16.msra.mxu0 %v6823
    %7966 = vmatprep.subr.bf16.mxu0 0
    %7967 = vmatpush1.bf16.msra.mxu0 %v6830
    %7968 = vmatprep.subr.bf16.mxu0 0
    %7969 = vmatpush1.bf16.msra.mxu0 %v6837
    %7970 = vmatprep.subr.bf16.mxu0 0
    %7971 = vmatpush1.bf16.msra.mxu0 %v6844
    %7972 = vmatprep.subr.bf16.mxu0 0
    %7973 = vmatpush1.bf16.msra.mxu0 %v6851
    %7974 = vmatprep.subr.bf16.mxu0 0
    %7975 = vmatpush1.bf16.msra.mxu0 %v6858
    %7976 = vmatprep.subr.bf16.mxu0 0
    %7977 = vmatpush1.bf16.msra.mxu0 %v6865
    %7978 = vmatprep.subr.bf16.mxu0 0
    %7979 = vmatpush1.bf16.msra.mxu0 %v6872
    %7980 = vmatprep.subr.bf16.mxu0 0
    %7981 = vmatpush1.bf16.msra.mxu0 %v6879
    %7982 = vmatprep.subr.bf16.mxu0 0
    %7983 = vmatpush1.bf16.msra.mxu0 %v6886
    %7984 = vmatprep.subr.bf16.mxu0 0
    %7985 = vmatpush1.bf16.msra.mxu0 %v6893
    %7986 = vmatprep.mubr.bf16.mxu0 %v4488
    %7987 = vmatmul.mubr.bf16.gmra.mrb[0].mxu0 %v4487
    %v7988 = vpop.f32.mrb[0].mxu0
    %v7989 = vadd.f32 %v7949, %v7988
    %v7990 = vpop.f32.mrb[0].mxu0
    %v7991 = vpop.f32.mrb[0].mxu0
    %v7992 = vpop.f32.mrb[0].mxu0
    %7993 = vdwg.mxu0
    %v7994 = vxor.u32 %v7500, 2147483648
    %v7995 = vxor.u32 %v7502, 2147483648
    %v7996 = vxor.u32 %v7664, 2147483648
    %v7997 = vxor.u32 %v7666, 2147483648
    %v7998 = vxor.u32 %v7828, 2147483648
    %v7999 = vxor.u32 %v7830, 2147483648
    %v8000 = vxor.u32 %v7989, 2147483648
    %v8001 = vmul.f32 %v7994, 1.442695
    %v8002 = vpow.pop %v8001
    %v8003 = vmul.f32 %v7995, 1.442695
    %v8004 = vpow.pop %v8003
    %v8005 = vmul.f32 %v7996, 1.442695
    %v8006 = vpow.pop %v8005
    %v8007 = vmul.f32 %v7997, 1.442695
    %v8008 = vpow.pop %v8007
    %v8009 = vmul.f32 %v7998, 1.442695
    %v8010 = vpow.pop %v8009
    %v8011 = vmul.f32 %v7999, 1.442695
    %v8012 = vpow.pop %v8011
    %v8013 = vmul.f32 %v8000, 1.442695
    %v8014 = vpow.pop %v8013
    %v8015 = vadd.f32 %v8002, 1.0
    %v8016 = vadd.f32 %v8004, 1.0
    %v8017 = vadd.f32 %v8006, 1.0
    %v8018 = vadd.f32 %v8008, 1.0
    %v8019 = vadd.f32 %v8010, 1.0
    %v8020 = vadd.f32 %v8012, 1.0
    %v8021 = vadd.f32 %v8014, 1.0
    %v8022 = vrcp.pop %v8015
    %v8023 = vmul.f32 1.0, %v8022
    %v8024 = vrcp.pop %v8016
    %v8025 = vmul.f32 1.0, %v8024
    %v8026 = vrcp.pop %v8017
    %v8027 = vmul.f32 1.0, %v8026
    %v8028 = vrcp.pop %v8018
    %v8029 = vmul.f32 1.0, %v8028
    %v8030 = vrcp.pop %v8019
    %v8031 = vmul.f32 1.0, %v8030
    %v8032 = vrcp.pop %v8020
    %v8033 = vmul.f32 1.0, %v8032
    %v8034 = vrcp.pop %v8021
    %v8035 = vmul.f32 1.0, %v8034
    %8036 = vst [vmem:[#allocation13] sm:$0xff] %v8023
    %8037 = vst [vmem:[#allocation13 + $0x8] sm:$0xff] %v8025
    %8038 = vst [vmem:[#allocation13 + $0x10] sm:$0xff] %v8027
    %8039 = vst [vmem:[#allocation13 + $0x18] sm:$0xff] %v8029
    %8040 = vst [vmem:[#allocation13 + $0x20] sm:$0xff] %v8031
    %8041 = vst [vmem:[#allocation13 + $0x28] sm:$0xff] %v8033
    %8042 = vst [vmem:[#allocation13 + $0x30] sm:$0xff] %v8035
    // Predicated region
    $region54: #{p_net_forward.1} parent=1 // pred_check
      _
    $region55: #{p_net_forward.1} parent=1 // pred_check_branch
      %8044 = sbr.rel (0) target = $region57
    $region56: #{p_net_forward.1} parent=1 // pred_region
      %s8046 = ssub.s32 896, 896
      %8047 = vsyncadd [#allocation4], %s8046
      %s8049 = sshll.u32 [#allocation13], 4
      %s8050 = int_to_ptr.vmem [resolvable:$true] %s8049
      %8052 = dma.vmem_to_hbm [thread:$0]  %s8050, 896, %s7, [#allocation4]
    $region57: #{p_net_forward.1} parent=1 // pred_fallthru
      _
    // Predicated region
    $region58: #{p_net_forward.1} parent=1 // pred_check
      _
    $region59: #{p_net_forward.1} parent=1 // pred_check_branch
      %8054 = sbr.rel (0) target = $region61
    $region60: #{p_net_forward.1} parent=1 // pred_region
      %8055 = dma.done [#allocation4], 896
    $region61: #{p_net_forward.1} parent=1 // pred_fallthru
      _
    %8056 = vsyncpa [#allocation3], 1
    %8057 = vsyncpa [#allocation6], 1
    %8058 = vsyncpa [#allocation9], 1
    %8059 = vsyncpa [#allocation12], 1
    %8060 = vsyncpa [#allocation4], 1

</llo_original>
